<compile_context>
chip_gen: v5e
topology: v5e:2x2
jax: 0.10.0
libtpu: 0.0.40
codegen_flags: <defaults>
</compile_context>

<pallas_src>
import functools

import jax
import jax.numpy as jnp
from jax import lax
from jax.experimental import pallas as pl
from jax.experimental.pallas import tpu as pltpu

CP = 128          # lane-padded channel width used throughout the kernel
B_TILE_MAX = 32   # portable batch-tile cap (fits v7x 64 MiB VMEM with margin;
                  # can be raised to 64-128 on v5e/v6e's 128 MiB VMEM)

# Flipped off automatically if this JAX/Mosaic build rejects pl.Buffered(1).
_SINGLE_BUFFER_WEIGHTS = True


def _round_up(x, m):
    return (x + m - 1) // m * m


def _conv_out(size, k, s):
    return (size - k) // s + 1


def _pick_b_tile(batch):
    # >=16 rows so bf16 intermediates fill packed (16,128) vregs and the MXU
    # sees a reasonable M; multiple of 16 keeps every in-kernel reshape a free
    # re-tiling of aligned (b_tile, 128) slabs.
    return max(16, min(B_TILE_MAX, _round_up(batch, 16)))


# ----------------------------------------------------------------------------
# Fused Pallas kernel: conv1 + conv2 + conv3 + fc1 + head.
# All matmuls use bf16 operands with f32 MXU accumulation; one fused
# bias+ReLU+bf16 epilogue per layer.
# ----------------------------------------------------------------------------
def _dqn_fused_kernel(p1_ref, w1_ref, b1_ref, w2_ref, b2_ref, w3_ref, b3_ref,
                      wf_ref, bf_ref, wh_ref, bh_ref, out_ref, *,
                      bt, oh1h, ow1h, oh2, ow2, oh3, ow3):
    f32, bf16 = jnp.float32, jnp.bfloat16

    # ---- conv1: ONE (n_pos1*bt, k1p) x (k1p, 128) matmul ---------------------
    p1 = p1_ref[...]                                   # (n_pos1, bt, k1p) bf16
    n_pos1, _, k1p = p1.shape
    a1 = jnp.dot(p1.reshape(n_pos1 * bt, k1p), w1_ref[...],
                 preferred_element_type=f32)
    a1 = jnp.maximum(a1 + b1_ref[...], 0.0).astype(bf16)     # (n_pos1*bt, 128)

    # Conv1 output rows are ordered (row-parity, col-parity, ih, jh, b), so the
    # four stride-2 phase planes are contiguous row ranges: the conv2 gather
    # below needs only unit-stride slices and free leading-dim reshapes.
    plane_rows = oh1h * ow1h * bt
    planes = [a1[rp * plane_rows:(rp + 1) * plane_rows]
              .reshape(oh1h, ow1h, bt, CP) for rp in range(4)]

    # ---- conv2 (4x4, stride 2): 16 dots with M = oh2*ow2*bt ------------------
    m2 = oh2 * ow2 * bt
    acc2 = None
    for ki in range(4):
        qi, ri = divmod(ki, 2)
        for kj in range(4):
            qj, rj = divmod(kj, 2)
            lhs = planes[ri * 2 + rj][qi:qi + oh2, qj:qj + ow2]
            t = jnp.dot(lhs.reshape(m2, CP), w2_ref[ki * 4 + kj],
                        preferred_element_type=f32)
            acc2 = t if acc2 is None else acc2 + t
    a2 = jnp.maximum(acc2 + b2_ref[...], 0.0).astype(bf16)   # single epilogue
    a2 = a2.reshape(oh2, ow2, bt, CP)

    # ---- conv3 (3x3, stride 1): 9 dots with M = oh3*ow3*bt -------------------
    m3 = oh3 * ow3 * bt
    acc3 = None
    for ki in range(3):
        for kj in range(3):
            lhs = a2[ki:ki + oh3, kj:kj + ow3]
            t = jnp.dot(lhs.reshape(m3, CP), w3_ref[ki * 3 + kj],
                        preferred_element_type=f32)
            acc3 = t if acc3 is None else acc3 + t
    a3 = jnp.maximum(acc3 + b3_ref[...], 0.0).astype(bf16)   # (m3, 128)

    # ---- fc1: sum over spatial positions, contiguous (bt, 128) row slices ----
    # TODO(synk): lanes 64:128 of each position are structural zeros (64->128
    # channel pad); packing two positions per 128-lane group would halve fc1's
    # K and its VMEM footprint (~4% of total MXU work at 84x84 inputs).
    hacc = None
    for p in range(oh3 * ow3):
        t = jnp.dot(a3[p * bt:(p + 1) * bt], wf_ref[p],
                    preferred_element_type=f32)
        hacc = t if hacc is None else hacc + t
    h = jnp.maximum(hacc + bf_ref[...], 0.0).astype(bf16)    # (bt, 512)

    # ---- head ----------------------------------------------------------------
    o = jnp.dot(h, wh_ref[...], preferred_element_type=f32) + bh_ref[...]
    out_ref[...] = o.astype(out_ref.dtype)                   # lane-dense (bt, 128)


# ----------------------------------------------------------------------------
# Wrapper-side conv1 im2col.  Output positions are grouped into 4 stride-2
# parity planes of the conv1 output grid (zero-padded to even extents), with
# batch second-minor, so the fused kernel never needs strided gathers.
# Columns are (C, kh, kw)-major to match PyTorch weight flattening.
# ----------------------------------------------------------------------------
def _conv1_patches_parity(x, kh=8, kw=8, stride=4):
    n, c, h, w = x.shape
    oh, ow = _conv_out(h, kh, stride), _conv_out(w, kw, stride)
    ohh, owh = (oh + 1) // 2, (ow + 1) // 2
    cols = []
    for ki in range(kh):
        for kj in range(kw):
            cols.append(x[:, :, ki:ki + stride * (oh - 1) + 1:stride,
                              kj:kj + stride * (ow - 1) + 1:stride])
    p = jnp.stack(cols, axis=2).reshape(n, c * kh * kw, oh, ow)
    p = jnp.pad(p, ((0, 0), (0, 0), (0, 2 * ohh - oh), (0, 2 * owh - ow)))
    p = p.reshape(n, c * kh * kw, ohh, 2, owh, 2)     # (b, K, ih, ri, jh, rj)
    p = p.transpose(3, 5, 2, 4, 0, 1)                 # (ri, rj, ih, jh, b, K)
    p = p.reshape(4 * ohh * owh, n, c * kh * kw)      # (n_pos1, B, K1)
    return p, oh, ow, ohh, owh


# ----------------------------------------------------------------------------
# Parameters: PyTorch-layout init + one-time conversion to kernel layout.
# ----------------------------------------------------------------------------
def init_params(key, image_dim, output_dim):
    c_in, h_in, w_in = image_dim
    h1, w1 = _conv_out(h_in, 8, 4), _conv_out(w_in, 8, 4)
    h2, w2 = _conv_out(h1, 4, 2), _conv_out(w1, 4, 2)
    h3, w3 = _conv_out(h2, 3, 1), _conv_out(w2, 3, 1)
    n_flatten = 64 * h3 * w3

    ks = jax.random.split(key, 10)
    s = 0.05
    params = {
        "conv1_w": s * jax.random.normal(ks[0], (32, c_in, 8, 8), jnp.float32),
        "conv1_b": s * jax.random.normal(ks[1], (32,), jnp.float32),
        "conv2_w": s * jax.random.normal(ks[2], (64, 32, 4, 4), jnp.float32),
        "conv2_b": s * jax.random.normal(ks[3], (64,), jnp.float32),
        "conv3_w": s * jax.random.normal(ks[4], (64, 64, 3, 3), jnp.float32),
        "conv3_b": s * jax.random.normal(ks[5], (64,), jnp.float32),
        "fc1_w": s * jax.random.normal(ks[6], (n_flatten, 512), jnp.float32),
        "fc1_b": s * jax.random.normal(ks[7], (512,), jnp.float32),
        "head_w": s * jax.random.normal(ks[8], (512, output_dim), jnp.float32),
        "head_b": s * jax.random.normal(ks[9], (output_dim,), jnp.float32),
    }
    return params, n_flatten


def prepare_kernel_params(params, image_dim, output_dim):
    """One-time weight plumbing: flatten / transpose / zero-pad to 128 lanes /
    cast to bf16.  Zero padding keeps results exact."""
    c_in, h_in, w_in = image_dim
    h1, w1 = _conv_out(h_in, 8, 4), _conv_out(w_in, 8, 4)
    h2, w2 = _conv_out(h1, 4, 2), _conv_out(w1, 4, 2)
    h3, w3 = _conv_out(h2, 3, 1), _conv_out(w2, 3, 1)

    k1 = c_in * 8 * 8
    k1p = _round_up(k1, 128)
    bf16 = jnp.bfloat16

    w1m = params["conv1_w"].reshape(32, k1).T                        # (k1, 32)
    w1m = jnp.zeros((k1p, CP), jnp.float32).at[:k1, :32].set(w1m)
    b1m = jnp.zeros((1, CP), jnp.float32).at[0, :32].set(params["conv1_b"])

    w2m = params["conv2_w"].transpose(2, 3, 1, 0).reshape(16, 32, 64)
    w2m = jnp.zeros((16, CP, CP), jnp.float32).at[:, :32, :64].set(w2m)
    b2m = jnp.zeros((1, CP), jnp.float32).at[0, :64].set(params["conv2_b"])

    w3m = params["conv3_w"].transpose(2, 3, 1, 0).reshape(9, 64, 64)
    w3m = jnp.zeros((9, CP, CP), jnp.float32).at[:, :64, :64].set(w3m)
    b3m = jnp.zeros((1, CP), jnp.float32).at[0, :64].set(params["conv3_b"])

    # fc1: PyTorch flattens (C, H, W); the kernel consumes one 128-padded
    # channel slab per spatial position -> weight laid out (h3*w3, 128, 512).
    wf = params["fc1_w"].reshape(64, h3, w3, 512).transpose(1, 2, 0, 3)
    wfm = jnp.zeros((h3 * w3, CP, 512), jnp.float32)
    wfm = wfm.at[:, :64, :].set(wf.reshape(h3 * w3, 64, 512))
    bfm = params["fc1_b"].reshape(1, 512)

    whm = jnp.zeros((512, CP), jnp.float32).at[:, :output_dim].set(params["head_w"])
    bhm = jnp.zeros((1, CP), jnp.float32).at[0, :output_dim].set(params["head_b"])

    return {
        "w1": w1m.astype(bf16), "b1": b1m,
        "w2": w2m.astype(bf16), "b2": b2m,
        "w3": w3m.astype(bf16), "b3": b3m,
        "wf": wfm.astype(bf16), "bf": bfm,
        "wh": whm.astype(bf16), "bh": bhm,
    }


def _const_spec(shape, single_buffer):
    """Full-array block with a constant index_map (weight stays VMEM-resident).
    When supported, request single buffering: these are fetched exactly once,
    so the default double buffer only wastes VMEM (matters most on v7x)."""
    nd = len(shape)
    index_map = lambda *_: (0,) * nd
    if single_buffer:
        return pl.BlockSpec(shape, index_map, pipeline_mode=pl.Buffered(1))
    return pl.BlockSpec(shape, index_map)


# ----------------------------------------------------------------------------
# Forward pass: one fused pallas_call, gridded over batch tiles.
# ----------------------------------------------------------------------------
@functools.partial(jax.jit, static_argnames=("output_dim", "single_buffer_weights"))
def _dqn_forward_impl(kparams, x, *, output_dim, single_buffer_weights):
    b = x.shape[0]
    patches, oh1, ow1, oh1h, ow1h = _conv1_patches_parity(x)  # (n_pos1, B, K1)
    oh2, ow2 = _conv_out(oh1, 4, 2), _conv_out(ow1, 4, 2)
    oh3, ow3 = _conv_out(oh2, 3, 1), _conv_out(ow2, 3, 1)
    n_pos1 = 4 * oh1h * ow1h

    k1 = patches.shape[-1]
    k1p = _round_up(k1, 128)
    b_tile = _pick_b_tile(b)
    b_pad = _round_up(b, b_tile)
    patches = jnp.pad(patches, ((0, 0), (0, b_pad - b), (0, k1p - k1)))
    patches = patches.astype(jnp.bfloat16)

    kern = functools.partial(_dqn_fused_kernel, bt=b_tile, oh1h=oh1h,
                             ow1h=ow1h, oh2=oh2, ow2=ow2, oh3=oh3, ow3=ow3)

    sb = single_buffer_weights
    weight_specs = [
        _const_spec((k1p, CP), sb), _const_spec((1, CP), sb),            # conv1
        _const_spec((16, CP, CP), sb), _const_spec((1, CP), sb),         # conv2
        _const_spec((9, CP, CP), sb), _const_spec((1, CP), sb),          # conv3
        _const_spec((oh3 * ow3, CP, 512), sb), _const_spec((1, 512), sb),  # fc1
        _const_spec((512, CP), sb), _const_spec((1, CP), sb),            # head
    ]

    # Advisory cost estimate so XLA can schedule the im2col glue around the call.
    macs = (n_pos1 * k1p * CP + 16 * oh2 * ow2 * CP * CP
            + 9 * oh3 * ow3 * CP * CP + oh3 * ow3 * CP * 512 + 512 * CP) * b_pad
    weight_bytes = sum(int(v.size) * v.dtype.itemsize for v in kparams.values())
    cost = pl.CostEstimate(
        flops=2 * macs, transcendentals=0,
        bytes_accessed=int(patches.size) * 2 + weight_bytes + b_pad * CP * 4)

    out = pl.pallas_call(
        kern,
        out_shape=jax.ShapeDtypeStruct((b_pad, CP), jnp.float32),
        grid=(b_pad // b_tile,),
        in_specs=[pl.BlockSpec((n_pos1, b_tile, k1p), lambda i: (0, i, 0))]
                 + weight_specs,
        out_specs=pl.BlockSpec((b_tile, CP), lambda i: (i, 0)),
        compiler_params=pltpu.CompilerParams(
            dimension_semantics=("parallel",),
            vmem_limit_bytes=64 * 1024 * 1024),
        cost_estimate=cost,
    )(patches, kparams["w1"], kparams["b1"], kparams["w2"], kparams["b2"],
      kparams["w3"], kparams["b3"], kparams["wf"], kparams["bf"],
      kparams["wh"], kparams["bh"])

    return out[:b, :output_dim]


def dqnetwork_forward(kparams, x, *, output_dim):
    """x: (B, C, H, W) float32 -> (B, output_dim) float32."""
    global _SINGLE_BUFFER_WEIGHTS
    if _SINGLE_BUFFER_WEIGHTS:
        try:
            return _dqn_forward_impl(kparams, x, output_dim=output_dim,
                                     single_buffer_weights=True)
        except Exception:
            _SINGLE_BUFFER_WEIGHTS = False   # fall back to default buffering
    return _dqn_forward_impl(kparams, x, output_dim=output_dim,
                             single_buffer_weights=False)


# ----------------------------------------------------------------------------
# Pure-JAX float32 reference (matches the PyTorch module semantics).
# ----------------------------------------------------------------------------
def reference_forward(params, x):
    dn = ("NCHW", "OIHW", "NCHW")
    y = lax.conv_general_dilated(x, params["conv1_w"], (4, 4), "VALID",
                                 dimension_numbers=dn)
    y = jax.nn.relu(y + params["conv1_b"][None, :, None, None])
    y = lax.conv_general_dilated(y, params["conv2_w"], (2, 2), "VALID",
                                 dimension_numbers=dn)
    y = jax.nn.relu(y + params["conv2_b"][None, :, None, None])
    y = lax.conv_general_dilated(y, params["conv3_w"], (1, 1), "VALID",
                                 dimension_numbers=dn)
    y = jax.nn.relu(y + params["conv3_b"][None, :, None, None])
    y = y.reshape(y.shape[0], -1)
    y = jax.nn.relu(y @ params["fc1_w"] + params["fc1_b"])
    return y @ params["head_w"] + params["head_b"]


if __name__ == "__main__":
    # Smallest spatial size this conv stack supports: 36 -> 8 -> 3 -> 1,
    # so n_flatten = 64.  Batch 2, 4 input channels, 6 actions.
    batch, image_dim, output_dim = 2, (4, 36, 36), 6

    key = jax.random.PRNGKey(0)
    k_params, k_x = jax.random.split(key)
    params, _ = init_params(k_params, image_dim, output_dim)
    kparams = prepare_kernel_params(params, image_dim, output_dim)
    x = jax.random.uniform(k_x, (batch,) + image_dim, jnp.float32)

    out = dqnetwork_forward(kparams, x, output_dim=output_dim)
    out = jax.block_until_ready(out)
    assert out.shape == (batch, output_dim), out.shape
    assert out.dtype == jnp.float32
    assert bool(jnp.all(jnp.isfinite(out)))

    # Tolerance check vs. the f32 reference (kernel uses bf16 operands).
    ref = reference_forward(params, x)
    max_err = float(jnp.max(jnp.abs(out - ref)))
    assert max_err < 6e-2, f"mismatch vs f32 reference: {max_err}"

    print("KERNEL_OK")
</pallas_src>

<mosaic_0001>
module attributes {stable_mosaic.version = 11 : i64} {
  func.func @_dqn_fused_kernel(%arg0: i32, %arg1: memref<64x16x256xbf16, #tpu.memory_space<vmem>>, %arg2: memref<256x128xbf16, #tpu.memory_space<vmem>>, %arg3: memref<1x128xf32, #tpu.memory_space<vmem>>, %arg4: memref<16x128x128xbf16, #tpu.memory_space<vmem>>, %arg5: memref<1x128xf32, #tpu.memory_space<vmem>>, %arg6: memref<9x128x128xbf16, #tpu.memory_space<vmem>>, %arg7: memref<1x128xf32, #tpu.memory_space<vmem>>, %arg8: memref<1x128x512xbf16, #tpu.memory_space<vmem>>, %arg9: memref<1x512xf32, #tpu.memory_space<vmem>>, %arg10: memref<512x128xbf16, #tpu.memory_space<vmem>>, %arg11: memref<1x128xf32, #tpu.memory_space<vmem>>, %arg12: memref<16x128xf32, #tpu.memory_space<vmem>>) attributes {dimension_semantics = [#tpu.dimension_semantics<parallel>], iteration_bounds = array<i64: 1>, scalar_prefetch = 0 : i64, scratch_operands = 0 : i64, tpu.core_type = #tpu.core_type<tc>, window_params = [{transform_indices = @transform_0, window_bounds = array<i64: 64, 16, 256>}, {pipeline_mode = #tpu.pipeline_mode<synchronous>, transform_indices = @transform_1, window_bounds = array<i64: 256, 128>}, {pipeline_mode = #tpu.pipeline_mode<synchronous>, transform_indices = @transform_2, window_bounds = array<i64: 1, 128>}, {pipeline_mode = #tpu.pipeline_mode<synchronous>, transform_indices = @transform_3, window_bounds = array<i64: 16, 128, 128>}, {pipeline_mode = #tpu.pipeline_mode<synchronous>, transform_indices = @transform_4, window_bounds = array<i64: 1, 128>}, {pipeline_mode = #tpu.pipeline_mode<synchronous>, transform_indices = @transform_5, window_bounds = array<i64: 9, 128, 128>}, {pipeline_mode = #tpu.pipeline_mode<synchronous>, transform_indices = @transform_6, window_bounds = array<i64: 1, 128>}, {pipeline_mode = #tpu.pipeline_mode<synchronous>, transform_indices = @transform_7, window_bounds = array<i64: 1, 128, 512>}, {pipeline_mode = #tpu.pipeline_mode<synchronous>, transform_indices = @transform_8, window_bounds = array<i64: 1, 512>}, {pipeline_mode = #tpu.pipeline_mode<synchronous>, transform_indices = @transform_9, window_bounds = array<i64: 512, 128>}, {pipeline_mode = #tpu.pipeline_mode<synchronous>, transform_indices = @transform_10, window_bounds = array<i64: 1, 128>}, {transform_indices = @transform_11, window_bounds = array<i64: 16, 128>}]} {
    %c0 = arith.constant 0 : index
    %c0_0 = arith.constant 0 : index
    %c0_1 = arith.constant 0 : index
    %0 = vector.load %arg1[%c0, %c0_0, %c0_1] : memref<64x16x256xbf16, #tpu.memory_space<vmem>>, vector<64x16x256xbf16>
    %1 = vector.shape_cast %0 : vector<64x16x256xbf16> to vector<1024x256xbf16>
    %c0_2 = arith.constant 0 : index
    %c0_3 = arith.constant 0 : index
    %2 = vector.load %arg2[%c0_2, %c0_3] : memref<256x128xbf16, #tpu.memory_space<vmem>>, vector<256x128xbf16>
    %cst = arith.constant dense<0.000000e+00> : vector<1024x128xf32>
    %3 = tpu.matmul %1, %2, %cst {dimension_numbers = #tpu.dot_dimension_numbers<[1], [0], [0], [1], [0, 0, 1, 1], [], []>} : vector<1024x256xbf16>, vector<256x128xbf16>, vector<1024x128xf32> -> vector<1024x128xf32>
    %c0_4 = arith.constant 0 : index
    %c0_5 = arith.constant 0 : index
    %4 = vector.load %arg3[%c0_4, %c0_5] : memref<1x128xf32, #tpu.memory_space<vmem>>, vector<1x128xf32>
    %5 = vector.broadcast %4 : vector<1x128xf32> to vector<1024x128xf32>
    %6 = arith.addf %3, %5 : vector<1024x128xf32>
    %cst_6 = arith.constant 0.000000e+00 : f32
    %7 = vector.broadcast %cst_6 : f32 to vector<1024x128xf32>
    %8 = arith.maximumf %6, %7 : vector<1024x128xf32>
    %9 = arith.truncf %8 : vector<1024x128xf32> to vector<1024x128xbf16>
    %10 = vector.extract_strided_slice %9 {offsets = [0, 0], sizes = [256, 128], strides = [1, 1]} : vector<1024x128xbf16> to vector<256x128xbf16>
    %11 = vector.shape_cast %10 : vector<256x128xbf16> to vector<4x4x16x128xbf16>
    %12 = vector.extract_strided_slice %9 {offsets = [256, 0], sizes = [256, 128], strides = [1, 1]} : vector<1024x128xbf16> to vector<256x128xbf16>
    %13 = vector.shape_cast %12 : vector<256x128xbf16> to vector<4x4x16x128xbf16>
    %14 = vector.extract_strided_slice %9 {offsets = [512, 0], sizes = [256, 128], strides = [1, 1]} : vector<1024x128xbf16> to vector<256x128xbf16>
    %15 = vector.shape_cast %14 : vector<256x128xbf16> to vector<4x4x16x128xbf16>
    %16 = vector.extract_strided_slice %9 {offsets = [768, 0], sizes = [256, 128], strides = [1, 1]} : vector<1024x128xbf16> to vector<256x128xbf16>
    %17 = vector.shape_cast %16 : vector<256x128xbf16> to vector<4x4x16x128xbf16>
    %18 = vector.extract_strided_slice %11 {offsets = [0, 0, 0, 0], sizes = [3, 3, 16, 128], strides = [1, 1, 1, 1]} : vector<4x4x16x128xbf16> to vector<3x3x16x128xbf16>
    %19 = vector.shape_cast %18 : vector<3x3x16x128xbf16> to vector<144x128xbf16>
    %c0_7 = arith.constant 0 : index
    %c0_8 = arith.constant 0 : index
    %c0_9 = arith.constant 0 : index
    %20 = vector.load %arg4[%c0_7, %c0_8, %c0_9] : memref<16x128x128xbf16, #tpu.memory_space<vmem>>, vector<1x128x128xbf16>
    %21 = vector.shape_cast %20 : vector<1x128x128xbf16> to vector<128x128xbf16>
    %cst_10 = arith.constant dense<0.000000e+00> : vector<144x128xf32>
    %22 = tpu.matmul %19, %21, %cst_10 {dimension_numbers = #tpu.dot_dimension_numbers<[1], [0], [0], [1], [0, 0, 1, 1], [], []>} : vector<144x128xbf16>, vector<128x128xbf16>, vector<144x128xf32> -> vector<144x128xf32>
    %23 = vector.extract_strided_slice %13 {offsets = [0, 0, 0, 0], sizes = [3, 3, 16, 128], strides = [1, 1, 1, 1]} : vector<4x4x16x128xbf16> to vector<3x3x16x128xbf16>
    %24 = vector.shape_cast %23 : vector<3x3x16x128xbf16> to vector<144x128xbf16>
    %c1 = arith.constant 1 : index
    %c0_11 = arith.constant 0 : index
    %c0_12 = arith.constant 0 : index
    %25 = vector.load %arg4[%c1, %c0_11, %c0_12] : memref<16x128x128xbf16, #tpu.memory_space<vmem>>, vector<1x128x128xbf16>
    %26 = vector.shape_cast %25 : vector<1x128x128xbf16> to vector<128x128xbf16>
    %cst_13 = arith.constant dense<0.000000e+00> : vector<144x128xf32>
    %27 = tpu.matmul %24, %26, %cst_13 {dimension_numbers = #tpu.dot_dimension_numbers<[1], [0], [0], [1], [0, 0, 1, 1], [], []>} : vector<144x128xbf16>, vector<128x128xbf16>, vector<144x128xf32> -> vector<144x128xf32>
    %28 = arith.addf %22, %27 : vector<144x128xf32>
    %29 = vector.extract_strided_slice %11 {offsets = [0, 1, 0, 0], sizes = [3, 3, 16, 128], strides = [1, 1, 1, 1]} : vector<4x4x16x128xbf16> to vector<3x3x16x128xbf16>
    %30 = vector.shape_cast %29 : vector<3x3x16x128xbf16> to vector<144x128xbf16>
    %c2 = arith.constant 2 : index
    %c0_14 = arith.constant 0 : index
    %c0_15 = arith.constant 0 : index
    %31 = vector.load %arg4[%c2, %c0_14, %c0_15] : memref<16x128x128xbf16, #tpu.memory_space<vmem>>, vector<1x128x128xbf16>
    %32 = vector.shape_cast %31 : vector<1x128x128xbf16> to vector<128x128xbf16>
    %cst_16 = arith.constant dense<0.000000e+00> : vector<144x128xf32>
    %33 = tpu.matmul %30, %32, %cst_16 {dimension_numbers = #tpu.dot_dimension_numbers<[1], [0], [0], [1], [0, 0, 1, 1], [], []>} : vector<144x128xbf16>, vector<128x128xbf16>, vector<144x128xf32> -> vector<144x128xf32>
    %34 = arith.addf %28, %33 : vector<144x128xf32>
    %35 = vector.extract_strided_slice %13 {offsets = [0, 1, 0, 0], sizes = [3, 3, 16, 128], strides = [1, 1, 1, 1]} : vector<4x4x16x128xbf16> to vector<3x3x16x128xbf16>
    %36 = vector.shape_cast %35 : vector<3x3x16x128xbf16> to vector<144x128xbf16>
    %c3 = arith.constant 3 : index
    %c0_17 = arith.constant 0 : index
    %c0_18 = arith.constant 0 : index
    %37 = vector.load %arg4[%c3, %c0_17, %c0_18] : memref<16x128x128xbf16, #tpu.memory_space<vmem>>, vector<1x128x128xbf16>
    %38 = vector.shape_cast %37 : vector<1x128x128xbf16> to vector<128x128xbf16>
    %cst_19 = arith.constant dense<0.000000e+00> : vector<144x128xf32>
    %39 = tpu.matmul %36, %38, %cst_19 {dimension_numbers = #tpu.dot_dimension_numbers<[1], [0], [0], [1], [0, 0, 1, 1], [], []>} : vector<144x128xbf16>, vector<128x128xbf16>, vector<144x128xf32> -> vector<144x128xf32>
    %40 = arith.addf %34, %39 : vector<144x128xf32>
    %41 = vector.extract_strided_slice %15 {offsets = [0, 0, 0, 0], sizes = [3, 3, 16, 128], strides = [1, 1, 1, 1]} : vector<4x4x16x128xbf16> to vector<3x3x16x128xbf16>
    %42 = vector.shape_cast %41 : vector<3x3x16x128xbf16> to vector<144x128xbf16>
    %c4 = arith.constant 4 : index
    %c0_20 = arith.constant 0 : index
    %c0_21 = arith.constant 0 : index
    %43 = vector.load %arg4[%c4, %c0_20, %c0_21] : memref<16x128x128xbf16, #tpu.memory_space<vmem>>, vector<1x128x128xbf16>
    %44 = vector.shape_cast %43 : vector<1x128x128xbf16> to vector<128x128xbf16>
    %cst_22 = arith.constant dense<0.000000e+00> : vector<144x128xf32>
    %45 = tpu.matmul %42, %44, %cst_22 {dimension_numbers = #tpu.dot_dimension_numbers<[1], [0], [0], [1], [0, 0, 1, 1], [], []>} : vector<144x128xbf16>, vector<128x128xbf16>, vector<144x128xf32> -> vector<144x128xf32>
    %46 = arith.addf %40, %45 : vector<144x128xf32>
    %47 = vector.extract_strided_slice %17 {offsets = [0, 0, 0, 0], sizes = [3, 3, 16, 128], strides = [1, 1, 1, 1]} : vector<4x4x16x128xbf16> to vector<3x3x16x128xbf16>
    %48 = vector.shape_cast %47 : vector<3x3x16x128xbf16> to vector<144x128xbf16>
    %c5 = arith.constant 5 : index
    %c0_23 = arith.constant 0 : index
    %c0_24 = arith.constant 0 : index
    %49 = vector.load %arg4[%c5, %c0_23, %c0_24] : memref<16x128x128xbf16, #tpu.memory_space<vmem>>, vector<1x128x128xbf16>
    %50 = vector.shape_cast %49 : vector<1x128x128xbf16> to vector<128x128xbf16>
    %cst_25 = arith.constant dense<0.000000e+00> : vector<144x128xf32>
    %51 = tpu.matmul %48, %50, %cst_25 {dimension_numbers = #tpu.dot_dimension_numbers<[1], [0], [0], [1], [0, 0, 1, 1], [], []>} : vector<144x128xbf16>, vector<128x128xbf16>, vector<144x128xf32> -> vector<144x128xf32>
    %52 = arith.addf %46, %51 : vector<144x128xf32>
    %53 = vector.extract_strided_slice %15 {offsets = [0, 1, 0, 0], sizes = [3, 3, 16, 128], strides = [1, 1, 1, 1]} : vector<4x4x16x128xbf16> to vector<3x3x16x128xbf16>
    %54 = vector.shape_cast %53 : vector<3x3x16x128xbf16> to vector<144x128xbf16>
    %c6 = arith.constant 6 : index
    %c0_26 = arith.constant 0 : index
    %c0_27 = arith.constant 0 : index
    %55 = vector.load %arg4[%c6, %c0_26, %c0_27] : memref<16x128x128xbf16, #tpu.memory_space<vmem>>, vector<1x128x128xbf16>
    %56 = vector.shape_cast %55 : vector<1x128x128xbf16> to vector<128x128xbf16>
    %cst_28 = arith.constant dense<0.000000e+00> : vector<144x128xf32>
    %57 = tpu.matmul %54, %56, %cst_28 {dimension_numbers = #tpu.dot_dimension_numbers<[1], [0], [0], [1], [0, 0, 1, 1], [], []>} : vector<144x128xbf16>, vector<128x128xbf16>, vector<144x128xf32> -> vector<144x128xf32>
    %58 = arith.addf %52, %57 : vector<144x128xf32>
    %59 = vector.extract_strided_slice %17 {offsets = [0, 1, 0, 0], sizes = [3, 3, 16, 128], strides = [1, 1, 1, 1]} : vector<4x4x16x128xbf16> to vector<3x3x16x128xbf16>
    %60 = vector.shape_cast %59 : vector<3x3x16x128xbf16> to vector<144x128xbf16>
    %c7 = arith.constant 7 : index
    %c0_29 = arith.constant 0 : index
    %c0_30 = arith.constant 0 : index
    %61 = vector.load %arg4[%c7, %c0_29, %c0_30] : memref<16x128x128xbf16, #tpu.memory_space<vmem>>, vector<1x128x128xbf16>
    %62 = vector.shape_cast %61 : vector<1x128x128xbf16> to vector<128x128xbf16>
    %cst_31 = arith.constant dense<0.000000e+00> : vector<144x128xf32>
    %63 = tpu.matmul %60, %62, %cst_31 {dimension_numbers = #tpu.dot_dimension_numbers<[1], [0], [0], [1], [0, 0, 1, 1], [], []>} : vector<144x128xbf16>, vector<128x128xbf16>, vector<144x128xf32> -> vector<144x128xf32>
    %64 = arith.addf %58, %63 : vector<144x128xf32>
    %65 = vector.extract_strided_slice %11 {offsets = [1, 0, 0, 0], sizes = [3, 3, 16, 128], strides = [1, 1, 1, 1]} : vector<4x4x16x128xbf16> to vector<3x3x16x128xbf16>
    %66 = vector.shape_cast %65 : vector<3x3x16x128xbf16> to vector<144x128xbf16>
    %c8 = arith.constant 8 : index
    %c0_32 = arith.constant 0 : index
    %c0_33 = arith.constant 0 : index
    %67 = vector.load %arg4[%c8, %c0_32, %c0_33] : memref<16x128x128xbf16, #tpu.memory_space<vmem>>, vector<1x128x128xbf16>
    %68 = vector.shape_cast %67 : vector<1x128x128xbf16> to vector<128x128xbf16>
    %cst_34 = arith.constant dense<0.000000e+00> : vector<144x128xf32>
    %69 = tpu.matmul %66, %68, %cst_34 {dimension_numbers = #tpu.dot_dimension_numbers<[1], [0], [0], [1], [0, 0, 1, 1], [], []>} : vector<144x128xbf16>, vector<128x128xbf16>, vector<144x128xf32> -> vector<144x128xf32>
    %70 = arith.addf %64, %69 : vector<144x128xf32>
    %71 = vector.extract_strided_slice %13 {offsets = [1, 0, 0, 0], sizes = [3, 3, 16, 128], strides = [1, 1, 1, 1]} : vector<4x4x16x128xbf16> to vector<3x3x16x128xbf16>
    %72 = vector.shape_cast %71 : vector<3x3x16x128xbf16> to vector<144x128xbf16>
    %c9 = arith.constant 9 : index
    %c0_35 = arith.constant 0 : index
    %c0_36 = arith.constant 0 : index
    %73 = vector.load %arg4[%c9, %c0_35, %c0_36] : memref<16x128x128xbf16, #tpu.memory_space<vmem>>, vector<1x128x128xbf16>
    %74 = vector.shape_cast %73 : vector<1x128x128xbf16> to vector<128x128xbf16>
    %cst_37 = arith.constant dense<0.000000e+00> : vector<144x128xf32>
    %75 = tpu.matmul %72, %74, %cst_37 {dimension_numbers = #tpu.dot_dimension_numbers<[1], [0], [0], [1], [0, 0, 1, 1], [], []>} : vector<144x128xbf16>, vector<128x128xbf16>, vector<144x128xf32> -> vector<144x128xf32>
    %76 = arith.addf %70, %75 : vector<144x128xf32>
    %77 = vector.extract_strided_slice %11 {offsets = [1, 1, 0, 0], sizes = [3, 3, 16, 128], strides = [1, 1, 1, 1]} : vector<4x4x16x128xbf16> to vector<3x3x16x128xbf16>
    %78 = vector.shape_cast %77 : vector<3x3x16x128xbf16> to vector<144x128xbf16>
    %c10 = arith.constant 10 : index
    %c0_38 = arith.constant 0 : index
    %c0_39 = arith.constant 0 : index
    %79 = vector.load %arg4[%c10, %c0_38, %c0_39] : memref<16x128x128xbf16, #tpu.memory_space<vmem>>, vector<1x128x128xbf16>
    %80 = vector.shape_cast %79 : vector<1x128x128xbf16> to vector<128x128xbf16>
    %cst_40 = arith.constant dense<0.000000e+00> : vector<144x128xf32>
    %81 = tpu.matmul %78, %80, %cst_40 {dimension_numbers = #tpu.dot_dimension_numbers<[1], [0], [0], [1], [0, 0, 1, 1], [], []>} : vector<144x128xbf16>, vector<128x128xbf16>, vector<144x128xf32> -> vector<144x128xf32>
    %82 = arith.addf %76, %81 : vector<144x128xf32>
    %83 = vector.extract_strided_slice %13 {offsets = [1, 1, 0, 0], sizes = [3, 3, 16, 128], strides = [1, 1, 1, 1]} : vector<4x4x16x128xbf16> to vector<3x3x16x128xbf16>
    %84 = vector.shape_cast %83 : vector<3x3x16x128xbf16> to vector<144x128xbf16>
    %c11 = arith.constant 11 : index
    %c0_41 = arith.constant 0 : index
    %c0_42 = arith.constant 0 : index
    %85 = vector.load %arg4[%c11, %c0_41, %c0_42] : memref<16x128x128xbf16, #tpu.memory_space<vmem>>, vector<1x128x128xbf16>
    %86 = vector.shape_cast %85 : vector<1x128x128xbf16> to vector<128x128xbf16>
    %cst_43 = arith.constant dense<0.000000e+00> : vector<144x128xf32>
    %87 = tpu.matmul %84, %86, %cst_43 {dimension_numbers = #tpu.dot_dimension_numbers<[1], [0], [0], [1], [0, 0, 1, 1], [], []>} : vector<144x128xbf16>, vector<128x128xbf16>, vector<144x128xf32> -> vector<144x128xf32>
    %88 = arith.addf %82, %87 : vector<144x128xf32>
    %89 = vector.extract_strided_slice %15 {offsets = [1, 0, 0, 0], sizes = [3, 3, 16, 128], strides = [1, 1, 1, 1]} : vector<4x4x16x128xbf16> to vector<3x3x16x128xbf16>
    %90 = vector.shape_cast %89 : vector<3x3x16x128xbf16> to vector<144x128xbf16>
    %c12 = arith.constant 12 : index
    %c0_44 = arith.constant 0 : index
    %c0_45 = arith.constant 0 : index
    %91 = vector.load %arg4[%c12, %c0_44, %c0_45] : memref<16x128x128xbf16, #tpu.memory_space<vmem>>, vector<1x128x128xbf16>
    %92 = vector.shape_cast %91 : vector<1x128x128xbf16> to vector<128x128xbf16>
    %cst_46 = arith.constant dense<0.000000e+00> : vector<144x128xf32>
    %93 = tpu.matmul %90, %92, %cst_46 {dimension_numbers = #tpu.dot_dimension_numbers<[1], [0], [0], [1], [0, 0, 1, 1], [], []>} : vector<144x128xbf16>, vector<128x128xbf16>, vector<144x128xf32> -> vector<144x128xf32>
    %94 = arith.addf %88, %93 : vector<144x128xf32>
    %95 = vector.extract_strided_slice %17 {offsets = [1, 0, 0, 0], sizes = [3, 3, 16, 128], strides = [1, 1, 1, 1]} : vector<4x4x16x128xbf16> to vector<3x3x16x128xbf16>
    %96 = vector.shape_cast %95 : vector<3x3x16x128xbf16> to vector<144x128xbf16>
    %c13 = arith.constant 13 : index
    %c0_47 = arith.constant 0 : index
    %c0_48 = arith.constant 0 : index
    %97 = vector.load %arg4[%c13, %c0_47, %c0_48] : memref<16x128x128xbf16, #tpu.memory_space<vmem>>, vector<1x128x128xbf16>
    %98 = vector.shape_cast %97 : vector<1x128x128xbf16> to vector<128x128xbf16>
    %cst_49 = arith.constant dense<0.000000e+00> : vector<144x128xf32>
    %99 = tpu.matmul %96, %98, %cst_49 {dimension_numbers = #tpu.dot_dimension_numbers<[1], [0], [0], [1], [0, 0, 1, 1], [], []>} : vector<144x128xbf16>, vector<128x128xbf16>, vector<144x128xf32> -> vector<144x128xf32>
    %100 = arith.addf %94, %99 : vector<144x128xf32>
    %101 = vector.extract_strided_slice %15 {offsets = [1, 1, 0, 0], sizes = [3, 3, 16, 128], strides = [1, 1, 1, 1]} : vector<4x4x16x128xbf16> to vector<3x3x16x128xbf16>
    %102 = vector.shape_cast %101 : vector<3x3x16x128xbf16> to vector<144x128xbf16>
    %c14 = arith.constant 14 : index
    %c0_50 = arith.constant 0 : index
    %c0_51 = arith.constant 0 : index
    %103 = vector.load %arg4[%c14, %c0_50, %c0_51] : memref<16x128x128xbf16, #tpu.memory_space<vmem>>, vector<1x128x128xbf16>
    %104 = vector.shape_cast %103 : vector<1x128x128xbf16> to vector<128x128xbf16>
    %cst_52 = arith.constant dense<0.000000e+00> : vector<144x128xf32>
    %105 = tpu.matmul %102, %104, %cst_52 {dimension_numbers = #tpu.dot_dimension_numbers<[1], [0], [0], [1], [0, 0, 1, 1], [], []>} : vector<144x128xbf16>, vector<128x128xbf16>, vector<144x128xf32> -> vector<144x128xf32>
    %106 = arith.addf %100, %105 : vector<144x128xf32>
    %107 = vector.extract_strided_slice %17 {offsets = [1, 1, 0, 0], sizes = [3, 3, 16, 128], strides = [1, 1, 1, 1]} : vector<4x4x16x128xbf16> to vector<3x3x16x128xbf16>
    %108 = vector.shape_cast %107 : vector<3x3x16x128xbf16> to vector<144x128xbf16>
    %c15 = arith.constant 15 : index
    %c0_53 = arith.constant 0 : index
    %c0_54 = arith.constant 0 : index
    %109 = vector.load %arg4[%c15, %c0_53, %c0_54] : memref<16x128x128xbf16, #tpu.memory_space<vmem>>, vector<1x128x128xbf16>
    %110 = vector.shape_cast %109 : vector<1x128x128xbf16> to vector<128x128xbf16>
    %cst_55 = arith.constant dense<0.000000e+00> : vector<144x128xf32>
    %111 = tpu.matmul %108, %110, %cst_55 {dimension_numbers = #tpu.dot_dimension_numbers<[1], [0], [0], [1], [0, 0, 1, 1], [], []>} : vector<144x128xbf16>, vector<128x128xbf16>, vector<144x128xf32> -> vector<144x128xf32>
    %112 = arith.addf %106, %111 : vector<144x128xf32>
    %c0_56 = arith.constant 0 : index
    %c0_57 = arith.constant 0 : index
    %113 = vector.load %arg5[%c0_56, %c0_57] : memref<1x128xf32, #tpu.memory_space<vmem>>, vector<1x128xf32>
    %114 = vector.broadcast %113 : vector<1x128xf32> to vector<144x128xf32>
    %115 = arith.addf %112, %114 : vector<144x128xf32>
    %cst_58 = arith.constant 0.000000e+00 : f32
    %116 = vector.broadcast %cst_58 : f32 to vector<144x128xf32>
    %117 = arith.maximumf %115, %116 : vector<144x128xf32>
    %118 = arith.truncf %117 : vector<144x128xf32> to vector<144x128xbf16>
    %119 = vector.shape_cast %118 : vector<144x128xbf16> to vector<3x3x16x128xbf16>
    %120 = vector.extract_strided_slice %119 {offsets = [0, 0, 0, 0], sizes = [1, 1, 16, 128], strides = [1, 1, 1, 1]} : vector<3x3x16x128xbf16> to vector<1x1x16x128xbf16>
    %121 = vector.shape_cast %120 : vector<1x1x16x128xbf16> to vector<16x128xbf16>
    %c0_59 = arith.constant 0 : index
    %c0_60 = arith.constant 0 : index
    %c0_61 = arith.constant 0 : index
    %122 = vector.load %arg6[%c0_59, %c0_60, %c0_61] : memref<9x128x128xbf16, #tpu.memory_space<vmem>>, vector<1x128x128xbf16>
    %123 = vector.shape_cast %122 : vector<1x128x128xbf16> to vector<128x128xbf16>
    %cst_62 = arith.constant dense<0.000000e+00> : vector<16x128xf32>
    %124 = tpu.matmul %121, %123, %cst_62 {dimension_numbers = #tpu.dot_dimension_numbers<[1], [0], [0], [1], [0, 0, 1, 1], [], []>} : vector<16x128xbf16>, vector<128x128xbf16>, vector<16x128xf32> -> vector<16x128xf32>
    %125 = vector.extract_strided_slice %119 {offsets = [0, 1, 0, 0], sizes = [1, 1, 16, 128], strides = [1, 1, 1, 1]} : vector<3x3x16x128xbf16> to vector<1x1x16x128xbf16>
    %126 = vector.shape_cast %125 : vector<1x1x16x128xbf16> to vector<16x128xbf16>
    %c1_63 = arith.constant 1 : index
    %c0_64 = arith.constant 0 : index
    %c0_65 = arith.constant 0 : index
    %127 = vector.load %arg6[%c1_63, %c0_64, %c0_65] : memref<9x128x128xbf16, #tpu.memory_space<vmem>>, vector<1x128x128xbf16>
    %128 = vector.shape_cast %127 : vector<1x128x128xbf16> to vector<128x128xbf16>
    %cst_66 = arith.constant dense<0.000000e+00> : vector<16x128xf32>
    %129 = tpu.matmul %126, %128, %cst_66 {dimension_numbers = #tpu.dot_dimension_numbers<[1], [0], [0], [1], [0, 0, 1, 1], [], []>} : vector<16x128xbf16>, vector<128x128xbf16>, vector<16x128xf32> -> vector<16x128xf32>
    %130 = arith.addf %124, %129 : vector<16x128xf32>
    %131 = vector.extract_strided_slice %119 {offsets = [0, 2, 0, 0], sizes = [1, 1, 16, 128], strides = [1, 1, 1, 1]} : vector<3x3x16x128xbf16> to vector<1x1x16x128xbf16>
    %132 = vector.shape_cast %131 : vector<1x1x16x128xbf16> to vector<16x128xbf16>
    %c2_67 = arith.constant 2 : index
    %c0_68 = arith.constant 0 : index
    %c0_69 = arith.constant 0 : index
    %133 = vector.load %arg6[%c2_67, %c0_68, %c0_69] : memref<9x128x128xbf16, #tpu.memory_space<vmem>>, vector<1x128x128xbf16>
    %134 = vector.shape_cast %133 : vector<1x128x128xbf16> to vector<128x128xbf16>
    %cst_70 = arith.constant dense<0.000000e+00> : vector<16x128xf32>
    %135 = tpu.matmul %132, %134, %cst_70 {dimension_numbers = #tpu.dot_dimension_numbers<[1], [0], [0], [1], [0, 0, 1, 1], [], []>} : vector<16x128xbf16>, vector<128x128xbf16>, vector<16x128xf32> -> vector<16x128xf32>
    %136 = arith.addf %130, %135 : vector<16x128xf32>
    %137 = vector.extract_strided_slice %119 {offsets = [1, 0, 0, 0], sizes = [1, 1, 16, 128], strides = [1, 1, 1, 1]} : vector<3x3x16x128xbf16> to vector<1x1x16x128xbf16>
    %138 = vector.shape_cast %137 : vector<1x1x16x128xbf16> to vector<16x128xbf16>
    %c3_71 = arith.constant 3 : index
    %c0_72 = arith.constant 0 : index
    %c0_73 = arith.constant 0 : index
    %139 = vector.load %arg6[%c3_71, %c0_72, %c0_73] : memref<9x128x128xbf16, #tpu.memory_space<vmem>>, vector<1x128x128xbf16>
    %140 = vector.shape_cast %139 : vector<1x128x128xbf16> to vector<128x128xbf16>
    %cst_74 = arith.constant dense<0.000000e+00> : vector<16x128xf32>
    %141 = tpu.matmul %138, %140, %cst_74 {dimension_numbers = #tpu.dot_dimension_numbers<[1], [0], [0], [1], [0, 0, 1, 1], [], []>} : vector<16x128xbf16>, vector<128x128xbf16>, vector<16x128xf32> -> vector<16x128xf32>
    %142 = arith.addf %136, %141 : vector<16x128xf32>
    %143 = vector.extract_strided_slice %119 {offsets = [1, 1, 0, 0], sizes = [1, 1, 16, 128], strides = [1, 1, 1, 1]} : vector<3x3x16x128xbf16> to vector<1x1x16x128xbf16>
    %144 = vector.shape_cast %143 : vector<1x1x16x128xbf16> to vector<16x128xbf16>
    %c4_75 = arith.constant 4 : index
    %c0_76 = arith.constant 0 : index
    %c0_77 = arith.constant 0 : index
    %145 = vector.load %arg6[%c4_75, %c0_76, %c0_77] : memref<9x128x128xbf16, #tpu.memory_space<vmem>>, vector<1x128x128xbf16>
    %146 = vector.shape_cast %145 : vector<1x128x128xbf16> to vector<128x128xbf16>
    %cst_78 = arith.constant dense<0.000000e+00> : vector<16x128xf32>
    %147 = tpu.matmul %144, %146, %cst_78 {dimension_numbers = #tpu.dot_dimension_numbers<[1], [0], [0], [1], [0, 0, 1, 1], [], []>} : vector<16x128xbf16>, vector<128x128xbf16>, vector<16x128xf32> -> vector<16x128xf32>
    %148 = arith.addf %142, %147 : vector<16x128xf32>
    %149 = vector.extract_strided_slice %119 {offsets = [1, 2, 0, 0], sizes = [1, 1, 16, 128], strides = [1, 1, 1, 1]} : vector<3x3x16x128xbf16> to vector<1x1x16x128xbf16>
    %150 = vector.shape_cast %149 : vector<1x1x16x128xbf16> to vector<16x128xbf16>
    %c5_79 = arith.constant 5 : index
    %c0_80 = arith.constant 0 : index
    %c0_81 = arith.constant 0 : index
    %151 = vector.load %arg6[%c5_79, %c0_80, %c0_81] : memref<9x128x128xbf16, #tpu.memory_space<vmem>>, vector<1x128x128xbf16>
    %152 = vector.shape_cast %151 : vector<1x128x128xbf16> to vector<128x128xbf16>
    %cst_82 = arith.constant dense<0.000000e+00> : vector<16x128xf32>
    %153 = tpu.matmul %150, %152, %cst_82 {dimension_numbers = #tpu.dot_dimension_numbers<[1], [0], [0], [1], [0, 0, 1, 1], [], []>} : vector<16x128xbf16>, vector<128x128xbf16>, vector<16x128xf32> -> vector<16x128xf32>
    %154 = arith.addf %148, %153 : vector<16x128xf32>
    %155 = vector.extract_strided_slice %119 {offsets = [2, 0, 0, 0], sizes = [1, 1, 16, 128], strides = [1, 1, 1, 1]} : vector<3x3x16x128xbf16> to vector<1x1x16x128xbf16>
    %156 = vector.shape_cast %155 : vector<1x1x16x128xbf16> to vector<16x128xbf16>
    %c6_83 = arith.constant 6 : index
    %c0_84 = arith.constant 0 : index
    %c0_85 = arith.constant 0 : index
    %157 = vector.load %arg6[%c6_83, %c0_84, %c0_85] : memref<9x128x128xbf16, #tpu.memory_space<vmem>>, vector<1x128x128xbf16>
    %158 = vector.shape_cast %157 : vector<1x128x128xbf16> to vector<128x128xbf16>
    %cst_86 = arith.constant dense<0.000000e+00> : vector<16x128xf32>
    %159 = tpu.matmul %156, %158, %cst_86 {dimension_numbers = #tpu.dot_dimension_numbers<[1], [0], [0], [1], [0, 0, 1, 1], [], []>} : vector<16x128xbf16>, vector<128x128xbf16>, vector<16x128xf32> -> vector<16x128xf32>
    %160 = arith.addf %154, %159 : vector<16x128xf32>
    %161 = vector.extract_strided_slice %119 {offsets = [2, 1, 0, 0], sizes = [1, 1, 16, 128], strides = [1, 1, 1, 1]} : vector<3x3x16x128xbf16> to vector<1x1x16x128xbf16>
    %162 = vector.shape_cast %161 : vector<1x1x16x128xbf16> to vector<16x128xbf16>
    %c7_87 = arith.constant 7 : index
    %c0_88 = arith.constant 0 : index
    %c0_89 = arith.constant 0 : index
    %163 = vector.load %arg6[%c7_87, %c0_88, %c0_89] : memref<9x128x128xbf16, #tpu.memory_space<vmem>>, vector<1x128x128xbf16>
    %164 = vector.shape_cast %163 : vector<1x128x128xbf16> to vector<128x128xbf16>
    %cst_90 = arith.constant dense<0.000000e+00> : vector<16x128xf32>
    %165 = tpu.matmul %162, %164, %cst_90 {dimension_numbers = #tpu.dot_dimension_numbers<[1], [0], [0], [1], [0, 0, 1, 1], [], []>} : vector<16x128xbf16>, vector<128x128xbf16>, vector<16x128xf32> -> vector<16x128xf32>
    %166 = arith.addf %160, %165 : vector<16x128xf32>
    %167 = vector.extract_strided_slice %119 {offsets = [2, 2, 0, 0], sizes = [1, 1, 16, 128], strides = [1, 1, 1, 1]} : vector<3x3x16x128xbf16> to vector<1x1x16x128xbf16>
    %168 = vector.shape_cast %167 : vector<1x1x16x128xbf16> to vector<16x128xbf16>
    %c8_91 = arith.constant 8 : index
    %c0_92 = arith.constant 0 : index
    %c0_93 = arith.constant 0 : index
    %169 = vector.load %arg6[%c8_91, %c0_92, %c0_93] : memref<9x128x128xbf16, #tpu.memory_space<vmem>>, vector<1x128x128xbf16>
    %170 = vector.shape_cast %169 : vector<1x128x128xbf16> to vector<128x128xbf16>
    %cst_94 = arith.constant dense<0.000000e+00> : vector<16x128xf32>
    %171 = tpu.matmul %168, %170, %cst_94 {dimension_numbers = #tpu.dot_dimension_numbers<[1], [0], [0], [1], [0, 0, 1, 1], [], []>} : vector<16x128xbf16>, vector<128x128xbf16>, vector<16x128xf32> -> vector<16x128xf32>
    %172 = arith.addf %166, %171 : vector<16x128xf32>
    %c0_95 = arith.constant 0 : index
    %c0_96 = arith.constant 0 : index
    %173 = vector.load %arg7[%c0_95, %c0_96] : memref<1x128xf32, #tpu.memory_space<vmem>>, vector<1x128xf32>
    %174 = vector.broadcast %173 : vector<1x128xf32> to vector<16x128xf32>
    %175 = arith.addf %172, %174 : vector<16x128xf32>
    %cst_97 = arith.constant 0.000000e+00 : f32
    %176 = vector.broadcast %cst_97 : f32 to vector<16x128xf32>
    %177 = arith.maximumf %175, %176 : vector<16x128xf32>
    %178 = arith.truncf %177 : vector<16x128xf32> to vector<16x128xbf16>
    %c0_98 = arith.constant 0 : index
    %c0_99 = arith.constant 0 : index
    %c0_100 = arith.constant 0 : index
    %179 = vector.load %arg8[%c0_98, %c0_99, %c0_100] : memref<1x128x512xbf16, #tpu.memory_space<vmem>>, vector<1x128x512xbf16>
    %180 = vector.shape_cast %179 : vector<1x128x512xbf16> to vector<128x512xbf16>
    %cst_101 = arith.constant dense<0.000000e+00> : vector<16x512xf32>
    %181 = tpu.matmul %178, %180, %cst_101 {dimension_numbers = #tpu.dot_dimension_numbers<[1], [0], [0], [1], [0, 0, 1, 1], [], []>} : vector<16x128xbf16>, vector<128x512xbf16>, vector<16x512xf32> -> vector<16x512xf32>
    %c0_102 = arith.constant 0 : index
    %c0_103 = arith.constant 0 : index
    %182 = vector.load %arg9[%c0_102, %c0_103] : memref<1x512xf32, #tpu.memory_space<vmem>>, vector<1x512xf32>
    %183 = vector.broadcast %182 : vector<1x512xf32> to vector<16x512xf32>
    %184 = arith.addf %181, %183 : vector<16x512xf32>
    %cst_104 = arith.constant 0.000000e+00 : f32
    %185 = vector.broadcast %cst_104 : f32 to vector<16x512xf32>
    %186 = arith.maximumf %184, %185 : vector<16x512xf32>
    %187 = arith.truncf %186 : vector<16x512xf32> to vector<16x512xbf16>
    %c0_105 = arith.constant 0 : index
    %c0_106 = arith.constant 0 : index
    %188 = vector.load %arg10[%c0_105, %c0_106] : memref<512x128xbf16, #tpu.memory_space<vmem>>, vector<512x128xbf16>
    %cst_107 = arith.constant dense<0.000000e+00> : vector<16x128xf32>
    %189 = tpu.matmul %187, %188, %cst_107 {dimension_numbers = #tpu.dot_dimension_numbers<[1], [0], [0], [1], [0, 0, 1, 1], [], []>} : vector<16x512xbf16>, vector<512x128xbf16>, vector<16x128xf32> -> vector<16x128xf32>
    %c0_108 = arith.constant 0 : index
    %c0_109 = arith.constant 0 : index
    %190 = vector.load %arg11[%c0_108, %c0_109] : memref<1x128xf32, #tpu.memory_space<vmem>>, vector<1x128xf32>
    %191 = vector.broadcast %190 : vector<1x128xf32> to vector<16x128xf32>
    %192 = arith.addf %189, %191 : vector<16x128xf32>
    %c0_110 = arith.constant 0 : index
    %c0_111 = arith.constant 0 : index
    %193 = vector.load %arg12[%c0_110, %c0_111] : memref<16x128xf32, #tpu.memory_space<vmem>>, vector<16x128xf32>
    tpu.vector_store %arg12[%c0_110, %c0_111], %192 {strides = array<i32>} : memref<16x128xf32, #tpu.memory_space<vmem>>, vector<16x128xf32>,
    return
  }
  func.func @transform_0(%arg0: i32) -> (i32, i32, i32) {
    %c0_i32 = arith.constant 0 : i32
    %c0_i32_0 = arith.constant 0 : i32
    %c0_i32_1 = arith.constant 0 : i32
    return %c0_i32, %arg0, %c0_i32_0 : i32, i32, i32
  }
  func.func @transform_1(%arg0: i32) -> (i32, i32) {
    %c0_i32 = arith.constant 0 : i32
    %c0_i32_0 = arith.constant 0 : i32
    %c0_i32_1 = arith.constant 0 : i32
    return %c0_i32, %c0_i32_0 : i32, i32
  }
  func.func @transform_2(%arg0: i32) -> (i32, i32) {
    %c0_i32 = arith.constant 0 : i32
    %c0_i32_0 = arith.constant 0 : i32
    %c0_i32_1 = arith.constant 0 : i32
    return %c0_i32, %c0_i32_0 : i32, i32
  }
  func.func @transform_3(%arg0: i32) -> (i32, i32, i32) {
    %c0_i32 = arith.constant 0 : i32
    %c0_i32_0 = arith.constant 0 : i32
    %c0_i32_1 = arith.constant 0 : i32
    %c0_i32_2 = arith.constant 0 : i32
    return %c0_i32, %c0_i32_0, %c0_i32_1 : i32, i32, i32
  }
  func.func @transform_4(%arg0: i32) -> (i32, i32) {
    %c0_i32 = arith.constant 0 : i32
    %c0_i32_0 = arith.constant 0 : i32
    %c0_i32_1 = arith.constant 0 : i32
    return %c0_i32, %c0_i32_0 : i32, i32
  }
  func.func @transform_5(%arg0: i32) -> (i32, i32, i32) {
    %c0_i32 = arith.constant 0 : i32
    %c0_i32_0 = arith.constant 0 : i32
    %c0_i32_1 = arith.constant 0 : i32
    %c0_i32_2 = arith.constant 0 : i32
    return %c0_i32, %c0_i32_0, %c0_i32_1 : i32, i32, i32
  }
  func.func @transform_6(%arg0: i32) -> (i32, i32) {
    %c0_i32 = arith.constant 0 : i32
    %c0_i32_0 = arith.constant 0 : i32
    %c0_i32_1 = arith.constant 0 : i32
    return %c0_i32, %c0_i32_0 : i32, i32
  }
  func.func @transform_7(%arg0: i32) -> (i32, i32, i32) {
    %c0_i32 = arith.constant 0 : i32
    %c0_i32_0 = arith.constant 0 : i32
    %c0_i32_1 = arith.constant 0 : i32
    %c0_i32_2 = arith.constant 0 : i32
    return %c0_i32, %c0_i32_0, %c0_i32_1 : i32, i32, i32
  }
  func.func @transform_8(%arg0: i32) -> (i32, i32) {
    %c0_i32 = arith.constant 0 : i32
    %c0_i32_0 = arith.constant 0 : i32
    %c0_i32_1 = arith.constant 0 : i32
    return %c0_i32, %c0_i32_0 : i32, i32
  }
  func.func @transform_9(%arg0: i32) -> (i32, i32) {
    %c0_i32 = arith.constant 0 : i32
    %c0_i32_0 = arith.constant 0 : i32
    %c0_i32_1 = arith.constant 0 : i32
    return %c0_i32, %c0_i32_0 : i32, i32
  }
  func.func @transform_10(%arg0: i32) -> (i32, i32) {
    %c0_i32 = arith.constant 0 : i32
    %c0_i32_0 = arith.constant 0 : i32
    %c0_i32_1 = arith.constant 0 : i32
    return %c0_i32, %c0_i32_0 : i32, i32
  }
  func.func @transform_11(%arg0: i32) -> (i32, i32) {
    %c0_i32 = arith.constant 0 : i32
    %c0_i32_0 = arith.constant 0 : i32
    return %arg0, %c0_i32 : i32, i32
  }
}

module attributes {stable_mosaic.version = 11 : i64} {
  func.func @_dqn_fused_kernel(%arg0: i32, %arg1: memref<64x16x256xbf16, #tpu.memory_space<vmem>>, %arg2: memref<256x128xbf16, #tpu.memory_space<vmem>>, %arg3: memref<1x128xf32, #tpu.memory_space<vmem>>, %arg4: memref<16x128x128xbf16, #tpu.memory_space<vmem>>, %arg5: memref<1x128xf32, #tpu.memory_space<vmem>>, %arg6: memref<9x128x128xbf16, #tpu.memory_space<vmem>>, %arg7: memref<1x128xf32, #tpu.memory_space<vmem>>, %arg8: memref<1x128x512xbf16, #tpu.memory_space<vmem>>, %arg9: memref<1x512xf32, #tpu.memory_space<vmem>>, %arg10: memref<512x128xbf16, #tpu.memory_space<vmem>>, %arg11: memref<1x128xf32, #tpu.memory_space<vmem>>, %arg12: memref<16x128xf32, #tpu.memory_space<vmem>>) attributes {dimension_semantics = [#tpu.dimension_semantics<parallel>], iteration_bounds = array<i64: 1>, scalar_prefetch = 0 : i64, scratch_operands = 0 : i64, tpu.core_type = #tpu.core_type<tc>, window_params = [{transform_indices = @transform_0, window_bounds = array<i64: 64, 16, 256>}, {pipeline_mode = #tpu.pipeline_mode<synchronous>, transform_indices = @transform_1, window_bounds = array<i64: 256, 128>}, {pipeline_mode = #tpu.pipeline_mode<synchronous>, transform_indices = @transform_2, window_bounds = array<i64: 1, 128>}, {pipeline_mode = #tpu.pipeline_mode<synchronous>, transform_indices = @transform_3, window_bounds = array<i64: 16, 128, 128>}, {pipeline_mode = #tpu.pipeline_mode<synchronous>, transform_indices = @transform_4, window_bounds = array<i64: 1, 128>}, {pipeline_mode = #tpu.pipeline_mode<synchronous>, transform_indices = @transform_5, window_bounds = array<i64: 9, 128, 128>}, {pipeline_mode = #tpu.pipeline_mode<synchronous>, transform_indices = @transform_6, window_bounds = array<i64: 1, 128>}, {pipeline_mode = #tpu.pipeline_mode<synchronous>, transform_indices = @transform_7, window_bounds = array<i64: 1, 128, 512>}, {pipeline_mode = #tpu.pipeline_mode<synchronous>, transform_indices = @transform_8, window_bounds = array<i64: 1, 512>}, {pipeline_mode = #tpu.pipeline_mode<synchronous>, transform_indices = @transform_9, window_bounds = array<i64: 512, 128>}, {pipeline_mode = #tpu.pipeline_mode<synchronous>, transform_indices = @transform_10, window_bounds = array<i64: 1, 128>}, {transform_indices = @transform_11, window_bounds = array<i64: 16, 128>}]} {
    %c0 = arith.constant 0 : index
    %c0_0 = arith.constant 0 : index
    %c0_1 = arith.constant 0 : index
    %0 = vector.load %arg1[%c0, %c0_0, %c0_1] : memref<64x16x256xbf16, #tpu.memory_space<vmem>>, vector<64x16x256xbf16>
    %1 = vector.shape_cast %0 : vector<64x16x256xbf16> to vector<1024x256xbf16>
    %c0_2 = arith.constant 0 : index
    %c0_3 = arith.constant 0 : index
    %2 = vector.load %arg2[%c0_2, %c0_3] : memref<256x128xbf16, #tpu.memory_space<vmem>>, vector<256x128xbf16>
    %cst = arith.constant dense<0.000000e+00> : vector<1024x128xf32>
    %3 = tpu.matmul %1, %2, %cst {dimension_numbers = #tpu.dot_dimension_numbers<[1], [0], [0], [1], [0, 0, 1, 1], [], []>} : vector<1024x256xbf16>, vector<256x128xbf16>, vector<1024x128xf32> -> vector<1024x128xf32>
    %c0_4 = arith.constant 0 : index
    %c0_5 = arith.constant 0 : index
    %4 = vector.load %arg3[%c0_4, %c0_5] : memref<1x128xf32, #tpu.memory_space<vmem>>, vector<1x128xf32>
    %5 = vector.broadcast %4 : vector<1x128xf32> to vector<1024x128xf32>
    %6 = arith.addf %3, %5 : vector<1024x128xf32>
    %cst_6 = arith.constant 0.000000e+00 : f32
    %7 = vector.broadcast %cst_6 : f32 to vector<1024x128xf32>
    %8 = arith.maximumf %6, %7 : vector<1024x128xf32>
    %9 = arith.truncf %8 : vector<1024x128xf32> to vector<1024x128xbf16>
    %10 = vector.extract_strided_slice %9 {offsets = [0, 0], sizes = [256, 128], strides = [1, 1]} : vector<1024x128xbf16> to vector<256x128xbf16>
    %11 = vector.shape_cast %10 : vector<256x128xbf16> to vector<4x4x16x128xbf16>
    %12 = vector.extract_strided_slice %9 {offsets = [256, 0], sizes = [256, 128], strides = [1, 1]} : vector<1024x128xbf16> to vector<256x128xbf16>
    %13 = vector.shape_cast %12 : vector<256x128xbf16> to vector<4x4x16x128xbf16>
    %14 = vector.extract_strided_slice %9 {offsets = [512, 0], sizes = [256, 128], strides = [1, 1]} : vector<1024x128xbf16> to vector<256x128xbf16>
    %15 = vector.shape_cast %14 : vector<256x128xbf16> to vector<4x4x16x128xbf16>
    %16 = vector.extract_strided_slice %9 {offsets = [768, 0], sizes = [256, 128], strides = [1, 1]} : vector<1024x128xbf16> to vector<256x128xbf16>
    %17 = vector.shape_cast %16 : vector<256x128xbf16> to vector<4x4x16x128xbf16>
    %18 = vector.extract_strided_slice %11 {offsets = [0, 0, 0, 0], sizes = [3, 3, 16, 128], strides = [1, 1, 1, 1]} : vector<4x4x16x128xbf16> to vector<3x3x16x128xbf16>
    %19 = vector.shape_cast %18 : vector<3x3x16x128xbf16> to vector<144x128xbf16>
    %c0_7 = arith.constant 0 : index
    %c0_8 = arith.constant 0 : index
    %c0_9 = arith.constant 0 : index
    %20 = vector.load %arg4[%c0_7, %c0_8, %c0_9] : memref<16x128x128xbf16, #tpu.memory_space<vmem>>, vector<1x128x128xbf16>
    %21 = vector.shape_cast %20 : vector<1x128x128xbf16> to vector<128x128xbf16>
    %cst_10 = arith.constant dense<0.000000e+00> : vector<144x128xf32>
    %22 = tpu.matmul %19, %21, %cst_10 {dimension_numbers = #tpu.dot_dimension_numbers<[1], [0], [0], [1], [0, 0, 1, 1], [], []>} : vector<144x128xbf16>, vector<128x128xbf16>, vector<144x128xf32> -> vector<144x128xf32>
    %23 = vector.extract_strided_slice %13 {offsets = [0, 0, 0, 0], sizes = [3, 3, 16, 128], strides = [1, 1, 1, 1]} : vector<4x4x16x128xbf16> to vector<3x3x16x128xbf16>
    %24 = vector.shape_cast %23 : vector<3x3x16x128xbf16> to vector<144x128xbf16>
    %c1 = arith.constant 1 : index
    %c0_11 = arith.constant 0 : index
    %c0_12 = arith.constant 0 : index
    %25 = vector.load %arg4[%c1, %c0_11, %c0_12] : memref<16x128x128xbf16, #tpu.memory_space<vmem>>, vector<1x128x128xbf16>
    %26 = vector.shape_cast %25 : vector<1x128x128xbf16> to vector<128x128xbf16>
    %cst_13 = arith.constant dense<0.000000e+00> : vector<144x128xf32>
    %27 = tpu.matmul %24, %26, %cst_13 {dimension_numbers = #tpu.dot_dimension_numbers<[1], [0], [0], [1], [0, 0, 1, 1], [], []>} : vector<144x128xbf16>, vector<128x128xbf16>, vector<144x128xf32> -> vector<144x128xf32>
    %28 = arith.addf %22, %27 : vector<144x128xf32>
    %29 = vector.extract_strided_slice %11 {offsets = [0, 1, 0, 0], sizes = [3, 3, 16, 128], strides = [1, 1, 1, 1]} : vector<4x4x16x128xbf16> to vector<3x3x16x128xbf16>
    %30 = vector.shape_cast %29 : vector<3x3x16x128xbf16> to vector<144x128xbf16>
    %c2 = arith.constant 2 : index
    %c0_14 = arith.constant 0 : index
    %c0_15 = arith.constant 0 : index
    %31 = vector.load %arg4[%c2, %c0_14, %c0_15] : memref<16x128x128xbf16, #tpu.memory_space<vmem>>, vector<1x128x128xbf16>
    %32 = vector.shape_cast %31 : vector<1x128x128xbf16> to vector<128x128xbf16>
    %cst_16 = arith.constant dense<0.000000e+00> : vector<144x128xf32>
    %33 = tpu.matmul %30, %32, %cst_16 {dimension_numbers = #tpu.dot_dimension_numbers<[1], [0], [0], [1], [0, 0, 1, 1], [], []>} : vector<144x128xbf16>, vector<128x128xbf16>, vector<144x128xf32> -> vector<144x128xf32>
    %34 = arith.addf %28, %33 : vector<144x128xf32>
    %35 = vector.extract_strided_slice %13 {offsets = [0, 1, 0, 0], sizes = [3, 3, 16, 128], strides = [1, 1, 1, 1]} : vector<4x4x16x128xbf16> to vector<3x3x16x128xbf16>
    %36 = vector.shape_cast %35 : vector<3x3x16x128xbf16> to vector<144x128xbf16>
    %c3 = arith.constant 3 : index
    %c0_17 = arith.constant 0 : index
    %c0_18 = arith.constant 0 : index
    %37 = vector.load %arg4[%c3, %c0_17, %c0_18] : memref<16x128x128xbf16, #tpu.memory_space<vmem>>, vector<1x128x128xbf16>
    %38 = vector.shape_cast %37 : vector<1x128x128xbf16> to vector<128x128xbf16>
    %cst_19 = arith.constant dense<0.000000e+00> : vector<144x128xf32>
    %39 = tpu.matmul %36, %38, %cst_19 {dimension_numbers = #tpu.dot_dimension_numbers<[1], [0], [0], [1], [0, 0, 1, 1], [], []>} : vector<144x128xbf16>, vector<128x128xbf16>, vector<144x128xf32> -> vector<144x128xf32>
    %40 = arith.addf %34, %39 : vector<144x128xf32>
    %41 = vector.extract_strided_slice %15 {offsets = [0, 0, 0, 0], sizes = [3, 3, 16, 128], strides = [1, 1, 1, 1]} : vector<4x4x16x128xbf16> to vector<3x3x16x128xbf16>
    %42 = vector.shape_cast %41 : vector<3x3x16x128xbf16> to vector<144x128xbf16>
    %c4 = arith.constant 4 : index
    %c0_20 = arith.constant 0 : index
    %c0_21 = arith.constant 0 : index
    %43 = vector.load %arg4[%c4, %c0_20, %c0_21] : memref<16x128x128xbf16, #tpu.memory_space<vmem>>, vector<1x128x128xbf16>
    %44 = vector.shape_cast %43 : vector<1x128x128xbf16> to vector<128x128xbf16>
    %cst_22 = arith.constant dense<0.000000e+00> : vector<144x128xf32>
    %45 = tpu.matmul %42, %44, %cst_22 {dimension_numbers = #tpu.dot_dimension_numbers<[1], [0], [0], [1], [0, 0, 1, 1], [], []>} : vector<144x128xbf16>, vector<128x128xbf16>, vector<144x128xf32> -> vector<144x128xf32>
    %46 = arith.addf %40, %45 : vector<144x128xf32>
    %47 = vector.extract_strided_slice %17 {offsets = [0, 0, 0, 0], sizes = [3, 3, 16, 128], strides = [1, 1, 1, 1]} : vector<4x4x16x128xbf16> to vector<3x3x16x128xbf16>
    %48 = vector.shape_cast %47 : vector<3x3x16x128xbf16> to vector<144x128xbf16>
    %c5 = arith.constant 5 : index
    %c0_23 = arith.constant 0 : index
    %c0_24 = arith.constant 0 : index
    %49 = vector.load %arg4[%c5, %c0_23, %c0_24] : memref<16x128x128xbf16, #tpu.memory_space<vmem>>, vector<1x128x128xbf16>
    %50 = vector.shape_cast %49 : vector<1x128x128xbf16> to vector<128x128xbf16>
    %cst_25 = arith.constant dense<0.000000e+00> : vector<144x128xf32>
    %51 = tpu.matmul %48, %50, %cst_25 {dimension_numbers = #tpu.dot_dimension_numbers<[1], [0], [0], [1], [0, 0, 1, 1], [], []>} : vector<144x128xbf16>, vector<128x128xbf16>, vector<144x128xf32> -> vector<144x128xf32>
    %52 = arith.addf %46, %51 : vector<144x128xf32>
    %53 = vector.extract_strided_slice %15 {offsets = [0, 1, 0, 0], sizes = [3, 3, 16, 128], strides = [1, 1, 1, 1]} : vector<4x4x16x128xbf16> to vector<3x3x16x128xbf16>
    %54 = vector.shape_cast %53 : vector<3x3x16x128xbf16> to vector<144x128xbf16>
    %c6 = arith.constant 6 : index
    %c0_26 = arith.constant 0 : index
    %c0_27 = arith.constant 0 : index
    %55 = vector.load %arg4[%c6, %c0_26, %c0_27] : memref<16x128x128xbf16, #tpu.memory_space<vmem>>, vector<1x128x128xbf16>
    %56 = vector.shape_cast %55 : vector<1x128x128xbf16> to vector<128x128xbf16>
    %cst_28 = arith.constant dense<0.000000e+00> : vector<144x128xf32>
    %57 = tpu.matmul %54, %56, %cst_28 {dimension_numbers = #tpu.dot_dimension_numbers<[1], [0], [0], [1], [0, 0, 1, 1], [], []>} : vector<144x128xbf16>, vector<128x128xbf16>, vector<144x128xf32> -> vector<144x128xf32>
    %58 = arith.addf %52, %57 : vector<144x128xf32>
    %59 = vector.extract_strided_slice %17 {offsets = [0, 1, 0, 0], sizes = [3, 3, 16, 128], strides = [1, 1, 1, 1]} : vector<4x4x16x128xbf16> to vector<3x3x16x128xbf16>
    %60 = vector.shape_cast %59 : vector<3x3x16x128xbf16> to vector<144x128xbf16>
    %c7 = arith.constant 7 : index
    %c0_29 = arith.constant 0 : index
    %c0_30 = arith.constant 0 : index
    %61 = vector.load %arg4[%c7, %c0_29, %c0_30] : memref<16x128x128xbf16, #tpu.memory_space<vmem>>, vector<1x128x128xbf16>
    %62 = vector.shape_cast %61 : vector<1x128x128xbf16> to vector<128x128xbf16>
    %cst_31 = arith.constant dense<0.000000e+00> : vector<144x128xf32>
    %63 = tpu.matmul %60, %62, %cst_31 {dimension_numbers = #tpu.dot_dimension_numbers<[1], [0], [0], [1], [0, 0, 1, 1], [], []>} : vector<144x128xbf16>, vector<128x128xbf16>, vector<144x128xf32> -> vector<144x128xf32>
    %64 = arith.addf %58, %63 : vector<144x128xf32>
    %65 = vector.extract_strided_slice %11 {offsets = [1, 0, 0, 0], sizes = [3, 3, 16, 128], strides = [1, 1, 1, 1]} : vector<4x4x16x128xbf16> to vector<3x3x16x128xbf16>
    %66 = vector.shape_cast %65 : vector<3x3x16x128xbf16> to vector<144x128xbf16>
    %c8 = arith.constant 8 : index
    %c0_32 = arith.constant 0 : index
    %c0_33 = arith.constant 0 : index
    %67 = vector.load %arg4[%c8, %c0_32, %c0_33] : memref<16x128x128xbf16, #tpu.memory_space<vmem>>, vector<1x128x128xbf16>
    %68 = vector.shape_cast %67 : vector<1x128x128xbf16> to vector<128x128xbf16>
    %cst_34 = arith.constant dense<0.000000e+00> : vector<144x128xf32>
    %69 = tpu.matmul %66, %68, %cst_34 {dimension_numbers = #tpu.dot_dimension_numbers<[1], [0], [0], [1], [0, 0, 1, 1], [], []>} : vector<144x128xbf16>, vector<128x128xbf16>, vector<144x128xf32> -> vector<144x128xf32>
    %70 = arith.addf %64, %69 : vector<144x128xf32>
    %71 = vector.extract_strided_slice %13 {offsets = [1, 0, 0, 0], sizes = [3, 3, 16, 128], strides = [1, 1, 1, 1]} : vector<4x4x16x128xbf16> to vector<3x3x16x128xbf16>
    %72 = vector.shape_cast %71 : vector<3x3x16x128xbf16> to vector<144x128xbf16>
    %c9 = arith.constant 9 : index
    %c0_35 = arith.constant 0 : index
    %c0_36 = arith.constant 0 : index
    %73 = vector.load %arg4[%c9, %c0_35, %c0_36] : memref<16x128x128xbf16, #tpu.memory_space<vmem>>, vector<1x128x128xbf16>
    %74 = vector.shape_cast %73 : vector<1x128x128xbf16> to vector<128x128xbf16>
    %cst_37 = arith.constant dense<0.000000e+00> : vector<144x128xf32>
    %75 = tpu.matmul %72, %74, %cst_37 {dimension_numbers = #tpu.dot_dimension_numbers<[1], [0], [0], [1], [0, 0, 1, 1], [], []>} : vector<144x128xbf16>, vector<128x128xbf16>, vector<144x128xf32> -> vector<144x128xf32>
    %76 = arith.addf %70, %75 : vector<144x128xf32>
    %77 = vector.extract_strided_slice %11 {offsets = [1, 1, 0, 0], sizes = [3, 3, 16, 128], strides = [1, 1, 1, 1]} : vector<4x4x16x128xbf16> to vector<3x3x16x128xbf16>
    %78 = vector.shape_cast %77 : vector<3x3x16x128xbf16> to vector<144x128xbf16>
    %c10 = arith.constant 10 : index
    %c0_38 = arith.constant 0 : index
    %c0_39 = arith.constant 0 : index
    %79 = vector.load %arg4[%c10, %c0_38, %c0_39] : memref<16x128x128xbf16, #tpu.memory_space<vmem>>, vector<1x128x128xbf16>
    %80 = vector.shape_cast %79 : vector<1x128x128xbf16> to vector<128x128xbf16>
    %cst_40 = arith.constant dense<0.000000e+00> : vector<144x128xf32>
    %81 = tpu.matmul %78, %80, %cst_40 {dimension_numbers = #tpu.dot_dimension_numbers<[1], [0], [0], [1], [0, 0, 1, 1], [], []>} : vector<144x128xbf16>, vector<128x128xbf16>, vector<144x128xf32> -> vector<144x128xf32>
    %82 = arith.addf %76, %81 : vector<144x128xf32>
    %83 = vector.extract_strided_slice %13 {offsets = [1, 1, 0, 0], sizes = [3, 3, 16, 128], strides = [1, 1, 1, 1]} : vector<4x4x16x128xbf16> to vector<3x3x16x128xbf16>
    %84 = vector.shape_cast %83 : vector<3x3x16x128xbf16> to vector<144x128xbf16>
    %c11 = arith.constant 11 : index
    %c0_41 = arith.constant 0 : index
    %c0_42 = arith.constant 0 : index
    %85 = vector.load %arg4[%c11, %c0_41, %c0_42] : memref<16x128x128xbf16, #tpu.memory_space<vmem>>, vector<1x128x128xbf16>
    %86 = vector.shape_cast %85 : vector<1x128x128xbf16> to vector<128x128xbf16>
    %cst_43 = arith.constant dense<0.000000e+00> : vector<144x128xf32>
    %87 = tpu.matmul %84, %86, %cst_43 {dimension_numbers = #tpu.dot_dimension_numbers<[1], [0], [0], [1], [0, 0, 1, 1], [], []>} : vector<144x128xbf16>, vector<128x128xbf16>, vector<144x128xf32> -> vector<144x128xf32>
    %88 = arith.addf %82, %87 : vector<144x128xf32>
    %89 = vector.extract_strided_slice %15 {offsets = [1, 0, 0, 0], sizes = [3, 3, 16, 128], strides = [1, 1, 1, 1]} : vector<4x4x16x128xbf16> to vector<3x3x16x128xbf16>
    %90 = vector.shape_cast %89 : vector<3x3x16x128xbf16> to vector<144x128xbf16>
    %c12 = arith.constant 12 : index
    %c0_44 = arith.constant 0 : index
    %c0_45 = arith.constant 0 : index
    %91 = vector.load %arg4[%c12, %c0_44, %c0_45] : memref<16x128x128xbf16, #tpu.memory_space<vmem>>, vector<1x128x128xbf16>
    %92 = vector.shape_cast %91 : vector<1x128x128xbf16> to vector<128x128xbf16>
    %cst_46 = arith.constant dense<0.000000e+00> : vector<144x128xf32>
    %93 = tpu.matmul %90, %92, %cst_46 {dimension_numbers = #tpu.dot_dimension_numbers<[1], [0], [0], [1], [0, 0, 1, 1], [], []>} : vector<144x128xbf16>, vector<128x128xbf16>, vector<144x128xf32> -> vector<144x128xf32>
    %94 = arith.addf %88, %93 : vector<144x128xf32>
    %95 = vector.extract_strided_slice %17 {offsets = [1, 0, 0, 0], sizes = [3, 3, 16, 128], strides = [1, 1, 1, 1]} : vector<4x4x16x128xbf16> to vector<3x3x16x128xbf16>
    %96 = vector.shape_cast %95 : vector<3x3x16x128xbf16> to vector<144x128xbf16>
    %c13 = arith.constant 13 : index
    %c0_47 = arith.constant 0 : index
    %c0_48 = arith.constant 0 : index
    %97 = vector.load %arg4[%c13, %c0_47, %c0_48] : memref<16x128x128xbf16, #tpu.memory_space<vmem>>, vector<1x128x128xbf16>
    %98 = vector.shape_cast %97 : vector<1x128x128xbf16> to vector<128x128xbf16>
    %cst_49 = arith.constant dense<0.000000e+00> : vector<144x128xf32>
    %99 = tpu.matmul %96, %98, %cst_49 {dimension_numbers = #tpu.dot_dimension_numbers<[1], [0], [0], [1], [0, 0, 1, 1], [], []>} : vector<144x128xbf16>, vector<128x128xbf16>, vector<144x128xf32> -> vector<144x128xf32>
    %100 = arith.addf %94, %99 : vector<144x128xf32>
    %101 = vector.extract_strided_slice %15 {offsets = [1, 1, 0, 0], sizes = [3, 3, 16, 128], strides = [1, 1, 1, 1]} : vector<4x4x16x128xbf16> to vector<3x3x16x128xbf16>
    %102 = vector.shape_cast %101 : vector<3x3x16x128xbf16> to vector<144x128xbf16>
    %c14 = arith.constant 14 : index
    %c0_50 = arith.constant 0 : index
    %c0_51 = arith.constant 0 : index
    %103 = vector.load %arg4[%c14, %c0_50, %c0_51] : memref<16x128x128xbf16, #tpu.memory_space<vmem>>, vector<1x128x128xbf16>
    %104 = vector.shape_cast %103 : vector<1x128x128xbf16> to vector<128x128xbf16>
    %cst_52 = arith.constant dense<0.000000e+00> : vector<144x128xf32>
    %105 = tpu.matmul %102, %104, %cst_52 {dimension_numbers = #tpu.dot_dimension_numbers<[1], [0], [0], [1], [0, 0, 1, 1], [], []>} : vector<144x128xbf16>, vector<128x128xbf16>, vector<144x128xf32> -> vector<144x128xf32>
    %106 = arith.addf %100, %105 : vector<144x128xf32>
    %107 = vector.extract_strided_slice %17 {offsets = [1, 1, 0, 0], sizes = [3, 3, 16, 128], strides = [1, 1, 1, 1]} : vector<4x4x16x128xbf16> to vector<3x3x16x128xbf16>
    %108 = vector.shape_cast %107 : vector<3x3x16x128xbf16> to vector<144x128xbf16>
    %c15 = arith.constant 15 : index
    %c0_53 = arith.constant 0 : index
    %c0_54 = arith.constant 0 : index
    %109 = vector.load %arg4[%c15, %c0_53, %c0_54] : memref<16x128x128xbf16, #tpu.memory_space<vmem>>, vector<1x128x128xbf16>
    %110 = vector.shape_cast %109 : vector<1x128x128xbf16> to vector<128x128xbf16>
    %cst_55 = arith.constant dense<0.000000e+00> : vector<144x128xf32>
    %111 = tpu.matmul %108, %110, %cst_55 {dimension_numbers = #tpu.dot_dimension_numbers<[1], [0], [0], [1], [0, 0, 1, 1], [], []>} : vector<144x128xbf16>, vector<128x128xbf16>, vector<144x128xf32> -> vector<144x128xf32>
    %112 = arith.addf %106, %111 : vector<144x128xf32>
    %c0_56 = arith.constant 0 : index
    %c0_57 = arith.constant 0 : index
    %113 = vector.load %arg5[%c0_56, %c0_57] : memref<1x128xf32, #tpu.memory_space<vmem>>, vector<1x128xf32>
    %114 = vector.broadcast %113 : vector<1x128xf32> to vector<144x128xf32>
    %115 = arith.addf %112, %114 : vector<144x128xf32>
    %cst_58 = arith.constant 0.000000e+00 : f32
    %116 = vector.broadcast %cst_58 : f32 to vector<144x128xf32>
    %117 = arith.maximumf %115, %116 : vector<144x128xf32>
    %118 = arith.truncf %117 : vector<144x128xf32> to vector<144x128xbf16>
    %119 = vector.shape_cast %118 : vector<144x128xbf16> to vector<3x3x16x128xbf16>
    %120 = vector.extract_strided_slice %119 {offsets = [0, 0, 0, 0], sizes = [1, 1, 16, 128], strides = [1, 1, 1, 1]} : vector<3x3x16x128xbf16> to vector<1x1x16x128xbf16>
    %121 = vector.shape_cast %120 : vector<1x1x16x128xbf16> to vector<16x128xbf16>
    %c0_59 = arith.constant 0 : index
    %c0_60 = arith.constant 0 : index
    %c0_61 = arith.constant 0 : index
    %122 = vector.load %arg6[%c0_59, %c0_60, %c0_61] : memref<9x128x128xbf16, #tpu.memory_space<vmem>>, vector<1x128x128xbf16>
    %123 = vector.shape_cast %122 : vector<1x128x128xbf16> to vector<128x128xbf16>
    %cst_62 = arith.constant dense<0.000000e+00> : vector<16x128xf32>
    %124 = tpu.matmul %121, %123, %cst_62 {dimension_numbers = #tpu.dot_dimension_numbers<[1], [0], [0], [1], [0, 0, 1, 1], [], []>} : vector<16x128xbf16>, vector<128x128xbf16>, vector<16x128xf32> -> vector<16x128xf32>
    %125 = vector.extract_strided_slice %119 {offsets = [0, 1, 0, 0], sizes = [1, 1, 16, 128], strides = [1, 1, 1, 1]} : vector<3x3x16x128xbf16> to vector<1x1x16x128xbf16>
    %126 = vector.shape_cast %125 : vector<1x1x16x128xbf16> to vector<16x128xbf16>
    %c1_63 = arith.constant 1 : index
    %c0_64 = arith.constant 0 : index
    %c0_65 = arith.constant 0 : index
    %127 = vector.load %arg6[%c1_63, %c0_64, %c0_65] : memref<9x128x128xbf16, #tpu.memory_space<vmem>>, vector<1x128x128xbf16>
    %128 = vector.shape_cast %127 : vector<1x128x128xbf16> to vector<128x128xbf16>
    %cst_66 = arith.constant dense<0.000000e+00> : vector<16x128xf32>
    %129 = tpu.matmul %126, %128, %cst_66 {dimension_numbers = #tpu.dot_dimension_numbers<[1], [0], [0], [1], [0, 0, 1, 1], [], []>} : vector<16x128xbf16>, vector<128x128xbf16>, vector<16x128xf32> -> vector<16x128xf32>
    %130 = arith.addf %124, %129 : vector<16x128xf32>
    %131 = vector.extract_strided_slice %119 {offsets = [0, 2, 0, 0], sizes = [1, 1, 16, 128], strides = [1, 1, 1, 1]} : vector<3x3x16x128xbf16> to vector<1x1x16x128xbf16>
    %132 = vector.shape_cast %131 : vector<1x1x16x128xbf16> to vector<16x128xbf16>
    %c2_67 = arith.constant 2 : index
    %c0_68 = arith.constant 0 : index
    %c0_69 = arith.constant 0 : index
    %133 = vector.load %arg6[%c2_67, %c0_68, %c0_69] : memref<9x128x128xbf16, #tpu.memory_space<vmem>>, vector<1x128x128xbf16>
    %134 = vector.shape_cast %133 : vector<1x128x128xbf16> to vector<128x128xbf16>
    %cst_70 = arith.constant dense<0.000000e+00> : vector<16x128xf32>
    %135 = tpu.matmul %132, %134, %cst_70 {dimension_numbers = #tpu.dot_dimension_numbers<[1], [0], [0], [1], [0, 0, 1, 1], [], []>} : vector<16x128xbf16>, vector<128x128xbf16>, vector<16x128xf32> -> vector<16x128xf32>
    %136 = arith.addf %130, %135 : vector<16x128xf32>
    %137 = vector.extract_strided_slice %119 {offsets = [1, 0, 0, 0], sizes = [1, 1, 16, 128], strides = [1, 1, 1, 1]} : vector<3x3x16x128xbf16> to vector<1x1x16x128xbf16>
    %138 = vector.shape_cast %137 : vector<1x1x16x128xbf16> to vector<16x128xbf16>
    %c3_71 = arith.constant 3 : index
    %c0_72 = arith.constant 0 : index
    %c0_73 = arith.constant 0 : index
    %139 = vector.load %arg6[%c3_71, %c0_72, %c0_73] : memref<9x128x128xbf16, #tpu.memory_space<vmem>>, vector<1x128x128xbf16>
    %140 = vector.shape_cast %139 : vector<1x128x128xbf16> to vector<128x128xbf16>
    %cst_74 = arith.constant dense<0.000000e+00> : vector<16x128xf32>
    %141 = tpu.matmul %138, %140, %cst_74 {dimension_numbers = #tpu.dot_dimension_numbers<[1], [0], [0], [1], [0, 0, 1, 1], [], []>} : vector<16x128xbf16>, vector<128x128xbf16>, vector<16x128xf32> -> vector<16x128xf32>
    %142 = arith.addf %136, %141 : vector<16x128xf32>
    %143 = vector.extract_strided_slice %119 {offsets = [1, 1, 0, 0], sizes = [1, 1, 16, 128], strides = [1, 1, 1, 1]} : vector<3x3x16x128xbf16> to vector<1x1x16x128xbf16>
    %144 = vector.shape_cast %143 : vector<1x1x16x128xbf16> to vector<16x128xbf16>
    %c4_75 = arith.constant 4 : index
    %c0_76 = arith.constant 0 : index
    %c0_77 = arith.constant 0 : index
    %145 = vector.load %arg6[%c4_75, %c0_76, %c0_77] : memref<9x128x128xbf16, #tpu.memory_space<vmem>>, vector<1x128x128xbf16>
    %146 = vector.shape_cast %145 : vector<1x128x128xbf16> to vector<128x128xbf16>
    %cst_78 = arith.constant dense<0.000000e+00> : vector<16x128xf32>
    %147 = tpu.matmul %144, %146, %cst_78 {dimension_numbers = #tpu.dot_dimension_numbers<[1], [0], [0], [1], [0, 0, 1, 1], [], []>} : vector<16x128xbf16>, vector<128x128xbf16>, vector<16x128xf32> -> vector<16x128xf32>
    %148 = arith.addf %142, %147 : vector<16x128xf32>
    %149 = vector.extract_strided_slice %119 {offsets = [1, 2, 0, 0], sizes = [1, 1, 16, 128], strides = [1, 1, 1, 1]} : vector<3x3x16x128xbf16> to vector<1x1x16x128xbf16>
    %150 = vector.shape_cast %149 : vector<1x1x16x128xbf16> to vector<16x128xbf16>
    %c5_79 = arith.constant 5 : index
    %c0_80 = arith.constant 0 : index
    %c0_81 = arith.constant 0 : index
    %151 = vector.load %arg6[%c5_79, %c0_80, %c0_81] : memref<9x128x128xbf16, #tpu.memory_space<vmem>>, vector<1x128x128xbf16>
    %152 = vector.shape_cast %151 : vector<1x128x128xbf16> to vector<128x128xbf16>
    %cst_82 = arith.constant dense<0.000000e+00> : vector<16x128xf32>
    %153 = tpu.matmul %150, %152, %cst_82 {dimension_numbers = #tpu.dot_dimension_numbers<[1], [0], [0], [1], [0, 0, 1, 1], [], []>} : vector<16x128xbf16>, vector<128x128xbf16>, vector<16x128xf32> -> vector<16x128xf32>
    %154 = arith.addf %148, %153 : vector<16x128xf32>
    %155 = vector.extract_strided_slice %119 {offsets = [2, 0, 0, 0], sizes = [1, 1, 16, 128], strides = [1, 1, 1, 1]} : vector<3x3x16x128xbf16> to vector<1x1x16x128xbf16>
    %156 = vector.shape_cast %155 : vector<1x1x16x128xbf16> to vector<16x128xbf16>
    %c6_83 = arith.constant 6 : index
    %c0_84 = arith.constant 0 : index
    %c0_85 = arith.constant 0 : index
    %157 = vector.load %arg6[%c6_83, %c0_84, %c0_85] : memref<9x128x128xbf16, #tpu.memory_space<vmem>>, vector<1x128x128xbf16>
    %158 = vector.shape_cast %157 : vector<1x128x128xbf16> to vector<128x128xbf16>
    %cst_86 = arith.constant dense<0.000000e+00> : vector<16x128xf32>
    %159 = tpu.matmul %156, %158, %cst_86 {dimension_numbers = #tpu.dot_dimension_numbers<[1], [0], [0], [1], [0, 0, 1, 1], [], []>} : vector<16x128xbf16>, vector<128x128xbf16>, vector<16x128xf32> -> vector<16x128xf32>
    %160 = arith.addf %154, %159 : vector<16x128xf32>
    %161 = vector.extract_strided_slice %119 {offsets = [2, 1, 0, 0], sizes = [1, 1, 16, 128], strides = [1, 1, 1, 1]} : vector<3x3x16x128xbf16> to vector<1x1x16x128xbf16>
    %162 = vector.shape_cast %161 : vector<1x1x16x128xbf16> to vector<16x128xbf16>
    %c7_87 = arith.constant 7 : index
    %c0_88 = arith.constant 0 : index
    %c0_89 = arith.constant 0 : index
    %163 = vector.load %arg6[%c7_87, %c0_88, %c0_89] : memref<9x128x128xbf16, #tpu.memory_space<vmem>>, vector<1x128x128xbf16>
    %164 = vector.shape_cast %163 : vector<1x128x128xbf16> to vector<128x128xbf16>
    %cst_90 = arith.constant dense<0.000000e+00> : vector<16x128xf32>
    %165 = tpu.matmul %162, %164, %cst_90 {dimension_numbers = #tpu.dot_dimension_numbers<[1], [0], [0], [1], [0, 0, 1, 1], [], []>} : vector<16x128xbf16>, vector<128x128xbf16>, vector<16x128xf32> -> vector<16x128xf32>
    %166 = arith.addf %160, %165 : vector<16x128xf32>
    %167 = vector.extract_strided_slice %119 {offsets = [2, 2, 0, 0], sizes = [1, 1, 16, 128], strides = [1, 1, 1, 1]} : vector<3x3x16x128xbf16> to vector<1x1x16x128xbf16>
    %168 = vector.shape_cast %167 : vector<1x1x16x128xbf16> to vector<16x128xbf16>
    %c8_91 = arith.constant 8 : index
    %c0_92 = arith.constant 0 : index
    %c0_93 = arith.constant 0 : index
    %169 = vector.load %arg6[%c8_91, %c0_92, %c0_93] : memref<9x128x128xbf16, #tpu.memory_space<vmem>>, vector<1x128x128xbf16>
    %170 = vector.shape_cast %169 : vector<1x128x128xbf16> to vector<128x128xbf16>
    %cst_94 = arith.constant dense<0.000000e+00> : vector<16x128xf32>
    %171 = tpu.matmul %168, %170, %cst_94 {dimension_numbers = #tpu.dot_dimension_numbers<[1], [0], [0], [1], [0, 0, 1, 1], [], []>} : vector<16x128xbf16>, vector<128x128xbf16>, vector<16x128xf32> -> vector<16x128xf32>
    %172 = arith.addf %166, %171 : vector<16x128xf32>
    %c0_95 = arith.constant 0 : index
    %c0_96 = arith.constant 0 : index
    %173 = vector.load %arg7[%c0_95, %c0_96] : memref<1x128xf32, #tpu.memory_space<vmem>>, vector<1x128xf32>
    %174 = vector.broadcast %173 : vector<1x128xf32> to vector<16x128xf32>
    %175 = arith.addf %172, %174 : vector<16x128xf32>
    %cst_97 = arith.constant 0.000000e+00 : f32
    %176 = vector.broadcast %cst_97 : f32 to vector<16x128xf32>
    %177 = arith.maximumf %175, %176 : vector<16x128xf32>
    %178 = arith.truncf %177 : vector<16x128xf32> to vector<16x128xbf16>
    %c0_98 = arith.constant 0 : index
    %c0_99 = arith.constant 0 : index
    %c0_100 = arith.constant 0 : index
    %179 = vector.load %arg8[%c0_98, %c0_99, %c0_100] : memref<1x128x512xbf16, #tpu.memory_space<vmem>>, vector<1x128x512xbf16>
    %180 = vector.shape_cast %179 : vector<1x128x512xbf16> to vector<128x512xbf16>
    %cst_101 = arith.constant dense<0.000000e+00> : vector<16x512xf32>
    %181 = tpu.matmul %178, %180, %cst_101 {dimension_numbers = #tpu.dot_dimension_numbers<[1], [0], [0], [1], [0, 0, 1, 1], [], []>} : vector<16x128xbf16>, vector<128x512xbf16>, vector<16x512xf32> -> vector<16x512xf32>
    %c0_102 = arith.constant 0 : index
    %c0_103 = arith.constant 0 : index
    %182 = vector.load %arg9[%c0_102, %c0_103] : memref<1x512xf32, #tpu.memory_space<vmem>>, vector<1x512xf32>
    %183 = vector.broadcast %182 : vector<1x512xf32> to vector<16x512xf32>
    %184 = arith.addf %181, %183 : vector<16x512xf32>
    %cst_104 = arith.constant 0.000000e+00 : f32
    %185 = vector.broadcast %cst_104 : f32 to vector<16x512xf32>
    %186 = arith.maximumf %184, %185 : vector<16x512xf32>
    %187 = arith.truncf %186 : vector<16x512xf32> to vector<16x512xbf16>
    %c0_105 = arith.constant 0 : index
    %c0_106 = arith.constant 0 : index
    %188 = vector.load %arg10[%c0_105, %c0_106] : memref<512x128xbf16, #tpu.memory_space<vmem>>, vector<512x128xbf16>
    %cst_107 = arith.constant dense<0.000000e+00> : vector<16x128xf32>
    %189 = tpu.matmul %187, %188, %cst_107 {dimension_numbers = #tpu.dot_dimension_numbers<[1], [0], [0], [1], [0, 0, 1, 1], [], []>} : vector<16x512xbf16>, vector<512x128xbf16>, vector<16x128xf32> -> vector<16x128xf32>
    %c0_108 = arith.constant 0 : index
    %c0_109 = arith.constant 0 : index
    %190 = vector.load %arg11[%c0_108, %c0_109] : memref<1x128xf32, #tpu.memory_space<vmem>>, vector<1x128xf32>
    %191 = vector.broadcast %190 : vector<1x128xf32> to vector<16x128xf32>
    %192 = arith.addf %189, %191 : vector<16x128xf32>
    %c0_110 = arith.constant 0 : index
    %c0_111 = arith.constant 0 : index
    %193 = vector.load %arg12[%c0_110, %c0_111] : memref<16x128xf32, #tpu.memory_space<vmem>>, vector<16x128xf32>
    tpu.vector_store %arg12[%c0_110, %c0_111], %192 {strides = array<i32>} : memref<16x128xf32, #tpu.memory_space<vmem>>, vector<16x128xf32>,
    return
  }
  func.func @transform_0(%arg0: i32) -> (i32, i32, i32) {
    %c0_i32 = arith.constant 0 : i32
    %c0_i32_0 = arith.constant 0 : i32
    %c0_i32_1 = arith.constant 0 : i32
    return %c0_i32, %arg0, %c0_i32_0 : i32, i32, i32
  }
  func.func @transform_1(%arg0: i32) -> (i32, i32) {
    %c0_i32 = arith.constant 0 : i32
    %c0_i32_0 = arith.constant 0 : i32
    %c0_i32_1 = arith.constant 0 : i32
    return %c0_i32, %c0_i32_0 : i32, i32
  }
  func.func @transform_2(%arg0: i32) -> (i32, i32) {
    %c0_i32 = arith.constant 0 : i32
    %c0_i32_0 = arith.constant 0 : i32
    %c0_i32_1 = arith.constant 0 : i32
    return %c0_i32, %c0_i32_0 : i32, i32
  }
  func.func @transform_3(%arg0: i32) -> (i32, i32, i32) {
    %c0_i32 = arith.constant 0 : i32
    %c0_i32_0 = arith.constant 0 : i32
    %c0_i32_1 = arith.constant 0 : i32
    %c0_i32_2 = arith.constant 0 : i32
    return %c0_i32, %c0_i32_0, %c0_i32_1 : i32, i32, i32
  }
  func.func @transform_4(%arg0: i32) -> (i32, i32) {
    %c0_i32 = arith.constant 0 : i32
    %c0_i32_0 = arith.constant 0 : i32
    %c0_i32_1 = arith.constant 0 : i32
    return %c0_i32, %c0_i32_0 : i32, i32
  }
  func.func @transform_5(%arg0: i32) -> (i32, i32, i32) {
    %c0_i32 = arith.constant 0 : i32
    %c0_i32_0 = arith.constant 0 : i32
    %c0_i32_1 = arith.constant 0 : i32
    %c0_i32_2 = arith.constant 0 : i32
    return %c0_i32, %c0_i32_0, %c0_i32_1 : i32, i32, i32
  }
  func.func @transform_6(%arg0: i32) -> (i32, i32) {
    %c0_i32 = arith.constant 0 : i32
    %c0_i32_0 = arith.constant 0 : i32
    %c0_i32_1 = arith.constant 0 : i32
    return %c0_i32, %c0_i32_0 : i32, i32
  }
  func.func @transform_7(%arg0: i32) -> (i32, i32, i32) {
    %c0_i32 = arith.constant 0 : i32
    %c0_i32_0 = arith.constant 0 : i32
    %c0_i32_1 = arith.constant 0 : i32
    %c0_i32_2 = arith.constant 0 : i32
    return %c0_i32, %c0_i32_0, %c0_i32_1 : i32, i32, i32
  }
  func.func @transform_8(%arg0: i32) -> (i32, i32) {
    %c0_i32 = arith.constant 0 : i32
    %c0_i32_0 = arith.constant 0 : i32
    %c0_i32_1 = arith.constant 0 : i32
    return %c0_i32, %c0_i32_0 : i32, i32
  }
  func.func @transform_9(%arg0: i32) -> (i32, i32) {
    %c0_i32 = arith.constant 0 : i32
    %c0_i32_0 = arith.constant 0 : i32
    %c0_i32_1 = arith.constant 0 : i32
    return %c0_i32, %c0_i32_0 : i32, i32
  }
  func.func @transform_10(%arg0: i32) -> (i32, i32) {
    %c0_i32 = arith.constant 0 : i32
    %c0_i32_0 = arith.constant 0 : i32
    %c0_i32_1 = arith.constant 0 : i32
    return %c0_i32, %c0_i32_0 : i32, i32
  }
  func.func @transform_11(%arg0: i32) -> (i32, i32) {
    %c0_i32 = arith.constant 0 : i32
    %c0_i32_0 = arith.constant 0 : i32
    return %arg0, %c0_i32 : i32, i32
  }
}

</mosaic_0001>

<llo_original>
// kernel: _dqn_forward_impl.1
$region0: #{_dqn_forward_impl.1}
  #allocation0 [shape = 'u32[]', space=smem, size = 0x4, offset = 0x4, fixed_abs, tag = 'smem constant byte address 0x4 - core index']
  #allocation1 [shape = 'u32[72,128]{1,0:T(1,128)}', space=vmem, size = 0x9000, scoped, tag = 'internal scratch']
  %s0 = inlined_call_operand.vmem [shape: bf16[64,16,256], index: 0, kind: input, shape index: {}]
  %s1 = inlined_call_operand.vmem [shape: bf16[256,128], index: 1, kind: input, shape index: {}]
  %s2 = inlined_call_operand.vmem [shape: f32[1,128], index: 2, kind: input, shape index: {}]
  %s3 = inlined_call_operand.vmem [shape: bf16[16,128,128], index: 3, kind: input, shape index: {}]
  %s4 = inlined_call_operand.vmem [shape: f32[1,128], index: 4, kind: input, shape index: {}]
  %s5 = inlined_call_operand.vmem [shape: bf16[9,128,128], index: 5, kind: input, shape index: {}]
  %s6 = inlined_call_operand.vmem [shape: f32[1,128], index: 6, kind: input, shape index: {}]
  %s7 = inlined_call_operand.vmem [shape: bf16[1,128,512], index: 7, kind: input, shape index: {}]
  %s8 = inlined_call_operand.vmem [shape: f32[1,512], index: 8, kind: input, shape index: {}]
  %s9 = inlined_call_operand.vmem [shape: bf16[512,128], index: 9, kind: input, shape index: {}]
  %s10 = inlined_call_operand.vmem [shape: f32[1,128], index: 10, kind: input, shape index: {}]
  %s11 = inlined_call_operand.vmem [shape: f32[16,128], index: 11, kind: output, shape index: {}]
  %s12 = sld [smem:[#allocation0]]
  $region54: #{_dqn_forward_impl.1} parent=0
    _
  %s14 = ssub.s32 1, %s12
  %s15 = scalar_select 0, %s14, %s12
  // Predicated region
  $region2: #{_dqn_forward_impl.1} parent=0 // pred_check
    _
  $region3: #{_dqn_forward_impl.1} parent=0 // pred_check_branch
    %17 = sbr.rel (0) target = $region5
  $region4: #{_dqn_forward_impl.1} parent=0 // pred_region
    _
  $region5: #{_dqn_forward_impl.1} parent=0 // pred_fallthru
    _
  // Predicated region
  $region6: #{_dqn_forward_impl.1} parent=0 // pred_check
    _
  $region7: #{_dqn_forward_impl.1} parent=0 // pred_check_branch
    %19 = sbr.rel (0) target = $region9
  $region8: #{_dqn_forward_impl.1} parent=0 // pred_region
    _
  $region9: #{_dqn_forward_impl.1} parent=0 // pred_fallthru
    _
  // Predicated region
  $region10: #{_dqn_forward_impl.1} parent=0 // pred_check
    _
  $region11: #{_dqn_forward_impl.1} parent=0 // pred_check_branch
    %21 = sbr.rel (0) target = $region13
  $region12: #{_dqn_forward_impl.1} parent=0 // pred_region
    _
  $region13: #{_dqn_forward_impl.1} parent=0 // pred_fallthru
    _
  // Predicated region
  $region14: #{_dqn_forward_impl.1} parent=0 // pred_check
    _
  $region15: #{_dqn_forward_impl.1} parent=0 // pred_check_branch
    %23 = sbr.rel (0) target = $region17
  $region16: #{_dqn_forward_impl.1} parent=0 // pred_region
    _
  $region17: #{_dqn_forward_impl.1} parent=0 // pred_fallthru
    _
  // Predicated region
  $region18: #{_dqn_forward_impl.1} parent=0 // pred_check
    _
  $region19: #{_dqn_forward_impl.1} parent=0 // pred_check_branch
    %25 = sbr.rel (0) target = $region21
  $region20: #{_dqn_forward_impl.1} parent=0 // pred_region
    _
  $region21: #{_dqn_forward_impl.1} parent=0 // pred_fallthru
    _
  // Predicated region
  $region22: #{_dqn_forward_impl.1} parent=0 // pred_check
    _
  $region23: #{_dqn_forward_impl.1} parent=0 // pred_check_branch
    %27 = sbr.rel (0) target = $region25
  $region24: #{_dqn_forward_impl.1} parent=0 // pred_region
    _
  $region25: #{_dqn_forward_impl.1} parent=0 // pred_fallthru
    _
  // Predicated region
  $region26: #{_dqn_forward_impl.1} parent=0 // pred_check
    _
  $region27: #{_dqn_forward_impl.1} parent=0 // pred_check_branch
    %29 = sbr.rel (0) target = $region29
  $region28: #{_dqn_forward_impl.1} parent=0 // pred_region
    _
  $region29: #{_dqn_forward_impl.1} parent=0 // pred_fallthru
    _
  // Predicated region
  $region30: #{_dqn_forward_impl.1} parent=0 // pred_check
    _
  $region31: #{_dqn_forward_impl.1} parent=0 // pred_check_branch
    %31 = sbr.rel (0) target = $region33
  $region32: #{_dqn_forward_impl.1} parent=0 // pred_region
    _
  $region33: #{_dqn_forward_impl.1} parent=0 // pred_fallthru
    _
  // Predicated region
  $region34: #{_dqn_forward_impl.1} parent=0 // pred_check
    _
  $region35: #{_dqn_forward_impl.1} parent=0 // pred_check_branch
    %33 = sbr.rel (0) target = $region37
  $region36: #{_dqn_forward_impl.1} parent=0 // pred_region
    _
  $region37: #{_dqn_forward_impl.1} parent=0 // pred_fallthru
    _
  // Predicated region
  $region38: #{_dqn_forward_impl.1} parent=0 // pred_check
    _
  $region39: #{_dqn_forward_impl.1} parent=0 // pred_check_branch
    %35 = sbr.rel (0) target = $region41
  $region40: #{_dqn_forward_impl.1} parent=0 // pred_region
    _
  $region41: #{_dqn_forward_impl.1} parent=0 // pred_fallthru
    _
  // Predicated region
  $region42: #{_dqn_forward_impl.1} parent=0 // pred_check
    _
  $region43: #{_dqn_forward_impl.1} parent=0 // pred_check_branch
    %37 = sbr.rel (0) target = $region45
  $region44: #{_dqn_forward_impl.1} parent=0 // pred_region
    _
  $region45: #{_dqn_forward_impl.1} parent=0 // pred_fallthru
    _
  %v38 = vld [vmem:[%s0] sm:$0xff]
  %v39 = vld [vmem:[%s0 + $0x8] sm:$0xff]
  %v40 = vld [vmem:[%s0 + $0x10] sm:$0xff]
  %v41 = vld [vmem:[%s0 + $0x18] sm:$0xff]
  %v42 = vld [vmem:[%s0 + $0x20] sm:$0xff]
  %v43 = vld [vmem:[%s0 + $0x28] sm:$0xff]
  %v44 = vld [vmem:[%s0 + $0x30] sm:$0xff]
  %v45 = vld [vmem:[%s0 + $0x38] sm:$0xff]
  %v46 = vld [vmem:[%s0 + $0x40] sm:$0xff]
  %v47 = vld [vmem:[%s0 + $0x48] sm:$0xff]
  %v48 = vld [vmem:[%s0 + $0x50] sm:$0xff]
  %v49 = vld [vmem:[%s0 + $0x58] sm:$0xff]
  %v50 = vld [vmem:[%s0 + $0x60] sm:$0xff]
  %v51 = vld [vmem:[%s0 + $0x68] sm:$0xff]
  %v52 = vld [vmem:[%s0 + $0x70] sm:$0xff]
  %v53 = vld [vmem:[%s0 + $0x78] sm:$0xff]
  %v54 = vld [vmem:[%s0 + $0x80] sm:$0xff]
  %v55 = vld [vmem:[%s0 + $0x88] sm:$0xff]
  %v56 = vld [vmem:[%s0 + $0x90] sm:$0xff]
  %v57 = vld [vmem:[%s0 + $0x98] sm:$0xff]
  %v58 = vld [vmem:[%s0 + $0xa0] sm:$0xff]
  %v59 = vld [vmem:[%s0 + $0xa8] sm:$0xff]
  %v60 = vld [vmem:[%s0 + $0xb0] sm:$0xff]
  %v61 = vld [vmem:[%s0 + $0xb8] sm:$0xff]
  %v62 = vld [vmem:[%s0 + $0xc0] sm:$0xff]
  %v63 = vld [vmem:[%s0 + $0xc8] sm:$0xff]
  %v64 = vld [vmem:[%s0 + $0xd0] sm:$0xff]
  %v65 = vld [vmem:[%s0 + $0xd8] sm:$0xff]
  %v66 = vld [vmem:[%s0 + $0xe0] sm:$0xff]
  %v67 = vld [vmem:[%s0 + $0xe8] sm:$0xff]
  %v68 = vld [vmem:[%s0 + $0xf0] sm:$0xff]
  %v69 = vld [vmem:[%s0 + $0xf8] sm:$0xff]
  %v70 = vld [vmem:[%s0 + $0x100] sm:$0xff]
  %v71 = vld [vmem:[%s0 + $0x108] sm:$0xff]
  %v72 = vld [vmem:[%s0 + $0x110] sm:$0xff]
  %v73 = vld [vmem:[%s0 + $0x118] sm:$0xff]
  %v74 = vld [vmem:[%s0 + $0x120] sm:$0xff]
  %v75 = vld [vmem:[%s0 + $0x128] sm:$0xff]
  %v76 = vld [vmem:[%s0 + $0x130] sm:$0xff]
  %v77 = vld [vmem:[%s0 + $0x138] sm:$0xff]
  %v78 = vld [vmem:[%s0 + $0x140] sm:$0xff]
  %v79 = vld [vmem:[%s0 + $0x148] sm:$0xff]
  %v80 = vld [vmem:[%s0 + $0x150] sm:$0xff]
  %v81 = vld [vmem:[%s0 + $0x158] sm:$0xff]
  %v82 = vld [vmem:[%s0 + $0x160] sm:$0xff]
  %v83 = vld [vmem:[%s0 + $0x168] sm:$0xff]
  %v84 = vld [vmem:[%s0 + $0x170] sm:$0xff]
  %v85 = vld [vmem:[%s0 + $0x178] sm:$0xff]
  %v86 = vld [vmem:[%s0 + $0x180] sm:$0xff]
  %v87 = vld [vmem:[%s0 + $0x188] sm:$0xff]
  %v88 = vld [vmem:[%s0 + $0x190] sm:$0xff]
  %v89 = vld [vmem:[%s0 + $0x198] sm:$0xff]
  %v90 = vld [vmem:[%s0 + $0x1a0] sm:$0xff]
  %v91 = vld [vmem:[%s0 + $0x1a8] sm:$0xff]
  %v92 = vld [vmem:[%s0 + $0x1b0] sm:$0xff]
  %v93 = vld [vmem:[%s0 + $0x1b8] sm:$0xff]
  %v94 = vld [vmem:[%s0 + $0x1c0] sm:$0xff]
  %v95 = vld [vmem:[%s0 + $0x1c8] sm:$0xff]
  %v96 = vld [vmem:[%s0 + $0x1d0] sm:$0xff]
  %v97 = vld [vmem:[%s0 + $0x1d8] sm:$0xff]
  %v98 = vld [vmem:[%s0 + $0x1e0] sm:$0xff]
  %v99 = vld [vmem:[%s0 + $0x1e8] sm:$0xff]
  %v100 = vld [vmem:[%s0 + $0x1f0] sm:$0xff]
  %v101 = vld [vmem:[%s0 + $0x1f8] sm:$0xff]
  %v102 = vld [vmem:[%s0 + $0x200] sm:$0xff]
  %v103 = vld [vmem:[%s0 + $0x208] sm:$0xff]
  %v104 = vld [vmem:[%s0 + $0x210] sm:$0xff]
  %v105 = vld [vmem:[%s0 + $0x218] sm:$0xff]
  %v106 = vld [vmem:[%s0 + $0x220] sm:$0xff]
  %v107 = vld [vmem:[%s0 + $0x228] sm:$0xff]
  %v108 = vld [vmem:[%s0 + $0x230] sm:$0xff]
  %v109 = vld [vmem:[%s0 + $0x238] sm:$0xff]
  %v110 = vld [vmem:[%s0 + $0x240] sm:$0xff]
  %v111 = vld [vmem:[%s0 + $0x248] sm:$0xff]
  %v112 = vld [vmem:[%s0 + $0x250] sm:$0xff]
  %v113 = vld [vmem:[%s0 + $0x258] sm:$0xff]
  %v114 = vld [vmem:[%s0 + $0x260] sm:$0xff]
  %v115 = vld [vmem:[%s0 + $0x268] sm:$0xff]
  %v116 = vld [vmem:[%s0 + $0x270] sm:$0xff]
  %v117 = vld [vmem:[%s0 + $0x278] sm:$0xff]
  %v118 = vld [vmem:[%s0 + $0x280] sm:$0xff]
  %v119 = vld [vmem:[%s0 + $0x288] sm:$0xff]
  %v120 = vld [vmem:[%s0 + $0x290] sm:$0xff]
  %v121 = vld [vmem:[%s0 + $0x298] sm:$0xff]
  %v122 = vld [vmem:[%s0 + $0x2a0] sm:$0xff]
  %v123 = vld [vmem:[%s0 + $0x2a8] sm:$0xff]
  %v124 = vld [vmem:[%s0 + $0x2b0] sm:$0xff]
  %v125 = vld [vmem:[%s0 + $0x2b8] sm:$0xff]
  %v126 = vld [vmem:[%s0 + $0x2c0] sm:$0xff]
  %v127 = vld [vmem:[%s0 + $0x2c8] sm:$0xff]
  %v128 = vld [vmem:[%s0 + $0x2d0] sm:$0xff]
  %v129 = vld [vmem:[%s0 + $0x2d8] sm:$0xff]
  %v130 = vld [vmem:[%s0 + $0x2e0] sm:$0xff]
  %v131 = vld [vmem:[%s0 + $0x2e8] sm:$0xff]
  %v132 = vld [vmem:[%s0 + $0x2f0] sm:$0xff]
  %v133 = vld [vmem:[%s0 + $0x2f8] sm:$0xff]
  %v134 = vld [vmem:[%s0 + $0x300] sm:$0xff]
  %v135 = vld [vmem:[%s0 + $0x308] sm:$0xff]
  %v136 = vld [vmem:[%s0 + $0x310] sm:$0xff]
  %v137 = vld [vmem:[%s0 + $0x318] sm:$0xff]
  %v138 = vld [vmem:[%s0 + $0x320] sm:$0xff]
  %v139 = vld [vmem:[%s0 + $0x328] sm:$0xff]
  %v140 = vld [vmem:[%s0 + $0x330] sm:$0xff]
  %v141 = vld [vmem:[%s0 + $0x338] sm:$0xff]
  %v142 = vld [vmem:[%s0 + $0x340] sm:$0xff]
  %v143 = vld [vmem:[%s0 + $0x348] sm:$0xff]
  %v144 = vld [vmem:[%s0 + $0x350] sm:$0xff]
  %v145 = vld [vmem:[%s0 + $0x358] sm:$0xff]
  %v146 = vld [vmem:[%s0 + $0x360] sm:$0xff]
  %v147 = vld [vmem:[%s0 + $0x368] sm:$0xff]
  %v148 = vld [vmem:[%s0 + $0x370] sm:$0xff]
  %v149 = vld [vmem:[%s0 + $0x378] sm:$0xff]
  %v150 = vld [vmem:[%s0 + $0x380] sm:$0xff]
  %v151 = vld [vmem:[%s0 + $0x388] sm:$0xff]
  %v152 = vld [vmem:[%s0 + $0x390] sm:$0xff]
  %v153 = vld [vmem:[%s0 + $0x398] sm:$0xff]
  %v154 = vld [vmem:[%s0 + $0x3a0] sm:$0xff]
  %v155 = vld [vmem:[%s0 + $0x3a8] sm:$0xff]
  %v156 = vld [vmem:[%s0 + $0x3b0] sm:$0xff]
  %v157 = vld [vmem:[%s0 + $0x3b8] sm:$0xff]
  %v158 = vld [vmem:[%s0 + $0x3c0] sm:$0xff]
  %v159 = vld [vmem:[%s0 + $0x3c8] sm:$0xff]
  %v160 = vld [vmem:[%s0 + $0x3d0] sm:$0xff]
  %v161 = vld [vmem:[%s0 + $0x3d8] sm:$0xff]
  %v162 = vld [vmem:[%s0 + $0x3e0] sm:$0xff]
  %v163 = vld [vmem:[%s0 + $0x3e8] sm:$0xff]
  %v164 = vld [vmem:[%s0 + $0x3f0] sm:$0xff]
  %v165 = vld [vmem:[%s0 + $0x3f8] sm:$0xff]
  %v166 = vld [vmem:[%s1] sm:$0xf]
  %v167 = vld [vmem:[%s1 + $0x4] sm:$0xf]
  %v168 = vld [vmem:[%s1 + $0x8] sm:$0xf]
  %v169 = vld [vmem:[%s1 + $0xc] sm:$0xf]
  %v170 = vld [vmem:[%s1 + $0x10] sm:$0xf]
  %v171 = vld [vmem:[%s1 + $0x14] sm:$0xf]
  %v172 = vld [vmem:[%s1 + $0x18] sm:$0xf]
  %v173 = vld [vmem:[%s1 + $0x1c] sm:$0xf]
  %v174 = vld [vmem:[%s1 + $0x20] sm:$0xf]
  %v175 = vld [vmem:[%s1 + $0x24] sm:$0xf]
  %v176 = vld [vmem:[%s1 + $0x28] sm:$0xf]
  %v177 = vld [vmem:[%s1 + $0x2c] sm:$0xf]
  %v178 = vld [vmem:[%s1 + $0x30] sm:$0xf]
  %v179 = vld [vmem:[%s1 + $0x34] sm:$0xf]
  %v180 = vld [vmem:[%s1 + $0x38] sm:$0xf]
  %v181 = vld [vmem:[%s1 + $0x3c] sm:$0xf]
  %v182 = vld [vmem:[%s1 + $0x40] sm:$0xf]
  %v183 = vld [vmem:[%s1 + $0x44] sm:$0xf]
  %v184 = vld [vmem:[%s1 + $0x48] sm:$0xf]
  %v185 = vld [vmem:[%s1 + $0x4c] sm:$0xf]
  %v186 = vld [vmem:[%s1 + $0x50] sm:$0xf]
  %v187 = vld [vmem:[%s1 + $0x54] sm:$0xf]
  %v188 = vld [vmem:[%s1 + $0x58] sm:$0xf]
  %v189 = vld [vmem:[%s1 + $0x5c] sm:$0xf]
  %v190 = vld [vmem:[%s1 + $0x60] sm:$0xf]
  %v191 = vld [vmem:[%s1 + $0x64] sm:$0xf]
  %v192 = vld [vmem:[%s1 + $0x68] sm:$0xf]
  %v193 = vld [vmem:[%s1 + $0x6c] sm:$0xf]
  %v194 = vld [vmem:[%s1 + $0x70] sm:$0xf]
  %v195 = vld [vmem:[%s1 + $0x74] sm:$0xf]
  %v196 = vld [vmem:[%s1 + $0x78] sm:$0xf]
  %v197 = vld [vmem:[%s1 + $0x7c] sm:$0xf]
  %v198 = vld [vmem:[%s2] sm:$0x1]
  %v200 = vperm.slane %v198, 0
  %v330 = vunpack.c.l.b16 %v38
  %v331 = vunpack.c.h.b16 %v38
  %v332 = vunpack.c.l.b16 %v39
  %v333 = vunpack.c.h.b16 %v39
  %v334 = vunpack.c.l.b16 %v40
  %v335 = vunpack.c.h.b16 %v40
  %v336 = vunpack.c.l.b16 %v41
  %v337 = vunpack.c.h.b16 %v41
  %v338 = vunpack.c.l.b16 %v42
  %v339 = vunpack.c.h.b16 %v42
  %v340 = vunpack.c.l.b16 %v43
  %v341 = vunpack.c.h.b16 %v43
  %v342 = vunpack.c.l.b16 %v44
  %v343 = vunpack.c.h.b16 %v44
  %v344 = vunpack.c.l.b16 %v45
  %v345 = vunpack.c.h.b16 %v45
  %v346 = vunpack.c.l.b16 %v46
  %v347 = vunpack.c.h.b16 %v46
  %v348 = vunpack.c.l.b16 %v47
  %v349 = vunpack.c.h.b16 %v47
  %v350 = vunpack.c.l.b16 %v48
  %v351 = vunpack.c.h.b16 %v48
  %v352 = vunpack.c.l.b16 %v49
  %v353 = vunpack.c.h.b16 %v49
  %v354 = vunpack.c.l.b16 %v50
  %v355 = vunpack.c.h.b16 %v50
  %v356 = vunpack.c.l.b16 %v51
  %v357 = vunpack.c.h.b16 %v51
  %v358 = vunpack.c.l.b16 %v52
  %v359 = vunpack.c.h.b16 %v52
  %v360 = vunpack.c.l.b16 %v53
  %v361 = vunpack.c.h.b16 %v53
  %v362 = vunpack.c.l.b16 %v54
  %v363 = vunpack.c.h.b16 %v54
  %v364 = vunpack.c.l.b16 %v55
  %v365 = vunpack.c.h.b16 %v55
  %v366 = vunpack.c.l.b16 %v56
  %v367 = vunpack.c.h.b16 %v56
  %v368 = vunpack.c.l.b16 %v57
  %v369 = vunpack.c.h.b16 %v57
  %v370 = vunpack.c.l.b16 %v58
  %v371 = vunpack.c.h.b16 %v58
  %v372 = vunpack.c.l.b16 %v59
  %v373 = vunpack.c.h.b16 %v59
  %v374 = vunpack.c.l.b16 %v60
  %v375 = vunpack.c.h.b16 %v60
  %v376 = vunpack.c.l.b16 %v61
  %v377 = vunpack.c.h.b16 %v61
  %v378 = vunpack.c.l.b16 %v62
  %v379 = vunpack.c.h.b16 %v62
  %v380 = vunpack.c.l.b16 %v63
  %v381 = vunpack.c.h.b16 %v63
  %v382 = vunpack.c.l.b16 %v64
  %v383 = vunpack.c.h.b16 %v64
  %v384 = vunpack.c.l.b16 %v65
  %v385 = vunpack.c.h.b16 %v65
  %v386 = vunpack.c.l.b16 %v66
  %v387 = vunpack.c.h.b16 %v66
  %v388 = vunpack.c.l.b16 %v67
  %v389 = vunpack.c.h.b16 %v67
  %v390 = vunpack.c.l.b16 %v68
  %v391 = vunpack.c.h.b16 %v68
  %v392 = vunpack.c.l.b16 %v69
  %v393 = vunpack.c.h.b16 %v69
  %v394 = vunpack.c.l.b16 %v70
  %v395 = vunpack.c.h.b16 %v70
  %v396 = vunpack.c.l.b16 %v71
  %v397 = vunpack.c.h.b16 %v71
  %v398 = vunpack.c.l.b16 %v72
  %v399 = vunpack.c.h.b16 %v72
  %v400 = vunpack.c.l.b16 %v73
  %v401 = vunpack.c.h.b16 %v73
  %v402 = vunpack.c.l.b16 %v74
  %v403 = vunpack.c.h.b16 %v74
  %v404 = vunpack.c.l.b16 %v75
  %v405 = vunpack.c.h.b16 %v75
  %v406 = vunpack.c.l.b16 %v76
  %v407 = vunpack.c.h.b16 %v76
  %v408 = vunpack.c.l.b16 %v77
  %v409 = vunpack.c.h.b16 %v77
  %v410 = vunpack.c.l.b16 %v78
  %v411 = vunpack.c.h.b16 %v78
  %v412 = vunpack.c.l.b16 %v79
  %v413 = vunpack.c.h.b16 %v79
  %v414 = vunpack.c.l.b16 %v80
  %v415 = vunpack.c.h.b16 %v80
  %v416 = vunpack.c.l.b16 %v81
  %v417 = vunpack.c.h.b16 %v81
  %v418 = vunpack.c.l.b16 %v82
  %v419 = vunpack.c.h.b16 %v82
  %v420 = vunpack.c.l.b16 %v83
  %v421 = vunpack.c.h.b16 %v83
  %v422 = vunpack.c.l.b16 %v84
  %v423 = vunpack.c.h.b16 %v84
  %v424 = vunpack.c.l.b16 %v85
  %v425 = vunpack.c.h.b16 %v85
  %v426 = vunpack.c.l.b16 %v86
  %v427 = vunpack.c.h.b16 %v86
  %v428 = vunpack.c.l.b16 %v87
  %v429 = vunpack.c.h.b16 %v87
  %v430 = vunpack.c.l.b16 %v88
  %v431 = vunpack.c.h.b16 %v88
  %v432 = vunpack.c.l.b16 %v89
  %v433 = vunpack.c.h.b16 %v89
  %v434 = vunpack.c.l.b16 %v90
  %v435 = vunpack.c.h.b16 %v90
  %v436 = vunpack.c.l.b16 %v91
  %v437 = vunpack.c.h.b16 %v91
  %v438 = vunpack.c.l.b16 %v92
  %v439 = vunpack.c.h.b16 %v92
  %v440 = vunpack.c.l.b16 %v93
  %v441 = vunpack.c.h.b16 %v93
  %v442 = vunpack.c.l.b16 %v94
  %v443 = vunpack.c.h.b16 %v94
  %v444 = vunpack.c.l.b16 %v95
  %v445 = vunpack.c.h.b16 %v95
  %v446 = vunpack.c.l.b16 %v96
  %v447 = vunpack.c.h.b16 %v96
  %v448 = vunpack.c.l.b16 %v97
  %v449 = vunpack.c.h.b16 %v97
  %v450 = vunpack.c.l.b16 %v98
  %v451 = vunpack.c.h.b16 %v98
  %v452 = vunpack.c.l.b16 %v99
  %v453 = vunpack.c.h.b16 %v99
  %v454 = vunpack.c.l.b16 %v100
  %v455 = vunpack.c.h.b16 %v100
  %v456 = vunpack.c.l.b16 %v101
  %v457 = vunpack.c.h.b16 %v101
  %v458 = vunpack.c.l.b16 %v102
  %v459 = vunpack.c.h.b16 %v102
  %v460 = vunpack.c.l.b16 %v103
  %v461 = vunpack.c.h.b16 %v103
  %v462 = vunpack.c.l.b16 %v104
  %v463 = vunpack.c.h.b16 %v104
  %v464 = vunpack.c.l.b16 %v105
  %v465 = vunpack.c.h.b16 %v105
  %v466 = vunpack.c.l.b16 %v106
  %v467 = vunpack.c.h.b16 %v106
  %v468 = vunpack.c.l.b16 %v107
  %v469 = vunpack.c.h.b16 %v107
  %v470 = vunpack.c.l.b16 %v108
  %v471 = vunpack.c.h.b16 %v108
  %v472 = vunpack.c.l.b16 %v109
  %v473 = vunpack.c.h.b16 %v109
  %v474 = vunpack.c.l.b16 %v110
  %v475 = vunpack.c.h.b16 %v110
  %v476 = vunpack.c.l.b16 %v111
  %v477 = vunpack.c.h.b16 %v111
  %v478 = vunpack.c.l.b16 %v112
  %v479 = vunpack.c.h.b16 %v112
  %v480 = vunpack.c.l.b16 %v113
  %v481 = vunpack.c.h.b16 %v113
  %v482 = vunpack.c.l.b16 %v114
  %v483 = vunpack.c.h.b16 %v114
  %v484 = vunpack.c.l.b16 %v115
  %v485 = vunpack.c.h.b16 %v115
  %v486 = vunpack.c.l.b16 %v116
  %v487 = vunpack.c.h.b16 %v116
  %v488 = vunpack.c.l.b16 %v117
  %v489 = vunpack.c.h.b16 %v117
  %v490 = vunpack.c.l.b16 %v118
  %v491 = vunpack.c.h.b16 %v118
  %v492 = vunpack.c.l.b16 %v119
  %v493 = vunpack.c.h.b16 %v119
  %v494 = vunpack.c.l.b16 %v120
  %v495 = vunpack.c.h.b16 %v120
  %v496 = vunpack.c.l.b16 %v121
  %v497 = vunpack.c.h.b16 %v121
  %v498 = vunpack.c.l.b16 %v122
  %v499 = vunpack.c.h.b16 %v122
  %v500 = vunpack.c.l.b16 %v123
  %v501 = vunpack.c.h.b16 %v123
  %v502 = vunpack.c.l.b16 %v124
  %v503 = vunpack.c.h.b16 %v124
  %v504 = vunpack.c.l.b16 %v125
  %v505 = vunpack.c.h.b16 %v125
  %v506 = vunpack.c.l.b16 %v126
  %v507 = vunpack.c.h.b16 %v126
  %v508 = vunpack.c.l.b16 %v127
  %v509 = vunpack.c.h.b16 %v127
  %v510 = vunpack.c.l.b16 %v128
  %v511 = vunpack.c.h.b16 %v128
  %v512 = vunpack.c.l.b16 %v129
  %v513 = vunpack.c.h.b16 %v129
  %v514 = vunpack.c.l.b16 %v130
  %v515 = vunpack.c.h.b16 %v130
  %v516 = vunpack.c.l.b16 %v131
  %v517 = vunpack.c.h.b16 %v131
  %v518 = vunpack.c.l.b16 %v132
  %v519 = vunpack.c.h.b16 %v132
  %v520 = vunpack.c.l.b16 %v133
  %v521 = vunpack.c.h.b16 %v133
  %v522 = vunpack.c.l.b16 %v134
  %v523 = vunpack.c.h.b16 %v134
  %v524 = vunpack.c.l.b16 %v135
  %v525 = vunpack.c.h.b16 %v135
  %v526 = vunpack.c.l.b16 %v136
  %v527 = vunpack.c.h.b16 %v136
  %v528 = vunpack.c.l.b16 %v137
  %v529 = vunpack.c.h.b16 %v137
  %v530 = vunpack.c.l.b16 %v138
  %v531 = vunpack.c.h.b16 %v138
  %v532 = vunpack.c.l.b16 %v139
  %v533 = vunpack.c.h.b16 %v139
  %v534 = vunpack.c.l.b16 %v140
  %v535 = vunpack.c.h.b16 %v140
  %v536 = vunpack.c.l.b16 %v141
  %v537 = vunpack.c.h.b16 %v141
  %v538 = vunpack.c.l.b16 %v142
  %v539 = vunpack.c.h.b16 %v142
  %v540 = vunpack.c.l.b16 %v143
  %v541 = vunpack.c.h.b16 %v143
  %v542 = vunpack.c.l.b16 %v144
  %v543 = vunpack.c.h.b16 %v144
  %v544 = vunpack.c.l.b16 %v145
  %v545 = vunpack.c.h.b16 %v145
  %v546 = vunpack.c.l.b16 %v146
  %v547 = vunpack.c.h.b16 %v146
  %v548 = vunpack.c.l.b16 %v147
  %v549 = vunpack.c.h.b16 %v147
  %v550 = vunpack.c.l.b16 %v148
  %v551 = vunpack.c.h.b16 %v148
  %v552 = vunpack.c.l.b16 %v149
  %v553 = vunpack.c.h.b16 %v149
  %v554 = vunpack.c.l.b16 %v150
  %v555 = vunpack.c.h.b16 %v150
  %v556 = vunpack.c.l.b16 %v151
  %v557 = vunpack.c.h.b16 %v151
  %v558 = vunpack.c.l.b16 %v152
  %v559 = vunpack.c.h.b16 %v152
  %v560 = vunpack.c.l.b16 %v153
  %v561 = vunpack.c.h.b16 %v153
  %v562 = vunpack.c.l.b16 %v154
  %v563 = vunpack.c.h.b16 %v154
  %v564 = vunpack.c.l.b16 %v155
  %v565 = vunpack.c.h.b16 %v155
  %v566 = vunpack.c.l.b16 %v156
  %v567 = vunpack.c.h.b16 %v156
  %v568 = vunpack.c.l.b16 %v157
  %v569 = vunpack.c.h.b16 %v157
  %v570 = vunpack.c.l.b16 %v158
  %v571 = vunpack.c.h.b16 %v158
  %v572 = vunpack.c.l.b16 %v159
  %v573 = vunpack.c.h.b16 %v159
  %v574 = vunpack.c.l.b16 %v160
  %v575 = vunpack.c.h.b16 %v160
  %v576 = vunpack.c.l.b16 %v161
  %v577 = vunpack.c.h.b16 %v161
  %v578 = vunpack.c.l.b16 %v162
  %v579 = vunpack.c.h.b16 %v162
  %v580 = vunpack.c.l.b16 %v163
  %v581 = vunpack.c.h.b16 %v163
  %v582 = vunpack.c.l.b16 %v164
  %v583 = vunpack.c.h.b16 %v164
  %v584 = vunpack.c.l.b16 %v165
  %v585 = vunpack.c.h.b16 %v165
  %v586 = vpack.c.b16 %v332, %v330
  %v587 = vpack.c.b16 %v333, %v331
  %v588 = vpack.c.b16 %v336, %v334
  %v589 = vpack.c.b16 %v337, %v335
  %v590 = vpack.c.b16 %v340, %v338
  %v591 = vpack.c.b16 %v341, %v339
  %v592 = vpack.c.b16 %v344, %v342
  %v593 = vpack.c.b16 %v345, %v343
  %v594 = vpack.c.b16 %v348, %v346
  %v595 = vpack.c.b16 %v349, %v347
  %v596 = vpack.c.b16 %v352, %v350
  %v597 = vpack.c.b16 %v353, %v351
  %v598 = vpack.c.b16 %v356, %v354
  %v599 = vpack.c.b16 %v357, %v355
  %v600 = vpack.c.b16 %v360, %v358
  %v601 = vpack.c.b16 %v361, %v359
  %v602 = vpack.c.b16 %v364, %v362
  %v603 = vpack.c.b16 %v365, %v363
  %v604 = vpack.c.b16 %v368, %v366
  %v605 = vpack.c.b16 %v369, %v367
  %v606 = vpack.c.b16 %v372, %v370
  %v607 = vpack.c.b16 %v373, %v371
  %v608 = vpack.c.b16 %v376, %v374
  %v609 = vpack.c.b16 %v377, %v375
  %v610 = vpack.c.b16 %v380, %v378
  %v611 = vpack.c.b16 %v381, %v379
  %v612 = vpack.c.b16 %v384, %v382
  %v613 = vpack.c.b16 %v385, %v383
  %v614 = vpack.c.b16 %v388, %v386
  %v615 = vpack.c.b16 %v389, %v387
  %v616 = vpack.c.b16 %v392, %v390
  %v617 = vpack.c.b16 %v393, %v391
  %v618 = vpack.c.b16 %v396, %v394
  %v619 = vpack.c.b16 %v397, %v395
  %v620 = vpack.c.b16 %v400, %v398
  %v621 = vpack.c.b16 %v401, %v399
  %v622 = vpack.c.b16 %v404, %v402
  %v623 = vpack.c.b16 %v405, %v403
  %v624 = vpack.c.b16 %v408, %v406
  %v625 = vpack.c.b16 %v409, %v407
  %v626 = vpack.c.b16 %v412, %v410
  %v627 = vpack.c.b16 %v413, %v411
  %v628 = vpack.c.b16 %v416, %v414
  %v629 = vpack.c.b16 %v417, %v415
  %v630 = vpack.c.b16 %v420, %v418
  %v631 = vpack.c.b16 %v421, %v419
  %v632 = vpack.c.b16 %v424, %v422
  %v633 = vpack.c.b16 %v425, %v423
  %v634 = vpack.c.b16 %v428, %v426
  %v635 = vpack.c.b16 %v429, %v427
  %v636 = vpack.c.b16 %v432, %v430
  %v637 = vpack.c.b16 %v433, %v431
  %v638 = vpack.c.b16 %v436, %v434
  %v639 = vpack.c.b16 %v437, %v435
  %v640 = vpack.c.b16 %v440, %v438
  %v641 = vpack.c.b16 %v441, %v439
  %v642 = vpack.c.b16 %v444, %v442
  %v643 = vpack.c.b16 %v445, %v443
  %v644 = vpack.c.b16 %v448, %v446
  %v645 = vpack.c.b16 %v449, %v447
  %v646 = vpack.c.b16 %v452, %v450
  %v647 = vpack.c.b16 %v453, %v451
  %v648 = vpack.c.b16 %v456, %v454
  %v649 = vpack.c.b16 %v457, %v455
  %v650 = vpack.c.b16 %v460, %v458
  %v651 = vpack.c.b16 %v461, %v459
  %v652 = vpack.c.b16 %v464, %v462
  %v653 = vpack.c.b16 %v465, %v463
  %v654 = vpack.c.b16 %v468, %v466
  %v655 = vpack.c.b16 %v469, %v467
  %v656 = vpack.c.b16 %v472, %v470
  %v657 = vpack.c.b16 %v473, %v471
  %v658 = vpack.c.b16 %v476, %v474
  %v659 = vpack.c.b16 %v477, %v475
  %v660 = vpack.c.b16 %v480, %v478
  %v661 = vpack.c.b16 %v481, %v479
  %v662 = vpack.c.b16 %v484, %v482
  %v663 = vpack.c.b16 %v485, %v483
  %v664 = vpack.c.b16 %v488, %v486
  %v665 = vpack.c.b16 %v489, %v487
  %v666 = vpack.c.b16 %v492, %v490
  %v667 = vpack.c.b16 %v493, %v491
  %v668 = vpack.c.b16 %v496, %v494
  %v669 = vpack.c.b16 %v497, %v495
  %v670 = vpack.c.b16 %v500, %v498
  %v671 = vpack.c.b16 %v501, %v499
  %v672 = vpack.c.b16 %v504, %v502
  %v673 = vpack.c.b16 %v505, %v503
  %v674 = vpack.c.b16 %v508, %v506
  %v675 = vpack.c.b16 %v509, %v507
  %v676 = vpack.c.b16 %v512, %v510
  %v677 = vpack.c.b16 %v513, %v511
  %v678 = vpack.c.b16 %v516, %v514
  %v679 = vpack.c.b16 %v517, %v515
  %v680 = vpack.c.b16 %v520, %v518
  %v681 = vpack.c.b16 %v521, %v519
  %v682 = vpack.c.b16 %v524, %v522
  %v683 = vpack.c.b16 %v525, %v523
  %v684 = vpack.c.b16 %v528, %v526
  %v685 = vpack.c.b16 %v529, %v527
  %v686 = vpack.c.b16 %v532, %v530
  %v687 = vpack.c.b16 %v533, %v531
  %v688 = vpack.c.b16 %v536, %v534
  %v689 = vpack.c.b16 %v537, %v535
  %v690 = vpack.c.b16 %v540, %v538
  %v691 = vpack.c.b16 %v541, %v539
  %v692 = vpack.c.b16 %v544, %v542
  %v693 = vpack.c.b16 %v545, %v543
  %v694 = vpack.c.b16 %v548, %v546
  %v695 = vpack.c.b16 %v549, %v547
  %v696 = vpack.c.b16 %v552, %v550
  %v697 = vpack.c.b16 %v553, %v551
  %v698 = vpack.c.b16 %v556, %v554
  %v699 = vpack.c.b16 %v557, %v555
  %v700 = vpack.c.b16 %v560, %v558
  %v701 = vpack.c.b16 %v561, %v559
  %v702 = vpack.c.b16 %v564, %v562
  %v703 = vpack.c.b16 %v565, %v563
  %v704 = vpack.c.b16 %v568, %v566
  %v705 = vpack.c.b16 %v569, %v567
  %v706 = vpack.c.b16 %v572, %v570
  %v707 = vpack.c.b16 %v573, %v571
  %v708 = vpack.c.b16 %v576, %v574
  %v709 = vpack.c.b16 %v577, %v575
  %v710 = vpack.c.b16 %v580, %v578
  %v711 = vpack.c.b16 %v581, %v579
  %v712 = vpack.c.b16 %v584, %v582
  %v713 = vpack.c.b16 %v585, %v583
  %v874 = vunpack.c.l.b16 %v166
  %v875 = vunpack.c.l.b16 %v167
  %v876 = vunpack.c.l.b16 %v168
  %v877 = vunpack.c.l.b16 %v169
  %v878 = vunpack.c.l.b16 %v170
  %v879 = vunpack.c.l.b16 %v171
  %v880 = vunpack.c.l.b16 %v172
  %v881 = vunpack.c.l.b16 %v173
  %v882 = vunpack.c.l.b16 %v174
  %v883 = vunpack.c.l.b16 %v175
  %v884 = vunpack.c.l.b16 %v176
  %v885 = vunpack.c.l.b16 %v177
  %v886 = vunpack.c.l.b16 %v178
  %v887 = vunpack.c.l.b16 %v179
  %v888 = vunpack.c.l.b16 %v180
  %v889 = vunpack.c.l.b16 %v181
  %v890 = vunpack.c.l.b16 %v182
  %v891 = vunpack.c.l.b16 %v183
  %v892 = vunpack.c.l.b16 %v184
  %v893 = vunpack.c.l.b16 %v185
  %v894 = vunpack.c.l.b16 %v186
  %v895 = vunpack.c.l.b16 %v187
  %v896 = vunpack.c.l.b16 %v188
  %v897 = vunpack.c.l.b16 %v189
  %v898 = vunpack.c.l.b16 %v190
  %v899 = vunpack.c.l.b16 %v191
  %v900 = vunpack.c.l.b16 %v192
  %v901 = vunpack.c.l.b16 %v193
  %v902 = vunpack.c.l.b16 %v194
  %v903 = vunpack.c.l.b16 %v195
  %v904 = vunpack.c.l.b16 %v196
  %v905 = vunpack.c.l.b16 %v197
  %v906 = vpack.c.b16 %v875, %v874
  %v907 = vpack.c.b16 %v877, %v876
  %v908 = vpack.c.b16 %v879, %v878
  %v909 = vpack.c.b16 %v881, %v880
  %v910 = vpack.c.b16 %v883, %v882
  %v911 = vpack.c.b16 %v885, %v884
  %v912 = vpack.c.b16 %v887, %v886
  %v913 = vpack.c.b16 %v889, %v888
  %v914 = vpack.c.b16 %v891, %v890
  %v915 = vpack.c.b16 %v893, %v892
  %v916 = vpack.c.b16 %v895, %v894
  %v917 = vpack.c.b16 %v897, %v896
  %v918 = vpack.c.b16 %v899, %v898
  %v919 = vpack.c.b16 %v901, %v900
  %v920 = vpack.c.b16 %v903, %v902
  %v921 = vpack.c.b16 %v905, %v904
  %938 = vmatpush.bf16.msra.mxu0 %v913
  %939 = vmatpush.bf16.msra.mxu0 %v912
  %940 = vmatpush.bf16.msra.mxu0 %v911
  %941 = vmatpush.bf16.msra.mxu0 %v910
  %942 = vmatpush.bf16.msra.mxu0 %v909
  %943 = vmatpush.bf16.msra.mxu0 %v908
  %944 = vmatpush.bf16.msra.mxu0 %v907
  %945 = vmatpush.bf16.msra.mxu0 %v906
  %946 = vmatmul.bf16.gmra.mxu0 %v586
  %v947 = vpop.f32.mrf.mxu0
  %v948 = vadd.f32 %v200, %v947
  %v949 = vpop.f32.mrf.mxu0
  %v950 = vadd.f32 %v200, %v949
  %951 = vmatmul.bf16.gmra.mxu0 %v588
  %v952 = vpop.f32.mrf.mxu0
  %v953 = vadd.f32 %v200, %v952
  %v954 = vpop.f32.mrf.mxu0
  %v955 = vadd.f32 %v200, %v954
  %956 = vmatmul.bf16.gmra.mxu0 %v590
  %v957 = vpop.f32.mrf.mxu0
  %v958 = vadd.f32 %v200, %v957
  %v959 = vpop.f32.mrf.mxu0
  %v960 = vadd.f32 %v200, %v959
  %961 = vmatmul.bf16.gmra.mxu0 %v592
  %v962 = vpop.f32.mrf.mxu0
  %v963 = vadd.f32 %v200, %v962
  %v964 = vpop.f32.mrf.mxu0
  %v965 = vadd.f32 %v200, %v964
  %966 = vmatmul.bf16.gmra.mxu0 %v594
  %v967 = vpop.f32.mrf.mxu0
  %v968 = vadd.f32 %v200, %v967
  %v969 = vpop.f32.mrf.mxu0
  %v970 = vadd.f32 %v200, %v969
  %971 = vmatmul.bf16.gmra.mxu0 %v596
  %v972 = vpop.f32.mrf.mxu0
  %v973 = vadd.f32 %v200, %v972
  %v974 = vpop.f32.mrf.mxu0
  %v975 = vadd.f32 %v200, %v974
  %976 = vmatmul.bf16.gmra.mxu0 %v598
  %v977 = vpop.f32.mrf.mxu0
  %v978 = vadd.f32 %v200, %v977
  %v979 = vpop.f32.mrf.mxu0
  %v980 = vadd.f32 %v200, %v979
  %981 = vmatmul.bf16.gmra.mxu0 %v600
  %v982 = vpop.f32.mrf.mxu0
  %v983 = vadd.f32 %v200, %v982
  %v984 = vpop.f32.mrf.mxu0
  %v985 = vadd.f32 %v200, %v984
  %986 = vmatmul.bf16.gmra.mxu0 %v602
  %v987 = vpop.f32.mrf.mxu0
  %v988 = vadd.f32 %v200, %v987
  %v989 = vpop.f32.mrf.mxu0
  %v990 = vadd.f32 %v200, %v989
  %991 = vmatmul.bf16.gmra.mxu0 %v604
  %v992 = vpop.f32.mrf.mxu0
  %v993 = vadd.f32 %v200, %v992
  %v994 = vpop.f32.mrf.mxu0
  %v995 = vadd.f32 %v200, %v994
  %996 = vmatmul.bf16.gmra.mxu0 %v606
  %v997 = vpop.f32.mrf.mxu0
  %v998 = vadd.f32 %v200, %v997
  %v999 = vpop.f32.mrf.mxu0
  %v1000 = vadd.f32 %v200, %v999
  %1001 = vmatmul.bf16.gmra.mxu0 %v608
  %v1002 = vpop.f32.mrf.mxu0
  %v1003 = vadd.f32 %v200, %v1002
  %v1004 = vpop.f32.mrf.mxu0
  %v1005 = vadd.f32 %v200, %v1004
  %1006 = vmatmul.bf16.gmra.mxu0 %v610
  %v1007 = vpop.f32.mrf.mxu0
  %v1008 = vadd.f32 %v200, %v1007
  %v1009 = vpop.f32.mrf.mxu0
  %v1010 = vadd.f32 %v200, %v1009
  %1011 = vmatmul.bf16.gmra.mxu0 %v612
  %v1012 = vpop.f32.mrf.mxu0
  %v1013 = vadd.f32 %v200, %v1012
  %v1014 = vpop.f32.mrf.mxu0
  %v1015 = vadd.f32 %v200, %v1014
  %1016 = vmatmul.bf16.gmra.mxu0 %v614
  %v1017 = vpop.f32.mrf.mxu0
  %v1018 = vadd.f32 %v200, %v1017
  %v1019 = vpop.f32.mrf.mxu0
  %v1020 = vadd.f32 %v200, %v1019
  %1021 = vmatmul.bf16.gmra.mxu0 %v616
  %v1022 = vpop.f32.mrf.mxu0
  %v1023 = vadd.f32 %v200, %v1022
  %v1024 = vpop.f32.mrf.mxu0
  %v1025 = vadd.f32 %v200, %v1024
  %1026 = vmatmul.bf16.gmra.mxu0 %v618
  %v1027 = vpop.f32.mrf.mxu0
  %v1028 = vadd.f32 %v200, %v1027
  %v1029 = vpop.f32.mrf.mxu0
  %v1030 = vadd.f32 %v200, %v1029
  %1031 = vmatmul.bf16.gmra.mxu0 %v620
  %v1032 = vpop.f32.mrf.mxu0
  %v1033 = vadd.f32 %v200, %v1032
  %v1034 = vpop.f32.mrf.mxu0
  %v1035 = vadd.f32 %v200, %v1034
  %1036 = vmatmul.bf16.gmra.mxu0 %v622
  %v1037 = vpop.f32.mrf.mxu0
  %v1038 = vadd.f32 %v200, %v1037
  %v1039 = vpop.f32.mrf.mxu0
  %v1040 = vadd.f32 %v200, %v1039
  %1041 = vmatmul.bf16.gmra.mxu0 %v624
  %v1042 = vpop.f32.mrf.mxu0
  %v1043 = vadd.f32 %v200, %v1042
  %v1044 = vpop.f32.mrf.mxu0
  %v1045 = vadd.f32 %v200, %v1044
  %1046 = vmatmul.bf16.gmra.mxu0 %v626
  %v1047 = vpop.f32.mrf.mxu0
  %v1048 = vadd.f32 %v200, %v1047
  %v1049 = vpop.f32.mrf.mxu0
  %v1050 = vadd.f32 %v200, %v1049
  %1051 = vmatmul.bf16.gmra.mxu0 %v628
  %v1052 = vpop.f32.mrf.mxu0
  %v1053 = vadd.f32 %v200, %v1052
  %v1054 = vpop.f32.mrf.mxu0
  %v1055 = vadd.f32 %v200, %v1054
  %1056 = vmatmul.bf16.gmra.mxu0 %v630
  %v1057 = vpop.f32.mrf.mxu0
  %v1058 = vadd.f32 %v200, %v1057
  %v1059 = vpop.f32.mrf.mxu0
  %v1060 = vadd.f32 %v200, %v1059
  %1061 = vmatmul.bf16.gmra.mxu0 %v632
  %v1062 = vpop.f32.mrf.mxu0
  %v1063 = vadd.f32 %v200, %v1062
  %v1064 = vpop.f32.mrf.mxu0
  %v1065 = vadd.f32 %v200, %v1064
  %1066 = vmatmul.bf16.gmra.mxu0 %v634
  %v1067 = vpop.f32.mrf.mxu0
  %v1068 = vadd.f32 %v200, %v1067
  %v1069 = vpop.f32.mrf.mxu0
  %v1070 = vadd.f32 %v200, %v1069
  %1071 = vmatmul.bf16.gmra.mxu0 %v636
  %v1072 = vpop.f32.mrf.mxu0
  %v1073 = vadd.f32 %v200, %v1072
  %v1074 = vpop.f32.mrf.mxu0
  %v1075 = vadd.f32 %v200, %v1074
  %1076 = vmatmul.bf16.gmra.mxu0 %v638
  %v1077 = vpop.f32.mrf.mxu0
  %v1078 = vadd.f32 %v200, %v1077
  %v1079 = vpop.f32.mrf.mxu0
  %v1080 = vadd.f32 %v200, %v1079
  %1081 = vmatmul.bf16.gmra.mxu0 %v640
  %v1082 = vpop.f32.mrf.mxu0
  %v1083 = vadd.f32 %v200, %v1082
  %v1084 = vpop.f32.mrf.mxu0
  %v1085 = vadd.f32 %v200, %v1084
  %1086 = vmatmul.bf16.gmra.mxu0 %v642
  %v1087 = vpop.f32.mrf.mxu0
  %v1088 = vadd.f32 %v200, %v1087
  %v1089 = vpop.f32.mrf.mxu0
  %v1090 = vadd.f32 %v200, %v1089
  %1091 = vmatmul.bf16.gmra.mxu0 %v644
  %v1092 = vpop.f32.mrf.mxu0
  %v1093 = vadd.f32 %v200, %v1092
  %v1094 = vpop.f32.mrf.mxu0
  %v1095 = vadd.f32 %v200, %v1094
  %1096 = vmatmul.bf16.gmra.mxu0 %v646
  %v1097 = vpop.f32.mrf.mxu0
  %v1098 = vadd.f32 %v200, %v1097
  %v1099 = vpop.f32.mrf.mxu0
  %v1100 = vadd.f32 %v200, %v1099
  %1101 = vmatmul.bf16.gmra.mxu0 %v648
  %v1102 = vpop.f32.mrf.mxu0
  %v1103 = vadd.f32 %v200, %v1102
  %v1104 = vpop.f32.mrf.mxu0
  %v1105 = vadd.f32 %v200, %v1104
  %1106 = vmatmul.bf16.gmra.mxu0 %v650
  %v1107 = vpop.f32.mrf.mxu0
  %v1108 = vadd.f32 %v200, %v1107
  %v1109 = vpop.f32.mrf.mxu0
  %v1110 = vadd.f32 %v200, %v1109
  %1111 = vmatmul.bf16.gmra.mxu0 %v652
  %v1112 = vpop.f32.mrf.mxu0
  %v1113 = vadd.f32 %v200, %v1112
  %v1114 = vpop.f32.mrf.mxu0
  %v1115 = vadd.f32 %v200, %v1114
  %1116 = vmatmul.bf16.gmra.mxu0 %v654
  %v1117 = vpop.f32.mrf.mxu0
  %v1118 = vadd.f32 %v200, %v1117
  %v1119 = vpop.f32.mrf.mxu0
  %v1120 = vadd.f32 %v200, %v1119
  %1121 = vmatmul.bf16.gmra.mxu0 %v656
  %v1122 = vpop.f32.mrf.mxu0
  %v1123 = vadd.f32 %v200, %v1122
  %v1124 = vpop.f32.mrf.mxu0
  %v1125 = vadd.f32 %v200, %v1124
  %1126 = vmatmul.bf16.gmra.mxu0 %v658
  %v1127 = vpop.f32.mrf.mxu0
  %v1128 = vadd.f32 %v200, %v1127
  %v1129 = vpop.f32.mrf.mxu0
  %v1130 = vadd.f32 %v200, %v1129
  %1131 = vmatmul.bf16.gmra.mxu0 %v660
  %v1132 = vpop.f32.mrf.mxu0
  %v1133 = vadd.f32 %v200, %v1132
  %v1134 = vpop.f32.mrf.mxu0
  %v1135 = vadd.f32 %v200, %v1134
  %1136 = vmatmul.bf16.gmra.mxu0 %v662
  %v1137 = vpop.f32.mrf.mxu0
  %v1138 = vadd.f32 %v200, %v1137
  %v1139 = vpop.f32.mrf.mxu0
  %v1140 = vadd.f32 %v200, %v1139
  %1141 = vmatmul.bf16.gmra.mxu0 %v664
  %v1142 = vpop.f32.mrf.mxu0
  %v1143 = vadd.f32 %v200, %v1142
  %v1144 = vpop.f32.mrf.mxu0
  %v1145 = vadd.f32 %v200, %v1144
  %1146 = vmatmul.bf16.gmra.mxu0 %v666
  %v1147 = vpop.f32.mrf.mxu0
  %v1148 = vadd.f32 %v200, %v1147
  %v1149 = vpop.f32.mrf.mxu0
  %v1150 = vadd.f32 %v200, %v1149
  %1151 = vmatmul.bf16.gmra.mxu0 %v668
  %v1152 = vpop.f32.mrf.mxu0
  %v1153 = vadd.f32 %v200, %v1152
  %v1154 = vpop.f32.mrf.mxu0
  %v1155 = vadd.f32 %v200, %v1154
  %1156 = vmatmul.bf16.gmra.mxu0 %v670
  %v1157 = vpop.f32.mrf.mxu0
  %v1158 = vadd.f32 %v200, %v1157
  %v1159 = vpop.f32.mrf.mxu0
  %v1160 = vadd.f32 %v200, %v1159
  %1161 = vmatmul.bf16.gmra.mxu0 %v672
  %v1162 = vpop.f32.mrf.mxu0
  %v1163 = vadd.f32 %v200, %v1162
  %v1164 = vpop.f32.mrf.mxu0
  %v1165 = vadd.f32 %v200, %v1164
  %1166 = vmatmul.bf16.gmra.mxu0 %v674
  %v1167 = vpop.f32.mrf.mxu0
  %v1168 = vadd.f32 %v200, %v1167
  %v1169 = vpop.f32.mrf.mxu0
  %v1170 = vadd.f32 %v200, %v1169
  %1171 = vmatmul.bf16.gmra.mxu0 %v676
  %v1172 = vpop.f32.mrf.mxu0
  %v1173 = vadd.f32 %v200, %v1172
  %v1174 = vpop.f32.mrf.mxu0
  %v1175 = vadd.f32 %v200, %v1174
  %1176 = vmatmul.bf16.gmra.mxu0 %v678
  %v1177 = vpop.f32.mrf.mxu0
  %v1178 = vadd.f32 %v200, %v1177
  %v1179 = vpop.f32.mrf.mxu0
  %v1180 = vadd.f32 %v200, %v1179
  %1181 = vmatmul.bf16.gmra.mxu0 %v680
  %v1182 = vpop.f32.mrf.mxu0
  %v1183 = vadd.f32 %v200, %v1182
  %v1184 = vpop.f32.mrf.mxu0
  %v1185 = vadd.f32 %v200, %v1184
  %1186 = vmatmul.bf16.gmra.mxu0 %v682
  %v1187 = vpop.f32.mrf.mxu0
  %v1188 = vadd.f32 %v200, %v1187
  %v1189 = vpop.f32.mrf.mxu0
  %v1190 = vadd.f32 %v200, %v1189
  %1191 = vmatmul.bf16.gmra.mxu0 %v684
  %v1192 = vpop.f32.mrf.mxu0
  %v1193 = vadd.f32 %v200, %v1192
  %v1194 = vpop.f32.mrf.mxu0
  %v1195 = vadd.f32 %v200, %v1194
  %1196 = vmatmul.bf16.gmra.mxu0 %v686
  %v1197 = vpop.f32.mrf.mxu0
  %v1198 = vadd.f32 %v200, %v1197
  %v1199 = vpop.f32.mrf.mxu0
  %v1200 = vadd.f32 %v200, %v1199
  %1201 = vmatmul.bf16.gmra.mxu0 %v688
  %v1202 = vpop.f32.mrf.mxu0
  %v1203 = vadd.f32 %v200, %v1202
  %v1204 = vpop.f32.mrf.mxu0
  %v1205 = vadd.f32 %v200, %v1204
  %1206 = vmatmul.bf16.gmra.mxu0 %v690
  %v1207 = vpop.f32.mrf.mxu0
  %v1208 = vadd.f32 %v200, %v1207
  %v1209 = vpop.f32.mrf.mxu0
  %v1210 = vadd.f32 %v200, %v1209
  %1211 = vmatmul.bf16.gmra.mxu0 %v692
  %v1212 = vpop.f32.mrf.mxu0
  %v1213 = vadd.f32 %v200, %v1212
  %v1214 = vpop.f32.mrf.mxu0
  %v1215 = vadd.f32 %v200, %v1214
  %1216 = vmatmul.bf16.gmra.mxu0 %v694
  %v1217 = vpop.f32.mrf.mxu0
  %v1218 = vadd.f32 %v200, %v1217
  %v1219 = vpop.f32.mrf.mxu0
  %v1220 = vadd.f32 %v200, %v1219
  %1221 = vmatmul.bf16.gmra.mxu0 %v696
  %v1222 = vpop.f32.mrf.mxu0
  %v1223 = vadd.f32 %v200, %v1222
  %v1224 = vpop.f32.mrf.mxu0
  %v1225 = vadd.f32 %v200, %v1224
  %1226 = vmatmul.bf16.gmra.mxu0 %v698
  %v1227 = vpop.f32.mrf.mxu0
  %v1228 = vadd.f32 %v200, %v1227
  %v1229 = vpop.f32.mrf.mxu0
  %v1230 = vadd.f32 %v200, %v1229
  %1231 = vmatmul.bf16.gmra.mxu0 %v700
  %v1232 = vpop.f32.mrf.mxu0
  %v1233 = vadd.f32 %v200, %v1232
  %v1234 = vpop.f32.mrf.mxu0
  %v1235 = vadd.f32 %v200, %v1234
  %1236 = vmatmul.bf16.gmra.mxu0 %v702
  %v1237 = vpop.f32.mrf.mxu0
  %v1238 = vadd.f32 %v200, %v1237
  %v1239 = vpop.f32.mrf.mxu0
  %v1240 = vadd.f32 %v200, %v1239
  %1241 = vmatmul.bf16.gmra.mxu0 %v704
  %v1242 = vpop.f32.mrf.mxu0
  %v1243 = vadd.f32 %v200, %v1242
  %v1244 = vpop.f32.mrf.mxu0
  %v1245 = vadd.f32 %v200, %v1244
  %1246 = vmatmul.bf16.gmra.mxu0 %v706
  %v1247 = vpop.f32.mrf.mxu0
  %v1248 = vadd.f32 %v200, %v1247
  %v1249 = vpop.f32.mrf.mxu0
  %v1250 = vadd.f32 %v200, %v1249
  %1251 = vmatmul.bf16.gmra.mxu0 %v708
  %v1252 = vpop.f32.mrf.mxu0
  %v1253 = vadd.f32 %v200, %v1252
  %v1254 = vpop.f32.mrf.mxu0
  %v1255 = vadd.f32 %v200, %v1254
  %1256 = vmatmul.bf16.gmra.mxu0 %v710
  %v1257 = vpop.f32.mrf.mxu0
  %v1258 = vadd.f32 %v200, %v1257
  %v1259 = vpop.f32.mrf.mxu0
  %v1260 = vadd.f32 %v200, %v1259
  %1261 = vmatmul.bf16.gmra.mxu0 %v712
  %v1262 = vpop.f32.mrf.mxu0
  %v1263 = vadd.f32 %v200, %v1262
  %v1264 = vpop.f32.mrf.mxu0
  %v1265 = vadd.f32 %v200, %v1264
  %1266 = vdwg.mxu0
  %1267 = vmatpush.bf16.msra.mxu0 %v921
  %1268 = vmatpush.bf16.msra.mxu0 %v920
  %1269 = vmatpush.bf16.msra.mxu0 %v919
  %1270 = vmatpush.bf16.msra.mxu0 %v918
  %1271 = vmatpush.bf16.msra.mxu0 %v917
  %1272 = vmatpush.bf16.msra.mxu0 %v916
  %1273 = vmatpush.bf16.msra.mxu0 %v915
  %1274 = vmatpush.bf16.msra.mxu0 %v914
  %1275 = vmatmul.bf16.gmra.mxu0 %v587
  %v1276 = vpop.f32.mrf.mxu0
  %v1277 = vadd.f32 %v948, %v1276
  %v1278 = vpop.f32.mrf.mxu0
  %v1279 = vadd.f32 %v950, %v1278
  %1280 = vmatmul.bf16.gmra.mxu0 %v589
  %v1281 = vpop.f32.mrf.mxu0
  %v1282 = vadd.f32 %v953, %v1281
  %v1283 = vpop.f32.mrf.mxu0
  %v1284 = vadd.f32 %v955, %v1283
  %1285 = vmatmul.bf16.gmra.mxu0 %v591
  %v1286 = vpop.f32.mrf.mxu0
  %v1287 = vadd.f32 %v958, %v1286
  %v1288 = vpop.f32.mrf.mxu0
  %v1289 = vadd.f32 %v960, %v1288
  %1290 = vmatmul.bf16.gmra.mxu0 %v593
  %v1291 = vpop.f32.mrf.mxu0
  %v1292 = vadd.f32 %v963, %v1291
  %v1293 = vpop.f32.mrf.mxu0
  %v1294 = vadd.f32 %v965, %v1293
  %1295 = vmatmul.bf16.gmra.mxu0 %v595
  %v1296 = vpop.f32.mrf.mxu0
  %v1297 = vadd.f32 %v968, %v1296
  %v1298 = vpop.f32.mrf.mxu0
  %v1299 = vadd.f32 %v970, %v1298
  %1300 = vmatmul.bf16.gmra.mxu0 %v597
  %v1301 = vpop.f32.mrf.mxu0
  %v1302 = vadd.f32 %v973, %v1301
  %v1303 = vpop.f32.mrf.mxu0
  %v1304 = vadd.f32 %v975, %v1303
  %1305 = vmatmul.bf16.gmra.mxu0 %v599
  %v1306 = vpop.f32.mrf.mxu0
  %v1307 = vadd.f32 %v978, %v1306
  %v1308 = vpop.f32.mrf.mxu0
  %v1309 = vadd.f32 %v980, %v1308
  %1310 = vmatmul.bf16.gmra.mxu0 %v601
  %v1311 = vpop.f32.mrf.mxu0
  %v1312 = vadd.f32 %v983, %v1311
  %v1313 = vpop.f32.mrf.mxu0
  %v1314 = vadd.f32 %v985, %v1313
  %1315 = vmatmul.bf16.gmra.mxu0 %v603
  %v1316 = vpop.f32.mrf.mxu0
  %v1317 = vadd.f32 %v988, %v1316
  %v1318 = vpop.f32.mrf.mxu0
  %v1319 = vadd.f32 %v990, %v1318
  %1320 = vmatmul.bf16.gmra.mxu0 %v605
  %v1321 = vpop.f32.mrf.mxu0
  %v1322 = vadd.f32 %v993, %v1321
  %v1323 = vpop.f32.mrf.mxu0
  %v1324 = vadd.f32 %v995, %v1323
  %1325 = vmatmul.bf16.gmra.mxu0 %v607
  %v1326 = vpop.f32.mrf.mxu0
  %v1327 = vadd.f32 %v998, %v1326
  %v1328 = vpop.f32.mrf.mxu0
  %v1329 = vadd.f32 %v1000, %v1328
  %1330 = vmatmul.bf16.gmra.mxu0 %v609
  %v1331 = vpop.f32.mrf.mxu0
  %v1332 = vadd.f32 %v1003, %v1331
  %v1333 = vpop.f32.mrf.mxu0
  %v1334 = vadd.f32 %v1005, %v1333
  %1335 = vmatmul.bf16.gmra.mxu0 %v611
  %v1336 = vpop.f32.mrf.mxu0
  %v1337 = vadd.f32 %v1008, %v1336
  %v1338 = vpop.f32.mrf.mxu0
  %v1339 = vadd.f32 %v1010, %v1338
  %1340 = vmatmul.bf16.gmra.mxu0 %v613
  %v1341 = vpop.f32.mrf.mxu0
  %v1342 = vadd.f32 %v1013, %v1341
  %v1343 = vpop.f32.mrf.mxu0
  %v1344 = vadd.f32 %v1015, %v1343
  %1345 = vmatmul.bf16.gmra.mxu0 %v615
  %v1346 = vpop.f32.mrf.mxu0
  %v1347 = vadd.f32 %v1018, %v1346
  %v1348 = vpop.f32.mrf.mxu0
  %v1349 = vadd.f32 %v1020, %v1348
  %1350 = vmatmul.bf16.gmra.mxu0 %v617
  %v1351 = vpop.f32.mrf.mxu0
  %v1352 = vadd.f32 %v1023, %v1351
  %v1353 = vpop.f32.mrf.mxu0
  %v1354 = vadd.f32 %v1025, %v1353
  %1355 = vmatmul.bf16.gmra.mxu0 %v619
  %v1356 = vpop.f32.mrf.mxu0
  %v1357 = vadd.f32 %v1028, %v1356
  %v1358 = vpop.f32.mrf.mxu0
  %v1359 = vadd.f32 %v1030, %v1358
  %1360 = vmatmul.bf16.gmra.mxu0 %v621
  %v1361 = vpop.f32.mrf.mxu0
  %v1362 = vadd.f32 %v1033, %v1361
  %v1363 = vpop.f32.mrf.mxu0
  %v1364 = vadd.f32 %v1035, %v1363
  %1365 = vmatmul.bf16.gmra.mxu0 %v623
  %v1366 = vpop.f32.mrf.mxu0
  %v1367 = vadd.f32 %v1038, %v1366
  %v1368 = vpop.f32.mrf.mxu0
  %v1369 = vadd.f32 %v1040, %v1368
  %1370 = vmatmul.bf16.gmra.mxu0 %v625
  %v1371 = vpop.f32.mrf.mxu0
  %v1372 = vadd.f32 %v1043, %v1371
  %v1373 = vpop.f32.mrf.mxu0
  %v1374 = vadd.f32 %v1045, %v1373
  %1375 = vmatmul.bf16.gmra.mxu0 %v627
  %v1376 = vpop.f32.mrf.mxu0
  %v1377 = vadd.f32 %v1048, %v1376
  %v1378 = vpop.f32.mrf.mxu0
  %v1379 = vadd.f32 %v1050, %v1378
  %1380 = vmatmul.bf16.gmra.mxu0 %v629
  %v1381 = vpop.f32.mrf.mxu0
  %v1382 = vadd.f32 %v1053, %v1381
  %v1383 = vpop.f32.mrf.mxu0
  %v1384 = vadd.f32 %v1055, %v1383
  %1385 = vmatmul.bf16.gmra.mxu0 %v631
  %v1386 = vpop.f32.mrf.mxu0
  %v1387 = vadd.f32 %v1058, %v1386
  %v1388 = vpop.f32.mrf.mxu0
  %v1389 = vadd.f32 %v1060, %v1388
  %1390 = vmatmul.bf16.gmra.mxu0 %v633
  %v1391 = vpop.f32.mrf.mxu0
  %v1392 = vadd.f32 %v1063, %v1391
  %v1393 = vpop.f32.mrf.mxu0
  %v1394 = vadd.f32 %v1065, %v1393
  %1395 = vmatmul.bf16.gmra.mxu0 %v635
  %v1396 = vpop.f32.mrf.mxu0
  %v1397 = vadd.f32 %v1068, %v1396
  %v1398 = vpop.f32.mrf.mxu0
  %v1399 = vadd.f32 %v1070, %v1398
  %1400 = vmatmul.bf16.gmra.mxu0 %v637
  %v1401 = vpop.f32.mrf.mxu0
  %v1402 = vadd.f32 %v1073, %v1401
  %v1403 = vpop.f32.mrf.mxu0
  %v1404 = vadd.f32 %v1075, %v1403
  %1405 = vmatmul.bf16.gmra.mxu0 %v639
  %v1406 = vpop.f32.mrf.mxu0
  %v1407 = vadd.f32 %v1078, %v1406
  %v1408 = vpop.f32.mrf.mxu0
  %v1409 = vadd.f32 %v1080, %v1408
  %1410 = vmatmul.bf16.gmra.mxu0 %v641
  %v1411 = vpop.f32.mrf.mxu0
  %v1412 = vadd.f32 %v1083, %v1411
  %v1413 = vpop.f32.mrf.mxu0
  %v1414 = vadd.f32 %v1085, %v1413
  %1415 = vmatmul.bf16.gmra.mxu0 %v643
  %v1416 = vpop.f32.mrf.mxu0
  %v1417 = vadd.f32 %v1088, %v1416
  %v1418 = vpop.f32.mrf.mxu0
  %v1419 = vadd.f32 %v1090, %v1418
  %1420 = vmatmul.bf16.gmra.mxu0 %v645
  %v1421 = vpop.f32.mrf.mxu0
  %v1422 = vadd.f32 %v1093, %v1421
  %v1423 = vpop.f32.mrf.mxu0
  %v1424 = vadd.f32 %v1095, %v1423
  %1425 = vmatmul.bf16.gmra.mxu0 %v647
  %v1426 = vpop.f32.mrf.mxu0
  %v1427 = vadd.f32 %v1098, %v1426
  %v1428 = vpop.f32.mrf.mxu0
  %v1429 = vadd.f32 %v1100, %v1428
  %1430 = vmatmul.bf16.gmra.mxu0 %v649
  %v1431 = vpop.f32.mrf.mxu0
  %v1432 = vadd.f32 %v1103, %v1431
  %v1433 = vpop.f32.mrf.mxu0
  %v1434 = vadd.f32 %v1105, %v1433
  %1435 = vmatmul.bf16.gmra.mxu0 %v651
  %v1436 = vpop.f32.mrf.mxu0
  %v1437 = vadd.f32 %v1108, %v1436
  %v1438 = vpop.f32.mrf.mxu0
  %v1439 = vadd.f32 %v1110, %v1438
  %1440 = vmatmul.bf16.gmra.mxu0 %v653
  %v1441 = vpop.f32.mrf.mxu0
  %v1442 = vadd.f32 %v1113, %v1441
  %v1443 = vpop.f32.mrf.mxu0
  %v1444 = vadd.f32 %v1115, %v1443
  %1445 = vmatmul.bf16.gmra.mxu0 %v655
  %v1446 = vpop.f32.mrf.mxu0
  %v1447 = vadd.f32 %v1118, %v1446
  %v1448 = vpop.f32.mrf.mxu0
  %v1449 = vadd.f32 %v1120, %v1448
  %1450 = vmatmul.bf16.gmra.mxu0 %v657
  %v1451 = vpop.f32.mrf.mxu0
  %v1452 = vadd.f32 %v1123, %v1451
  %v1453 = vpop.f32.mrf.mxu0
  %v1454 = vadd.f32 %v1125, %v1453
  %1455 = vmatmul.bf16.gmra.mxu0 %v659
  %v1456 = vpop.f32.mrf.mxu0
  %v1457 = vadd.f32 %v1128, %v1456
  %v1458 = vpop.f32.mrf.mxu0
  %v1459 = vadd.f32 %v1130, %v1458
  %1460 = vmatmul.bf16.gmra.mxu0 %v661
  %v1461 = vpop.f32.mrf.mxu0
  %v1462 = vadd.f32 %v1133, %v1461
  %v1463 = vpop.f32.mrf.mxu0
  %v1464 = vadd.f32 %v1135, %v1463
  %1465 = vmatmul.bf16.gmra.mxu0 %v663
  %v1466 = vpop.f32.mrf.mxu0
  %v1467 = vadd.f32 %v1138, %v1466
  %v1468 = vpop.f32.mrf.mxu0
  %v1469 = vadd.f32 %v1140, %v1468
  %1470 = vmatmul.bf16.gmra.mxu0 %v665
  %v1471 = vpop.f32.mrf.mxu0
  %v1472 = vadd.f32 %v1143, %v1471
  %v1473 = vpop.f32.mrf.mxu0
  %v1474 = vadd.f32 %v1145, %v1473
  %1475 = vmatmul.bf16.gmra.mxu0 %v667
  %v1476 = vpop.f32.mrf.mxu0
  %v1477 = vadd.f32 %v1148, %v1476
  %v1478 = vpop.f32.mrf.mxu0
  %v1479 = vadd.f32 %v1150, %v1478
  %1480 = vmatmul.bf16.gmra.mxu0 %v669
  %v1481 = vpop.f32.mrf.mxu0
  %v1482 = vadd.f32 %v1153, %v1481
  %v1483 = vpop.f32.mrf.mxu0
  %v1484 = vadd.f32 %v1155, %v1483
  %1485 = vmatmul.bf16.gmra.mxu0 %v671
  %v1486 = vpop.f32.mrf.mxu0
  %v1487 = vadd.f32 %v1158, %v1486
  %v1488 = vpop.f32.mrf.mxu0
  %v1489 = vadd.f32 %v1160, %v1488
  %1490 = vmatmul.bf16.gmra.mxu0 %v673
  %v1491 = vpop.f32.mrf.mxu0
  %v1492 = vadd.f32 %v1163, %v1491
  %v1493 = vpop.f32.mrf.mxu0
  %v1494 = vadd.f32 %v1165, %v1493
  %1495 = vmatmul.bf16.gmra.mxu0 %v675
  %v1496 = vpop.f32.mrf.mxu0
  %v1497 = vadd.f32 %v1168, %v1496
  %v1498 = vpop.f32.mrf.mxu0
  %v1499 = vadd.f32 %v1170, %v1498
  %1500 = vmatmul.bf16.gmra.mxu0 %v677
  %v1501 = vpop.f32.mrf.mxu0
  %v1502 = vadd.f32 %v1173, %v1501
  %v1503 = vpop.f32.mrf.mxu0
  %v1504 = vadd.f32 %v1175, %v1503
  %1505 = vmatmul.bf16.gmra.mxu0 %v679
  %v1506 = vpop.f32.mrf.mxu0
  %v1507 = vadd.f32 %v1178, %v1506
  %v1508 = vpop.f32.mrf.mxu0
  %v1509 = vadd.f32 %v1180, %v1508
  %1510 = vmatmul.bf16.gmra.mxu0 %v681
  %v1511 = vpop.f32.mrf.mxu0
  %v1512 = vadd.f32 %v1183, %v1511
  %v1513 = vpop.f32.mrf.mxu0
  %v1514 = vadd.f32 %v1185, %v1513
  %1515 = vmatmul.bf16.gmra.mxu0 %v683
  %v1516 = vpop.f32.mrf.mxu0
  %v1517 = vadd.f32 %v1188, %v1516
  %v1518 = vpop.f32.mrf.mxu0
  %v1519 = vadd.f32 %v1190, %v1518
  %1520 = vmatmul.bf16.gmra.mxu0 %v685
  %v1521 = vpop.f32.mrf.mxu0
  %v1522 = vadd.f32 %v1193, %v1521
  %v1523 = vpop.f32.mrf.mxu0
  %v1524 = vadd.f32 %v1195, %v1523
  %1525 = vmatmul.bf16.gmra.mxu0 %v687
  %v1526 = vpop.f32.mrf.mxu0
  %v1527 = vadd.f32 %v1198, %v1526
  %v1528 = vpop.f32.mrf.mxu0
  %v1529 = vadd.f32 %v1200, %v1528
  %1530 = vmatmul.bf16.gmra.mxu0 %v689
  %v1531 = vpop.f32.mrf.mxu0
  %v1532 = vadd.f32 %v1203, %v1531
  %v1533 = vpop.f32.mrf.mxu0
  %v1534 = vadd.f32 %v1205, %v1533
  %1535 = vmatmul.bf16.gmra.mxu0 %v691
  %v1536 = vpop.f32.mrf.mxu0
  %v1537 = vadd.f32 %v1208, %v1536
  %v1538 = vpop.f32.mrf.mxu0
  %v1539 = vadd.f32 %v1210, %v1538
  %1540 = vmatmul.bf16.gmra.mxu0 %v693
  %v1541 = vpop.f32.mrf.mxu0
  %v1542 = vadd.f32 %v1213, %v1541
  %v1543 = vpop.f32.mrf.mxu0
  %v1544 = vadd.f32 %v1215, %v1543
  %1545 = vmatmul.bf16.gmra.mxu0 %v695
  %v1546 = vpop.f32.mrf.mxu0
  %v1547 = vadd.f32 %v1218, %v1546
  %v1548 = vpop.f32.mrf.mxu0
  %v1549 = vadd.f32 %v1220, %v1548
  %1550 = vmatmul.bf16.gmra.mxu0 %v697
  %v1551 = vpop.f32.mrf.mxu0
  %v1552 = vadd.f32 %v1223, %v1551
  %v1553 = vpop.f32.mrf.mxu0
  %v1554 = vadd.f32 %v1225, %v1553
  %1555 = vmatmul.bf16.gmra.mxu0 %v699
  %v1556 = vpop.f32.mrf.mxu0
  %v1557 = vadd.f32 %v1228, %v1556
  %v1558 = vpop.f32.mrf.mxu0
  %v1559 = vadd.f32 %v1230, %v1558
  %1560 = vmatmul.bf16.gmra.mxu0 %v701
  %v1561 = vpop.f32.mrf.mxu0
  %v1562 = vadd.f32 %v1233, %v1561
  %v1563 = vpop.f32.mrf.mxu0
  %v1564 = vadd.f32 %v1235, %v1563
  %1565 = vmatmul.bf16.gmra.mxu0 %v703
  %v1566 = vpop.f32.mrf.mxu0
  %v1567 = vadd.f32 %v1238, %v1566
  %v1568 = vpop.f32.mrf.mxu0
  %v1569 = vadd.f32 %v1240, %v1568
  %1570 = vmatmul.bf16.gmra.mxu0 %v705
  %v1571 = vpop.f32.mrf.mxu0
  %v1572 = vadd.f32 %v1243, %v1571
  %v1573 = vpop.f32.mrf.mxu0
  %v1574 = vadd.f32 %v1245, %v1573
  %1575 = vmatmul.bf16.gmra.mxu0 %v707
  %v1576 = vpop.f32.mrf.mxu0
  %v1577 = vadd.f32 %v1248, %v1576
  %v1578 = vpop.f32.mrf.mxu0
  %v1579 = vadd.f32 %v1250, %v1578
  %1580 = vmatmul.bf16.gmra.mxu0 %v709
  %v1581 = vpop.f32.mrf.mxu0
  %v1582 = vadd.f32 %v1253, %v1581
  %v1583 = vpop.f32.mrf.mxu0
  %v1584 = vadd.f32 %v1255, %v1583
  %1585 = vmatmul.bf16.gmra.mxu0 %v711
  %v1586 = vpop.f32.mrf.mxu0
  %v1587 = vadd.f32 %v1258, %v1586
  %v1588 = vpop.f32.mrf.mxu0
  %v1589 = vadd.f32 %v1260, %v1588
  %1590 = vmatmul.bf16.gmra.mxu0 %v713
  %v1591 = vpop.f32.mrf.mxu0
  %v1592 = vadd.f32 %v1263, %v1591
  %v1593 = vpop.f32.mrf.mxu0
  %v1594 = vadd.f32 %v1265, %v1593
  %1595 = vdwg.mxu0
  %v1596 = vmax.f32 %v1277, 0.0
  %v1597 = vmax.f32 %v1279, 0.0
  %v1598 = vmax.f32 %v1282, 0.0
  %v1599 = vmax.f32 %v1284, 0.0
  %v1600 = vmax.f32 %v1287, 0.0
  %v1601 = vmax.f32 %v1289, 0.0
  %v1602 = vmax.f32 %v1292, 0.0
  %v1603 = vmax.f32 %v1294, 0.0
  %v1604 = vmax.f32 %v1297, 0.0
  %v1605 = vmax.f32 %v1299, 0.0
  %v1606 = vmax.f32 %v1302, 0.0
  %v1607 = vmax.f32 %v1304, 0.0
  %v1608 = vmax.f32 %v1307, 0.0
  %v1609 = vmax.f32 %v1309, 0.0
  %v1610 = vmax.f32 %v1312, 0.0
  %v1611 = vmax.f32 %v1314, 0.0
  %v1612 = vmax.f32 %v1317, 0.0
  %v1613 = vmax.f32 %v1319, 0.0
  %v1614 = vmax.f32 %v1322, 0.0
  %v1615 = vmax.f32 %v1324, 0.0
  %v1616 = vmax.f32 %v1327, 0.0
  %v1617 = vmax.f32 %v1329, 0.0
  %v1618 = vmax.f32 %v1332, 0.0
  %v1619 = vmax.f32 %v1334, 0.0
  %v1620 = vmax.f32 %v1337, 0.0
  %v1621 = vmax.f32 %v1339, 0.0
  %v1622 = vmax.f32 %v1342, 0.0
  %v1623 = vmax.f32 %v1344, 0.0
  %v1624 = vmax.f32 %v1347, 0.0
  %v1625 = vmax.f32 %v1349, 0.0
  %v1626 = vmax.f32 %v1352, 0.0
  %v1627 = vmax.f32 %v1354, 0.0
  %v1628 = vmax.f32 %v1357, 0.0
  %v1629 = vmax.f32 %v1359, 0.0
  %v1630 = vmax.f32 %v1362, 0.0
  %v1631 = vmax.f32 %v1364, 0.0
  %v1632 = vmax.f32 %v1367, 0.0
  %v1633 = vmax.f32 %v1369, 0.0
  %v1634 = vmax.f32 %v1372, 0.0
  %v1635 = vmax.f32 %v1374, 0.0
  %v1636 = vmax.f32 %v1377, 0.0
  %v1637 = vmax.f32 %v1379, 0.0
  %v1638 = vmax.f32 %v1382, 0.0
  %v1639 = vmax.f32 %v1384, 0.0
  %v1640 = vmax.f32 %v1387, 0.0
  %v1641 = vmax.f32 %v1389, 0.0
  %v1642 = vmax.f32 %v1392, 0.0
  %v1643 = vmax.f32 %v1394, 0.0
  %v1644 = vmax.f32 %v1397, 0.0
  %v1645 = vmax.f32 %v1399, 0.0
  %v1646 = vmax.f32 %v1402, 0.0
  %v1647 = vmax.f32 %v1404, 0.0
  %v1648 = vmax.f32 %v1407, 0.0
  %v1649 = vmax.f32 %v1409, 0.0
  %v1650 = vmax.f32 %v1412, 0.0
  %v1651 = vmax.f32 %v1414, 0.0
  %v1652 = vmax.f32 %v1417, 0.0
  %v1653 = vmax.f32 %v1419, 0.0
  %v1654 = vmax.f32 %v1422, 0.0
  %v1655 = vmax.f32 %v1424, 0.0
  %v1656 = vmax.f32 %v1427, 0.0
  %v1657 = vmax.f32 %v1429, 0.0
  %v1658 = vmax.f32 %v1432, 0.0
  %v1659 = vmax.f32 %v1434, 0.0
  %v1660 = vmax.f32 %v1437, 0.0
  %v1661 = vmax.f32 %v1439, 0.0
  %v1662 = vmax.f32 %v1442, 0.0
  %v1663 = vmax.f32 %v1444, 0.0
  %v1664 = vmax.f32 %v1447, 0.0
  %v1665 = vmax.f32 %v1449, 0.0
  %v1666 = vmax.f32 %v1452, 0.0
  %v1667 = vmax.f32 %v1454, 0.0
  %v1668 = vmax.f32 %v1457, 0.0
  %v1669 = vmax.f32 %v1459, 0.0
  %v1670 = vmax.f32 %v1462, 0.0
  %v1671 = vmax.f32 %v1464, 0.0
  %v1672 = vmax.f32 %v1467, 0.0
  %v1673 = vmax.f32 %v1469, 0.0
  %v1674 = vmax.f32 %v1472, 0.0
  %v1675 = vmax.f32 %v1474, 0.0
  %v1676 = vmax.f32 %v1477, 0.0
  %v1677 = vmax.f32 %v1479, 0.0
  %v1678 = vmax.f32 %v1482, 0.0
  %v1679 = vmax.f32 %v1484, 0.0
  %v1680 = vmax.f32 %v1487, 0.0
  %v1681 = vmax.f32 %v1489, 0.0
  %v1682 = vmax.f32 %v1492, 0.0
  %v1683 = vmax.f32 %v1494, 0.0
  %v1684 = vmax.f32 %v1497, 0.0
  %v1685 = vmax.f32 %v1499, 0.0
  %v1686 = vmax.f32 %v1502, 0.0
  %v1687 = vmax.f32 %v1504, 0.0
  %v1688 = vmax.f32 %v1507, 0.0
  %v1689 = vmax.f32 %v1509, 0.0
  %v1690 = vmax.f32 %v1512, 0.0
  %v1691 = vmax.f32 %v1514, 0.0
  %v1692 = vmax.f32 %v1517, 0.0
  %v1693 = vmax.f32 %v1519, 0.0
  %v1694 = vmax.f32 %v1522, 0.0
  %v1695 = vmax.f32 %v1524, 0.0
  %v1696 = vmax.f32 %v1527, 0.0
  %v1697 = vmax.f32 %v1529, 0.0
  %v1698 = vmax.f32 %v1532, 0.0
  %v1699 = vmax.f32 %v1534, 0.0
  %v1700 = vmax.f32 %v1537, 0.0
  %v1701 = vmax.f32 %v1539, 0.0
  %v1702 = vmax.f32 %v1542, 0.0
  %v1703 = vmax.f32 %v1544, 0.0
  %v1704 = vmax.f32 %v1547, 0.0
  %v1705 = vmax.f32 %v1549, 0.0
  %v1706 = vmax.f32 %v1552, 0.0
  %v1707 = vmax.f32 %v1554, 0.0
  %v1708 = vmax.f32 %v1557, 0.0
  %v1709 = vmax.f32 %v1559, 0.0
  %v1710 = vmax.f32 %v1562, 0.0
  %v1711 = vmax.f32 %v1564, 0.0
  %v1712 = vmax.f32 %v1567, 0.0
  %v1713 = vmax.f32 %v1569, 0.0
  %v1714 = vmax.f32 %v1572, 0.0
  %v1715 = vmax.f32 %v1574, 0.0
  %v1716 = vmax.f32 %v1577, 0.0
  %v1717 = vmax.f32 %v1579, 0.0
  %v1718 = vmax.f32 %v1582, 0.0
  %v1719 = vmax.f32 %v1584, 0.0
  %v1720 = vmax.f32 %v1587, 0.0
  %v1721 = vmax.f32 %v1589, 0.0
  %v1722 = vmax.f32 %v1592, 0.0
  %v1723 = vmax.f32 %v1594, 0.0
  %v1724 = vpack.c.bf16 %v1596, %v1596
  %v1725 = vpack.c.bf16 %v1597, %v1597
  %v1726 = vpack.c.bf16 %v1598, %v1598
  %v1727 = vpack.c.bf16 %v1599, %v1599
  %v1728 = vpack.c.bf16 %v1600, %v1600
  %v1729 = vpack.c.bf16 %v1601, %v1601
  %v1730 = vpack.c.bf16 %v1602, %v1602
  %v1731 = vpack.c.bf16 %v1603, %v1603
  %v1732 = vpack.c.bf16 %v1604, %v1604
  %v1733 = vpack.c.bf16 %v1605, %v1605
  %v1734 = vpack.c.bf16 %v1606, %v1606
  %v1735 = vpack.c.bf16 %v1607, %v1607
  %v1736 = vpack.c.bf16 %v1608, %v1608
  %v1737 = vpack.c.bf16 %v1609, %v1609
  %v1738 = vpack.c.bf16 %v1610, %v1610
  %v1739 = vpack.c.bf16 %v1611, %v1611
  %v1740 = vpack.c.bf16 %v1612, %v1612
  %v1741 = vpack.c.bf16 %v1613, %v1613
  %v1742 = vpack.c.bf16 %v1614, %v1614
  %v1743 = vpack.c.bf16 %v1615, %v1615
  %v1744 = vpack.c.bf16 %v1616, %v1616
  %v1745 = vpack.c.bf16 %v1617, %v1617
  %v1746 = vpack.c.bf16 %v1618, %v1618
  %v1747 = vpack.c.bf16 %v1619, %v1619
  %v1748 = vpack.c.bf16 %v1620, %v1620
  %v1749 = vpack.c.bf16 %v1621, %v1621
  %v1750 = vpack.c.bf16 %v1622, %v1622
  %v1751 = vpack.c.bf16 %v1623, %v1623
  %v1752 = vpack.c.bf16 %v1624, %v1624
  %v1753 = vpack.c.bf16 %v1625, %v1625
  %v1754 = vpack.c.bf16 %v1626, %v1626
  %v1755 = vpack.c.bf16 %v1627, %v1627
  %v1756 = vpack.c.bf16 %v1628, %v1628
  %v1757 = vpack.c.bf16 %v1629, %v1629
  %v1758 = vpack.c.bf16 %v1630, %v1630
  %v1759 = vpack.c.bf16 %v1631, %v1631
  %v1760 = vpack.c.bf16 %v1632, %v1632
  %v1761 = vpack.c.bf16 %v1633, %v1633
  %v1762 = vpack.c.bf16 %v1634, %v1634
  %v1763 = vpack.c.bf16 %v1635, %v1635
  %v1764 = vpack.c.bf16 %v1636, %v1636
  %v1765 = vpack.c.bf16 %v1637, %v1637
  %v1766 = vpack.c.bf16 %v1638, %v1638
  %v1767 = vpack.c.bf16 %v1639, %v1639
  %v1768 = vpack.c.bf16 %v1640, %v1640
  %v1769 = vpack.c.bf16 %v1641, %v1641
  %v1770 = vpack.c.bf16 %v1642, %v1642
  %v1771 = vpack.c.bf16 %v1643, %v1643
  %v1772 = vpack.c.bf16 %v1644, %v1644
  %v1773 = vpack.c.bf16 %v1645, %v1645
  %v1774 = vpack.c.bf16 %v1646, %v1646
  %v1775 = vpack.c.bf16 %v1647, %v1647
  %v1776 = vpack.c.bf16 %v1648, %v1648
  %v1777 = vpack.c.bf16 %v1649, %v1649
  %v1778 = vpack.c.bf16 %v1650, %v1650
  %v1779 = vpack.c.bf16 %v1651, %v1651
  %v1780 = vpack.c.bf16 %v1652, %v1652
  %v1781 = vpack.c.bf16 %v1653, %v1653
  %v1782 = vpack.c.bf16 %v1654, %v1654
  %v1783 = vpack.c.bf16 %v1655, %v1655
  %v1784 = vpack.c.bf16 %v1656, %v1656
  %v1785 = vpack.c.bf16 %v1657, %v1657
  %v1786 = vpack.c.bf16 %v1658, %v1658
  %v1787 = vpack.c.bf16 %v1659, %v1659
  %v1788 = vpack.c.bf16 %v1660, %v1660
  %v1789 = vpack.c.bf16 %v1661, %v1661
  %v1790 = vpack.c.bf16 %v1662, %v1662
  %v1791 = vpack.c.bf16 %v1663, %v1663
  %v1792 = vpack.c.bf16 %v1664, %v1664
  %v1793 = vpack.c.bf16 %v1665, %v1665
  %v1794 = vpack.c.bf16 %v1666, %v1666
  %v1795 = vpack.c.bf16 %v1667, %v1667
  %v1796 = vpack.c.bf16 %v1668, %v1668
  %v1797 = vpack.c.bf16 %v1669, %v1669
  %v1798 = vpack.c.bf16 %v1670, %v1670
  %v1799 = vpack.c.bf16 %v1671, %v1671
  %v1800 = vpack.c.bf16 %v1672, %v1672
  %v1801 = vpack.c.bf16 %v1673, %v1673
  %v1802 = vpack.c.bf16 %v1674, %v1674
  %v1803 = vpack.c.bf16 %v1675, %v1675
  %v1804 = vpack.c.bf16 %v1676, %v1676
  %v1805 = vpack.c.bf16 %v1677, %v1677
  %v1806 = vpack.c.bf16 %v1678, %v1678
  %v1807 = vpack.c.bf16 %v1679, %v1679
  %v1808 = vpack.c.bf16 %v1680, %v1680
  %v1809 = vpack.c.bf16 %v1681, %v1681
  %v1810 = vpack.c.bf16 %v1682, %v1682
  %v1811 = vpack.c.bf16 %v1683, %v1683
  %v1812 = vpack.c.bf16 %v1684, %v1684
  %v1813 = vpack.c.bf16 %v1685, %v1685
  %v1814 = vpack.c.bf16 %v1686, %v1686
  %v1815 = vpack.c.bf16 %v1687, %v1687
  %v1816 = vpack.c.bf16 %v1688, %v1688
  %v1817 = vpack.c.bf16 %v1689, %v1689
  %v1818 = vpack.c.bf16 %v1690, %v1690
  %v1819 = vpack.c.bf16 %v1691, %v1691
  %v1820 = vpack.c.bf16 %v1692, %v1692
  %v1821 = vpack.c.bf16 %v1693, %v1693
  %v1822 = vpack.c.bf16 %v1694, %v1694
  %v1823 = vpack.c.bf16 %v1695, %v1695
  %v1824 = vpack.c.bf16 %v1696, %v1696
  %v1825 = vpack.c.bf16 %v1697, %v1697
  %v1826 = vpack.c.bf16 %v1698, %v1698
  %v1827 = vpack.c.bf16 %v1699, %v1699
  %v1828 = vpack.c.bf16 %v1700, %v1700
  %v1829 = vpack.c.bf16 %v1701, %v1701
  %v1830 = vpack.c.bf16 %v1702, %v1702
  %v1831 = vpack.c.bf16 %v1703, %v1703
  %v1832 = vpack.c.bf16 %v1704, %v1704
  %v1833 = vpack.c.bf16 %v1705, %v1705
  %v1834 = vpack.c.bf16 %v1706, %v1706
  %v1835 = vpack.c.bf16 %v1707, %v1707
  %v1836 = vpack.c.bf16 %v1708, %v1708
  %v1837 = vpack.c.bf16 %v1709, %v1709
  %v1838 = vpack.c.bf16 %v1710, %v1710
  %v1839 = vpack.c.bf16 %v1711, %v1711
  %v1840 = vpack.c.bf16 %v1712, %v1712
  %v1841 = vpack.c.bf16 %v1713, %v1713
  %v1842 = vpack.c.bf16 %v1714, %v1714
  %v1843 = vpack.c.bf16 %v1715, %v1715
  %v1844 = vpack.c.bf16 %v1716, %v1716
  %v1845 = vpack.c.bf16 %v1717, %v1717
  %v1846 = vpack.c.bf16 %v1718, %v1718
  %v1847 = vpack.c.bf16 %v1719, %v1719
  %v1848 = vpack.c.bf16 %v1720, %v1720
  %v1849 = vpack.c.bf16 %v1721, %v1721
  %v1850 = vpack.c.bf16 %v1722, %v1722
  %v1851 = vpack.c.bf16 %v1723, %v1723
  %v1852 = vld [vmem:[%s3] sm:$0xf]
  %v1853 = vld [vmem:[%s3 + $0x4] sm:$0xf]
  %v1854 = vld [vmem:[%s3 + $0x8] sm:$0xf]
  %v1855 = vld [vmem:[%s3 + $0xc] sm:$0xf]
  %v1856 = vld [vmem:[%s3 + $0x10] sm:$0xf]
  %v1857 = vld [vmem:[%s3 + $0x14] sm:$0xf]
  %v1858 = vld [vmem:[%s3 + $0x18] sm:$0xf]
  %v1859 = vld [vmem:[%s3 + $0x1c] sm:$0xf]
  %v1860 = vld [vmem:[%s3 + $0x20] sm:$0xf]
  %v1861 = vld [vmem:[%s3 + $0x24] sm:$0xf]
  %v1862 = vld [vmem:[%s3 + $0x28] sm:$0xf]
  %v1863 = vld [vmem:[%s3 + $0x2c] sm:$0xf]
  %v1864 = vld [vmem:[%s3 + $0x30] sm:$0xf]
  %v1865 = vld [vmem:[%s3 + $0x34] sm:$0xf]
  %v1866 = vld [vmem:[%s3 + $0x38] sm:$0xf]
  %v1867 = vld [vmem:[%s3 + $0x3c] sm:$0xf]
  %s1868 = scalar_lea.vmem %s3, 64
  %v1869 = vld [vmem:[%s1868] sm:$0xf]
  %v1870 = vld [vmem:[%s1868 + $0x4] sm:$0xf]
  %v1871 = vld [vmem:[%s1868 + $0x8] sm:$0xf]
  %v1872 = vld [vmem:[%s1868 + $0xc] sm:$0xf]
  %v1873 = vld [vmem:[%s1868 + $0x10] sm:$0xf]
  %v1874 = vld [vmem:[%s1868 + $0x14] sm:$0xf]
  %v1875 = vld [vmem:[%s1868 + $0x18] sm:$0xf]
  %v1876 = vld [vmem:[%s1868 + $0x1c] sm:$0xf]
  %v1877 = vld [vmem:[%s1868 + $0x20] sm:$0xf]
  %v1878 = vld [vmem:[%s1868 + $0x24] sm:$0xf]
  %v1879 = vld [vmem:[%s1868 + $0x28] sm:$0xf]
  %v1880 = vld [vmem:[%s1868 + $0x2c] sm:$0xf]
  %v1881 = vld [vmem:[%s1868 + $0x30] sm:$0xf]
  %v1882 = vld [vmem:[%s1868 + $0x34] sm:$0xf]
  %v1883 = vld [vmem:[%s1868 + $0x38] sm:$0xf]
  %v1884 = vld [vmem:[%s1868 + $0x3c] sm:$0xf]
  %v1903 = vunpack.c.l.b16 %v1756
  %v1904 = vunpack.c.l.b16 %v1757
  %v1905 = vunpack.c.l.b16 %v1758
  %v1906 = vunpack.c.l.b16 %v1759
  %v1907 = vunpack.c.l.b16 %v1760
  %v1908 = vunpack.c.l.b16 %v1761
  %v1909 = vunpack.c.l.b16 %v1764
  %v1910 = vunpack.c.l.b16 %v1765
  %v1911 = vunpack.c.l.b16 %v1766
  %v1912 = vunpack.c.l.b16 %v1767
  %v1913 = vunpack.c.l.b16 %v1768
  %v1914 = vunpack.c.l.b16 %v1769
  %v1915 = vunpack.c.l.b16 %v1772
  %v1916 = vunpack.c.l.b16 %v1773
  %v1917 = vunpack.c.l.b16 %v1774
  %v1918 = vunpack.c.l.b16 %v1775
  %v1919 = vunpack.c.l.b16 %v1776
  %v1920 = vunpack.c.l.b16 %v1777
  %v1921 = vpack.c.b16 %v1904, %v1903
  %v1922 = vpack.c.b16 %v1906, %v1905
  %v1923 = vpack.c.b16 %v1908, %v1907
  %v1924 = vpack.c.b16 %v1910, %v1909
  %v1925 = vpack.c.b16 %v1912, %v1911
  %v1926 = vpack.c.b16 %v1914, %v1913
  %v1927 = vpack.c.b16 %v1916, %v1915
  %v1928 = vpack.c.b16 %v1918, %v1917
  %v1929 = vpack.c.b16 %v1920, %v1919
  %v1955 = vunpack.c.l.b16 %v1869
  %v1956 = vunpack.c.l.b16 %v1870
  %v1957 = vunpack.c.l.b16 %v1871
  %v1958 = vunpack.c.l.b16 %v1872
  %v1959 = vunpack.c.l.b16 %v1873
  %v1960 = vunpack.c.l.b16 %v1874
  %v1961 = vunpack.c.l.b16 %v1875
  %v1962 = vunpack.c.l.b16 %v1876
  %v1963 = vunpack.c.l.b16 %v1877
  %v1964 = vunpack.c.l.b16 %v1878
  %v1965 = vunpack.c.l.b16 %v1879
  %v1966 = vunpack.c.l.b16 %v1880
  %v1967 = vunpack.c.l.b16 %v1881
  %v1968 = vunpack.c.l.b16 %v1882
  %v1969 = vunpack.c.l.b16 %v1883
  %v1970 = vunpack.c.l.b16 %v1884
  %v1971 = vpack.c.b16 %v1956, %v1955
  %v1972 = vpack.c.b16 %v1958, %v1957
  %v1973 = vpack.c.b16 %v1960, %v1959
  %v1974 = vpack.c.b16 %v1962, %v1961
  %v1975 = vpack.c.b16 %v1964, %v1963
  %v1976 = vpack.c.b16 %v1966, %v1965
  %v1977 = vpack.c.b16 %v1968, %v1967
  %v1978 = vpack.c.b16 %v1970, %v1969
  %1987 = vmatpush.bf16.msra.mxu0 %v1978
  %1988 = vmatpush.bf16.msra.mxu0 %v1977
  %1989 = vmatpush.bf16.msra.mxu0 %v1976
  %1990 = vmatpush.bf16.msra.mxu0 %v1975
  %1991 = vmatpush.bf16.msra.mxu0 %v1974
  %1992 = vmatpush.bf16.msra.mxu0 %v1973
  %1993 = vmatpush.bf16.msra.mxu0 %v1972
  %1994 = vmatpush.bf16.msra.mxu0 %v1971
  %1995 = vmatmul.bf16.gmra.mxu0 %v1921
  %v1996 = vpop.f32.mrf.mxu0
  %v1997 = vadd.f32 0.0, %v1996
  %v1998 = vpop.f32.mrf.mxu0
  %v1999 = vadd.f32 0.0, %v1998
  %2000 = vmatmul.bf16.gmra.mxu0 %v1922
  %v2001 = vpop.f32.mrf.mxu0
  %v2002 = vadd.f32 0.0, %v2001
  %v2003 = vpop.f32.mrf.mxu0
  %v2004 = vadd.f32 0.0, %v2003
  %2005 = vmatmul.bf16.gmra.mxu0 %v1923
  %v2006 = vpop.f32.mrf.mxu0
  %v2007 = vadd.f32 0.0, %v2006
  %v2008 = vpop.f32.mrf.mxu0
  %v2009 = vadd.f32 0.0, %v2008
  %2010 = vmatmul.bf16.gmra.mxu0 %v1924
  %v2011 = vpop.f32.mrf.mxu0
  %v2012 = vadd.f32 0.0, %v2011
  %v2013 = vpop.f32.mrf.mxu0
  %v2014 = vadd.f32 0.0, %v2013
  %2015 = vmatmul.bf16.gmra.mxu0 %v1925
  %v2016 = vpop.f32.mrf.mxu0
  %v2017 = vadd.f32 0.0, %v2016
  %v2018 = vpop.f32.mrf.mxu0
  %v2019 = vadd.f32 0.0, %v2018
  %2020 = vmatmul.bf16.gmra.mxu0 %v1926
  %v2021 = vpop.f32.mrf.mxu0
  %v2022 = vadd.f32 0.0, %v2021
  %v2023 = vpop.f32.mrf.mxu0
  %v2024 = vadd.f32 0.0, %v2023
  %2025 = vmatmul.bf16.gmra.mxu0 %v1927
  %v2026 = vpop.f32.mrf.mxu0
  %v2027 = vadd.f32 0.0, %v2026
  %v2028 = vpop.f32.mrf.mxu0
  %v2029 = vadd.f32 0.0, %v2028
  %2030 = vmatmul.bf16.gmra.mxu0 %v1928
  %v2031 = vpop.f32.mrf.mxu0
  %v2032 = vadd.f32 0.0, %v2031
  %v2033 = vpop.f32.mrf.mxu0
  %v2034 = vadd.f32 0.0, %v2033
  %2035 = vmatmul.bf16.gmra.mxu0 %v1929
  %v2036 = vpop.f32.mrf.mxu0
  %v2037 = vadd.f32 0.0, %v2036
  %v2038 = vpop.f32.mrf.mxu0
  %v2039 = vadd.f32 0.0, %v2038
  %2040 = vdwg.mxu0
  %v2059 = vunpack.c.l.b16 %v1724
  %v2060 = vunpack.c.l.b16 %v1725
  %v2061 = vunpack.c.l.b16 %v1726
  %v2062 = vunpack.c.l.b16 %v1727
  %v2063 = vunpack.c.l.b16 %v1728
  %v2064 = vunpack.c.l.b16 %v1729
  %v2065 = vunpack.c.l.b16 %v1732
  %v2066 = vunpack.c.l.b16 %v1733
  %v2067 = vunpack.c.l.b16 %v1734
  %v2068 = vunpack.c.l.b16 %v1735
  %v2069 = vunpack.c.l.b16 %v1736
  %v2070 = vunpack.c.l.b16 %v1737
  %v2071 = vunpack.c.l.b16 %v1740
  %v2072 = vunpack.c.l.b16 %v1741
  %v2073 = vunpack.c.l.b16 %v1742
  %v2074 = vunpack.c.l.b16 %v1743
  %v2075 = vunpack.c.l.b16 %v1744
  %v2076 = vunpack.c.l.b16 %v1745
  %v2077 = vpack.c.b16 %v2060, %v2059
  %v2078 = vpack.c.b16 %v2062, %v2061
  %v2079 = vpack.c.b16 %v2064, %v2063
  %v2080 = vpack.c.b16 %v2066, %v2065
  %v2081 = vpack.c.b16 %v2068, %v2067
  %v2082 = vpack.c.b16 %v2070, %v2069
  %v2083 = vpack.c.b16 %v2072, %v2071
  %v2084 = vpack.c.b16 %v2074, %v2073
  %v2085 = vpack.c.b16 %v2076, %v2075
  %v2111 = vunpack.c.l.b16 %v1852
  %v2112 = vunpack.c.l.b16 %v1853
  %v2113 = vunpack.c.l.b16 %v1854
  %v2114 = vunpack.c.l.b16 %v1855
  %v2115 = vunpack.c.l.b16 %v1856
  %v2116 = vunpack.c.l.b16 %v1857
  %v2117 = vunpack.c.l.b16 %v1858
  %v2118 = vunpack.c.l.b16 %v1859
  %v2119 = vunpack.c.l.b16 %v1860
  %v2120 = vunpack.c.l.b16 %v1861
  %v2121 = vunpack.c.l.b16 %v1862
  %v2122 = vunpack.c.l.b16 %v1863
  %v2123 = vunpack.c.l.b16 %v1864
  %v2124 = vunpack.c.l.b16 %v1865
  %v2125 = vunpack.c.l.b16 %v1866
  %v2126 = vunpack.c.l.b16 %v1867
  %v2127 = vpack.c.b16 %v2112, %v2111
  %v2128 = vpack.c.b16 %v2114, %v2113
  %v2129 = vpack.c.b16 %v2116, %v2115
  %v2130 = vpack.c.b16 %v2118, %v2117
  %v2131 = vpack.c.b16 %v2120, %v2119
  %v2132 = vpack.c.b16 %v2122, %v2121
  %v2133 = vpack.c.b16 %v2124, %v2123
  %v2134 = vpack.c.b16 %v2126, %v2125
  %2143 = vmatpush.bf16.msra.mxu0 %v2134
  %2144 = vmatpush.bf16.msra.mxu0 %v2133
  %2145 = vmatpush.bf16.msra.mxu0 %v2132
  %2146 = vmatpush.bf16.msra.mxu0 %v2131
  %2147 = vmatpush.bf16.msra.mxu0 %v2130
  %2148 = vmatpush.bf16.msra.mxu0 %v2129
  %2149 = vmatpush.bf16.msra.mxu0 %v2128
  %2150 = vmatpush.bf16.msra.mxu0 %v2127
  %2151 = vmatmul.bf16.gmra.mxu0 %v2077
  %v2152 = vpop.f32.mrf.mxu0
  %v2153 = vadd.f32 %v1997, %v2152
  %v2154 = vpop.f32.mrf.mxu0
  %v2155 = vadd.f32 %v1999, %v2154
  %2156 = vmatmul.bf16.gmra.mxu0 %v2078
  %v2157 = vpop.f32.mrf.mxu0
  %v2158 = vadd.f32 %v2002, %v2157
  %v2159 = vpop.f32.mrf.mxu0
  %v2160 = vadd.f32 %v2004, %v2159
  %2161 = vmatmul.bf16.gmra.mxu0 %v2079
  %v2162 = vpop.f32.mrf.mxu0
  %v2163 = vadd.f32 %v2007, %v2162
  %v2164 = vpop.f32.mrf.mxu0
  %v2165 = vadd.f32 %v2009, %v2164
  %2166 = vmatmul.bf16.gmra.mxu0 %v2080
  %v2167 = vpop.f32.mrf.mxu0
  %v2168 = vadd.f32 %v2012, %v2167
  %v2169 = vpop.f32.mrf.mxu0
  %v2170 = vadd.f32 %v2014, %v2169
  %2171 = vmatmul.bf16.gmra.mxu0 %v2081
  %v2172 = vpop.f32.mrf.mxu0
  %v2173 = vadd.f32 %v2017, %v2172
  %v2174 = vpop.f32.mrf.mxu0
  %v2175 = vadd.f32 %v2019, %v2174
  %2176 = vmatmul.bf16.gmra.mxu0 %v2082
  %v2177 = vpop.f32.mrf.mxu0
  %v2178 = vadd.f32 %v2022, %v2177
  %v2179 = vpop.f32.mrf.mxu0
  %v2180 = vadd.f32 %v2024, %v2179
  %2181 = vmatmul.bf16.gmra.mxu0 %v2083
  %v2182 = vpop.f32.mrf.mxu0
  %v2183 = vadd.f32 %v2027, %v2182
  %v2184 = vpop.f32.mrf.mxu0
  %v2185 = vadd.f32 %v2029, %v2184
  %2186 = vmatmul.bf16.gmra.mxu0 %v2084
  %v2187 = vpop.f32.mrf.mxu0
  %v2188 = vadd.f32 %v2032, %v2187
  %v2189 = vpop.f32.mrf.mxu0
  %v2190 = vadd.f32 %v2034, %v2189
  %2191 = vmatmul.bf16.gmra.mxu0 %v2085
  %v2192 = vpop.f32.mrf.mxu0
  %v2193 = vadd.f32 %v2037, %v2192
  %v2194 = vpop.f32.mrf.mxu0
  %v2195 = vadd.f32 %v2039, %v2194
  %2196 = vdwg.mxu0
  %s2197 = scalar_lea.vmem %s3, 128
  %v2198 = vld [vmem:[%s2197] sm:$0xf]
  %v2199 = vld [vmem:[%s2197 + $0x4] sm:$0xf]
  %v2200 = vld [vmem:[%s2197 + $0x8] sm:$0xf]
  %v2201 = vld [vmem:[%s2197 + $0xc] sm:$0xf]
  %v2202 = vld [vmem:[%s2197 + $0x10] sm:$0xf]
  %v2203 = vld [vmem:[%s2197 + $0x14] sm:$0xf]
  %v2204 = vld [vmem:[%s2197 + $0x18] sm:$0xf]
  %v2205 = vld [vmem:[%s2197 + $0x1c] sm:$0xf]
  %v2206 = vld [vmem:[%s2197 + $0x20] sm:$0xf]
  %v2207 = vld [vmem:[%s2197 + $0x24] sm:$0xf]
  %v2208 = vld [vmem:[%s2197 + $0x28] sm:$0xf]
  %v2209 = vld [vmem:[%s2197 + $0x2c] sm:$0xf]
  %v2210 = vld [vmem:[%s2197 + $0x30] sm:$0xf]
  %v2211 = vld [vmem:[%s2197 + $0x34] sm:$0xf]
  %v2212 = vld [vmem:[%s2197 + $0x38] sm:$0xf]
  %v2213 = vld [vmem:[%s2197 + $0x3c] sm:$0xf]
  %v2220 = vunpack.c.l.b16 %v1730
  %v2221 = vunpack.c.l.b16 %v1731
  %v2222 = vunpack.c.l.b16 %v1738
  %v2223 = vunpack.c.l.b16 %v1739
  %v2224 = vunpack.c.l.b16 %v1746
  %v2225 = vunpack.c.l.b16 %v1747
  %v2226 = vpack.c.b16 %v2221, %v2220
  %v2227 = vpack.c.b16 %v2223, %v2222
  %v2228 = vpack.c.b16 %v2225, %v2224
  %v2248 = vunpack.c.l.b16 %v2198
  %v2249 = vunpack.c.l.b16 %v2199
  %v2250 = vunpack.c.l.b16 %v2200
  %v2251 = vunpack.c.l.b16 %v2201
  %v2252 = vunpack.c.l.b16 %v2202
  %v2253 = vunpack.c.l.b16 %v2203
  %v2254 = vunpack.c.l.b16 %v2204
  %v2255 = vunpack.c.l.b16 %v2205
  %v2256 = vunpack.c.l.b16 %v2206
  %v2257 = vunpack.c.l.b16 %v2207
  %v2258 = vunpack.c.l.b16 %v2208
  %v2259 = vunpack.c.l.b16 %v2209
  %v2260 = vunpack.c.l.b16 %v2210
  %v2261 = vunpack.c.l.b16 %v2211
  %v2262 = vunpack.c.l.b16 %v2212
  %v2263 = vunpack.c.l.b16 %v2213
  %v2264 = vpack.c.b16 %v2249, %v2248
  %v2265 = vpack.c.b16 %v2251, %v2250
  %v2266 = vpack.c.b16 %v2253, %v2252
  %v2267 = vpack.c.b16 %v2255, %v2254
  %v2268 = vpack.c.b16 %v2257, %v2256
  %v2269 = vpack.c.b16 %v2259, %v2258
  %v2270 = vpack.c.b16 %v2261, %v2260
  %v2271 = vpack.c.b16 %v2263, %v2262
  %2280 = vmatpush.bf16.msra.mxu0 %v2271
  %2281 = vmatpush.bf16.msra.mxu0 %v2270
  %2282 = vmatpush.bf16.msra.mxu0 %v2269
  %2283 = vmatpush.bf16.msra.mxu0 %v2268
  %2284 = vmatpush.bf16.msra.mxu0 %v2267
  %2285 = vmatpush.bf16.msra.mxu0 %v2266
  %2286 = vmatpush.bf16.msra.mxu0 %v2265
  %2287 = vmatpush.bf16.msra.mxu0 %v2264
  %2288 = vmatmul.bf16.gmra.mxu0 %v2078
  %v2289 = vpop.f32.mrf.mxu0
  %v2290 = vadd.f32 0.0, %v2289
  %v2291 = vpop.f32.mrf.mxu0
  %v2292 = vadd.f32 0.0, %v2291
  %2293 = vmatmul.bf16.gmra.mxu0 %v2079
  %v2294 = vpop.f32.mrf.mxu0
  %v2295 = vadd.f32 0.0, %v2294
  %v2296 = vpop.f32.mrf.mxu0
  %v2297 = vadd.f32 0.0, %v2296
  %2298 = vmatmul.bf16.gmra.mxu0 %v2226
  %v2299 = vpop.f32.mrf.mxu0
  %v2300 = vadd.f32 0.0, %v2299
  %v2301 = vpop.f32.mrf.mxu0
  %v2302 = vadd.f32 0.0, %v2301
  %2303 = vmatmul.bf16.gmra.mxu0 %v2081
  %v2304 = vpop.f32.mrf.mxu0
  %v2305 = vadd.f32 0.0, %v2304
  %v2306 = vpop.f32.mrf.mxu0
  %v2307 = vadd.f32 0.0, %v2306
  %2308 = vmatmul.bf16.gmra.mxu0 %v2082
  %v2309 = vpop.f32.mrf.mxu0
  %v2310 = vadd.f32 0.0, %v2309
  %v2311 = vpop.f32.mrf.mxu0
  %v2312 = vadd.f32 0.0, %v2311
  %2313 = vmatmul.bf16.gmra.mxu0 %v2227
  %v2314 = vpop.f32.mrf.mxu0
  %v2315 = vadd.f32 0.0, %v2314
  %v2316 = vpop.f32.mrf.mxu0
  %v2317 = vadd.f32 0.0, %v2316
  %2318 = vmatmul.bf16.gmra.mxu0 %v2084
  %v2319 = vpop.f32.mrf.mxu0
  %v2320 = vadd.f32 0.0, %v2319
  %v2321 = vpop.f32.mrf.mxu0
  %v2322 = vadd.f32 0.0, %v2321
  %2323 = vmatmul.bf16.gmra.mxu0 %v2085
  %v2324 = vpop.f32.mrf.mxu0
  %v2325 = vadd.f32 0.0, %v2324
  %v2326 = vpop.f32.mrf.mxu0
  %v2327 = vadd.f32 0.0, %v2326
  %2328 = vmatmul.bf16.gmra.mxu0 %v2228
  %v2329 = vpop.f32.mrf.mxu0
  %v2330 = vadd.f32 0.0, %v2329
  %v2331 = vpop.f32.mrf.mxu0
  %v2332 = vadd.f32 0.0, %v2331
  %2333 = vdwg.mxu0
  %v2334 = vadd.f32 %v2153, %v2290
  %v2335 = vadd.f32 %v2155, %v2292
  %v2336 = vadd.f32 %v2158, %v2295
  %v2337 = vadd.f32 %v2160, %v2297
  %v2338 = vadd.f32 %v2163, %v2300
  %v2339 = vadd.f32 %v2165, %v2302
  %v2340 = vadd.f32 %v2168, %v2305
  %v2341 = vadd.f32 %v2170, %v2307
  %v2342 = vadd.f32 %v2173, %v2310
  %v2343 = vadd.f32 %v2175, %v2312
  %v2344 = vadd.f32 %v2178, %v2315
  %v2345 = vadd.f32 %v2180, %v2317
  %v2346 = vadd.f32 %v2183, %v2320
  %v2347 = vadd.f32 %v2185, %v2322
  %v2348 = vadd.f32 %v2188, %v2325
  %v2349 = vadd.f32 %v2190, %v2327
  %v2350 = vadd.f32 %v2193, %v2330
  %v2351 = vadd.f32 %v2195, %v2332
  %s2352 = scalar_lea.vmem %s3, 192
  %v2353 = vld [vmem:[%s2352] sm:$0xf]
  %v2354 = vld [vmem:[%s2352 + $0x4] sm:$0xf]
  %v2355 = vld [vmem:[%s2352 + $0x8] sm:$0xf]
  %v2356 = vld [vmem:[%s2352 + $0xc] sm:$0xf]
  %v2357 = vld [vmem:[%s2352 + $0x10] sm:$0xf]
  %v2358 = vld [vmem:[%s2352 + $0x14] sm:$0xf]
  %v2359 = vld [vmem:[%s2352 + $0x18] sm:$0xf]
  %v2360 = vld [vmem:[%s2352 + $0x1c] sm:$0xf]
  %v2361 = vld [vmem:[%s2352 + $0x20] sm:$0xf]
  %v2362 = vld [vmem:[%s2352 + $0x24] sm:$0xf]
  %v2363 = vld [vmem:[%s2352 + $0x28] sm:$0xf]
  %v2364 = vld [vmem:[%s2352 + $0x2c] sm:$0xf]
  %v2365 = vld [vmem:[%s2352 + $0x30] sm:$0xf]
  %v2366 = vld [vmem:[%s2352 + $0x34] sm:$0xf]
  %v2367 = vld [vmem:[%s2352 + $0x38] sm:$0xf]
  %v2368 = vld [vmem:[%s2352 + $0x3c] sm:$0xf]
  %v2375 = vunpack.c.l.b16 %v1762
  %v2376 = vunpack.c.l.b16 %v1763
  %v2377 = vunpack.c.l.b16 %v1770
  %v2378 = vunpack.c.l.b16 %v1771
  %v2379 = vunpack.c.l.b16 %v1778
  %v2380 = vunpack.c.l.b16 %v1779
  %v2381 = vpack.c.b16 %v2376, %v2375
  %v2382 = vpack.c.b16 %v2378, %v2377
  %v2383 = vpack.c.b16 %v2380, %v2379
  %v2403 = vunpack.c.l.b16 %v2353
  %v2404 = vunpack.c.l.b16 %v2354
  %v2405 = vunpack.c.l.b16 %v2355
  %v2406 = vunpack.c.l.b16 %v2356
  %v2407 = vunpack.c.l.b16 %v2357
  %v2408 = vunpack.c.l.b16 %v2358
  %v2409 = vunpack.c.l.b16 %v2359
  %v2410 = vunpack.c.l.b16 %v2360
  %v2411 = vunpack.c.l.b16 %v2361
  %v2412 = vunpack.c.l.b16 %v2362
  %v2413 = vunpack.c.l.b16 %v2363
  %v2414 = vunpack.c.l.b16 %v2364
  %v2415 = vunpack.c.l.b16 %v2365
  %v2416 = vunpack.c.l.b16 %v2366
  %v2417 = vunpack.c.l.b16 %v2367
  %v2418 = vunpack.c.l.b16 %v2368
  %v2419 = vpack.c.b16 %v2404, %v2403
  %v2420 = vpack.c.b16 %v2406, %v2405
  %v2421 = vpack.c.b16 %v2408, %v2407
  %v2422 = vpack.c.b16 %v2410, %v2409
  %v2423 = vpack.c.b16 %v2412, %v2411
  %v2424 = vpack.c.b16 %v2414, %v2413
  %v2425 = vpack.c.b16 %v2416, %v2415
  %v2426 = vpack.c.b16 %v2418, %v2417
  %2435 = vmatpush.bf16.msra.mxu0 %v2426
  %2436 = vmatpush.bf16.msra.mxu0 %v2425
  %2437 = vmatpush.bf16.msra.mxu0 %v2424
  %2438 = vmatpush.bf16.msra.mxu0 %v2423
  %2439 = vmatpush.bf16.msra.mxu0 %v2422
  %2440 = vmatpush.bf16.msra.mxu0 %v2421
  %2441 = vmatpush.bf16.msra.mxu0 %v2420
  %2442 = vmatpush.bf16.msra.mxu0 %v2419
  %2443 = vmatmul.bf16.gmra.mxu0 %v1922
  %v2444 = vpop.f32.mrf.mxu0
  %v2445 = vadd.f32 0.0, %v2444
  %v2446 = vpop.f32.mrf.mxu0
  %v2447 = vadd.f32 0.0, %v2446
  %2448 = vmatmul.bf16.gmra.mxu0 %v1923
  %v2449 = vpop.f32.mrf.mxu0
  %v2450 = vadd.f32 0.0, %v2449
  %v2451 = vpop.f32.mrf.mxu0
  %v2452 = vadd.f32 0.0, %v2451
  %2453 = vmatmul.bf16.gmra.mxu0 %v2381
  %v2454 = vpop.f32.mrf.mxu0
  %v2455 = vadd.f32 0.0, %v2454
  %v2456 = vpop.f32.mrf.mxu0
  %v2457 = vadd.f32 0.0, %v2456
  %2458 = vmatmul.bf16.gmra.mxu0 %v1925
  %v2459 = vpop.f32.mrf.mxu0
  %v2460 = vadd.f32 0.0, %v2459
  %v2461 = vpop.f32.mrf.mxu0
  %v2462 = vadd.f32 0.0, %v2461
  %2463 = vmatmul.bf16.gmra.mxu0 %v1926
  %v2464 = vpop.f32.mrf.mxu0
  %v2465 = vadd.f32 0.0, %v2464
  %v2466 = vpop.f32.mrf.mxu0
  %v2467 = vadd.f32 0.0, %v2466
  %2468 = vmatmul.bf16.gmra.mxu0 %v2382
  %v2469 = vpop.f32.mrf.mxu0
  %v2470 = vadd.f32 0.0, %v2469
  %v2471 = vpop.f32.mrf.mxu0
  %v2472 = vadd.f32 0.0, %v2471
  %2473 = vmatmul.bf16.gmra.mxu0 %v1928
  %v2474 = vpop.f32.mrf.mxu0
  %v2475 = vadd.f32 0.0, %v2474
  %v2476 = vpop.f32.mrf.mxu0
  %v2477 = vadd.f32 0.0, %v2476
  %2478 = vmatmul.bf16.gmra.mxu0 %v1929
  %v2479 = vpop.f32.mrf.mxu0
  %v2480 = vadd.f32 0.0, %v2479
  %v2481 = vpop.f32.mrf.mxu0
  %v2482 = vadd.f32 0.0, %v2481
  %2483 = vmatmul.bf16.gmra.mxu0 %v2383
  %v2484 = vpop.f32.mrf.mxu0
  %v2485 = vadd.f32 0.0, %v2484
  %v2486 = vpop.f32.mrf.mxu0
  %v2487 = vadd.f32 0.0, %v2486
  %2488 = vdwg.mxu0
  %v2489 = vadd.f32 %v2334, %v2445
  %v2490 = vadd.f32 %v2335, %v2447
  %v2491 = vadd.f32 %v2336, %v2450
  %v2492 = vadd.f32 %v2337, %v2452
  %v2493 = vadd.f32 %v2338, %v2455
  %v2494 = vadd.f32 %v2339, %v2457
  %v2495 = vadd.f32 %v2340, %v2460
  %v2496 = vadd.f32 %v2341, %v2462
  %v2497 = vadd.f32 %v2342, %v2465
  %v2498 = vadd.f32 %v2343, %v2467
  %v2499 = vadd.f32 %v2344, %v2470
  %v2500 = vadd.f32 %v2345, %v2472
  %v2501 = vadd.f32 %v2346, %v2475
  %v2502 = vadd.f32 %v2347, %v2477
  %v2503 = vadd.f32 %v2348, %v2480
  %v2504 = vadd.f32 %v2349, %v2482
  %v2505 = vadd.f32 %v2350, %v2485
  %v2506 = vadd.f32 %v2351, %v2487
  %s2507 = scalar_lea.vmem %s3, 256
  %v2508 = vld [vmem:[%s2507] sm:$0xf]
  %v2509 = vld [vmem:[%s2507 + $0x4] sm:$0xf]
  %v2510 = vld [vmem:[%s2507 + $0x8] sm:$0xf]
  %v2511 = vld [vmem:[%s2507 + $0xc] sm:$0xf]
  %v2512 = vld [vmem:[%s2507 + $0x10] sm:$0xf]
  %v2513 = vld [vmem:[%s2507 + $0x14] sm:$0xf]
  %v2514 = vld [vmem:[%s2507 + $0x18] sm:$0xf]
  %v2515 = vld [vmem:[%s2507 + $0x1c] sm:$0xf]
  %v2516 = vld [vmem:[%s2507 + $0x20] sm:$0xf]
  %v2517 = vld [vmem:[%s2507 + $0x24] sm:$0xf]
  %v2518 = vld [vmem:[%s2507 + $0x28] sm:$0xf]
  %v2519 = vld [vmem:[%s2507 + $0x2c] sm:$0xf]
  %v2520 = vld [vmem:[%s2507 + $0x30] sm:$0xf]
  %v2521 = vld [vmem:[%s2507 + $0x34] sm:$0xf]
  %v2522 = vld [vmem:[%s2507 + $0x38] sm:$0xf]
  %v2523 = vld [vmem:[%s2507 + $0x3c] sm:$0xf]
  %v2542 = vunpack.c.l.b16 %v1788
  %v2543 = vunpack.c.l.b16 %v1789
  %v2544 = vunpack.c.l.b16 %v1790
  %v2545 = vunpack.c.l.b16 %v1791
  %v2546 = vunpack.c.l.b16 %v1792
  %v2547 = vunpack.c.l.b16 %v1793
  %v2548 = vunpack.c.l.b16 %v1796
  %v2549 = vunpack.c.l.b16 %v1797
  %v2550 = vunpack.c.l.b16 %v1798
  %v2551 = vunpack.c.l.b16 %v1799
  %v2552 = vunpack.c.l.b16 %v1800
  %v2553 = vunpack.c.l.b16 %v1801
  %v2554 = vunpack.c.l.b16 %v1804
  %v2555 = vunpack.c.l.b16 %v1805
  %v2556 = vunpack.c.l.b16 %v1806
  %v2557 = vunpack.c.l.b16 %v1807
  %v2558 = vunpack.c.l.b16 %v1808
  %v2559 = vunpack.c.l.b16 %v1809
  %v2560 = vpack.c.b16 %v2543, %v2542
  %v2561 = vpack.c.b16 %v2545, %v2544
  %v2562 = vpack.c.b16 %v2547, %v2546
  %v2563 = vpack.c.b16 %v2549, %v2548
  %v2564 = vpack.c.b16 %v2551, %v2550
  %v2565 = vpack.c.b16 %v2553, %v2552
  %v2566 = vpack.c.b16 %v2555, %v2554
  %v2567 = vpack.c.b16 %v2557, %v2556
  %v2568 = vpack.c.b16 %v2559, %v2558
  %v2594 = vunpack.c.l.b16 %v2508
  %v2595 = vunpack.c.l.b16 %v2509
  %v2596 = vunpack.c.l.b16 %v2510
  %v2597 = vunpack.c.l.b16 %v2511
  %v2598 = vunpack.c.l.b16 %v2512
  %v2599 = vunpack.c.l.b16 %v2513
  %v2600 = vunpack.c.l.b16 %v2514
  %v2601 = vunpack.c.l.b16 %v2515
  %v2602 = vunpack.c.l.b16 %v2516
  %v2603 = vunpack.c.l.b16 %v2517
  %v2604 = vunpack.c.l.b16 %v2518
  %v2605 = vunpack.c.l.b16 %v2519
  %v2606 = vunpack.c.l.b16 %v2520
  %v2607 = vunpack.c.l.b16 %v2521
  %v2608 = vunpack.c.l.b16 %v2522
  %v2609 = vunpack.c.l.b16 %v2523
  %v2610 = vpack.c.b16 %v2595, %v2594
  %v2611 = vpack.c.b16 %v2597, %v2596
  %v2612 = vpack.c.b16 %v2599, %v2598
  %v2613 = vpack.c.b16 %v2601, %v2600
  %v2614 = vpack.c.b16 %v2603, %v2602
  %v2615 = vpack.c.b16 %v2605, %v2604
  %v2616 = vpack.c.b16 %v2607, %v2606
  %v2617 = vpack.c.b16 %v2609, %v2608
  %2626 = vmatpush.bf16.msra.mxu0 %v2617
  %2627 = vmatpush.bf16.msra.mxu0 %v2616
  %2628 = vmatpush.bf16.msra.mxu0 %v2615
  %2629 = vmatpush.bf16.msra.mxu0 %v2614
  %2630 = vmatpush.bf16.msra.mxu0 %v2613
  %2631 = vmatpush.bf16.msra.mxu0 %v2612
  %2632 = vmatpush.bf16.msra.mxu0 %v2611
  %2633 = vmatpush.bf16.msra.mxu0 %v2610
  %2634 = vmatmul.bf16.gmra.mxu0 %v2560
  %v2635 = vpop.f32.mrf.mxu0
  %v2636 = vadd.f32 0.0, %v2635
  %v2637 = vpop.f32.mrf.mxu0
  %v2638 = vadd.f32 0.0, %v2637
  %2639 = vmatmul.bf16.gmra.mxu0 %v2561
  %v2640 = vpop.f32.mrf.mxu0
  %v2641 = vadd.f32 0.0, %v2640
  %v2642 = vpop.f32.mrf.mxu0
  %v2643 = vadd.f32 0.0, %v2642
  %2644 = vmatmul.bf16.gmra.mxu0 %v2562
  %v2645 = vpop.f32.mrf.mxu0
  %v2646 = vadd.f32 0.0, %v2645
  %v2647 = vpop.f32.mrf.mxu0
  %v2648 = vadd.f32 0.0, %v2647
  %2649 = vmatmul.bf16.gmra.mxu0 %v2563
  %v2650 = vpop.f32.mrf.mxu0
  %v2651 = vadd.f32 0.0, %v2650
  %v2652 = vpop.f32.mrf.mxu0
  %v2653 = vadd.f32 0.0, %v2652
  %2654 = vmatmul.bf16.gmra.mxu0 %v2564
  %v2655 = vpop.f32.mrf.mxu0
  %v2656 = vadd.f32 0.0, %v2655
  %v2657 = vpop.f32.mrf.mxu0
  %v2658 = vadd.f32 0.0, %v2657
  %2659 = vmatmul.bf16.gmra.mxu0 %v2565
  %v2660 = vpop.f32.mrf.mxu0
  %v2661 = vadd.f32 0.0, %v2660
  %v2662 = vpop.f32.mrf.mxu0
  %v2663 = vadd.f32 0.0, %v2662
  %2664 = vmatmul.bf16.gmra.mxu0 %v2566
  %v2665 = vpop.f32.mrf.mxu0
  %v2666 = vadd.f32 0.0, %v2665
  %v2667 = vpop.f32.mrf.mxu0
  %v2668 = vadd.f32 0.0, %v2667
  %2669 = vmatmul.bf16.gmra.mxu0 %v2567
  %v2670 = vpop.f32.mrf.mxu0
  %v2671 = vadd.f32 0.0, %v2670
  %v2672 = vpop.f32.mrf.mxu0
  %v2673 = vadd.f32 0.0, %v2672
  %2674 = vmatmul.bf16.gmra.mxu0 %v2568
  %v2675 = vpop.f32.mrf.mxu0
  %v2676 = vadd.f32 0.0, %v2675
  %v2677 = vpop.f32.mrf.mxu0
  %v2678 = vadd.f32 0.0, %v2677
  %2679 = vdwg.mxu0
  %v2680 = vadd.f32 %v2489, %v2636
  %v2681 = vadd.f32 %v2490, %v2638
  %v2682 = vadd.f32 %v2491, %v2641
  %v2683 = vadd.f32 %v2492, %v2643
  %v2684 = vadd.f32 %v2493, %v2646
  %v2685 = vadd.f32 %v2494, %v2648
  %v2686 = vadd.f32 %v2495, %v2651
  %v2687 = vadd.f32 %v2496, %v2653
  %v2688 = vadd.f32 %v2497, %v2656
  %v2689 = vadd.f32 %v2498, %v2658
  %v2690 = vadd.f32 %v2499, %v2661
  %v2691 = vadd.f32 %v2500, %v2663
  %v2692 = vadd.f32 %v2501, %v2666
  %v2693 = vadd.f32 %v2502, %v2668
  %v2694 = vadd.f32 %v2503, %v2671
  %v2695 = vadd.f32 %v2504, %v2673
  %v2696 = vadd.f32 %v2505, %v2676
  %v2697 = vadd.f32 %v2506, %v2678
  %s2698 = scalar_lea.vmem %s3, 320
  %v2699 = vld [vmem:[%s2698] sm:$0xf]
  %v2700 = vld [vmem:[%s2698 + $0x4] sm:$0xf]
  %v2701 = vld [vmem:[%s2698 + $0x8] sm:$0xf]
  %v2702 = vld [vmem:[%s2698 + $0xc] sm:$0xf]
  %v2703 = vld [vmem:[%s2698 + $0x10] sm:$0xf]
  %v2704 = vld [vmem:[%s2698 + $0x14] sm:$0xf]
  %v2705 = vld [vmem:[%s2698 + $0x18] sm:$0xf]
  %v2706 = vld [vmem:[%s2698 + $0x1c] sm:$0xf]
  %v2707 = vld [vmem:[%s2698 + $0x20] sm:$0xf]
  %v2708 = vld [vmem:[%s2698 + $0x24] sm:$0xf]
  %v2709 = vld [vmem:[%s2698 + $0x28] sm:$0xf]
  %v2710 = vld [vmem:[%s2698 + $0x2c] sm:$0xf]
  %v2711 = vld [vmem:[%s2698 + $0x30] sm:$0xf]
  %v2712 = vld [vmem:[%s2698 + $0x34] sm:$0xf]
  %v2713 = vld [vmem:[%s2698 + $0x38] sm:$0xf]
  %v2714 = vld [vmem:[%s2698 + $0x3c] sm:$0xf]
  %v2733 = vunpack.c.l.b16 %v1820
  %v2734 = vunpack.c.l.b16 %v1821
  %v2735 = vunpack.c.l.b16 %v1822
  %v2736 = vunpack.c.l.b16 %v1823
  %v2737 = vunpack.c.l.b16 %v1824
  %v2738 = vunpack.c.l.b16 %v1825
  %v2739 = vunpack.c.l.b16 %v1828
  %v2740 = vunpack.c.l.b16 %v1829
  %v2741 = vunpack.c.l.b16 %v1830
  %v2742 = vunpack.c.l.b16 %v1831
  %v2743 = vunpack.c.l.b16 %v1832
  %v2744 = vunpack.c.l.b16 %v1833
  %v2745 = vunpack.c.l.b16 %v1836
  %v2746 = vunpack.c.l.b16 %v1837
  %v2747 = vunpack.c.l.b16 %v1838
  %v2748 = vunpack.c.l.b16 %v1839
  %v2749 = vunpack.c.l.b16 %v1840
  %v2750 = vunpack.c.l.b16 %v1841
  %v2751 = vpack.c.b16 %v2734, %v2733
  %v2752 = vpack.c.b16 %v2736, %v2735
  %v2753 = vpack.c.b16 %v2738, %v2737
  %v2754 = vpack.c.b16 %v2740, %v2739
  %v2755 = vpack.c.b16 %v2742, %v2741
  %v2756 = vpack.c.b16 %v2744, %v2743
  %v2757 = vpack.c.b16 %v2746, %v2745
  %v2758 = vpack.c.b16 %v2748, %v2747
  %v2759 = vpack.c.b16 %v2750, %v2749
  %v2785 = vunpack.c.l.b16 %v2699
  %v2786 = vunpack.c.l.b16 %v2700
  %v2787 = vunpack.c.l.b16 %v2701
  %v2788 = vunpack.c.l.b16 %v2702
  %v2789 = vunpack.c.l.b16 %v2703
  %v2790 = vunpack.c.l.b16 %v2704
  %v2791 = vunpack.c.l.b16 %v2705
  %v2792 = vunpack.c.l.b16 %v2706
  %v2793 = vunpack.c.l.b16 %v2707
  %v2794 = vunpack.c.l.b16 %v2708
  %v2795 = vunpack.c.l.b16 %v2709
  %v2796 = vunpack.c.l.b16 %v2710
  %v2797 = vunpack.c.l.b16 %v2711
  %v2798 = vunpack.c.l.b16 %v2712
  %v2799 = vunpack.c.l.b16 %v2713
  %v2800 = vunpack.c.l.b16 %v2714
  %v2801 = vpack.c.b16 %v2786, %v2785
  %v2802 = vpack.c.b16 %v2788, %v2787
  %v2803 = vpack.c.b16 %v2790, %v2789
  %v2804 = vpack.c.b16 %v2792, %v2791
  %v2805 = vpack.c.b16 %v2794, %v2793
  %v2806 = vpack.c.b16 %v2796, %v2795
  %v2807 = vpack.c.b16 %v2798, %v2797
  %v2808 = vpack.c.b16 %v2800, %v2799
  %2817 = vmatpush.bf16.msra.mxu0 %v2808
  %2818 = vmatpush.bf16.msra.mxu0 %v2807
  %2819 = vmatpush.bf16.msra.mxu0 %v2806
  %2820 = vmatpush.bf16.msra.mxu0 %v2805
  %2821 = vmatpush.bf16.msra.mxu0 %v2804
  %2822 = vmatpush.bf16.msra.mxu0 %v2803
  %2823 = vmatpush.bf16.msra.mxu0 %v2802
  %2824 = vmatpush.bf16.msra.mxu0 %v2801
  %2825 = vmatmul.bf16.gmra.mxu0 %v2751
  %v2826 = vpop.f32.mrf.mxu0
  %v2827 = vadd.f32 0.0, %v2826
  %v2828 = vpop.f32.mrf.mxu0
  %v2829 = vadd.f32 0.0, %v2828
  %2830 = vmatmul.bf16.gmra.mxu0 %v2752
  %v2831 = vpop.f32.mrf.mxu0
  %v2832 = vadd.f32 0.0, %v2831
  %v2833 = vpop.f32.mrf.mxu0
  %v2834 = vadd.f32 0.0, %v2833
  %2835 = vmatmul.bf16.gmra.mxu0 %v2753
  %v2836 = vpop.f32.mrf.mxu0
  %v2837 = vadd.f32 0.0, %v2836
  %v2838 = vpop.f32.mrf.mxu0
  %v2839 = vadd.f32 0.0, %v2838
  %2840 = vmatmul.bf16.gmra.mxu0 %v2754
  %v2841 = vpop.f32.mrf.mxu0
  %v2842 = vadd.f32 0.0, %v2841
  %v2843 = vpop.f32.mrf.mxu0
  %v2844 = vadd.f32 0.0, %v2843
  %2845 = vmatmul.bf16.gmra.mxu0 %v2755
  %v2846 = vpop.f32.mrf.mxu0
  %v2847 = vadd.f32 0.0, %v2846
  %v2848 = vpop.f32.mrf.mxu0
  %v2849 = vadd.f32 0.0, %v2848
  %2850 = vmatmul.bf16.gmra.mxu0 %v2756
  %v2851 = vpop.f32.mrf.mxu0
  %v2852 = vadd.f32 0.0, %v2851
  %v2853 = vpop.f32.mrf.mxu0
  %v2854 = vadd.f32 0.0, %v2853
  %2855 = vmatmul.bf16.gmra.mxu0 %v2757
  %v2856 = vpop.f32.mrf.mxu0
  %v2857 = vadd.f32 0.0, %v2856
  %v2858 = vpop.f32.mrf.mxu0
  %v2859 = vadd.f32 0.0, %v2858
  %2860 = vmatmul.bf16.gmra.mxu0 %v2758
  %v2861 = vpop.f32.mrf.mxu0
  %v2862 = vadd.f32 0.0, %v2861
  %v2863 = vpop.f32.mrf.mxu0
  %v2864 = vadd.f32 0.0, %v2863
  %2865 = vmatmul.bf16.gmra.mxu0 %v2759
  %v2866 = vpop.f32.mrf.mxu0
  %v2867 = vadd.f32 0.0, %v2866
  %v2868 = vpop.f32.mrf.mxu0
  %v2869 = vadd.f32 0.0, %v2868
  %2870 = vdwg.mxu0
  %v2871 = vadd.f32 %v2680, %v2827
  %v2872 = vadd.f32 %v2681, %v2829
  %v2873 = vadd.f32 %v2682, %v2832
  %v2874 = vadd.f32 %v2683, %v2834
  %v2875 = vadd.f32 %v2684, %v2837
  %v2876 = vadd.f32 %v2685, %v2839
  %v2877 = vadd.f32 %v2686, %v2842
  %v2878 = vadd.f32 %v2687, %v2844
  %v2879 = vadd.f32 %v2688, %v2847
  %v2880 = vadd.f32 %v2689, %v2849
  %v2881 = vadd.f32 %v2690, %v2852
  %v2882 = vadd.f32 %v2691, %v2854
  %v2883 = vadd.f32 %v2692, %v2857
  %v2884 = vadd.f32 %v2693, %v2859
  %v2885 = vadd.f32 %v2694, %v2862
  %v2886 = vadd.f32 %v2695, %v2864
  %v2887 = vadd.f32 %v2696, %v2867
  %v2888 = vadd.f32 %v2697, %v2869
  %s2889 = scalar_lea.vmem %s3, 384
  %v2890 = vld [vmem:[%s2889] sm:$0xf]
  %v2891 = vld [vmem:[%s2889 + $0x4] sm:$0xf]
  %v2892 = vld [vmem:[%s2889 + $0x8] sm:$0xf]
  %v2893 = vld [vmem:[%s2889 + $0xc] sm:$0xf]
  %v2894 = vld [vmem:[%s2889 + $0x10] sm:$0xf]
  %v2895 = vld [vmem:[%s2889 + $0x14] sm:$0xf]
  %v2896 = vld [vmem:[%s2889 + $0x18] sm:$0xf]
  %v2897 = vld [vmem:[%s2889 + $0x1c] sm:$0xf]
  %v2898 = vld [vmem:[%s2889 + $0x20] sm:$0xf]
  %v2899 = vld [vmem:[%s2889 + $0x24] sm:$0xf]
  %v2900 = vld [vmem:[%s2889 + $0x28] sm:$0xf]
  %v2901 = vld [vmem:[%s2889 + $0x2c] sm:$0xf]
  %v2902 = vld [vmem:[%s2889 + $0x30] sm:$0xf]
  %v2903 = vld [vmem:[%s2889 + $0x34] sm:$0xf]
  %v2904 = vld [vmem:[%s2889 + $0x38] sm:$0xf]
  %v2905 = vld [vmem:[%s2889 + $0x3c] sm:$0xf]
  %v2912 = vunpack.c.l.b16 %v1794
  %v2913 = vunpack.c.l.b16 %v1795
  %v2914 = vunpack.c.l.b16 %v1802
  %v2915 = vunpack.c.l.b16 %v1803
  %v2916 = vunpack.c.l.b16 %v1810
  %v2917 = vunpack.c.l.b16 %v1811
  %v2918 = vpack.c.b16 %v2913, %v2912
  %v2919 = vpack.c.b16 %v2915, %v2914
  %v2920 = vpack.c.b16 %v2917, %v2916
  %v2940 = vunpack.c.l.b16 %v2890
  %v2941 = vunpack.c.l.b16 %v2891
  %v2942 = vunpack.c.l.b16 %v2892
  %v2943 = vunpack.c.l.b16 %v2893
  %v2944 = vunpack.c.l.b16 %v2894
  %v2945 = vunpack.c.l.b16 %v2895
  %v2946 = vunpack.c.l.b16 %v2896
  %v2947 = vunpack.c.l.b16 %v2897
  %v2948 = vunpack.c.l.b16 %v2898
  %v2949 = vunpack.c.l.b16 %v2899
  %v2950 = vunpack.c.l.b16 %v2900
  %v2951 = vunpack.c.l.b16 %v2901
  %v2952 = vunpack.c.l.b16 %v2902
  %v2953 = vunpack.c.l.b16 %v2903
  %v2954 = vunpack.c.l.b16 %v2904
  %v2955 = vunpack.c.l.b16 %v2905
  %v2956 = vpack.c.b16 %v2941, %v2940
  %v2957 = vpack.c.b16 %v2943, %v2942
  %v2958 = vpack.c.b16 %v2945, %v2944
  %v2959 = vpack.c.b16 %v2947, %v2946
  %v2960 = vpack.c.b16 %v2949, %v2948
  %v2961 = vpack.c.b16 %v2951, %v2950
  %v2962 = vpack.c.b16 %v2953, %v2952
  %v2963 = vpack.c.b16 %v2955, %v2954
  %2972 = vmatpush.bf16.msra.mxu0 %v2963
  %2973 = vmatpush.bf16.msra.mxu0 %v2962
  %2974 = vmatpush.bf16.msra.mxu0 %v2961
  %2975 = vmatpush.bf16.msra.mxu0 %v2960
  %2976 = vmatpush.bf16.msra.mxu0 %v2959
  %2977 = vmatpush.bf16.msra.mxu0 %v2958
  %2978 = vmatpush.bf16.msra.mxu0 %v2957
  %2979 = vmatpush.bf16.msra.mxu0 %v2956
  %2980 = vmatmul.bf16.gmra.mxu0 %v2561
  %v2981 = vpop.f32.mrf.mxu0
  %v2982 = vadd.f32 0.0, %v2981
  %v2983 = vpop.f32.mrf.mxu0
  %v2984 = vadd.f32 0.0, %v2983
  %2985 = vmatmul.bf16.gmra.mxu0 %v2562
  %v2986 = vpop.f32.mrf.mxu0
  %v2987 = vadd.f32 0.0, %v2986
  %v2988 = vpop.f32.mrf.mxu0
  %v2989 = vadd.f32 0.0, %v2988
  %2990 = vmatmul.bf16.gmra.mxu0 %v2918
  %v2991 = vpop.f32.mrf.mxu0
  %v2992 = vadd.f32 0.0, %v2991
  %v2993 = vpop.f32.mrf.mxu0
  %v2994 = vadd.f32 0.0, %v2993
  %2995 = vmatmul.bf16.gmra.mxu0 %v2564
  %v2996 = vpop.f32.mrf.mxu0
  %v2997 = vadd.f32 0.0, %v2996
  %v2998 = vpop.f32.mrf.mxu0
  %v2999 = vadd.f32 0.0, %v2998
  %3000 = vmatmul.bf16.gmra.mxu0 %v2565
  %v3001 = vpop.f32.mrf.mxu0
  %v3002 = vadd.f32 0.0, %v3001
  %v3003 = vpop.f32.mrf.mxu0
  %v3004 = vadd.f32 0.0, %v3003
  %3005 = vmatmul.bf16.gmra.mxu0 %v2919
  %v3006 = vpop.f32.mrf.mxu0
  %v3007 = vadd.f32 0.0, %v3006
  %v3008 = vpop.f32.mrf.mxu0
  %v3009 = vadd.f32 0.0, %v3008
  %3010 = vmatmul.bf16.gmra.mxu0 %v2567
  %v3011 = vpop.f32.mrf.mxu0
  %v3012 = vadd.f32 0.0, %v3011
  %v3013 = vpop.f32.mrf.mxu0
  %v3014 = vadd.f32 0.0, %v3013
  %3015 = vmatmul.bf16.gmra.mxu0 %v2568
  %v3016 = vpop.f32.mrf.mxu0
  %v3017 = vadd.f32 0.0, %v3016
  %v3018 = vpop.f32.mrf.mxu0
  %v3019 = vadd.f32 0.0, %v3018
  %3020 = vmatmul.bf16.gmra.mxu0 %v2920
  %v3021 = vpop.f32.mrf.mxu0
  %v3022 = vadd.f32 0.0, %v3021
  %v3023 = vpop.f32.mrf.mxu0
  %v3024 = vadd.f32 0.0, %v3023
  %3025 = vdwg.mxu0
  %v3026 = vadd.f32 %v2871, %v2982
  %v3027 = vadd.f32 %v2872, %v2984
  %v3028 = vadd.f32 %v2873, %v2987
  %v3029 = vadd.f32 %v2874, %v2989
  %v3030 = vadd.f32 %v2875, %v2992
  %v3031 = vadd.f32 %v2876, %v2994
  %v3032 = vadd.f32 %v2877, %v2997
  %v3033 = vadd.f32 %v2878, %v2999
  %v3034 = vadd.f32 %v2879, %v3002
  %v3035 = vadd.f32 %v2880, %v3004
  %v3036 = vadd.f32 %v2881, %v3007
  %v3037 = vadd.f32 %v2882, %v3009
  %v3038 = vadd.f32 %v2883, %v3012
  %v3039 = vadd.f32 %v2884, %v3014
  %v3040 = vadd.f32 %v2885, %v3017
  %v3041 = vadd.f32 %v2886, %v3019
  %v3042 = vadd.f32 %v2887, %v3022
  %v3043 = vadd.f32 %v2888, %v3024
  %s3044 = scalar_lea.vmem %s3, 448
  %v3045 = vld [vmem:[%s3044] sm:$0xf]
  %v3046 = vld [vmem:[%s3044 + $0x4] sm:$0xf]
  %v3047 = vld [vmem:[%s3044 + $0x8] sm:$0xf]
  %v3048 = vld [vmem:[%s3044 + $0xc] sm:$0xf]
  %v3049 = vld [vmem:[%s3044 + $0x10] sm:$0xf]
  %v3050 = vld [vmem:[%s3044 + $0x14] sm:$0xf]
  %v3051 = vld [vmem:[%s3044 + $0x18] sm:$0xf]
  %v3052 = vld [vmem:[%s3044 + $0x1c] sm:$0xf]
  %v3053 = vld [vmem:[%s3044 + $0x20] sm:$0xf]
  %v3054 = vld [vmem:[%s3044 + $0x24] sm:$0xf]
  %v3055 = vld [vmem:[%s3044 + $0x28] sm:$0xf]
  %v3056 = vld [vmem:[%s3044 + $0x2c] sm:$0xf]
  %v3057 = vld [vmem:[%s3044 + $0x30] sm:$0xf]
  %v3058 = vld [vmem:[%s3044 + $0x34] sm:$0xf]
  %v3059 = vld [vmem:[%s3044 + $0x38] sm:$0xf]
  %v3060 = vld [vmem:[%s3044 + $0x3c] sm:$0xf]
  %v3067 = vunpack.c.l.b16 %v1826
  %v3068 = vunpack.c.l.b16 %v1827
  %v3069 = vunpack.c.l.b16 %v1834
  %v3070 = vunpack.c.l.b16 %v1835
  %v3071 = vunpack.c.l.b16 %v1842
  %v3072 = vunpack.c.l.b16 %v1843
  %v3073 = vpack.c.b16 %v3068, %v3067
  %v3074 = vpack.c.b16 %v3070, %v3069
  %v3075 = vpack.c.b16 %v3072, %v3071
  %v3095 = vunpack.c.l.b16 %v3045
  %v3096 = vunpack.c.l.b16 %v3046
  %v3097 = vunpack.c.l.b16 %v3047
  %v3098 = vunpack.c.l.b16 %v3048
  %v3099 = vunpack.c.l.b16 %v3049
  %v3100 = vunpack.c.l.b16 %v3050
  %v3101 = vunpack.c.l.b16 %v3051
  %v3102 = vunpack.c.l.b16 %v3052
  %v3103 = vunpack.c.l.b16 %v3053
  %v3104 = vunpack.c.l.b16 %v3054
  %v3105 = vunpack.c.l.b16 %v3055
  %v3106 = vunpack.c.l.b16 %v3056
  %v3107 = vunpack.c.l.b16 %v3057
  %v3108 = vunpack.c.l.b16 %v3058
  %v3109 = vunpack.c.l.b16 %v3059
  %v3110 = vunpack.c.l.b16 %v3060
  %v3111 = vpack.c.b16 %v3096, %v3095
  %v3112 = vpack.c.b16 %v3098, %v3097
  %v3113 = vpack.c.b16 %v3100, %v3099
  %v3114 = vpack.c.b16 %v3102, %v3101
  %v3115 = vpack.c.b16 %v3104, %v3103
  %v3116 = vpack.c.b16 %v3106, %v3105
  %v3117 = vpack.c.b16 %v3108, %v3107
  %v3118 = vpack.c.b16 %v3110, %v3109
  %3127 = vmatpush.bf16.msra.mxu0 %v3118
  %3128 = vmatpush.bf16.msra.mxu0 %v3117
  %3129 = vmatpush.bf16.msra.mxu0 %v3116
  %3130 = vmatpush.bf16.msra.mxu0 %v3115
  %3131 = vmatpush.bf16.msra.mxu0 %v3114
  %3132 = vmatpush.bf16.msra.mxu0 %v3113
  %3133 = vmatpush.bf16.msra.mxu0 %v3112
  %3134 = vmatpush.bf16.msra.mxu0 %v3111
  %3135 = vmatmul.bf16.gmra.mxu0 %v2752
  %v3136 = vpop.f32.mrf.mxu0
  %v3137 = vadd.f32 0.0, %v3136
  %v3138 = vpop.f32.mrf.mxu0
  %v3139 = vadd.f32 0.0, %v3138
  %3140 = vmatmul.bf16.gmra.mxu0 %v2753
  %v3141 = vpop.f32.mrf.mxu0
  %v3142 = vadd.f32 0.0, %v3141
  %v3143 = vpop.f32.mrf.mxu0
  %v3144 = vadd.f32 0.0, %v3143
  %3145 = vmatmul.bf16.gmra.mxu0 %v3073
  %v3146 = vpop.f32.mrf.mxu0
  %v3147 = vadd.f32 0.0, %v3146
  %v3148 = vpop.f32.mrf.mxu0
  %v3149 = vadd.f32 0.0, %v3148
  %3150 = vmatmul.bf16.gmra.mxu0 %v2755
  %v3151 = vpop.f32.mrf.mxu0
  %v3152 = vadd.f32 0.0, %v3151
  %v3153 = vpop.f32.mrf.mxu0
  %v3154 = vadd.f32 0.0, %v3153
  %3155 = vmatmul.bf16.gmra.mxu0 %v2756
  %v3156 = vpop.f32.mrf.mxu0
  %v3157 = vadd.f32 0.0, %v3156
  %v3158 = vpop.f32.mrf.mxu0
  %v3159 = vadd.f32 0.0, %v3158
  %3160 = vmatmul.bf16.gmra.mxu0 %v3074
  %v3161 = vpop.f32.mrf.mxu0
  %v3162 = vadd.f32 0.0, %v3161
  %v3163 = vpop.f32.mrf.mxu0
  %v3164 = vadd.f32 0.0, %v3163
  %3165 = vmatmul.bf16.gmra.mxu0 %v2758
  %v3166 = vpop.f32.mrf.mxu0
  %v3167 = vadd.f32 0.0, %v3166
  %v3168 = vpop.f32.mrf.mxu0
  %v3169 = vadd.f32 0.0, %v3168
  %3170 = vmatmul.bf16.gmra.mxu0 %v2759
  %v3171 = vpop.f32.mrf.mxu0
  %v3172 = vadd.f32 0.0, %v3171
  %v3173 = vpop.f32.mrf.mxu0
  %v3174 = vadd.f32 0.0, %v3173
  %3175 = vmatmul.bf16.gmra.mxu0 %v3075
  %v3176 = vpop.f32.mrf.mxu0
  %v3177 = vadd.f32 0.0, %v3176
  %v3178 = vpop.f32.mrf.mxu0
  %v3179 = vadd.f32 0.0, %v3178
  %3180 = vdwg.mxu0
  %v3181 = vadd.f32 %v3026, %v3137
  %v3182 = vadd.f32 %v3027, %v3139
  %v3183 = vadd.f32 %v3028, %v3142
  %v3184 = vadd.f32 %v3029, %v3144
  %v3185 = vadd.f32 %v3030, %v3147
  %v3186 = vadd.f32 %v3031, %v3149
  %v3187 = vadd.f32 %v3032, %v3152
  %v3188 = vadd.f32 %v3033, %v3154
  %v3189 = vadd.f32 %v3034, %v3157
  %v3190 = vadd.f32 %v3035, %v3159
  %v3191 = vadd.f32 %v3036, %v3162
  %v3192 = vadd.f32 %v3037, %v3164
  %v3193 = vadd.f32 %v3038, %v3167
  %v3194 = vadd.f32 %v3039, %v3169
  %v3195 = vadd.f32 %v3040, %v3172
  %v3196 = vadd.f32 %v3041, %v3174
  %v3197 = vadd.f32 %v3042, %v3177
  %v3198 = vadd.f32 %v3043, %v3179
  %s3199 = scalar_lea.vmem %s3, 512
  %v3200 = vld [vmem:[%s3199] sm:$0xf]
  %v3201 = vld [vmem:[%s3199 + $0x4] sm:$0xf]
  %v3202 = vld [vmem:[%s3199 + $0x8] sm:$0xf]
  %v3203 = vld [vmem:[%s3199 + $0xc] sm:$0xf]
  %v3204 = vld [vmem:[%s3199 + $0x10] sm:$0xf]
  %v3205 = vld [vmem:[%s3199 + $0x14] sm:$0xf]
  %v3206 = vld [vmem:[%s3199 + $0x18] sm:$0xf]
  %v3207 = vld [vmem:[%s3199 + $0x1c] sm:$0xf]
  %v3208 = vld [vmem:[%s3199 + $0x20] sm:$0xf]
  %v3209 = vld [vmem:[%s3199 + $0x24] sm:$0xf]
  %v3210 = vld [vmem:[%s3199 + $0x28] sm:$0xf]
  %v3211 = vld [vmem:[%s3199 + $0x2c] sm:$0xf]
  %v3212 = vld [vmem:[%s3199 + $0x30] sm:$0xf]
  %v3213 = vld [vmem:[%s3199 + $0x34] sm:$0xf]
  %v3214 = vld [vmem:[%s3199 + $0x38] sm:$0xf]
  %v3215 = vld [vmem:[%s3199 + $0x3c] sm:$0xf]
  %v3222 = vunpack.c.l.b16 %v1748
  %v3223 = vunpack.c.l.b16 %v1749
  %v3224 = vunpack.c.l.b16 %v1750
  %v3225 = vunpack.c.l.b16 %v1751
  %v3226 = vunpack.c.l.b16 %v1752
  %v3227 = vunpack.c.l.b16 %v1753
  %v3228 = vpack.c.b16 %v3223, %v3222
  %v3229 = vpack.c.b16 %v3225, %v3224
  %v3230 = vpack.c.b16 %v3227, %v3226
  %v3250 = vunpack.c.l.b16 %v3200
  %v3251 = vunpack.c.l.b16 %v3201
  %v3252 = vunpack.c.l.b16 %v3202
  %v3253 = vunpack.c.l.b16 %v3203
  %v3254 = vunpack.c.l.b16 %v3204
  %v3255 = vunpack.c.l.b16 %v3205
  %v3256 = vunpack.c.l.b16 %v3206
  %v3257 = vunpack.c.l.b16 %v3207
  %v3258 = vunpack.c.l.b16 %v3208
  %v3259 = vunpack.c.l.b16 %v3209
  %v3260 = vunpack.c.l.b16 %v3210
  %v3261 = vunpack.c.l.b16 %v3211
  %v3262 = vunpack.c.l.b16 %v3212
  %v3263 = vunpack.c.l.b16 %v3213
  %v3264 = vunpack.c.l.b16 %v3214
  %v3265 = vunpack.c.l.b16 %v3215
  %v3266 = vpack.c.b16 %v3251, %v3250
  %v3267 = vpack.c.b16 %v3253, %v3252
  %v3268 = vpack.c.b16 %v3255, %v3254
  %v3269 = vpack.c.b16 %v3257, %v3256
  %v3270 = vpack.c.b16 %v3259, %v3258
  %v3271 = vpack.c.b16 %v3261, %v3260
  %v3272 = vpack.c.b16 %v3263, %v3262
  %v3273 = vpack.c.b16 %v3265, %v3264
  %3282 = vmatpush.bf16.msra.mxu0 %v3273
  %3283 = vmatpush.bf16.msra.mxu0 %v3272
  %3284 = vmatpush.bf16.msra.mxu0 %v3271
  %3285 = vmatpush.bf16.msra.mxu0 %v3270
  %3286 = vmatpush.bf16.msra.mxu0 %v3269
  %3287 = vmatpush.bf16.msra.mxu0 %v3268
  %3288 = vmatpush.bf16.msra.mxu0 %v3267
  %3289 = vmatpush.bf16.msra.mxu0 %v3266
  %3290 = vmatmul.bf16.gmra.mxu0 %v2080
  %v3291 = vpop.f32.mrf.mxu0
  %v3292 = vadd.f32 0.0, %v3291
  %v3293 = vpop.f32.mrf.mxu0
  %v3294 = vadd.f32 0.0, %v3293
  %3295 = vmatmul.bf16.gmra.mxu0 %v2081
  %v3296 = vpop.f32.mrf.mxu0
  %v3297 = vadd.f32 0.0, %v3296
  %v3298 = vpop.f32.mrf.mxu0
  %v3299 = vadd.f32 0.0, %v3298
  %3300 = vmatmul.bf16.gmra.mxu0 %v2082
  %v3301 = vpop.f32.mrf.mxu0
  %v3302 = vadd.f32 0.0, %v3301
  %v3303 = vpop.f32.mrf.mxu0
  %v3304 = vadd.f32 0.0, %v3303
  %3305 = vmatmul.bf16.gmra.mxu0 %v2083
  %v3306 = vpop.f32.mrf.mxu0
  %v3307 = vadd.f32 0.0, %v3306
  %v3308 = vpop.f32.mrf.mxu0
  %v3309 = vadd.f32 0.0, %v3308
  %3310 = vmatmul.bf16.gmra.mxu0 %v2084
  %v3311 = vpop.f32.mrf.mxu0
  %v3312 = vadd.f32 0.0, %v3311
  %v3313 = vpop.f32.mrf.mxu0
  %v3314 = vadd.f32 0.0, %v3313
  %3315 = vmatmul.bf16.gmra.mxu0 %v2085
  %v3316 = vpop.f32.mrf.mxu0
  %v3317 = vadd.f32 0.0, %v3316
  %v3318 = vpop.f32.mrf.mxu0
  %v3319 = vadd.f32 0.0, %v3318
  %3320 = vmatmul.bf16.gmra.mxu0 %v3228
  %v3321 = vpop.f32.mrf.mxu0
  %v3322 = vadd.f32 0.0, %v3321
  %v3323 = vpop.f32.mrf.mxu0
  %v3324 = vadd.f32 0.0, %v3323
  %3325 = vmatmul.bf16.gmra.mxu0 %v3229
  %v3326 = vpop.f32.mrf.mxu0
  %v3327 = vadd.f32 0.0, %v3326
  %v3328 = vpop.f32.mrf.mxu0
  %v3329 = vadd.f32 0.0, %v3328
  %3330 = vmatmul.bf16.gmra.mxu0 %v3230
  %v3331 = vpop.f32.mrf.mxu0
  %v3332 = vadd.f32 0.0, %v3331
  %v3333 = vpop.f32.mrf.mxu0
  %v3334 = vadd.f32 0.0, %v3333
  %3335 = vdwg.mxu0
  %v3336 = vadd.f32 %v3181, %v3292
  %v3337 = vadd.f32 %v3182, %v3294
  %v3338 = vadd.f32 %v3183, %v3297
  %v3339 = vadd.f32 %v3184, %v3299
  %v3340 = vadd.f32 %v3185, %v3302
  %v3341 = vadd.f32 %v3186, %v3304
  %v3342 = vadd.f32 %v3187, %v3307
  %v3343 = vadd.f32 %v3188, %v3309
  %v3344 = vadd.f32 %v3189, %v3312
  %v3345 = vadd.f32 %v3190, %v3314
  %v3346 = vadd.f32 %v3191, %v3317
  %v3347 = vadd.f32 %v3192, %v3319
  %v3348 = vadd.f32 %v3193, %v3322
  %v3349 = vadd.f32 %v3194, %v3324
  %v3350 = vadd.f32 %v3195, %v3327
  %v3351 = vadd.f32 %v3196, %v3329
  %v3352 = vadd.f32 %v3197, %v3332
  %v3353 = vadd.f32 %v3198, %v3334
  %s3354 = scalar_lea.vmem %s3, 576
  %v3355 = vld [vmem:[%s3354] sm:$0xf]
  %v3356 = vld [vmem:[%s3354 + $0x4] sm:$0xf]
  %v3357 = vld [vmem:[%s3354 + $0x8] sm:$0xf]
  %v3358 = vld [vmem:[%s3354 + $0xc] sm:$0xf]
  %v3359 = vld [vmem:[%s3354 + $0x10] sm:$0xf]
  %v3360 = vld [vmem:[%s3354 + $0x14] sm:$0xf]
  %v3361 = vld [vmem:[%s3354 + $0x18] sm:$0xf]
  %v3362 = vld [vmem:[%s3354 + $0x1c] sm:$0xf]
  %v3363 = vld [vmem:[%s3354 + $0x20] sm:$0xf]
  %v3364 = vld [vmem:[%s3354 + $0x24] sm:$0xf]
  %v3365 = vld [vmem:[%s3354 + $0x28] sm:$0xf]
  %v3366 = vld [vmem:[%s3354 + $0x2c] sm:$0xf]
  %v3367 = vld [vmem:[%s3354 + $0x30] sm:$0xf]
  %v3368 = vld [vmem:[%s3354 + $0x34] sm:$0xf]
  %v3369 = vld [vmem:[%s3354 + $0x38] sm:$0xf]
  %v3370 = vld [vmem:[%s3354 + $0x3c] sm:$0xf]
  %v3377 = vunpack.c.l.b16 %v1780
  %v3378 = vunpack.c.l.b16 %v1781
  %v3379 = vunpack.c.l.b16 %v1782
  %v3380 = vunpack.c.l.b16 %v1783
  %v3381 = vunpack.c.l.b16 %v1784
  %v3382 = vunpack.c.l.b16 %v1785
  %v3383 = vpack.c.b16 %v3378, %v3377
  %v3384 = vpack.c.b16 %v3380, %v3379
  %v3385 = vpack.c.b16 %v3382, %v3381
  %v3405 = vunpack.c.l.b16 %v3355
  %v3406 = vunpack.c.l.b16 %v3356
  %v3407 = vunpack.c.l.b16 %v3357
  %v3408 = vunpack.c.l.b16 %v3358
  %v3409 = vunpack.c.l.b16 %v3359
  %v3410 = vunpack.c.l.b16 %v3360
  %v3411 = vunpack.c.l.b16 %v3361
  %v3412 = vunpack.c.l.b16 %v3362
  %v3413 = vunpack.c.l.b16 %v3363
  %v3414 = vunpack.c.l.b16 %v3364
  %v3415 = vunpack.c.l.b16 %v3365
  %v3416 = vunpack.c.l.b16 %v3366
  %v3417 = vunpack.c.l.b16 %v3367
  %v3418 = vunpack.c.l.b16 %v3368
  %v3419 = vunpack.c.l.b16 %v3369
  %v3420 = vunpack.c.l.b16 %v3370
  %v3421 = vpack.c.b16 %v3406, %v3405
  %v3422 = vpack.c.b16 %v3408, %v3407
  %v3423 = vpack.c.b16 %v3410, %v3409
  %v3424 = vpack.c.b16 %v3412, %v3411
  %v3425 = vpack.c.b16 %v3414, %v3413
  %v3426 = vpack.c.b16 %v3416, %v3415
  %v3427 = vpack.c.b16 %v3418, %v3417
  %v3428 = vpack.c.b16 %v3420, %v3419
  %3437 = vmatpush.bf16.msra.mxu0 %v3428
  %3438 = vmatpush.bf16.msra.mxu0 %v3427
  %3439 = vmatpush.bf16.msra.mxu0 %v3426
  %3440 = vmatpush.bf16.msra.mxu0 %v3425
  %3441 = vmatpush.bf16.msra.mxu0 %v3424
  %3442 = vmatpush.bf16.msra.mxu0 %v3423
  %3443 = vmatpush.bf16.msra.mxu0 %v3422
  %3444 = vmatpush.bf16.msra.mxu0 %v3421
  %3445 = vmatmul.bf16.gmra.mxu0 %v1924
  %v3446 = vpop.f32.mrf.mxu0
  %v3447 = vadd.f32 0.0, %v3446
  %v3448 = vpop.f32.mrf.mxu0
  %v3449 = vadd.f32 0.0, %v3448
  %3450 = vmatmul.bf16.gmra.mxu0 %v1925
  %v3451 = vpop.f32.mrf.mxu0
  %v3452 = vadd.f32 0.0, %v3451
  %v3453 = vpop.f32.mrf.mxu0
  %v3454 = vadd.f32 0.0, %v3453
  %3455 = vmatmul.bf16.gmra.mxu0 %v1926
  %v3456 = vpop.f32.mrf.mxu0
  %v3457 = vadd.f32 0.0, %v3456
  %v3458 = vpop.f32.mrf.mxu0
  %v3459 = vadd.f32 0.0, %v3458
  %3460 = vmatmul.bf16.gmra.mxu0 %v1927
  %v3461 = vpop.f32.mrf.mxu0
  %v3462 = vadd.f32 0.0, %v3461
  %v3463 = vpop.f32.mrf.mxu0
  %v3464 = vadd.f32 0.0, %v3463
  %3465 = vmatmul.bf16.gmra.mxu0 %v1928
  %v3466 = vpop.f32.mrf.mxu0
  %v3467 = vadd.f32 0.0, %v3466
  %v3468 = vpop.f32.mrf.mxu0
  %v3469 = vadd.f32 0.0, %v3468
  %3470 = vmatmul.bf16.gmra.mxu0 %v1929
  %v3471 = vpop.f32.mrf.mxu0
  %v3472 = vadd.f32 0.0, %v3471
  %v3473 = vpop.f32.mrf.mxu0
  %v3474 = vadd.f32 0.0, %v3473
  %3475 = vmatmul.bf16.gmra.mxu0 %v3383
  %v3476 = vpop.f32.mrf.mxu0
  %v3477 = vadd.f32 0.0, %v3476
  %v3478 = vpop.f32.mrf.mxu0
  %v3479 = vadd.f32 0.0, %v3478
  %3480 = vmatmul.bf16.gmra.mxu0 %v3384
  %v3481 = vpop.f32.mrf.mxu0
  %v3482 = vadd.f32 0.0, %v3481
  %v3483 = vpop.f32.mrf.mxu0
  %v3484 = vadd.f32 0.0, %v3483
  %3485 = vmatmul.bf16.gmra.mxu0 %v3385
  %v3486 = vpop.f32.mrf.mxu0
  %v3487 = vadd.f32 0.0, %v3486
  %v3488 = vpop.f32.mrf.mxu0
  %v3489 = vadd.f32 0.0, %v3488
  %3490 = vdwg.mxu0
  %v3491 = vadd.f32 %v3336, %v3447
  %v3492 = vadd.f32 %v3337, %v3449
  %v3493 = vadd.f32 %v3338, %v3452
  %v3494 = vadd.f32 %v3339, %v3454
  %v3495 = vadd.f32 %v3340, %v3457
  %v3496 = vadd.f32 %v3341, %v3459
  %v3497 = vadd.f32 %v3342, %v3462
  %v3498 = vadd.f32 %v3343, %v3464
  %v3499 = vadd.f32 %v3344, %v3467
  %v3500 = vadd.f32 %v3345, %v3469
  %v3501 = vadd.f32 %v3346, %v3472
  %v3502 = vadd.f32 %v3347, %v3474
  %v3503 = vadd.f32 %v3348, %v3477
  %v3504 = vadd.f32 %v3349, %v3479
  %v3505 = vadd.f32 %v3350, %v3482
  %v3506 = vadd.f32 %v3351, %v3484
  %v3507 = vadd.f32 %v3352, %v3487
  %v3508 = vadd.f32 %v3353, %v3489
  %s3509 = scalar_lea.vmem %s3, 640
  %v3510 = vld [vmem:[%s3509] sm:$0xf]
  %v3511 = vld [vmem:[%s3509 + $0x4] sm:$0xf]
  %v3512 = vld [vmem:[%s3509 + $0x8] sm:$0xf]
  %v3513 = vld [vmem:[%s3509 + $0xc] sm:$0xf]
  %v3514 = vld [vmem:[%s3509 + $0x10] sm:$0xf]
  %v3515 = vld [vmem:[%s3509 + $0x14] sm:$0xf]
  %v3516 = vld [vmem:[%s3509 + $0x18] sm:$0xf]
  %v3517 = vld [vmem:[%s3509 + $0x1c] sm:$0xf]
  %v3518 = vld [vmem:[%s3509 + $0x20] sm:$0xf]
  %v3519 = vld [vmem:[%s3509 + $0x24] sm:$0xf]
  %v3520 = vld [vmem:[%s3509 + $0x28] sm:$0xf]
  %v3521 = vld [vmem:[%s3509 + $0x2c] sm:$0xf]
  %v3522 = vld [vmem:[%s3509 + $0x30] sm:$0xf]
  %v3523 = vld [vmem:[%s3509 + $0x34] sm:$0xf]
  %v3524 = vld [vmem:[%s3509 + $0x38] sm:$0xf]
  %v3525 = vld [vmem:[%s3509 + $0x3c] sm:$0xf]
  %v3528 = vunpack.c.l.b16 %v1754
  %v3529 = vunpack.c.l.b16 %v1755
  %v3530 = vpack.c.b16 %v3529, %v3528
  %v3548 = vunpack.c.l.b16 %v3510
  %v3549 = vunpack.c.l.b16 %v3511
  %v3550 = vunpack.c.l.b16 %v3512
  %v3551 = vunpack.c.l.b16 %v3513
  %v3552 = vunpack.c.l.b16 %v3514
  %v3553 = vunpack.c.l.b16 %v3515
  %v3554 = vunpack.c.l.b16 %v3516
  %v3555 = vunpack.c.l.b16 %v3517
  %v3556 = vunpack.c.l.b16 %v3518
  %v3557 = vunpack.c.l.b16 %v3519
  %v3558 = vunpack.c.l.b16 %v3520
  %v3559 = vunpack.c.l.b16 %v3521
  %v3560 = vunpack.c.l.b16 %v3522
  %v3561 = vunpack.c.l.b16 %v3523
  %v3562 = vunpack.c.l.b16 %v3524
  %v3563 = vunpack.c.l.b16 %v3525
  %v3564 = vpack.c.b16 %v3549, %v3548
  %v3565 = vpack.c.b16 %v3551, %v3550
  %v3566 = vpack.c.b16 %v3553, %v3552
  %v3567 = vpack.c.b16 %v3555, %v3554
  %v3568 = vpack.c.b16 %v3557, %v3556
  %v3569 = vpack.c.b16 %v3559, %v3558
  %v3570 = vpack.c.b16 %v3561, %v3560
  %v3571 = vpack.c.b16 %v3563, %v3562
  %3580 = vmatpush.bf16.msra.mxu0 %v3571
  %3581 = vmatpush.bf16.msra.mxu0 %v3570
  %3582 = vmatpush.bf16.msra.mxu0 %v3569
  %3583 = vmatpush.bf16.msra.mxu0 %v3568
  %3584 = vmatpush.bf16.msra.mxu0 %v3567
  %3585 = vmatpush.bf16.msra.mxu0 %v3566
  %3586 = vmatpush.bf16.msra.mxu0 %v3565
  %3587 = vmatpush.bf16.msra.mxu0 %v3564
  %3588 = vmatmul.bf16.gmra.mxu0 %v2081
  %v3589 = vpop.f32.mrf.mxu0
  %v3590 = vadd.f32 0.0, %v3589
  %v3591 = vpop.f32.mrf.mxu0
  %v3592 = vadd.f32 0.0, %v3591
  %3593 = vmatmul.bf16.gmra.mxu0 %v2082
  %v3594 = vpop.f32.mrf.mxu0
  %v3595 = vadd.f32 0.0, %v3594
  %v3596 = vpop.f32.mrf.mxu0
  %v3597 = vadd.f32 0.0, %v3596
  %3598 = vmatmul.bf16.gmra.mxu0 %v2227
  %v3599 = vpop.f32.mrf.mxu0
  %v3600 = vadd.f32 0.0, %v3599
  %v3601 = vpop.f32.mrf.mxu0
  %v3602 = vadd.f32 0.0, %v3601
  %3603 = vmatmul.bf16.gmra.mxu0 %v2084
  %v3604 = vpop.f32.mrf.mxu0
  %v3605 = vadd.f32 0.0, %v3604
  %v3606 = vpop.f32.mrf.mxu0
  %v3607 = vadd.f32 0.0, %v3606
  %3608 = vmatmul.bf16.gmra.mxu0 %v2085
  %v3609 = vpop.f32.mrf.mxu0
  %v3610 = vadd.f32 0.0, %v3609
  %v3611 = vpop.f32.mrf.mxu0
  %v3612 = vadd.f32 0.0, %v3611
  %3613 = vmatmul.bf16.gmra.mxu0 %v2228
  %v3614 = vpop.f32.mrf.mxu0
  %v3615 = vadd.f32 0.0, %v3614
  %v3616 = vpop.f32.mrf.mxu0
  %v3617 = vadd.f32 0.0, %v3616
  %3618 = vmatmul.bf16.gmra.mxu0 %v3229
  %v3619 = vpop.f32.mrf.mxu0
  %v3620 = vadd.f32 0.0, %v3619
  %v3621 = vpop.f32.mrf.mxu0
  %v3622 = vadd.f32 0.0, %v3621
  %3623 = vmatmul.bf16.gmra.mxu0 %v3230
  %v3624 = vpop.f32.mrf.mxu0
  %v3625 = vadd.f32 0.0, %v3624
  %v3626 = vpop.f32.mrf.mxu0
  %v3627 = vadd.f32 0.0, %v3626
  %3628 = vmatmul.bf16.gmra.mxu0 %v3530
  %v3629 = vpop.f32.mrf.mxu0
  %v3630 = vadd.f32 0.0, %v3629
  %v3631 = vpop.f32.mrf.mxu0
  %v3632 = vadd.f32 0.0, %v3631
  %3633 = vdwg.mxu0
  %v3634 = vadd.f32 %v3491, %v3590
  %v3635 = vadd.f32 %v3492, %v3592
  %v3636 = vadd.f32 %v3493, %v3595
  %v3637 = vadd.f32 %v3494, %v3597
  %v3638 = vadd.f32 %v3495, %v3600
  %v3639 = vadd.f32 %v3496, %v3602
  %v3640 = vadd.f32 %v3497, %v3605
  %v3641 = vadd.f32 %v3498, %v3607
  %v3642 = vadd.f32 %v3499, %v3610
  %v3643 = vadd.f32 %v3500, %v3612
  %v3644 = vadd.f32 %v3501, %v3615
  %v3645 = vadd.f32 %v3502, %v3617
  %v3646 = vadd.f32 %v3503, %v3620
  %v3647 = vadd.f32 %v3504, %v3622
  %v3648 = vadd.f32 %v3505, %v3625
  %v3649 = vadd.f32 %v3506, %v3627
  %v3650 = vadd.f32 %v3507, %v3630
  %v3651 = vadd.f32 %v3508, %v3632
  %s3652 = scalar_lea.vmem %s3, 704
  %v3653 = vld [vmem:[%s3652] sm:$0xf]
  %v3654 = vld [vmem:[%s3652 + $0x4] sm:$0xf]
  %v3655 = vld [vmem:[%s3652 + $0x8] sm:$0xf]
  %v3656 = vld [vmem:[%s3652 + $0xc] sm:$0xf]
  %v3657 = vld [vmem:[%s3652 + $0x10] sm:$0xf]
  %v3658 = vld [vmem:[%s3652 + $0x14] sm:$0xf]
  %v3659 = vld [vmem:[%s3652 + $0x18] sm:$0xf]
  %v3660 = vld [vmem:[%s3652 + $0x1c] sm:$0xf]
  %v3661 = vld [vmem:[%s3652 + $0x20] sm:$0xf]
  %v3662 = vld [vmem:[%s3652 + $0x24] sm:$0xf]
  %v3663 = vld [vmem:[%s3652 + $0x28] sm:$0xf]
  %v3664 = vld [vmem:[%s3652 + $0x2c] sm:$0xf]
  %v3665 = vld [vmem:[%s3652 + $0x30] sm:$0xf]
  %v3666 = vld [vmem:[%s3652 + $0x34] sm:$0xf]
  %v3667 = vld [vmem:[%s3652 + $0x38] sm:$0xf]
  %v3668 = vld [vmem:[%s3652 + $0x3c] sm:$0xf]
  %v3671 = vunpack.c.l.b16 %v1786
  %v3672 = vunpack.c.l.b16 %v1787
  %v3673 = vpack.c.b16 %v3672, %v3671
  %v3691 = vunpack.c.l.b16 %v3653
  %v3692 = vunpack.c.l.b16 %v3654
  %v3693 = vunpack.c.l.b16 %v3655
  %v3694 = vunpack.c.l.b16 %v3656
  %v3695 = vunpack.c.l.b16 %v3657
  %v3696 = vunpack.c.l.b16 %v3658
  %v3697 = vunpack.c.l.b16 %v3659
  %v3698 = vunpack.c.l.b16 %v3660
  %v3699 = vunpack.c.l.b16 %v3661
  %v3700 = vunpack.c.l.b16 %v3662
  %v3701 = vunpack.c.l.b16 %v3663
  %v3702 = vunpack.c.l.b16 %v3664
  %v3703 = vunpack.c.l.b16 %v3665
  %v3704 = vunpack.c.l.b16 %v3666
  %v3705 = vunpack.c.l.b16 %v3667
  %v3706 = vunpack.c.l.b16 %v3668
  %v3707 = vpack.c.b16 %v3692, %v3691
  %v3708 = vpack.c.b16 %v3694, %v3693
  %v3709 = vpack.c.b16 %v3696, %v3695
  %v3710 = vpack.c.b16 %v3698, %v3697
  %v3711 = vpack.c.b16 %v3700, %v3699
  %v3712 = vpack.c.b16 %v3702, %v3701
  %v3713 = vpack.c.b16 %v3704, %v3703
  %v3714 = vpack.c.b16 %v3706, %v3705
  %3723 = vmatpush.bf16.msra.mxu0 %v3714
  %3724 = vmatpush.bf16.msra.mxu0 %v3713
  %3725 = vmatpush.bf16.msra.mxu0 %v3712
  %3726 = vmatpush.bf16.msra.mxu0 %v3711
  %3727 = vmatpush.bf16.msra.mxu0 %v3710
  %3728 = vmatpush.bf16.msra.mxu0 %v3709
  %3729 = vmatpush.bf16.msra.mxu0 %v3708
  %3730 = vmatpush.bf16.msra.mxu0 %v3707
  %3731 = vmatmul.bf16.gmra.mxu0 %v1925
  %v3732 = vpop.f32.mrf.mxu0
  %v3733 = vadd.f32 0.0, %v3732
  %v3734 = vpop.f32.mrf.mxu0
  %v3735 = vadd.f32 0.0, %v3734
  %3736 = vmatmul.bf16.gmra.mxu0 %v1926
  %v3737 = vpop.f32.mrf.mxu0
  %v3738 = vadd.f32 0.0, %v3737
  %v3739 = vpop.f32.mrf.mxu0
  %v3740 = vadd.f32 0.0, %v3739
  %3741 = vmatmul.bf16.gmra.mxu0 %v2382
  %v3742 = vpop.f32.mrf.mxu0
  %v3743 = vadd.f32 0.0, %v3742
  %v3744 = vpop.f32.mrf.mxu0
  %v3745 = vadd.f32 0.0, %v3744
  %3746 = vmatmul.bf16.gmra.mxu0 %v1928
  %v3747 = vpop.f32.mrf.mxu0
  %v3748 = vadd.f32 0.0, %v3747
  %v3749 = vpop.f32.mrf.mxu0
  %v3750 = vadd.f32 0.0, %v3749
  %3751 = vmatmul.bf16.gmra.mxu0 %v1929
  %v3752 = vpop.f32.mrf.mxu0
  %v3753 = vadd.f32 0.0, %v3752
  %v3754 = vpop.f32.mrf.mxu0
  %v3755 = vadd.f32 0.0, %v3754
  %3756 = vmatmul.bf16.gmra.mxu0 %v2383
  %v3757 = vpop.f32.mrf.mxu0
  %v3758 = vadd.f32 0.0, %v3757
  %v3759 = vpop.f32.mrf.mxu0
  %v3760 = vadd.f32 0.0, %v3759
  %3761 = vmatmul.bf16.gmra.mxu0 %v3384
  %v3762 = vpop.f32.mrf.mxu0
  %v3763 = vadd.f32 0.0, %v3762
  %v3764 = vpop.f32.mrf.mxu0
  %v3765 = vadd.f32 0.0, %v3764
  %3766 = vmatmul.bf16.gmra.mxu0 %v3385
  %v3767 = vpop.f32.mrf.mxu0
  %v3768 = vadd.f32 0.0, %v3767
  %v3769 = vpop.f32.mrf.mxu0
  %v3770 = vadd.f32 0.0, %v3769
  %3771 = vmatmul.bf16.gmra.mxu0 %v3673
  %v3772 = vpop.f32.mrf.mxu0
  %v3773 = vadd.f32 0.0, %v3772
  %v3774 = vpop.f32.mrf.mxu0
  %v3775 = vadd.f32 0.0, %v3774
  %3776 = vdwg.mxu0
  %v3777 = vadd.f32 %v3634, %v3733
  %v3778 = vadd.f32 %v3635, %v3735
  %v3779 = vadd.f32 %v3636, %v3738
  %v3780 = vadd.f32 %v3637, %v3740
  %v3781 = vadd.f32 %v3638, %v3743
  %v3782 = vadd.f32 %v3639, %v3745
  %v3783 = vadd.f32 %v3640, %v3748
  %v3784 = vadd.f32 %v3641, %v3750
  %v3785 = vadd.f32 %v3642, %v3753
  %v3786 = vadd.f32 %v3643, %v3755
  %v3787 = vadd.f32 %v3644, %v3758
  %v3788 = vadd.f32 %v3645, %v3760
  %v3789 = vadd.f32 %v3646, %v3763
  %v3790 = vadd.f32 %v3647, %v3765
  %v3791 = vadd.f32 %v3648, %v3768
  %v3792 = vadd.f32 %v3649, %v3770
  %v3793 = vadd.f32 %v3650, %v3773
  %v3794 = vadd.f32 %v3651, %v3775
  %s3795 = scalar_lea.vmem %s3, 768
  %v3796 = vld [vmem:[%s3795] sm:$0xf]
  %v3797 = vld [vmem:[%s3795 + $0x4] sm:$0xf]
  %v3798 = vld [vmem:[%s3795 + $0x8] sm:$0xf]
  %v3799 = vld [vmem:[%s3795 + $0xc] sm:$0xf]
  %v3800 = vld [vmem:[%s3795 + $0x10] sm:$0xf]
  %v3801 = vld [vmem:[%s3795 + $0x14] sm:$0xf]
  %v3802 = vld [vmem:[%s3795 + $0x18] sm:$0xf]
  %v3803 = vld [vmem:[%s3795 + $0x1c] sm:$0xf]
  %v3804 = vld [vmem:[%s3795 + $0x20] sm:$0xf]
  %v3805 = vld [vmem:[%s3795 + $0x24] sm:$0xf]
  %v3806 = vld [vmem:[%s3795 + $0x28] sm:$0xf]
  %v3807 = vld [vmem:[%s3795 + $0x2c] sm:$0xf]
  %v3808 = vld [vmem:[%s3795 + $0x30] sm:$0xf]
  %v3809 = vld [vmem:[%s3795 + $0x34] sm:$0xf]
  %v3810 = vld [vmem:[%s3795 + $0x38] sm:$0xf]
  %v3811 = vld [vmem:[%s3795 + $0x3c] sm:$0xf]
  %v3818 = vunpack.c.l.b16 %v1812
  %v3819 = vunpack.c.l.b16 %v1813
  %v3820 = vunpack.c.l.b16 %v1814
  %v3821 = vunpack.c.l.b16 %v1815
  %v3822 = vunpack.c.l.b16 %v1816
  %v3823 = vunpack.c.l.b16 %v1817
  %v3824 = vpack.c.b16 %v3819, %v3818
  %v3825 = vpack.c.b16 %v3821, %v3820
  %v3826 = vpack.c.b16 %v3823, %v3822
  %v3846 = vunpack.c.l.b16 %v3796
  %v3847 = vunpack.c.l.b16 %v3797
  %v3848 = vunpack.c.l.b16 %v3798
  %v3849 = vunpack.c.l.b16 %v3799
  %v3850 = vunpack.c.l.b16 %v3800
  %v3851 = vunpack.c.l.b16 %v3801
  %v3852 = vunpack.c.l.b16 %v3802
  %v3853 = vunpack.c.l.b16 %v3803
  %v3854 = vunpack.c.l.b16 %v3804
  %v3855 = vunpack.c.l.b16 %v3805
  %v3856 = vunpack.c.l.b16 %v3806
  %v3857 = vunpack.c.l.b16 %v3807
  %v3858 = vunpack.c.l.b16 %v3808
  %v3859 = vunpack.c.l.b16 %v3809
  %v3860 = vunpack.c.l.b16 %v3810
  %v3861 = vunpack.c.l.b16 %v3811
  %v3862 = vpack.c.b16 %v3847, %v3846
  %v3863 = vpack.c.b16 %v3849, %v3848
  %v3864 = vpack.c.b16 %v3851, %v3850
  %v3865 = vpack.c.b16 %v3853, %v3852
  %v3866 = vpack.c.b16 %v3855, %v3854
  %v3867 = vpack.c.b16 %v3857, %v3856
  %v3868 = vpack.c.b16 %v3859, %v3858
  %v3869 = vpack.c.b16 %v3861, %v3860
  %3878 = vmatpush.bf16.msra.mxu0 %v3869
  %3879 = vmatpush.bf16.msra.mxu0 %v3868
  %3880 = vmatpush.bf16.msra.mxu0 %v3867
  %3881 = vmatpush.bf16.msra.mxu0 %v3866
  %3882 = vmatpush.bf16.msra.mxu0 %v3865
  %3883 = vmatpush.bf16.msra.mxu0 %v3864
  %3884 = vmatpush.bf16.msra.mxu0 %v3863
  %3885 = vmatpush.bf16.msra.mxu0 %v3862
  %3886 = vmatmul.bf16.gmra.mxu0 %v2563
  %v3887 = vpop.f32.mrf.mxu0
  %v3888 = vadd.f32 0.0, %v3887
  %v3889 = vpop.f32.mrf.mxu0
  %v3890 = vadd.f32 0.0, %v3889
  %3891 = vmatmul.bf16.gmra.mxu0 %v2564
  %v3892 = vpop.f32.mrf.mxu0
  %v3893 = vadd.f32 0.0, %v3892
  %v3894 = vpop.f32.mrf.mxu0
  %v3895 = vadd.f32 0.0, %v3894
  %3896 = vmatmul.bf16.gmra.mxu0 %v2565
  %v3897 = vpop.f32.mrf.mxu0
  %v3898 = vadd.f32 0.0, %v3897
  %v3899 = vpop.f32.mrf.mxu0
  %v3900 = vadd.f32 0.0, %v3899
  %3901 = vmatmul.bf16.gmra.mxu0 %v2566
  %v3902 = vpop.f32.mrf.mxu0
  %v3903 = vadd.f32 0.0, %v3902
  %v3904 = vpop.f32.mrf.mxu0
  %v3905 = vadd.f32 0.0, %v3904
  %3906 = vmatmul.bf16.gmra.mxu0 %v2567
  %v3907 = vpop.f32.mrf.mxu0
  %v3908 = vadd.f32 0.0, %v3907
  %v3909 = vpop.f32.mrf.mxu0
  %v3910 = vadd.f32 0.0, %v3909
  %3911 = vmatmul.bf16.gmra.mxu0 %v2568
  %v3912 = vpop.f32.mrf.mxu0
  %v3913 = vadd.f32 0.0, %v3912
  %v3914 = vpop.f32.mrf.mxu0
  %v3915 = vadd.f32 0.0, %v3914
  %3916 = vmatmul.bf16.gmra.mxu0 %v3824
  %v3917 = vpop.f32.mrf.mxu0
  %v3918 = vadd.f32 0.0, %v3917
  %v3919 = vpop.f32.mrf.mxu0
  %v3920 = vadd.f32 0.0, %v3919
  %3921 = vmatmul.bf16.gmra.mxu0 %v3825
  %v3922 = vpop.f32.mrf.mxu0
  %v3923 = vadd.f32 0.0, %v3922
  %v3924 = vpop.f32.mrf.mxu0
  %v3925 = vadd.f32 0.0, %v3924
  %3926 = vmatmul.bf16.gmra.mxu0 %v3826
  %v3927 = vpop.f32.mrf.mxu0
  %v3928 = vadd.f32 0.0, %v3927
  %v3929 = vpop.f32.mrf.mxu0
  %v3930 = vadd.f32 0.0, %v3929
  %3931 = vdwg.mxu0
  %v3932 = vadd.f32 %v3777, %v3888
  %v3933 = vadd.f32 %v3778, %v3890
  %v3934 = vadd.f32 %v3779, %v3893
  %v3935 = vadd.f32 %v3780, %v3895
  %v3936 = vadd.f32 %v3781, %v3898
  %v3937 = vadd.f32 %v3782, %v3900
  %v3938 = vadd.f32 %v3783, %v3903
  %v3939 = vadd.f32 %v3784, %v3905
  %v3940 = vadd.f32 %v3785, %v3908
  %v3941 = vadd.f32 %v3786, %v3910
  %v3942 = vadd.f32 %v3787, %v3913
  %v3943 = vadd.f32 %v3788, %v3915
  %v3944 = vadd.f32 %v3789, %v3918
  %v3945 = vadd.f32 %v3790, %v3920
  %v3946 = vadd.f32 %v3791, %v3923
  %v3947 = vadd.f32 %v3792, %v3925
  %v3948 = vadd.f32 %v3793, %v3928
  %v3949 = vadd.f32 %v3794, %v3930
  %s3950 = scalar_lea.vmem %s3, 832
  %v3951 = vld [vmem:[%s3950] sm:$0xf]
  %v3952 = vld [vmem:[%s3950 + $0x4] sm:$0xf]
  %v3953 = vld [vmem:[%s3950 + $0x8] sm:$0xf]
  %v3954 = vld [vmem:[%s3950 + $0xc] sm:$0xf]
  %v3955 = vld [vmem:[%s3950 + $0x10] sm:$0xf]
  %v3956 = vld [vmem:[%s3950 + $0x14] sm:$0xf]
  %v3957 = vld [vmem:[%s3950 + $0x18] sm:$0xf]
  %v3958 = vld [vmem:[%s3950 + $0x1c] sm:$0xf]
  %v3959 = vld [vmem:[%s3950 + $0x20] sm:$0xf]
  %v3960 = vld [vmem:[%s3950 + $0x24] sm:$0xf]
  %v3961 = vld [vmem:[%s3950 + $0x28] sm:$0xf]
  %v3962 = vld [vmem:[%s3950 + $0x2c] sm:$0xf]
  %v3963 = vld [vmem:[%s3950 + $0x30] sm:$0xf]
  %v3964 = vld [vmem:[%s3950 + $0x34] sm:$0xf]
  %v3965 = vld [vmem:[%s3950 + $0x38] sm:$0xf]
  %v3966 = vld [vmem:[%s3950 + $0x3c] sm:$0xf]
  %v3973 = vunpack.c.l.b16 %v1844
  %v3974 = vunpack.c.l.b16 %v1845
  %v3975 = vunpack.c.l.b16 %v1846
  %v3976 = vunpack.c.l.b16 %v1847
  %v3977 = vunpack.c.l.b16 %v1848
  %v3978 = vunpack.c.l.b16 %v1849
  %v3979 = vpack.c.b16 %v3974, %v3973
  %v3980 = vpack.c.b16 %v3976, %v3975
  %v3981 = vpack.c.b16 %v3978, %v3977
  %v4001 = vunpack.c.l.b16 %v3951
  %v4002 = vunpack.c.l.b16 %v3952
  %v4003 = vunpack.c.l.b16 %v3953
  %v4004 = vunpack.c.l.b16 %v3954
  %v4005 = vunpack.c.l.b16 %v3955
  %v4006 = vunpack.c.l.b16 %v3956
  %v4007 = vunpack.c.l.b16 %v3957
  %v4008 = vunpack.c.l.b16 %v3958
  %v4009 = vunpack.c.l.b16 %v3959
  %v4010 = vunpack.c.l.b16 %v3960
  %v4011 = vunpack.c.l.b16 %v3961
  %v4012 = vunpack.c.l.b16 %v3962
  %v4013 = vunpack.c.l.b16 %v3963
  %v4014 = vunpack.c.l.b16 %v3964
  %v4015 = vunpack.c.l.b16 %v3965
  %v4016 = vunpack.c.l.b16 %v3966
  %v4017 = vpack.c.b16 %v4002, %v4001
  %v4018 = vpack.c.b16 %v4004, %v4003
  %v4019 = vpack.c.b16 %v4006, %v4005
  %v4020 = vpack.c.b16 %v4008, %v4007
  %v4021 = vpack.c.b16 %v4010, %v4009
  %v4022 = vpack.c.b16 %v4012, %v4011
  %v4023 = vpack.c.b16 %v4014, %v4013
  %v4024 = vpack.c.b16 %v4016, %v4015
  %4033 = vmatpush.bf16.msra.mxu0 %v4024
  %4034 = vmatpush.bf16.msra.mxu0 %v4023
  %4035 = vmatpush.bf16.msra.mxu0 %v4022
  %4036 = vmatpush.bf16.msra.mxu0 %v4021
  %4037 = vmatpush.bf16.msra.mxu0 %v4020
  %4038 = vmatpush.bf16.msra.mxu0 %v4019
  %4039 = vmatpush.bf16.msra.mxu0 %v4018
  %4040 = vmatpush.bf16.msra.mxu0 %v4017
  %4041 = vmatmul.bf16.gmra.mxu0 %v2754
  %v4042 = vpop.f32.mrf.mxu0
  %v4043 = vadd.f32 0.0, %v4042
  %v4044 = vpop.f32.mrf.mxu0
  %v4045 = vadd.f32 0.0, %v4044
  %4046 = vmatmul.bf16.gmra.mxu0 %v2755
  %v4047 = vpop.f32.mrf.mxu0
  %v4048 = vadd.f32 0.0, %v4047
  %v4049 = vpop.f32.mrf.mxu0
  %v4050 = vadd.f32 0.0, %v4049
  %4051 = vmatmul.bf16.gmra.mxu0 %v2756
  %v4052 = vpop.f32.mrf.mxu0
  %v4053 = vadd.f32 0.0, %v4052
  %v4054 = vpop.f32.mrf.mxu0
  %v4055 = vadd.f32 0.0, %v4054
  %4056 = vmatmul.bf16.gmra.mxu0 %v2757
  %v4057 = vpop.f32.mrf.mxu0
  %v4058 = vadd.f32 0.0, %v4057
  %v4059 = vpop.f32.mrf.mxu0
  %v4060 = vadd.f32 0.0, %v4059
  %4061 = vmatmul.bf16.gmra.mxu0 %v2758
  %v4062 = vpop.f32.mrf.mxu0
  %v4063 = vadd.f32 0.0, %v4062
  %v4064 = vpop.f32.mrf.mxu0
  %v4065 = vadd.f32 0.0, %v4064
  %4066 = vmatmul.bf16.gmra.mxu0 %v2759
  %v4067 = vpop.f32.mrf.mxu0
  %v4068 = vadd.f32 0.0, %v4067
  %v4069 = vpop.f32.mrf.mxu0
  %v4070 = vadd.f32 0.0, %v4069
  %4071 = vmatmul.bf16.gmra.mxu0 %v3979
  %v4072 = vpop.f32.mrf.mxu0
  %v4073 = vadd.f32 0.0, %v4072
  %v4074 = vpop.f32.mrf.mxu0
  %v4075 = vadd.f32 0.0, %v4074
  %4076 = vmatmul.bf16.gmra.mxu0 %v3980
  %v4077 = vpop.f32.mrf.mxu0
  %v4078 = vadd.f32 0.0, %v4077
  %v4079 = vpop.f32.mrf.mxu0
  %v4080 = vadd.f32 0.0, %v4079
  %4081 = vmatmul.bf16.gmra.mxu0 %v3981
  %v4082 = vpop.f32.mrf.mxu0
  %v4083 = vadd.f32 0.0, %v4082
  %v4084 = vpop.f32.mrf.mxu0
  %v4085 = vadd.f32 0.0, %v4084
  %4086 = vdwg.mxu0
  %v4087 = vadd.f32 %v3932, %v4043
  %v4088 = vadd.f32 %v3933, %v4045
  %v4089 = vadd.f32 %v3934, %v4048
  %v4090 = vadd.f32 %v3935, %v4050
  %v4091 = vadd.f32 %v3936, %v4053
  %v4092 = vadd.f32 %v3937, %v4055
  %v4093 = vadd.f32 %v3938, %v4058
  %v4094 = vadd.f32 %v3939, %v4060
  %v4095 = vadd.f32 %v3940, %v4063
  %v4096 = vadd.f32 %v3941, %v4065
  %v4097 = vadd.f32 %v3942, %v4068
  %v4098 = vadd.f32 %v3943, %v4070
  %v4099 = vadd.f32 %v3944, %v4073
  %v4100 = vadd.f32 %v3945, %v4075
  %v4101 = vadd.f32 %v3946, %v4078
  %v4102 = vadd.f32 %v3947, %v4080
  %v4103 = vadd.f32 %v3948, %v4083
  %v4104 = vadd.f32 %v3949, %v4085
  %s4105 = scalar_lea.vmem %s3, 896
  %v4106 = vld [vmem:[%s4105] sm:$0xf]
  %v4107 = vld [vmem:[%s4105 + $0x4] sm:$0xf]
  %v4108 = vld [vmem:[%s4105 + $0x8] sm:$0xf]
  %v4109 = vld [vmem:[%s4105 + $0xc] sm:$0xf]
  %v4110 = vld [vmem:[%s4105 + $0x10] sm:$0xf]
  %v4111 = vld [vmem:[%s4105 + $0x14] sm:$0xf]
  %v4112 = vld [vmem:[%s4105 + $0x18] sm:$0xf]
  %v4113 = vld [vmem:[%s4105 + $0x1c] sm:$0xf]
  %v4114 = vld [vmem:[%s4105 + $0x20] sm:$0xf]
  %v4115 = vld [vmem:[%s4105 + $0x24] sm:$0xf]
  %v4116 = vld [vmem:[%s4105 + $0x28] sm:$0xf]
  %v4117 = vld [vmem:[%s4105 + $0x2c] sm:$0xf]
  %v4118 = vld [vmem:[%s4105 + $0x30] sm:$0xf]
  %v4119 = vld [vmem:[%s4105 + $0x34] sm:$0xf]
  %v4120 = vld [vmem:[%s4105 + $0x38] sm:$0xf]
  %v4121 = vld [vmem:[%s4105 + $0x3c] sm:$0xf]
  %v4124 = vunpack.c.l.b16 %v1818
  %v4125 = vunpack.c.l.b16 %v1819
  %v4126 = vpack.c.b16 %v4125, %v4124
  %v4144 = vunpack.c.l.b16 %v4106
  %v4145 = vunpack.c.l.b16 %v4107
  %v4146 = vunpack.c.l.b16 %v4108
  %v4147 = vunpack.c.l.b16 %v4109
  %v4148 = vunpack.c.l.b16 %v4110
  %v4149 = vunpack.c.l.b16 %v4111
  %v4150 = vunpack.c.l.b16 %v4112
  %v4151 = vunpack.c.l.b16 %v4113
  %v4152 = vunpack.c.l.b16 %v4114
  %v4153 = vunpack.c.l.b16 %v4115
  %v4154 = vunpack.c.l.b16 %v4116
  %v4155 = vunpack.c.l.b16 %v4117
  %v4156 = vunpack.c.l.b16 %v4118
  %v4157 = vunpack.c.l.b16 %v4119
  %v4158 = vunpack.c.l.b16 %v4120
  %v4159 = vunpack.c.l.b16 %v4121
  %v4160 = vpack.c.b16 %v4145, %v4144
  %v4161 = vpack.c.b16 %v4147, %v4146
  %v4162 = vpack.c.b16 %v4149, %v4148
  %v4163 = vpack.c.b16 %v4151, %v4150
  %v4164 = vpack.c.b16 %v4153, %v4152
  %v4165 = vpack.c.b16 %v4155, %v4154
  %v4166 = vpack.c.b16 %v4157, %v4156
  %v4167 = vpack.c.b16 %v4159, %v4158
  %4176 = vmatpush.bf16.msra.mxu0 %v4167
  %4177 = vmatpush.bf16.msra.mxu0 %v4166
  %4178 = vmatpush.bf16.msra.mxu0 %v4165
  %4179 = vmatpush.bf16.msra.mxu0 %v4164
  %4180 = vmatpush.bf16.msra.mxu0 %v4163
  %4181 = vmatpush.bf16.msra.mxu0 %v4162
  %4182 = vmatpush.bf16.msra.mxu0 %v4161
  %4183 = vmatpush.bf16.msra.mxu0 %v4160
  %4184 = vmatmul.bf16.gmra.mxu0 %v2564
  %v4185 = vpop.f32.mrf.mxu0
  %v4186 = vadd.f32 0.0, %v4185
  %v4187 = vpop.f32.mrf.mxu0
  %v4188 = vadd.f32 0.0, %v4187
  %4189 = vmatmul.bf16.gmra.mxu0 %v2565
  %v4190 = vpop.f32.mrf.mxu0
  %v4191 = vadd.f32 0.0, %v4190
  %v4192 = vpop.f32.mrf.mxu0
  %v4193 = vadd.f32 0.0, %v4192
  %4194 = vmatmul.bf16.gmra.mxu0 %v2919
  %v4195 = vpop.f32.mrf.mxu0
  %v4196 = vadd.f32 0.0, %v4195
  %v4197 = vpop.f32.mrf.mxu0
  %v4198 = vadd.f32 0.0, %v4197
  %4199 = vmatmul.bf16.gmra.mxu0 %v2567
  %v4200 = vpop.f32.mrf.mxu0
  %v4201 = vadd.f32 0.0, %v4200
  %v4202 = vpop.f32.mrf.mxu0
  %v4203 = vadd.f32 0.0, %v4202
  %4204 = vmatmul.bf16.gmra.mxu0 %v2568
  %v4205 = vpop.f32.mrf.mxu0
  %v4206 = vadd.f32 0.0, %v4205
  %v4207 = vpop.f32.mrf.mxu0
  %v4208 = vadd.f32 0.0, %v4207
  %4209 = vmatmul.bf16.gmra.mxu0 %v2920
  %v4210 = vpop.f32.mrf.mxu0
  %v4211 = vadd.f32 0.0, %v4210
  %v4212 = vpop.f32.mrf.mxu0
  %v4213 = vadd.f32 0.0, %v4212
  %4214 = vmatmul.bf16.gmra.mxu0 %v3825
  %v4215 = vpop.f32.mrf.mxu0
  %v4216 = vadd.f32 0.0, %v4215
  %v4217 = vpop.f32.mrf.mxu0
  %v4218 = vadd.f32 0.0, %v4217
  %4219 = vmatmul.bf16.gmra.mxu0 %v3826
  %v4220 = vpop.f32.mrf.mxu0
  %v4221 = vadd.f32 0.0, %v4220
  %v4222 = vpop.f32.mrf.mxu0
  %v4223 = vadd.f32 0.0, %v4222
  %4224 = vmatmul.bf16.gmra.mxu0 %v4126
  %v4225 = vpop.f32.mrf.mxu0
  %v4226 = vadd.f32 0.0, %v4225
  %v4227 = vpop.f32.mrf.mxu0
  %v4228 = vadd.f32 0.0, %v4227
  %4229 = vdwg.mxu0
  %v4230 = vadd.f32 %v4087, %v4186
  %v4231 = vadd.f32 %v4088, %v4188
  %v4232 = vadd.f32 %v4089, %v4191
  %v4233 = vadd.f32 %v4090, %v4193
  %v4234 = vadd.f32 %v4091, %v4196
  %v4235 = vadd.f32 %v4092, %v4198
  %v4236 = vadd.f32 %v4093, %v4201
  %v4237 = vadd.f32 %v4094, %v4203
  %v4238 = vadd.f32 %v4095, %v4206
  %v4239 = vadd.f32 %v4096, %v4208
  %v4240 = vadd.f32 %v4097, %v4211
  %v4241 = vadd.f32 %v4098, %v4213
  %v4242 = vadd.f32 %v4099, %v4216
  %v4243 = vadd.f32 %v4100, %v4218
  %v4244 = vadd.f32 %v4101, %v4221
  %v4245 = vadd.f32 %v4102, %v4223
  %v4246 = vadd.f32 %v4103, %v4226
  %v4247 = vadd.f32 %v4104, %v4228
  %s4248 = scalar_lea.vmem %s3, 960
  %v4249 = vld [vmem:[%s4248] sm:$0xf]
  %v4250 = vld [vmem:[%s4248 + $0x4] sm:$0xf]
  %v4251 = vld [vmem:[%s4248 + $0x8] sm:$0xf]
  %v4252 = vld [vmem:[%s4248 + $0xc] sm:$0xf]
  %v4253 = vld [vmem:[%s4248 + $0x10] sm:$0xf]
  %v4254 = vld [vmem:[%s4248 + $0x14] sm:$0xf]
  %v4255 = vld [vmem:[%s4248 + $0x18] sm:$0xf]
  %v4256 = vld [vmem:[%s4248 + $0x1c] sm:$0xf]
  %v4257 = vld [vmem:[%s4248 + $0x20] sm:$0xf]
  %v4258 = vld [vmem:[%s4248 + $0x24] sm:$0xf]
  %v4259 = vld [vmem:[%s4248 + $0x28] sm:$0xf]
  %v4260 = vld [vmem:[%s4248 + $0x2c] sm:$0xf]
  %v4261 = vld [vmem:[%s4248 + $0x30] sm:$0xf]
  %v4262 = vld [vmem:[%s4248 + $0x34] sm:$0xf]
  %v4263 = vld [vmem:[%s4248 + $0x38] sm:$0xf]
  %v4264 = vld [vmem:[%s4248 + $0x3c] sm:$0xf]
  %v4267 = vunpack.c.l.b16 %v1850
  %v4268 = vunpack.c.l.b16 %v1851
  %v4269 = vpack.c.b16 %v4268, %v4267
  %v4287 = vunpack.c.l.b16 %v4249
  %v4288 = vunpack.c.l.b16 %v4250
  %v4289 = vunpack.c.l.b16 %v4251
  %v4290 = vunpack.c.l.b16 %v4252
  %v4291 = vunpack.c.l.b16 %v4253
  %v4292 = vunpack.c.l.b16 %v4254
  %v4293 = vunpack.c.l.b16 %v4255
  %v4294 = vunpack.c.l.b16 %v4256
  %v4295 = vunpack.c.l.b16 %v4257
  %v4296 = vunpack.c.l.b16 %v4258
  %v4297 = vunpack.c.l.b16 %v4259
  %v4298 = vunpack.c.l.b16 %v4260
  %v4299 = vunpack.c.l.b16 %v4261
  %v4300 = vunpack.c.l.b16 %v4262
  %v4301 = vunpack.c.l.b16 %v4263
  %v4302 = vunpack.c.l.b16 %v4264
  %v4303 = vpack.c.b16 %v4288, %v4287
  %v4304 = vpack.c.b16 %v4290, %v4289
  %v4305 = vpack.c.b16 %v4292, %v4291
  %v4306 = vpack.c.b16 %v4294, %v4293
  %v4307 = vpack.c.b16 %v4296, %v4295
  %v4308 = vpack.c.b16 %v4298, %v4297
  %v4309 = vpack.c.b16 %v4300, %v4299
  %v4310 = vpack.c.b16 %v4302, %v4301
  %4319 = vmatpush.bf16.msra.mxu0 %v4310
  %4320 = vmatpush.bf16.msra.mxu0 %v4309
  %4321 = vmatpush.bf16.msra.mxu0 %v4308
  %4322 = vmatpush.bf16.msra.mxu0 %v4307
  %4323 = vmatpush.bf16.msra.mxu0 %v4306
  %4324 = vmatpush.bf16.msra.mxu0 %v4305
  %4325 = vmatpush.bf16.msra.mxu0 %v4304
  %4326 = vmatpush.bf16.msra.mxu0 %v4303
  %4327 = vmatmul.bf16.gmra.mxu0 %v2755
  %v4328 = vpop.f32.mrf.mxu0
  %v4329 = vadd.f32 0.0, %v4328
  %v4330 = vpop.f32.mrf.mxu0
  %v4331 = vadd.f32 0.0, %v4330
  %4332 = vmatmul.bf16.gmra.mxu0 %v2756
  %v4333 = vpop.f32.mrf.mxu0
  %v4334 = vadd.f32 0.0, %v4333
  %v4335 = vpop.f32.mrf.mxu0
  %v4336 = vadd.f32 0.0, %v4335
  %4337 = vmatmul.bf16.gmra.mxu0 %v3074
  %v4338 = vpop.f32.mrf.mxu0
  %v4339 = vadd.f32 0.0, %v4338
  %v4340 = vpop.f32.mrf.mxu0
  %v4341 = vadd.f32 0.0, %v4340
  %4342 = vmatmul.bf16.gmra.mxu0 %v2758
  %v4343 = vpop.f32.mrf.mxu0
  %v4344 = vadd.f32 0.0, %v4343
  %v4345 = vpop.f32.mrf.mxu0
  %v4346 = vadd.f32 0.0, %v4345
  %4347 = vmatmul.bf16.gmra.mxu0 %v2759
  %v4348 = vpop.f32.mrf.mxu0
  %v4349 = vadd.f32 0.0, %v4348
  %v4350 = vpop.f32.mrf.mxu0
  %v4351 = vadd.f32 0.0, %v4350
  %4352 = vmatmul.bf16.gmra.mxu0 %v3075
  %v4353 = vpop.f32.mrf.mxu0
  %v4354 = vadd.f32 0.0, %v4353
  %v4355 = vpop.f32.mrf.mxu0
  %v4356 = vadd.f32 0.0, %v4355
  %4357 = vmatmul.bf16.gmra.mxu0 %v3980
  %v4358 = vpop.f32.mrf.mxu0
  %v4359 = vadd.f32 0.0, %v4358
  %v4360 = vpop.f32.mrf.mxu0
  %v4361 = vadd.f32 0.0, %v4360
  %4362 = vmatmul.bf16.gmra.mxu0 %v3981
  %v4363 = vpop.f32.mrf.mxu0
  %v4364 = vadd.f32 0.0, %v4363
  %v4365 = vpop.f32.mrf.mxu0
  %v4366 = vadd.f32 0.0, %v4365
  %4367 = vmatmul.bf16.gmra.mxu0 %v4269
  %v4368 = vpop.f32.mrf.mxu0
  %v4369 = vadd.f32 0.0, %v4368
  %v4370 = vpop.f32.mrf.mxu0
  %v4371 = vadd.f32 0.0, %v4370
  %4372 = vdwg.mxu0
  %v4373 = vadd.f32 %v4230, %v4329
  %v4374 = vadd.f32 %v4231, %v4331
  %v4375 = vadd.f32 %v4232, %v4334
  %v4376 = vadd.f32 %v4233, %v4336
  %v4377 = vadd.f32 %v4234, %v4339
  %v4378 = vadd.f32 %v4235, %v4341
  %v4379 = vadd.f32 %v4236, %v4344
  %v4380 = vadd.f32 %v4237, %v4346
  %v4381 = vadd.f32 %v4238, %v4349
  %v4382 = vadd.f32 %v4239, %v4351
  %v4383 = vadd.f32 %v4240, %v4354
  %v4384 = vadd.f32 %v4241, %v4356
  %v4385 = vadd.f32 %v4242, %v4359
  %v4386 = vadd.f32 %v4243, %v4361
  %v4387 = vadd.f32 %v4244, %v4364
  %v4388 = vadd.f32 %v4245, %v4366
  %v4389 = vadd.f32 %v4246, %v4369
  %v4390 = vadd.f32 %v4247, %v4371
  %v4391 = vld [vmem:[%s4] sm:$0x1]
  %v4393 = vperm.slane %v4391, 0
  %v4395 = vadd.f32 %v4373, %v4393
  %v4396 = vadd.f32 %v4374, %v4393
  %v4397 = vadd.f32 %v4375, %v4393
  %v4398 = vadd.f32 %v4376, %v4393
  %v4399 = vadd.f32 %v4377, %v4393
  %v4400 = vadd.f32 %v4378, %v4393
  %v4401 = vadd.f32 %v4379, %v4393
  %v4402 = vadd.f32 %v4380, %v4393
  %v4403 = vadd.f32 %v4381, %v4393
  %v4404 = vadd.f32 %v4382, %v4393
  %v4405 = vadd.f32 %v4383, %v4393
  %v4406 = vadd.f32 %v4384, %v4393
  %v4407 = vadd.f32 %v4385, %v4393
  %v4408 = vadd.f32 %v4386, %v4393
  %v4409 = vadd.f32 %v4387, %v4393
  %v4410 = vadd.f32 %v4388, %v4393
  %v4411 = vadd.f32 %v4389, %v4393
  %v4412 = vadd.f32 %v4390, %v4393
  %v4413 = vmax.f32 %v4395, 0.0
  %v4414 = vmax.f32 %v4396, 0.0
  %v4415 = vmax.f32 %v4397, 0.0
  %v4416 = vmax.f32 %v4398, 0.0
  %v4417 = vmax.f32 %v4399, 0.0
  %v4418 = vmax.f32 %v4400, 0.0
  %v4419 = vmax.f32 %v4401, 0.0
  %v4420 = vmax.f32 %v4402, 0.0
  %v4421 = vmax.f32 %v4403, 0.0
  %v4422 = vmax.f32 %v4404, 0.0
  %v4423 = vmax.f32 %v4405, 0.0
  %v4424 = vmax.f32 %v4406, 0.0
  %v4425 = vmax.f32 %v4407, 0.0
  %v4426 = vmax.f32 %v4408, 0.0
  %v4427 = vmax.f32 %v4409, 0.0
  %v4428 = vmax.f32 %v4410, 0.0
  %v4429 = vmax.f32 %v4411, 0.0
  %v4430 = vmax.f32 %v4412, 0.0
  %v4431 = vpack.c.bf16 %v4413, %v4413
  %v4432 = vpack.c.bf16 %v4414, %v4414
  %v4433 = vpack.c.bf16 %v4415, %v4415
  %v4434 = vpack.c.bf16 %v4416, %v4416
  %v4435 = vpack.c.bf16 %v4417, %v4417
  %v4436 = vpack.c.bf16 %v4418, %v4418
  %v4437 = vpack.c.bf16 %v4419, %v4419
  %v4438 = vpack.c.bf16 %v4420, %v4420
  %v4439 = vpack.c.bf16 %v4421, %v4421
  %v4440 = vpack.c.bf16 %v4422, %v4422
  %v4441 = vpack.c.bf16 %v4423, %v4423
  %v4442 = vpack.c.bf16 %v4424, %v4424
  %v4443 = vpack.c.bf16 %v4425, %v4425
  %v4444 = vpack.c.bf16 %v4426, %v4426
  %v4445 = vpack.c.bf16 %v4427, %v4427
  %v4446 = vpack.c.bf16 %v4428, %v4428
  %v4447 = vpack.c.bf16 %v4429, %v4429
  %v4448 = vpack.c.bf16 %v4430, %v4430
  %v4449 = vld [vmem:[%s5] sm:$0xf]
  %v4450 = vld [vmem:[%s5 + $0x4] sm:$0xf]
  %v4451 = vld [vmem:[%s5 + $0x8] sm:$0xf]
  %v4452 = vld [vmem:[%s5 + $0xc] sm:$0xf]
  %v4453 = vld [vmem:[%s5 + $0x10] sm:$0xf]
  %v4454 = vld [vmem:[%s5 + $0x14] sm:$0xf]
  %v4455 = vld [vmem:[%s5 + $0x18] sm:$0xf]
  %v4456 = vld [vmem:[%s5 + $0x1c] sm:$0xf]
  %v4457 = vld [vmem:[%s5 + $0x20] sm:$0xf]
  %v4458 = vld [vmem:[%s5 + $0x24] sm:$0xf]
  %v4459 = vld [vmem:[%s5 + $0x28] sm:$0xf]
  %v4460 = vld [vmem:[%s5 + $0x2c] sm:$0xf]
  %v4461 = vld [vmem:[%s5 + $0x30] sm:$0xf]
  %v4462 = vld [vmem:[%s5 + $0x34] sm:$0xf]
  %v4463 = vld [vmem:[%s5 + $0x38] sm:$0xf]
  %v4464 = vld [vmem:[%s5 + $0x3c] sm:$0xf]
  %s4465 = scalar_lea.vmem %s5, 64
  %v4466 = vld [vmem:[%s4465] sm:$0xf]
  %v4467 = vld [vmem:[%s4465 + $0x4] sm:$0xf]
  %v4468 = vld [vmem:[%s4465 + $0x8] sm:$0xf]
  %v4469 = vld [vmem:[%s4465 + $0xc] sm:$0xf]
  %v4470 = vld [vmem:[%s4465 + $0x10] sm:$0xf]
  %v4471 = vld [vmem:[%s4465 + $0x14] sm:$0xf]
  %v4472 = vld [vmem:[%s4465 + $0x18] sm:$0xf]
  %v4473 = vld [vmem:[%s4465 + $0x1c] sm:$0xf]
  %v4474 = vld [vmem:[%s4465 + $0x20] sm:$0xf]
  %v4475 = vld [vmem:[%s4465 + $0x24] sm:$0xf]
  %v4476 = vld [vmem:[%s4465 + $0x28] sm:$0xf]
  %v4477 = vld [vmem:[%s4465 + $0x2c] sm:$0xf]
  %v4478 = vld [vmem:[%s4465 + $0x30] sm:$0xf]
  %v4479 = vld [vmem:[%s4465 + $0x34] sm:$0xf]
  %v4480 = vld [vmem:[%s4465 + $0x38] sm:$0xf]
  %v4481 = vld [vmem:[%s4465 + $0x3c] sm:$0xf]
  %v4484 = vunpack.c.l.b16 %v4433
  %v4485 = vunpack.c.l.b16 %v4434
  %v4486 = vpack.c.b16 %v4485, %v4484
  %v4504 = vunpack.c.l.b16 %v4466
  %v4505 = vunpack.c.l.b16 %v4467
  %v4506 = vunpack.c.l.b16 %v4468
  %v4507 = vunpack.c.l.b16 %v4469
  %v4508 = vunpack.c.l.b16 %v4470
  %v4509 = vunpack.c.l.b16 %v4471
  %v4510 = vunpack.c.l.b16 %v4472
  %v4511 = vunpack.c.l.b16 %v4473
  %v4512 = vunpack.c.l.b16 %v4474
  %v4513 = vunpack.c.l.b16 %v4475
  %v4514 = vunpack.c.l.b16 %v4476
  %v4515 = vunpack.c.l.b16 %v4477
  %v4516 = vunpack.c.l.b16 %v4478
  %v4517 = vunpack.c.l.b16 %v4479
  %v4518 = vunpack.c.l.b16 %v4480
  %v4519 = vunpack.c.l.b16 %v4481
  %v4520 = vpack.c.b16 %v4505, %v4504
  %v4521 = vpack.c.b16 %v4507, %v4506
  %v4522 = vpack.c.b16 %v4509, %v4508
  %v4523 = vpack.c.b16 %v4511, %v4510
  %v4524 = vpack.c.b16 %v4513, %v4512
  %v4525 = vpack.c.b16 %v4515, %v4514
  %v4526 = vpack.c.b16 %v4517, %v4516
  %v4527 = vpack.c.b16 %v4519, %v4518
  %4536 = vmatpush.bf16.msra.mxu0 %v4527
  %4537 = vmatpush.bf16.msra.mxu0 %v4526
  %4538 = vmatpush.bf16.msra.mxu0 %v4525
  %4539 = vmatpush.bf16.msra.mxu0 %v4524
  %4540 = vmatpush.bf16.msra.mxu0 %v4523
  %4541 = vmatpush.bf16.msra.mxu0 %v4522
  %4542 = vmatpush.bf16.msra.mxu0 %v4521
  %4543 = vmatpush.bf16.msra.mxu0 %v4520
  %4544 = vmatmul.bf16.gmra.mxu0 %v4486
  %v4545 = vpop.f32.mrf.mxu0
  %v4546 = vadd.f32 0.0, %v4545
  %v4547 = vpop.f32.mrf.mxu0
  %v4548 = vadd.f32 0.0, %v4547
  %4549 = vdwg.mxu0
  %v4552 = vunpack.c.l.b16 %v4431
  %v4553 = vunpack.c.l.b16 %v4432
  %v4554 = vpack.c.b16 %v4553, %v4552
  %v4572 = vunpack.c.l.b16 %v4449
  %v4573 = vunpack.c.l.b16 %v4450
  %v4574 = vunpack.c.l.b16 %v4451
  %v4575 = vunpack.c.l.b16 %v4452
  %v4576 = vunpack.c.l.b16 %v4453
  %v4577 = vunpack.c.l.b16 %v4454
  %v4578 = vunpack.c.l.b16 %v4455
  %v4579 = vunpack.c.l.b16 %v4456
  %v4580 = vunpack.c.l.b16 %v4457
  %v4581 = vunpack.c.l.b16 %v4458
  %v4582 = vunpack.c.l.b16 %v4459
  %v4583 = vunpack.c.l.b16 %v4460
  %v4584 = vunpack.c.l.b16 %v4461
  %v4585 = vunpack.c.l.b16 %v4462
  %v4586 = vunpack.c.l.b16 %v4463
  %v4587 = vunpack.c.l.b16 %v4464
  %v4588 = vpack.c.b16 %v4573, %v4572
  %v4589 = vpack.c.b16 %v4575, %v4574
  %v4590 = vpack.c.b16 %v4577, %v4576
  %v4591 = vpack.c.b16 %v4579, %v4578
  %v4592 = vpack.c.b16 %v4581, %v4580
  %v4593 = vpack.c.b16 %v4583, %v4582
  %v4594 = vpack.c.b16 %v4585, %v4584
  %v4595 = vpack.c.b16 %v4587, %v4586
  %4604 = vmatpush.bf16.msra.mxu0 %v4595
  %4605 = vmatpush.bf16.msra.mxu0 %v4594
  %4606 = vmatpush.bf16.msra.mxu0 %v4593
  %4607 = vmatpush.bf16.msra.mxu0 %v4592
  %4608 = vmatpush.bf16.msra.mxu0 %v4591
  %4609 = vmatpush.bf16.msra.mxu0 %v4590
  %4610 = vmatpush.bf16.msra.mxu0 %v4589
  %4611 = vmatpush.bf16.msra.mxu0 %v4588
  %4612 = vmatmul.bf16.gmra.mxu0 %v4554
  %v4613 = vpop.f32.mrf.mxu0
  %v4614 = vadd.f32 %v4546, %v4613
  %v4615 = vpop.f32.mrf.mxu0
  %v4616 = vadd.f32 %v4548, %v4615
  %4617 = vdwg.mxu0
  %s4618 = scalar_lea.vmem %s5, 128
  %v4619 = vld [vmem:[%s4618] sm:$0xf]
  %v4620 = vld [vmem:[%s4618 + $0x4] sm:$0xf]
  %v4621 = vld [vmem:[%s4618 + $0x8] sm:$0xf]
  %v4622 = vld [vmem:[%s4618 + $0xc] sm:$0xf]
  %v4623 = vld [vmem:[%s4618 + $0x10] sm:$0xf]
  %v4624 = vld [vmem:[%s4618 + $0x14] sm:$0xf]
  %v4625 = vld [vmem:[%s4618 + $0x18] sm:$0xf]
  %v4626 = vld [vmem:[%s4618 + $0x1c] sm:$0xf]
  %v4627 = vld [vmem:[%s4618 + $0x20] sm:$0xf]
  %v4628 = vld [vmem:[%s4618 + $0x24] sm:$0xf]
  %v4629 = vld [vmem:[%s4618 + $0x28] sm:$0xf]
  %v4630 = vld [vmem:[%s4618 + $0x2c] sm:$0xf]
  %v4631 = vld [vmem:[%s4618 + $0x30] sm:$0xf]
  %v4632 = vld [vmem:[%s4618 + $0x34] sm:$0xf]
  %v4633 = vld [vmem:[%s4618 + $0x38] sm:$0xf]
  %v4634 = vld [vmem:[%s4618 + $0x3c] sm:$0xf]
  %v4637 = vunpack.c.l.b16 %v4435
  %v4638 = vunpack.c.l.b16 %v4436
  %v4639 = vpack.c.b16 %v4638, %v4637
  %v4657 = vunpack.c.l.b16 %v4619
  %v4658 = vunpack.c.l.b16 %v4620
  %v4659 = vunpack.c.l.b16 %v4621
  %v4660 = vunpack.c.l.b16 %v4622
  %v4661 = vunpack.c.l.b16 %v4623
  %v4662 = vunpack.c.l.b16 %v4624
  %v4663 = vunpack.c.l.b16 %v4625
  %v4664 = vunpack.c.l.b16 %v4626
  %v4665 = vunpack.c.l.b16 %v4627
  %v4666 = vunpack.c.l.b16 %v4628
  %v4667 = vunpack.c.l.b16 %v4629
  %v4668 = vunpack.c.l.b16 %v4630
  %v4669 = vunpack.c.l.b16 %v4631
  %v4670 = vunpack.c.l.b16 %v4632
  %v4671 = vunpack.c.l.b16 %v4633
  %v4672 = vunpack.c.l.b16 %v4634
  %v4673 = vpack.c.b16 %v4658, %v4657
  %v4674 = vpack.c.b16 %v4660, %v4659
  %v4675 = vpack.c.b16 %v4662, %v4661
  %v4676 = vpack.c.b16 %v4664, %v4663
  %v4677 = vpack.c.b16 %v4666, %v4665
  %v4678 = vpack.c.b16 %v4668, %v4667
  %v4679 = vpack.c.b16 %v4670, %v4669
  %v4680 = vpack.c.b16 %v4672, %v4671
  %4689 = vmatpush.bf16.msra.mxu0 %v4680
  %4690 = vmatpush.bf16.msra.mxu0 %v4679
  %4691 = vmatpush.bf16.msra.mxu0 %v4678
  %4692 = vmatpush.bf16.msra.mxu0 %v4677
  %4693 = vmatpush.bf16.msra.mxu0 %v4676
  %4694 = vmatpush.bf16.msra.mxu0 %v4675
  %4695 = vmatpush.bf16.msra.mxu0 %v4674
  %4696 = vmatpush.bf16.msra.mxu0 %v4673
  %4697 = vmatmul.bf16.gmra.mxu0 %v4639
  %v4698 = vpop.f32.mrf.mxu0
  %v4699 = vadd.f32 0.0, %v4698
  %v4700 = vpop.f32.mrf.mxu0
  %v4701 = vadd.f32 0.0, %v4700
  %4702 = vdwg.mxu0
  %v4703 = vadd.f32 %v4614, %v4699
  %v4704 = vadd.f32 %v4616, %v4701
  %s4705 = scalar_lea.vmem %s5, 192
  %v4706 = vld [vmem:[%s4705] sm:$0xf]
  %v4707 = vld [vmem:[%s4705 + $0x4] sm:$0xf]
  %v4708 = vld [vmem:[%s4705 + $0x8] sm:$0xf]
  %v4709 = vld [vmem:[%s4705 + $0xc] sm:$0xf]
  %v4710 = vld [vmem:[%s4705 + $0x10] sm:$0xf]
  %v4711 = vld [vmem:[%s4705 + $0x14] sm:$0xf]
  %v4712 = vld [vmem:[%s4705 + $0x18] sm:$0xf]
  %v4713 = vld [vmem:[%s4705 + $0x1c] sm:$0xf]
  %v4714 = vld [vmem:[%s4705 + $0x20] sm:$0xf]
  %v4715 = vld [vmem:[%s4705 + $0x24] sm:$0xf]
  %v4716 = vld [vmem:[%s4705 + $0x28] sm:$0xf]
  %v4717 = vld [vmem:[%s4705 + $0x2c] sm:$0xf]
  %v4718 = vld [vmem:[%s4705 + $0x30] sm:$0xf]
  %v4719 = vld [vmem:[%s4705 + $0x34] sm:$0xf]
  %v4720 = vld [vmem:[%s4705 + $0x38] sm:$0xf]
  %v4721 = vld [vmem:[%s4705 + $0x3c] sm:$0xf]
  %v4724 = vunpack.c.l.b16 %v4437
  %v4725 = vunpack.c.l.b16 %v4438
  %v4726 = vpack.c.b16 %v4725, %v4724
  %v4744 = vunpack.c.l.b16 %v4706
  %v4745 = vunpack.c.l.b16 %v4707
  %v4746 = vunpack.c.l.b16 %v4708
  %v4747 = vunpack.c.l.b16 %v4709
  %v4748 = vunpack.c.l.b16 %v4710
  %v4749 = vunpack.c.l.b16 %v4711
  %v4750 = vunpack.c.l.b16 %v4712
  %v4751 = vunpack.c.l.b16 %v4713
  %v4752 = vunpack.c.l.b16 %v4714
  %v4753 = vunpack.c.l.b16 %v4715
  %v4754 = vunpack.c.l.b16 %v4716
  %v4755 = vunpack.c.l.b16 %v4717
  %v4756 = vunpack.c.l.b16 %v4718
  %v4757 = vunpack.c.l.b16 %v4719
  %v4758 = vunpack.c.l.b16 %v4720
  %v4759 = vunpack.c.l.b16 %v4721
  %v4760 = vpack.c.b16 %v4745, %v4744
  %v4761 = vpack.c.b16 %v4747, %v4746
  %v4762 = vpack.c.b16 %v4749, %v4748
  %v4763 = vpack.c.b16 %v4751, %v4750
  %v4764 = vpack.c.b16 %v4753, %v4752
  %v4765 = vpack.c.b16 %v4755, %v4754
  %v4766 = vpack.c.b16 %v4757, %v4756
  %v4767 = vpack.c.b16 %v4759, %v4758
  %4776 = vmatpush.bf16.msra.mxu0 %v4767
  %4777 = vmatpush.bf16.msra.mxu0 %v4766
  %4778 = vmatpush.bf16.msra.mxu0 %v4765
  %4779 = vmatpush.bf16.msra.mxu0 %v4764
  %4780 = vmatpush.bf16.msra.mxu0 %v4763
  %4781 = vmatpush.bf16.msra.mxu0 %v4762
  %4782 = vmatpush.bf16.msra.mxu0 %v4761
  %4783 = vmatpush.bf16.msra.mxu0 %v4760
  %4784 = vmatmul.bf16.gmra.mxu0 %v4726
  %v4785 = vpop.f32.mrf.mxu0
  %v4786 = vadd.f32 0.0, %v4785
  %v4787 = vpop.f32.mrf.mxu0
  %v4788 = vadd.f32 0.0, %v4787
  %4789 = vdwg.mxu0
  %v4790 = vadd.f32 %v4703, %v4786
  %v4791 = vadd.f32 %v4704, %v4788
  %s4792 = scalar_lea.vmem %s5, 256
  %v4793 = vld [vmem:[%s4792] sm:$0xf]
  %v4794 = vld [vmem:[%s4792 + $0x4] sm:$0xf]
  %v4795 = vld [vmem:[%s4792 + $0x8] sm:$0xf]
  %v4796 = vld [vmem:[%s4792 + $0xc] sm:$0xf]
  %v4797 = vld [vmem:[%s4792 + $0x10] sm:$0xf]
  %v4798 = vld [vmem:[%s4792 + $0x14] sm:$0xf]
  %v4799 = vld [vmem:[%s4792 + $0x18] sm:$0xf]
  %v4800 = vld [vmem:[%s4792 + $0x1c] sm:$0xf]
  %v4801 = vld [vmem:[%s4792 + $0x20] sm:$0xf]
  %v4802 = vld [vmem:[%s4792 + $0x24] sm:$0xf]
  %v4803 = vld [vmem:[%s4792 + $0x28] sm:$0xf]
  %v4804 = vld [vmem:[%s4792 + $0x2c] sm:$0xf]
  %v4805 = vld [vmem:[%s4792 + $0x30] sm:$0xf]
  %v4806 = vld [vmem:[%s4792 + $0x34] sm:$0xf]
  %v4807 = vld [vmem:[%s4792 + $0x38] sm:$0xf]
  %v4808 = vld [vmem:[%s4792 + $0x3c] sm:$0xf]
  %v4811 = vunpack.c.l.b16 %v4439
  %v4812 = vunpack.c.l.b16 %v4440
  %v4813 = vpack.c.b16 %v4812, %v4811
  %v4831 = vunpack.c.l.b16 %v4793
  %v4832 = vunpack.c.l.b16 %v4794
  %v4833 = vunpack.c.l.b16 %v4795
  %v4834 = vunpack.c.l.b16 %v4796
  %v4835 = vunpack.c.l.b16 %v4797
  %v4836 = vunpack.c.l.b16 %v4798
  %v4837 = vunpack.c.l.b16 %v4799
  %v4838 = vunpack.c.l.b16 %v4800
  %v4839 = vunpack.c.l.b16 %v4801
  %v4840 = vunpack.c.l.b16 %v4802
  %v4841 = vunpack.c.l.b16 %v4803
  %v4842 = vunpack.c.l.b16 %v4804
  %v4843 = vunpack.c.l.b16 %v4805
  %v4844 = vunpack.c.l.b16 %v4806
  %v4845 = vunpack.c.l.b16 %v4807
  %v4846 = vunpack.c.l.b16 %v4808
  %v4847 = vpack.c.b16 %v4832, %v4831
  %v4848 = vpack.c.b16 %v4834, %v4833
  %v4849 = vpack.c.b16 %v4836, %v4835
  %v4850 = vpack.c.b16 %v4838, %v4837
  %v4851 = vpack.c.b16 %v4840, %v4839
  %v4852 = vpack.c.b16 %v4842, %v4841
  %v4853 = vpack.c.b16 %v4844, %v4843
  %v4854 = vpack.c.b16 %v4846, %v4845
  %4863 = vmatpush.bf16.msra.mxu0 %v4854
  %4864 = vmatpush.bf16.msra.mxu0 %v4853
  %4865 = vmatpush.bf16.msra.mxu0 %v4852
  %4866 = vmatpush.bf16.msra.mxu0 %v4851
  %4867 = vmatpush.bf16.msra.mxu0 %v4850
  %4868 = vmatpush.bf16.msra.mxu0 %v4849
  %4869 = vmatpush.bf16.msra.mxu0 %v4848
  %4870 = vmatpush.bf16.msra.mxu0 %v4847
  %4871 = vmatmul.bf16.gmra.mxu0 %v4813
  %v4872 = vpop.f32.mrf.mxu0
  %v4873 = vadd.f32 0.0, %v4872
  %v4874 = vpop.f32.mrf.mxu0
  %v4875 = vadd.f32 0.0, %v4874
  %4876 = vdwg.mxu0
  %v4877 = vadd.f32 %v4790, %v4873
  %v4878 = vadd.f32 %v4791, %v4875
  %s4879 = scalar_lea.vmem %s5, 320
  %v4880 = vld [vmem:[%s4879] sm:$0xf]
  %v4881 = vld [vmem:[%s4879 + $0x4] sm:$0xf]
  %v4882 = vld [vmem:[%s4879 + $0x8] sm:$0xf]
  %v4883 = vld [vmem:[%s4879 + $0xc] sm:$0xf]
  %v4884 = vld [vmem:[%s4879 + $0x10] sm:$0xf]
  %v4885 = vld [vmem:[%s4879 + $0x14] sm:$0xf]
  %v4886 = vld [vmem:[%s4879 + $0x18] sm:$0xf]
  %v4887 = vld [vmem:[%s4879 + $0x1c] sm:$0xf]
  %v4888 = vld [vmem:[%s4879 + $0x20] sm:$0xf]
  %v4889 = vld [vmem:[%s4879 + $0x24] sm:$0xf]
  %v4890 = vld [vmem:[%s4879 + $0x28] sm:$0xf]
  %v4891 = vld [vmem:[%s4879 + $0x2c] sm:$0xf]
  %v4892 = vld [vmem:[%s4879 + $0x30] sm:$0xf]
  %v4893 = vld [vmem:[%s4879 + $0x34] sm:$0xf]
  %v4894 = vld [vmem:[%s4879 + $0x38] sm:$0xf]
  %v4895 = vld [vmem:[%s4879 + $0x3c] sm:$0xf]
  %v4898 = vunpack.c.l.b16 %v4441
  %v4899 = vunpack.c.l.b16 %v4442
  %v4900 = vpack.c.b16 %v4899, %v4898
  %v4918 = vunpack.c.l.b16 %v4880
  %v4919 = vunpack.c.l.b16 %v4881
  %v4920 = vunpack.c.l.b16 %v4882
  %v4921 = vunpack.c.l.b16 %v4883
  %v4922 = vunpack.c.l.b16 %v4884
  %v4923 = vunpack.c.l.b16 %v4885
  %v4924 = vunpack.c.l.b16 %v4886
  %v4925 = vunpack.c.l.b16 %v4887
  %v4926 = vunpack.c.l.b16 %v4888
  %v4927 = vunpack.c.l.b16 %v4889
  %v4928 = vunpack.c.l.b16 %v4890
  %v4929 = vunpack.c.l.b16 %v4891
  %v4930 = vunpack.c.l.b16 %v4892
  %v4931 = vunpack.c.l.b16 %v4893
  %v4932 = vunpack.c.l.b16 %v4894
  %v4933 = vunpack.c.l.b16 %v4895
  %v4934 = vpack.c.b16 %v4919, %v4918
  %v4935 = vpack.c.b16 %v4921, %v4920
  %v4936 = vpack.c.b16 %v4923, %v4922
  %v4937 = vpack.c.b16 %v4925, %v4924
  %v4938 = vpack.c.b16 %v4927, %v4926
  %v4939 = vpack.c.b16 %v4929, %v4928
  %v4940 = vpack.c.b16 %v4931, %v4930
  %v4941 = vpack.c.b16 %v4933, %v4932
  %4950 = vmatpush.bf16.msra.mxu0 %v4941
  %4951 = vmatpush.bf16.msra.mxu0 %v4940
  %4952 = vmatpush.bf16.msra.mxu0 %v4939
  %4953 = vmatpush.bf16.msra.mxu0 %v4938
  %4954 = vmatpush.bf16.msra.mxu0 %v4937
  %4955 = vmatpush.bf16.msra.mxu0 %v4936
  %4956 = vmatpush.bf16.msra.mxu0 %v4935
  %4957 = vmatpush.bf16.msra.mxu0 %v4934
  %4958 = vmatmul.bf16.gmra.mxu0 %v4900
  %v4959 = vpop.f32.mrf.mxu0
  %v4960 = vadd.f32 0.0, %v4959
  %v4961 = vpop.f32.mrf.mxu0
  %v4962 = vadd.f32 0.0, %v4961
  %4963 = vdwg.mxu0
  %v4964 = vadd.f32 %v4877, %v4960
  %v4965 = vadd.f32 %v4878, %v4962
  %s4966 = scalar_lea.vmem %s5, 384
  %v4967 = vld [vmem:[%s4966] sm:$0xf]
  %v4968 = vld [vmem:[%s4966 + $0x4] sm:$0xf]
  %v4969 = vld [vmem:[%s4966 + $0x8] sm:$0xf]
  %v4970 = vld [vmem:[%s4966 + $0xc] sm:$0xf]
  %v4971 = vld [vmem:[%s4966 + $0x10] sm:$0xf]
  %v4972 = vld [vmem:[%s4966 + $0x14] sm:$0xf]
  %v4973 = vld [vmem:[%s4966 + $0x18] sm:$0xf]
  %v4974 = vld [vmem:[%s4966 + $0x1c] sm:$0xf]
  %v4975 = vld [vmem:[%s4966 + $0x20] sm:$0xf]
  %v4976 = vld [vmem:[%s4966 + $0x24] sm:$0xf]
  %v4977 = vld [vmem:[%s4966 + $0x28] sm:$0xf]
  %v4978 = vld [vmem:[%s4966 + $0x2c] sm:$0xf]
  %v4979 = vld [vmem:[%s4966 + $0x30] sm:$0xf]
  %v4980 = vld [vmem:[%s4966 + $0x34] sm:$0xf]
  %v4981 = vld [vmem:[%s4966 + $0x38] sm:$0xf]
  %v4982 = vld [vmem:[%s4966 + $0x3c] sm:$0xf]
  %v4985 = vunpack.c.l.b16 %v4443
  %v4986 = vunpack.c.l.b16 %v4444
  %v4987 = vpack.c.b16 %v4986, %v4985
  %v5005 = vunpack.c.l.b16 %v4967
  %v5006 = vunpack.c.l.b16 %v4968
  %v5007 = vunpack.c.l.b16 %v4969
  %v5008 = vunpack.c.l.b16 %v4970
  %v5009 = vunpack.c.l.b16 %v4971
  %v5010 = vunpack.c.l.b16 %v4972
  %v5011 = vunpack.c.l.b16 %v4973
  %v5012 = vunpack.c.l.b16 %v4974
  %v5013 = vunpack.c.l.b16 %v4975
  %v5014 = vunpack.c.l.b16 %v4976
  %v5015 = vunpack.c.l.b16 %v4977
  %v5016 = vunpack.c.l.b16 %v4978
  %v5017 = vunpack.c.l.b16 %v4979
  %v5018 = vunpack.c.l.b16 %v4980
  %v5019 = vunpack.c.l.b16 %v4981
  %v5020 = vunpack.c.l.b16 %v4982
  %v5021 = vpack.c.b16 %v5006, %v5005
  %v5022 = vpack.c.b16 %v5008, %v5007
  %v5023 = vpack.c.b16 %v5010, %v5009
  %v5024 = vpack.c.b16 %v5012, %v5011
  %v5025 = vpack.c.b16 %v5014, %v5013
  %v5026 = vpack.c.b16 %v5016, %v5015
  %v5027 = vpack.c.b16 %v5018, %v5017
  %v5028 = vpack.c.b16 %v5020, %v5019
  %5037 = vmatpush.bf16.msra.mxu0 %v5028
  %5038 = vmatpush.bf16.msra.mxu0 %v5027
  %5039 = vmatpush.bf16.msra.mxu0 %v5026
  %5040 = vmatpush.bf16.msra.mxu0 %v5025
  %5041 = vmatpush.bf16.msra.mxu0 %v5024
  %5042 = vmatpush.bf16.msra.mxu0 %v5023
  %5043 = vmatpush.bf16.msra.mxu0 %v5022
  %5044 = vmatpush.bf16.msra.mxu0 %v5021
  %5045 = vmatmul.bf16.gmra.mxu0 %v4987
  %v5046 = vpop.f32.mrf.mxu0
  %v5047 = vadd.f32 0.0, %v5046
  %v5048 = vpop.f32.mrf.mxu0
  %v5049 = vadd.f32 0.0, %v5048
  %5050 = vdwg.mxu0
  %v5051 = vadd.f32 %v4964, %v5047
  %v5052 = vadd.f32 %v4965, %v5049
  %s5053 = scalar_lea.vmem %s5, 448
  %v5054 = vld [vmem:[%s5053] sm:$0xf]
  %v5055 = vld [vmem:[%s5053 + $0x4] sm:$0xf]
  %v5056 = vld [vmem:[%s5053 + $0x8] sm:$0xf]
  %v5057 = vld [vmem:[%s5053 + $0xc] sm:$0xf]
  %v5058 = vld [vmem:[%s5053 + $0x10] sm:$0xf]
  %v5059 = vld [vmem:[%s5053 + $0x14] sm:$0xf]
  %v5060 = vld [vmem:[%s5053 + $0x18] sm:$0xf]
  %v5061 = vld [vmem:[%s5053 + $0x1c] sm:$0xf]
  %v5062 = vld [vmem:[%s5053 + $0x20] sm:$0xf]
  %v5063 = vld [vmem:[%s5053 + $0x24] sm:$0xf]
  %v5064 = vld [vmem:[%s5053 + $0x28] sm:$0xf]
  %v5065 = vld [vmem:[%s5053 + $0x2c] sm:$0xf]
  %v5066 = vld [vmem:[%s5053 + $0x30] sm:$0xf]
  %v5067 = vld [vmem:[%s5053 + $0x34] sm:$0xf]
  %v5068 = vld [vmem:[%s5053 + $0x38] sm:$0xf]
  %v5069 = vld [vmem:[%s5053 + $0x3c] sm:$0xf]
  %v5072 = vunpack.c.l.b16 %v4445
  %v5073 = vunpack.c.l.b16 %v4446
  %v5074 = vpack.c.b16 %v5073, %v5072
  %v5092 = vunpack.c.l.b16 %v5054
  %v5093 = vunpack.c.l.b16 %v5055
  %v5094 = vunpack.c.l.b16 %v5056
  %v5095 = vunpack.c.l.b16 %v5057
  %v5096 = vunpack.c.l.b16 %v5058
  %v5097 = vunpack.c.l.b16 %v5059
  %v5098 = vunpack.c.l.b16 %v5060
  %v5099 = vunpack.c.l.b16 %v5061
  %v5100 = vunpack.c.l.b16 %v5062
  %v5101 = vunpack.c.l.b16 %v5063
  %v5102 = vunpack.c.l.b16 %v5064
  %v5103 = vunpack.c.l.b16 %v5065
  %v5104 = vunpack.c.l.b16 %v5066
  %v5105 = vunpack.c.l.b16 %v5067
  %v5106 = vunpack.c.l.b16 %v5068
  %v5107 = vunpack.c.l.b16 %v5069
  %v5108 = vpack.c.b16 %v5093, %v5092
  %v5109 = vpack.c.b16 %v5095, %v5094
  %v5110 = vpack.c.b16 %v5097, %v5096
  %v5111 = vpack.c.b16 %v5099, %v5098
  %v5112 = vpack.c.b16 %v5101, %v5100
  %v5113 = vpack.c.b16 %v5103, %v5102
  %v5114 = vpack.c.b16 %v5105, %v5104
  %v5115 = vpack.c.b16 %v5107, %v5106
  %5124 = vmatpush.bf16.msra.mxu0 %v5115
  %5125 = vmatpush.bf16.msra.mxu0 %v5114
  %5126 = vmatpush.bf16.msra.mxu0 %v5113
  %5127 = vmatpush.bf16.msra.mxu0 %v5112
  %5128 = vmatpush.bf16.msra.mxu0 %v5111
  %5129 = vmatpush.bf16.msra.mxu0 %v5110
  %5130 = vmatpush.bf16.msra.mxu0 %v5109
  %5131 = vmatpush.bf16.msra.mxu0 %v5108
  %5132 = vmatmul.bf16.gmra.mxu0 %v5074
  %v5133 = vpop.f32.mrf.mxu0
  %v5134 = vadd.f32 0.0, %v5133
  %v5135 = vpop.f32.mrf.mxu0
  %v5136 = vadd.f32 0.0, %v5135
  %5137 = vdwg.mxu0
  %v5138 = vadd.f32 %v5051, %v5134
  %v5139 = vadd.f32 %v5052, %v5136
  %s5140 = scalar_lea.vmem %s5, 512
  %v5141 = vld [vmem:[%s5140] sm:$0xf]
  %v5142 = vld [vmem:[%s5140 + $0x4] sm:$0xf]
  %v5143 = vld [vmem:[%s5140 + $0x8] sm:$0xf]
  %v5144 = vld [vmem:[%s5140 + $0xc] sm:$0xf]
  %v5145 = vld [vmem:[%s5140 + $0x10] sm:$0xf]
  %v5146 = vld [vmem:[%s5140 + $0x14] sm:$0xf]
  %v5147 = vld [vmem:[%s5140 + $0x18] sm:$0xf]
  %v5148 = vld [vmem:[%s5140 + $0x1c] sm:$0xf]
  %v5149 = vld [vmem:[%s5140 + $0x20] sm:$0xf]
  %v5150 = vld [vmem:[%s5140 + $0x24] sm:$0xf]
  %v5151 = vld [vmem:[%s5140 + $0x28] sm:$0xf]
  %v5152 = vld [vmem:[%s5140 + $0x2c] sm:$0xf]
  %v5153 = vld [vmem:[%s5140 + $0x30] sm:$0xf]
  %v5154 = vld [vmem:[%s5140 + $0x34] sm:$0xf]
  %v5155 = vld [vmem:[%s5140 + $0x38] sm:$0xf]
  %v5156 = vld [vmem:[%s5140 + $0x3c] sm:$0xf]
  %v5159 = vunpack.c.l.b16 %v4447
  %v5160 = vunpack.c.l.b16 %v4448
  %v5161 = vpack.c.b16 %v5160, %v5159
  %v5179 = vunpack.c.l.b16 %v5141
  %v5180 = vunpack.c.l.b16 %v5142
  %v5181 = vunpack.c.l.b16 %v5143
  %v5182 = vunpack.c.l.b16 %v5144
  %v5183 = vunpack.c.l.b16 %v5145
  %v5184 = vunpack.c.l.b16 %v5146
  %v5185 = vunpack.c.l.b16 %v5147
  %v5186 = vunpack.c.l.b16 %v5148
  %v5187 = vunpack.c.l.b16 %v5149
  %v5188 = vunpack.c.l.b16 %v5150
  %v5189 = vunpack.c.l.b16 %v5151
  %v5190 = vunpack.c.l.b16 %v5152
  %v5191 = vunpack.c.l.b16 %v5153
  %v5192 = vunpack.c.l.b16 %v5154
  %v5193 = vunpack.c.l.b16 %v5155
  %v5194 = vunpack.c.l.b16 %v5156
  %v5195 = vpack.c.b16 %v5180, %v5179
  %v5196 = vpack.c.b16 %v5182, %v5181
  %v5197 = vpack.c.b16 %v5184, %v5183
  %v5198 = vpack.c.b16 %v5186, %v5185
  %v5199 = vpack.c.b16 %v5188, %v5187
  %v5200 = vpack.c.b16 %v5190, %v5189
  %v5201 = vpack.c.b16 %v5192, %v5191
  %v5202 = vpack.c.b16 %v5194, %v5193
  %5211 = vmatpush.bf16.msra.mxu0 %v5202
  %5212 = vmatpush.bf16.msra.mxu0 %v5201
  %5213 = vmatpush.bf16.msra.mxu0 %v5200
  %5214 = vmatpush.bf16.msra.mxu0 %v5199
  %5215 = vmatpush.bf16.msra.mxu0 %v5198
  %5216 = vmatpush.bf16.msra.mxu0 %v5197
  %5217 = vmatpush.bf16.msra.mxu0 %v5196
  %5218 = vmatpush.bf16.msra.mxu0 %v5195
  %5219 = vmatmul.bf16.gmra.mxu0 %v5161
  %v5220 = vpop.f32.mrf.mxu0
  %v5221 = vadd.f32 0.0, %v5220
  %v5222 = vpop.f32.mrf.mxu0
  %v5223 = vadd.f32 0.0, %v5222
  %5224 = vdwg.mxu0
  %v5225 = vadd.f32 %v5138, %v5221
  %v5226 = vadd.f32 %v5139, %v5223
  %v5227 = vld [vmem:[%s6] sm:$0x1]
  %v5229 = vperm.slane %v5227, 0
  %v5231 = vadd.f32 %v5225, %v5229
  %v5232 = vadd.f32 %v5226, %v5229
  %v5233 = vmax.f32 %v5231, 0.0
  %v5234 = vmax.f32 %v5232, 0.0
  %v5235 = vpack.c.bf16 %v5234, %v5233
  %v5236 = vld [vmem:[%s7] sm:$0xff]
  %v5237 = vld [vmem:[%s7 + $0x8] sm:$0xff]
  %v5238 = vld [vmem:[%s7 + $0x10] sm:$0xff]
  %v5239 = vld [vmem:[%s7 + $0x18] sm:$0xff]
  %v5240 = vld [vmem:[%s7 + $0x20] sm:$0xff]
  %v5241 = vld [vmem:[%s7 + $0x28] sm:$0xff]
  %v5242 = vld [vmem:[%s7 + $0x30] sm:$0xff]
  %v5243 = vld [vmem:[%s7 + $0x38] sm:$0xff]
  %v5244 = vld [vmem:[%s7 + $0x40] sm:$0xff]
  %v5245 = vld [vmem:[%s7 + $0x48] sm:$0xff]
  %v5246 = vld [vmem:[%s7 + $0x50] sm:$0xff]
  %v5247 = vld [vmem:[%s7 + $0x58] sm:$0xff]
  %v5248 = vld [vmem:[%s7 + $0x60] sm:$0xff]
  %v5249 = vld [vmem:[%s7 + $0x68] sm:$0xff]
  %v5250 = vld [vmem:[%s7 + $0x70] sm:$0xff]
  %v5251 = vld [vmem:[%s7 + $0x78] sm:$0xff]
  %v5252 = vld [vmem:[%s7 + $0x80] sm:$0xff]
  %v5253 = vld [vmem:[%s7 + $0x88] sm:$0xff]
  %v5254 = vld [vmem:[%s7 + $0x90] sm:$0xff]
  %v5255 = vld [vmem:[%s7 + $0x98] sm:$0xff]
  %v5256 = vld [vmem:[%s7 + $0xa0] sm:$0xff]
  %v5257 = vld [vmem:[%s7 + $0xa8] sm:$0xff]
  %v5258 = vld [vmem:[%s7 + $0xb0] sm:$0xff]
  %v5259 = vld [vmem:[%s7 + $0xb8] sm:$0xff]
  %v5260 = vld [vmem:[%s7 + $0xc0] sm:$0xff]
  %v5261 = vld [vmem:[%s7 + $0xc8] sm:$0xff]
  %v5262 = vld [vmem:[%s7 + $0xd0] sm:$0xff]
  %v5263 = vld [vmem:[%s7 + $0xd8] sm:$0xff]
  %v5264 = vld [vmem:[%s7 + $0xe0] sm:$0xff]
  %v5265 = vld [vmem:[%s7 + $0xe8] sm:$0xff]
  %v5266 = vld [vmem:[%s7 + $0xf0] sm:$0xff]
  %v5267 = vld [vmem:[%s7 + $0xf8] sm:$0xff]
  %v5268 = vld [vmem:[%s8] sm:$0xf]
  %v5270 = vperm.slane %v5268, 0
  %v5271 = vperm.slane %v5268, 1
  %v5272 = vperm.slane %v5268, 2
  %v5273 = vperm.slane %v5268, 3
  %v5310 = vunpack.c.l.b16 %v5236
  %v5311 = vunpack.c.h.b16 %v5236
  %v5312 = vunpack.c.l.b16 %v5237
  %v5313 = vunpack.c.h.b16 %v5237
  %v5314 = vunpack.c.l.b16 %v5238
  %v5315 = vunpack.c.h.b16 %v5238
  %v5316 = vunpack.c.l.b16 %v5239
  %v5317 = vunpack.c.h.b16 %v5239
  %v5318 = vunpack.c.l.b16 %v5240
  %v5319 = vunpack.c.h.b16 %v5240
  %v5320 = vunpack.c.l.b16 %v5241
  %v5321 = vunpack.c.h.b16 %v5241
  %v5322 = vunpack.c.l.b16 %v5242
  %v5323 = vunpack.c.h.b16 %v5242
  %v5324 = vunpack.c.l.b16 %v5243
  %v5325 = vunpack.c.h.b16 %v5243
  %v5326 = vunpack.c.l.b16 %v5244
  %v5327 = vunpack.c.h.b16 %v5244
  %v5328 = vunpack.c.l.b16 %v5245
  %v5329 = vunpack.c.h.b16 %v5245
  %v5330 = vunpack.c.l.b16 %v5246
  %v5331 = vunpack.c.h.b16 %v5246
  %v5332 = vunpack.c.l.b16 %v5247
  %v5333 = vunpack.c.h.b16 %v5247
  %v5334 = vunpack.c.l.b16 %v5248
  %v5335 = vunpack.c.h.b16 %v5248
  %v5336 = vunpack.c.l.b16 %v5249
  %v5337 = vunpack.c.h.b16 %v5249
  %v5338 = vunpack.c.l.b16 %v5250
  %v5339 = vunpack.c.h.b16 %v5250
  %v5340 = vunpack.c.l.b16 %v5251
  %v5341 = vunpack.c.h.b16 %v5251
  %v5342 = vunpack.c.l.b16 %v5252
  %v5343 = vunpack.c.h.b16 %v5252
  %v5344 = vunpack.c.l.b16 %v5253
  %v5345 = vunpack.c.h.b16 %v5253
  %v5346 = vunpack.c.l.b16 %v5254
  %v5347 = vunpack.c.h.b16 %v5254
  %v5348 = vunpack.c.l.b16 %v5255
  %v5349 = vunpack.c.h.b16 %v5255
  %v5350 = vunpack.c.l.b16 %v5256
  %v5351 = vunpack.c.h.b16 %v5256
  %v5352 = vunpack.c.l.b16 %v5257
  %v5353 = vunpack.c.h.b16 %v5257
  %v5354 = vunpack.c.l.b16 %v5258
  %v5355 = vunpack.c.h.b16 %v5258
  %v5356 = vunpack.c.l.b16 %v5259
  %v5357 = vunpack.c.h.b16 %v5259
  %v5358 = vunpack.c.l.b16 %v5260
  %v5359 = vunpack.c.h.b16 %v5260
  %v5360 = vunpack.c.l.b16 %v5261
  %v5361 = vunpack.c.h.b16 %v5261
  %v5362 = vunpack.c.l.b16 %v5262
  %v5363 = vunpack.c.h.b16 %v5262
  %v5364 = vunpack.c.l.b16 %v5263
  %v5365 = vunpack.c.h.b16 %v5263
  %v5366 = vunpack.c.l.b16 %v5264
  %v5367 = vunpack.c.h.b16 %v5264
  %v5368 = vunpack.c.l.b16 %v5265
  %v5369 = vunpack.c.h.b16 %v5265
  %v5370 = vunpack.c.l.b16 %v5266
  %v5371 = vunpack.c.h.b16 %v5266
  %v5372 = vunpack.c.l.b16 %v5267
  %v5373 = vunpack.c.h.b16 %v5267
  %v5374 = vpack.c.b16 %v5314, %v5310
  %v5375 = vpack.c.b16 %v5315, %v5311
  %v5376 = vpack.c.b16 %v5316, %v5312
  %v5377 = vpack.c.b16 %v5317, %v5313
  %v5378 = vpack.c.b16 %v5322, %v5318
  %v5379 = vpack.c.b16 %v5323, %v5319
  %v5380 = vpack.c.b16 %v5324, %v5320
  %v5381 = vpack.c.b16 %v5325, %v5321
  %v5382 = vpack.c.b16 %v5330, %v5326
  %v5383 = vpack.c.b16 %v5331, %v5327
  %v5384 = vpack.c.b16 %v5332, %v5328
  %v5385 = vpack.c.b16 %v5333, %v5329
  %v5386 = vpack.c.b16 %v5338, %v5334
  %v5387 = vpack.c.b16 %v5339, %v5335
  %v5388 = vpack.c.b16 %v5340, %v5336
  %v5389 = vpack.c.b16 %v5341, %v5337
  %v5390 = vpack.c.b16 %v5346, %v5342
  %v5391 = vpack.c.b16 %v5347, %v5343
  %v5392 = vpack.c.b16 %v5348, %v5344
  %v5393 = vpack.c.b16 %v5349, %v5345
  %v5394 = vpack.c.b16 %v5354, %v5350
  %v5395 = vpack.c.b16 %v5355, %v5351
  %v5396 = vpack.c.b16 %v5356, %v5352
  %v5397 = vpack.c.b16 %v5357, %v5353
  %v5398 = vpack.c.b16 %v5362, %v5358
  %v5399 = vpack.c.b16 %v5363, %v5359
  %v5400 = vpack.c.b16 %v5364, %v5360
  %v5401 = vpack.c.b16 %v5365, %v5361
  %v5402 = vpack.c.b16 %v5370, %v5366
  %v5403 = vpack.c.b16 %v5371, %v5367
  %v5404 = vpack.c.b16 %v5372, %v5368
  %v5405 = vpack.c.b16 %v5373, %v5369
  %5438 = vmatpush.bf16.msra.mxu0 %v5402
  %5439 = vmatpush.bf16.msra.mxu0 %v5398
  %5440 = vmatpush.bf16.msra.mxu0 %v5394
  %5441 = vmatpush.bf16.msra.mxu0 %v5390
  %5442 = vmatpush.bf16.msra.mxu0 %v5386
  %5443 = vmatpush.bf16.msra.mxu0 %v5382
  %5444 = vmatpush.bf16.msra.mxu0 %v5378
  %5445 = vmatpush.bf16.msra.mxu0 %v5374
  %5446 = vmatmul.bf16.gmra.mxu0 %v5235
  %v5447 = vpop.f32.mrf.mxu0
  %v5448 = vadd.f32 %v5270, %v5447
  %v5449 = vpop.f32.mrf.mxu0
  %v5450 = vadd.f32 %v5270, %v5449
  %5451 = vdwg.mxu0
  %5452 = vmatpush.bf16.msra.mxu0 %v5403
  %5453 = vmatpush.bf16.msra.mxu0 %v5399
  %5454 = vmatpush.bf16.msra.mxu0 %v5395
  %5455 = vmatpush.bf16.msra.mxu0 %v5391
  %5456 = vmatpush.bf16.msra.mxu0 %v5387
  %5457 = vmatpush.bf16.msra.mxu0 %v5383
  %5458 = vmatpush.bf16.msra.mxu0 %v5379
  %5459 = vmatpush.bf16.msra.mxu0 %v5375
  %5460 = vmatmul.bf16.gmra.mxu0 %v5235
  %v5461 = vpop.f32.mrf.mxu0
  %v5462 = vadd.f32 %v5271, %v5461
  %v5463 = vpop.f32.mrf.mxu0
  %v5464 = vadd.f32 %v5271, %v5463
  %5465 = vdwg.mxu0
  %5466 = vmatpush.bf16.msra.mxu0 %v5404
  %5467 = vmatpush.bf16.msra.mxu0 %v5400
  %5468 = vmatpush.bf16.msra.mxu0 %v5396
  %5469 = vmatpush.bf16.msra.mxu0 %v5392
  %5470 = vmatpush.bf16.msra.mxu0 %v5388
  %5471 = vmatpush.bf16.msra.mxu0 %v5384
  %5472 = vmatpush.bf16.msra.mxu0 %v5380
  %5473 = vmatpush.bf16.msra.mxu0 %v5376
  %5474 = vmatmul.bf16.gmra.mxu0 %v5235
  %v5475 = vpop.f32.mrf.mxu0
  %v5476 = vadd.f32 %v5272, %v5475
  %v5477 = vpop.f32.mrf.mxu0
  %v5478 = vadd.f32 %v5272, %v5477
  %5479 = vdwg.mxu0
  %5480 = vmatpush.bf16.msra.mxu0 %v5405
  %5481 = vmatpush.bf16.msra.mxu0 %v5401
  %5482 = vmatpush.bf16.msra.mxu0 %v5397
  %5483 = vmatpush.bf16.msra.mxu0 %v5393
  %5484 = vmatpush.bf16.msra.mxu0 %v5389
  %5485 = vmatpush.bf16.msra.mxu0 %v5385
  %5486 = vmatpush.bf16.msra.mxu0 %v5381
  %5487 = vmatpush.bf16.msra.mxu0 %v5377
  %5488 = vmatmul.bf16.gmra.mxu0 %v5235
  %v5489 = vpop.f32.mrf.mxu0
  %v5490 = vadd.f32 %v5273, %v5489
  %v5491 = vpop.f32.mrf.mxu0
  %v5492 = vadd.f32 %v5273, %v5491
  %5493 = vdwg.mxu0
  %v5494 = vmax.f32 %v5448, 0.0
  %v5495 = vmax.f32 %v5462, 0.0
  %v5496 = vmax.f32 %v5476, 0.0
  %v5497 = vmax.f32 %v5490, 0.0
  %v5498 = vmax.f32 %v5450, 0.0
  %v5499 = vmax.f32 %v5464, 0.0
  %v5500 = vmax.f32 %v5478, 0.0
  %v5501 = vmax.f32 %v5492, 0.0
  %v5502 = vpack.c.bf16 %v5498, %v5494
  %v5503 = vpack.c.bf16 %v5499, %v5495
  %v5504 = vpack.c.bf16 %v5500, %v5496
  %v5505 = vpack.c.bf16 %v5501, %v5497
  %v5506 = vld [vmem:[%s9] sm:$0xf]
  %v5507 = vld [vmem:[%s9 + $0x4] sm:$0xf]
  %v5508 = vld [vmem:[%s9 + $0x8] sm:$0xf]
  %v5509 = vld [vmem:[%s9 + $0xc] sm:$0xf]
  %v5510 = vld [vmem:[%s9 + $0x10] sm:$0xf]
  %v5511 = vld [vmem:[%s9 + $0x14] sm:$0xf]
  %v5512 = vld [vmem:[%s9 + $0x18] sm:$0xf]
  %v5513 = vld [vmem:[%s9 + $0x1c] sm:$0xf]
  %v5514 = vld [vmem:[%s9 + $0x20] sm:$0xf]
  %v5515 = vld [vmem:[%s9 + $0x24] sm:$0xf]
  %v5516 = vld [vmem:[%s9 + $0x28] sm:$0xf]
  %v5517 = vld [vmem:[%s9 + $0x2c] sm:$0xf]
  %v5518 = vld [vmem:[%s9 + $0x30] sm:$0xf]
  %v5519 = vld [vmem:[%s9 + $0x34] sm:$0xf]
  %v5520 = vld [vmem:[%s9 + $0x38] sm:$0xf]
  %v5521 = vld [vmem:[%s9 + $0x3c] sm:$0xf]
  %v5522 = vld [vmem:[%s9 + $0x40] sm:$0xf]
  %v5523 = vld [vmem:[%s9 + $0x44] sm:$0xf]
  %v5524 = vld [vmem:[%s9 + $0x48] sm:$0xf]
  %v5525 = vld [vmem:[%s9 + $0x4c] sm:$0xf]
  %v5526 = vld [vmem:[%s9 + $0x50] sm:$0xf]
  %v5527 = vld [vmem:[%s9 + $0x54] sm:$0xf]
  %v5528 = vld [vmem:[%s9 + $0x58] sm:$0xf]
  %v5529 = vld [vmem:[%s9 + $0x5c] sm:$0xf]
  %v5530 = vld [vmem:[%s9 + $0x60] sm:$0xf]
  %v5531 = vld [vmem:[%s9 + $0x64] sm:$0xf]
  %v5532 = vld [vmem:[%s9 + $0x68] sm:$0xf]
  %v5533 = vld [vmem:[%s9 + $0x6c] sm:$0xf]
  %v5534 = vld [vmem:[%s9 + $0x70] sm:$0xf]
  %v5535 = vld [vmem:[%s9 + $0x74] sm:$0xf]
  %v5536 = vld [vmem:[%s9 + $0x78] sm:$0xf]
  %v5537 = vld [vmem:[%s9 + $0x7c] sm:$0xf]
  %v5538 = vld [vmem:[%s9 + $0x80] sm:$0xf]
  %v5539 = vld [vmem:[%s9 + $0x84] sm:$0xf]
  %v5540 = vld [vmem:[%s9 + $0x88] sm:$0xf]
  %v5541 = vld [vmem:[%s9 + $0x8c] sm:$0xf]
  %v5542 = vld [vmem:[%s9 + $0x90] sm:$0xf]
  %v5543 = vld [vmem:[%s9 + $0x94] sm:$0xf]
  %v5544 = vld [vmem:[%s9 + $0x98] sm:$0xf]
  %v5545 = vld [vmem:[%s9 + $0x9c] sm:$0xf]
  %v5546 = vld [vmem:[%s9 + $0xa0] sm:$0xf]
  %v5547 = vld [vmem:[%s9 + $0xa4] sm:$0xf]
  %v5548 = vld [vmem:[%s9 + $0xa8] sm:$0xf]
  %v5549 = vld [vmem:[%s9 + $0xac] sm:$0xf]
  %v5550 = vld [vmem:[%s9 + $0xb0] sm:$0xf]
  %v5551 = vld [vmem:[%s9 + $0xb4] sm:$0xf]
  %v5552 = vld [vmem:[%s9 + $0xb8] sm:$0xf]
  %v5553 = vld [vmem:[%s9 + $0xbc] sm:$0xf]
  %v5554 = vld [vmem:[%s9 + $0xc0] sm:$0xf]
  %v5555 = vld [vmem:[%s9 + $0xc4] sm:$0xf]
  %v5556 = vld [vmem:[%s9 + $0xc8] sm:$0xf]
  %v5557 = vld [vmem:[%s9 + $0xcc] sm:$0xf]
  %v5558 = vld [vmem:[%s9 + $0xd0] sm:$0xf]
  %v5559 = vld [vmem:[%s9 + $0xd4] sm:$0xf]
  %v5560 = vld [vmem:[%s9 + $0xd8] sm:$0xf]
  %v5561 = vld [vmem:[%s9 + $0xdc] sm:$0xf]
  %v5562 = vld [vmem:[%s9 + $0xe0] sm:$0xf]
  %v5563 = vld [vmem:[%s9 + $0xe4] sm:$0xf]
  %v5564 = vld [vmem:[%s9 + $0xe8] sm:$0xf]
  %v5565 = vld [vmem:[%s9 + $0xec] sm:$0xf]
  %v5566 = vld [vmem:[%s9 + $0xf0] sm:$0xf]
  %v5567 = vld [vmem:[%s9 + $0xf4] sm:$0xf]
  %v5568 = vld [vmem:[%s9 + $0xf8] sm:$0xf]
  %v5569 = vld [vmem:[%s9 + $0xfc] sm:$0xf]
  %v5570 = vld [vmem:[%s10] sm:$0x1]
  %v5572 = vperm.slane %v5570, 0
  %v5638 = vunpack.c.l.b16 %v5506
  %v5639 = vunpack.c.l.b16 %v5507
  %v5640 = vunpack.c.l.b16 %v5508
  %v5641 = vunpack.c.l.b16 %v5509
  %v5642 = vunpack.c.l.b16 %v5510
  %v5643 = vunpack.c.l.b16 %v5511
  %v5644 = vunpack.c.l.b16 %v5512
  %v5645 = vunpack.c.l.b16 %v5513
  %v5646 = vunpack.c.l.b16 %v5514
  %v5647 = vunpack.c.l.b16 %v5515
  %v5648 = vunpack.c.l.b16 %v5516
  %v5649 = vunpack.c.l.b16 %v5517
  %v5650 = vunpack.c.l.b16 %v5518
  %v5651 = vunpack.c.l.b16 %v5519
  %v5652 = vunpack.c.l.b16 %v5520
  %v5653 = vunpack.c.l.b16 %v5521
  %v5654 = vunpack.c.l.b16 %v5522
  %v5655 = vunpack.c.l.b16 %v5523
  %v5656 = vunpack.c.l.b16 %v5524
  %v5657 = vunpack.c.l.b16 %v5525
  %v5658 = vunpack.c.l.b16 %v5526
  %v5659 = vunpack.c.l.b16 %v5527
  %v5660 = vunpack.c.l.b16 %v5528
  %v5661 = vunpack.c.l.b16 %v5529
  %v5662 = vunpack.c.l.b16 %v5530
  %v5663 = vunpack.c.l.b16 %v5531
  %v5664 = vunpack.c.l.b16 %v5532
  %v5665 = vunpack.c.l.b16 %v5533
  %v5666 = vunpack.c.l.b16 %v5534
  %v5667 = vunpack.c.l.b16 %v5535
  %v5668 = vunpack.c.l.b16 %v5536
  %v5669 = vunpack.c.l.b16 %v5537
  %v5670 = vunpack.c.l.b16 %v5538
  %v5671 = vunpack.c.l.b16 %v5539
  %v5672 = vunpack.c.l.b16 %v5540
  %v5673 = vunpack.c.l.b16 %v5541
  %v5674 = vunpack.c.l.b16 %v5542
  %v5675 = vunpack.c.l.b16 %v5543
  %v5676 = vunpack.c.l.b16 %v5544
  %v5677 = vunpack.c.l.b16 %v5545
  %v5678 = vunpack.c.l.b16 %v5546
  %v5679 = vunpack.c.l.b16 %v5547
  %v5680 = vunpack.c.l.b16 %v5548
  %v5681 = vunpack.c.l.b16 %v5549
  %v5682 = vunpack.c.l.b16 %v5550
  %v5683 = vunpack.c.l.b16 %v5551
  %v5684 = vunpack.c.l.b16 %v5552
  %v5685 = vunpack.c.l.b16 %v5553
  %v5686 = vunpack.c.l.b16 %v5554
  %v5687 = vunpack.c.l.b16 %v5555
  %v5688 = vunpack.c.l.b16 %v5556
  %v5689 = vunpack.c.l.b16 %v5557
  %v5690 = vunpack.c.l.b16 %v5558
  %v5691 = vunpack.c.l.b16 %v5559
  %v5692 = vunpack.c.l.b16 %v5560
  %v5693 = vunpack.c.l.b16 %v5561
  %v5694 = vunpack.c.l.b16 %v5562
  %v5695 = vunpack.c.l.b16 %v5563
  %v5696 = vunpack.c.l.b16 %v5564
  %v5697 = vunpack.c.l.b16 %v5565
  %v5698 = vunpack.c.l.b16 %v5566
  %v5699 = vunpack.c.l.b16 %v5567
  %v5700 = vunpack.c.l.b16 %v5568
  %v5701 = vunpack.c.l.b16 %v5569
  %v5702 = vpack.c.b16 %v5639, %v5638
  %v5703 = vpack.c.b16 %v5641, %v5640
  %v5704 = vpack.c.b16 %v5643, %v5642
  %v5705 = vpack.c.b16 %v5645, %v5644
  %v5706 = vpack.c.b16 %v5647, %v5646
  %v5707 = vpack.c.b16 %v5649, %v5648
  %v5708 = vpack.c.b16 %v5651, %v5650
  %v5709 = vpack.c.b16 %v5653, %v5652
  %v5710 = vpack.c.b16 %v5655, %v5654
  %v5711 = vpack.c.b16 %v5657, %v5656
  %v5712 = vpack.c.b16 %v5659, %v5658
  %v5713 = vpack.c.b16 %v5661, %v5660
  %v5714 = vpack.c.b16 %v5663, %v5662
  %v5715 = vpack.c.b16 %v5665, %v5664
  %v5716 = vpack.c.b16 %v5667, %v5666
  %v5717 = vpack.c.b16 %v5669, %v5668
  %v5718 = vpack.c.b16 %v5671, %v5670
  %v5719 = vpack.c.b16 %v5673, %v5672
  %v5720 = vpack.c.b16 %v5675, %v5674
  %v5721 = vpack.c.b16 %v5677, %v5676
  %v5722 = vpack.c.b16 %v5679, %v5678
  %v5723 = vpack.c.b16 %v5681, %v5680
  %v5724 = vpack.c.b16 %v5683, %v5682
  %v5725 = vpack.c.b16 %v5685, %v5684
  %v5726 = vpack.c.b16 %v5687, %v5686
  %v5727 = vpack.c.b16 %v5689, %v5688
  %v5728 = vpack.c.b16 %v5691, %v5690
  %v5729 = vpack.c.b16 %v5693, %v5692
  %v5730 = vpack.c.b16 %v5695, %v5694
  %v5731 = vpack.c.b16 %v5697, %v5696
  %v5732 = vpack.c.b16 %v5699, %v5698
  %v5733 = vpack.c.b16 %v5701, %v5700
  %5766 = vmatpush.bf16.msra.mxu0 %v5709
  %5767 = vmatpush.bf16.msra.mxu0 %v5708
  %5768 = vmatpush.bf16.msra.mxu0 %v5707
  %5769 = vmatpush.bf16.msra.mxu0 %v5706
  %5770 = vmatpush.bf16.msra.mxu0 %v5705
  %5771 = vmatpush.bf16.msra.mxu0 %v5704
  %5772 = vmatpush.bf16.msra.mxu0 %v5703
  %5773 = vmatpush.bf16.msra.mxu0 %v5702
  %5774 = vmatmul.bf16.gmra.mxu0 %v5502
  %v5775 = vpop.f32.mrf.mxu0
  %v5776 = vadd.f32 %v5572, %v5775
  %v5777 = vpop.f32.mrf.mxu0
  %v5778 = vadd.f32 %v5572, %v5777
  %5779 = vdwg.mxu0
  %5780 = vmatpush.bf16.msra.mxu0 %v5717
  %5781 = vmatpush.bf16.msra.mxu0 %v5716
  %5782 = vmatpush.bf16.msra.mxu0 %v5715
  %5783 = vmatpush.bf16.msra.mxu0 %v5714
  %5784 = vmatpush.bf16.msra.mxu0 %v5713
  %5785 = vmatpush.bf16.msra.mxu0 %v5712
  %5786 = vmatpush.bf16.msra.mxu0 %v5711
  %5787 = vmatpush.bf16.msra.mxu0 %v5710
  %5788 = vmatmul.bf16.gmra.mxu0 %v5503
  %v5789 = vpop.f32.mrf.mxu0
  %v5790 = vadd.f32 %v5776, %v5789
  %v5791 = vpop.f32.mrf.mxu0
  %v5792 = vadd.f32 %v5778, %v5791
  %5793 = vdwg.mxu0
  %5794 = vmatpush.bf16.msra.mxu0 %v5725
  %5795 = vmatpush.bf16.msra.mxu0 %v5724
  %5796 = vmatpush.bf16.msra.mxu0 %v5723
  %5797 = vmatpush.bf16.msra.mxu0 %v5722
  %5798 = vmatpush.bf16.msra.mxu0 %v5721
  %5799 = vmatpush.bf16.msra.mxu0 %v5720
  %5800 = vmatpush.bf16.msra.mxu0 %v5719
  %5801 = vmatpush.bf16.msra.mxu0 %v5718
  %5802 = vmatmul.bf16.gmra.mxu0 %v5504
  %v5803 = vpop.f32.mrf.mxu0
  %v5804 = vadd.f32 %v5790, %v5803
  %v5805 = vpop.f32.mrf.mxu0
  %v5806 = vadd.f32 %v5792, %v5805
  %5807 = vdwg.mxu0
  %5808 = vmatpush.bf16.msra.mxu0 %v5733
  %5809 = vmatpush.bf16.msra.mxu0 %v5732
  %5810 = vmatpush.bf16.msra.mxu0 %v5731
  %5811 = vmatpush.bf16.msra.mxu0 %v5730
  %5812 = vmatpush.bf16.msra.mxu0 %v5729
  %5813 = vmatpush.bf16.msra.mxu0 %v5728
  %5814 = vmatpush.bf16.msra.mxu0 %v5727
  %5815 = vmatpush.bf16.msra.mxu0 %v5726
  %5816 = vmatmul.bf16.gmra.mxu0 %v5505
  %v5817 = vpop.f32.mrf.mxu0
  %v5818 = vadd.f32 %v5804, %v5817
  %v5819 = vpop.f32.mrf.mxu0
  %v5820 = vadd.f32 %v5806, %v5819
  %5821 = vdwg.mxu0
  %5822 = vst [vmem:[%s11] sm:$0xff] %v5818
  %5823 = vst [vmem:[%s11 + $0x8] sm:$0xff] %v5820
  // Predicated region
  $region46: #{_dqn_forward_impl.1} parent=0 // pred_check
    _
  $region47: #{_dqn_forward_impl.1} parent=0 // pred_check_branch
    %5825 = sbr.rel (0) target = $region49
  $region48: #{_dqn_forward_impl.1} parent=0 // pred_region
    _
  $region49: #{_dqn_forward_impl.1} parent=0 // pred_fallthru
    _
  // Predicated region
  $region50: #{_dqn_forward_impl.1} parent=0 // pred_check
    _
  $region51: #{_dqn_forward_impl.1} parent=0 // pred_check_branch
    %5827 = sbr.rel (0) target = $region53
  $region52: #{_dqn_forward_impl.1} parent=0 // pred_region
    _
  $region53: #{_dqn_forward_impl.1} parent=0 // pred_fallthru
    _

// kernel: _dqn_forward_impl.1
$region0: #{_dqn_forward_impl.1}
  #allocation0 [shape = 'u32[]', space=smem, size = 0x4, offset = 0x4, fixed_abs, tag = 'smem constant byte address 0x4 - core index']
  #allocation1 [shape = 'u32[72,128]{1,0:T(1,128)}', space=vmem, size = 0x9000, scoped, tag = 'internal scratch']
  %s0 = inlined_call_operand.vmem [shape: bf16[64,16,256], index: 0, kind: input, shape index: {}]
  %s1 = inlined_call_operand.vmem [shape: bf16[256,128], index: 1, kind: input, shape index: {}]
  %s2 = inlined_call_operand.vmem [shape: f32[1,128], index: 2, kind: input, shape index: {}]
  %s3 = inlined_call_operand.vmem [shape: bf16[16,128,128], index: 3, kind: input, shape index: {}]
  %s4 = inlined_call_operand.vmem [shape: f32[1,128], index: 4, kind: input, shape index: {}]
  %s5 = inlined_call_operand.vmem [shape: bf16[9,128,128], index: 5, kind: input, shape index: {}]
  %s6 = inlined_call_operand.vmem [shape: f32[1,128], index: 6, kind: input, shape index: {}]
  %s7 = inlined_call_operand.vmem [shape: bf16[1,128,512], index: 7, kind: input, shape index: {}]
  %s8 = inlined_call_operand.vmem [shape: f32[1,512], index: 8, kind: input, shape index: {}]
  %s9 = inlined_call_operand.vmem [shape: bf16[512,128], index: 9, kind: input, shape index: {}]
  %s10 = inlined_call_operand.vmem [shape: f32[1,128], index: 10, kind: input, shape index: {}]
  %s11 = inlined_call_operand.vmem [shape: f32[16,128], index: 11, kind: output, shape index: {}]
  %s12 = sld [smem:[#allocation0]]
  $region54: #{_dqn_forward_impl.1} parent=0
    _
  %s14 = ssub.s32 1, %s12
  %s15 = scalar_select 0, %s14, %s12
  // Predicated region
  $region2: #{_dqn_forward_impl.1} parent=0 // pred_check
    _
  $region3: #{_dqn_forward_impl.1} parent=0 // pred_check_branch
    %17 = sbr.rel (0) target = $region5
  $region4: #{_dqn_forward_impl.1} parent=0 // pred_region
    _
  $region5: #{_dqn_forward_impl.1} parent=0 // pred_fallthru
    _
  // Predicated region
  $region6: #{_dqn_forward_impl.1} parent=0 // pred_check
    _
  $region7: #{_dqn_forward_impl.1} parent=0 // pred_check_branch
    %19 = sbr.rel (0) target = $region9
  $region8: #{_dqn_forward_impl.1} parent=0 // pred_region
    _
  $region9: #{_dqn_forward_impl.1} parent=0 // pred_fallthru
    _
  // Predicated region
  $region10: #{_dqn_forward_impl.1} parent=0 // pred_check
    _
  $region11: #{_dqn_forward_impl.1} parent=0 // pred_check_branch
    %21 = sbr.rel (0) target = $region13
  $region12: #{_dqn_forward_impl.1} parent=0 // pred_region
    _
  $region13: #{_dqn_forward_impl.1} parent=0 // pred_fallthru
    _
  // Predicated region
  $region14: #{_dqn_forward_impl.1} parent=0 // pred_check
    _
  $region15: #{_dqn_forward_impl.1} parent=0 // pred_check_branch
    %23 = sbr.rel (0) target = $region17
  $region16: #{_dqn_forward_impl.1} parent=0 // pred_region
    _
  $region17: #{_dqn_forward_impl.1} parent=0 // pred_fallthru
    _
  // Predicated region
  $region18: #{_dqn_forward_impl.1} parent=0 // pred_check
    _
  $region19: #{_dqn_forward_impl.1} parent=0 // pred_check_branch
    %25 = sbr.rel (0) target = $region21
  $region20: #{_dqn_forward_impl.1} parent=0 // pred_region
    _
  $region21: #{_dqn_forward_impl.1} parent=0 // pred_fallthru
    _
  // Predicated region
  $region22: #{_dqn_forward_impl.1} parent=0 // pred_check
    _
  $region23: #{_dqn_forward_impl.1} parent=0 // pred_check_branch
    %27 = sbr.rel (0) target = $region25
  $region24: #{_dqn_forward_impl.1} parent=0 // pred_region
    _
  $region25: #{_dqn_forward_impl.1} parent=0 // pred_fallthru
    _
  // Predicated region
  $region26: #{_dqn_forward_impl.1} parent=0 // pred_check
    _
  $region27: #{_dqn_forward_impl.1} parent=0 // pred_check_branch
    %29 = sbr.rel (0) target = $region29
  $region28: #{_dqn_forward_impl.1} parent=0 // pred_region
    _
  $region29: #{_dqn_forward_impl.1} parent=0 // pred_fallthru
    _
  // Predicated region
  $region30: #{_dqn_forward_impl.1} parent=0 // pred_check
    _
  $region31: #{_dqn_forward_impl.1} parent=0 // pred_check_branch
    %31 = sbr.rel (0) target = $region33
  $region32: #{_dqn_forward_impl.1} parent=0 // pred_region
    _
  $region33: #{_dqn_forward_impl.1} parent=0 // pred_fallthru
    _
  // Predicated region
  $region34: #{_dqn_forward_impl.1} parent=0 // pred_check
    _
  $region35: #{_dqn_forward_impl.1} parent=0 // pred_check_branch
    %33 = sbr.rel (0) target = $region37
  $region36: #{_dqn_forward_impl.1} parent=0 // pred_region
    _
  $region37: #{_dqn_forward_impl.1} parent=0 // pred_fallthru
    _
  // Predicated region
  $region38: #{_dqn_forward_impl.1} parent=0 // pred_check
    _
  $region39: #{_dqn_forward_impl.1} parent=0 // pred_check_branch
    %35 = sbr.rel (0) target = $region41
  $region40: #{_dqn_forward_impl.1} parent=0 // pred_region
    _
  $region41: #{_dqn_forward_impl.1} parent=0 // pred_fallthru
    _
  // Predicated region
  $region42: #{_dqn_forward_impl.1} parent=0 // pred_check
    _
  $region43: #{_dqn_forward_impl.1} parent=0 // pred_check_branch
    %37 = sbr.rel (0) target = $region45
  $region44: #{_dqn_forward_impl.1} parent=0 // pred_region
    _
  $region45: #{_dqn_forward_impl.1} parent=0 // pred_fallthru
    _
  %v38 = vld [vmem:[%s0] sm:$0xff]
  %v39 = vld [vmem:[%s0 + $0x8] sm:$0xff]
  %v40 = vld [vmem:[%s0 + $0x10] sm:$0xff]
  %v41 = vld [vmem:[%s0 + $0x18] sm:$0xff]
  %v42 = vld [vmem:[%s0 + $0x20] sm:$0xff]
  %v43 = vld [vmem:[%s0 + $0x28] sm:$0xff]
  %v44 = vld [vmem:[%s0 + $0x30] sm:$0xff]
  %v45 = vld [vmem:[%s0 + $0x38] sm:$0xff]
  %v46 = vld [vmem:[%s0 + $0x40] sm:$0xff]
  %v47 = vld [vmem:[%s0 + $0x48] sm:$0xff]
  %v48 = vld [vmem:[%s0 + $0x50] sm:$0xff]
  %v49 = vld [vmem:[%s0 + $0x58] sm:$0xff]
  %v50 = vld [vmem:[%s0 + $0x60] sm:$0xff]
  %v51 = vld [vmem:[%s0 + $0x68] sm:$0xff]
  %v52 = vld [vmem:[%s0 + $0x70] sm:$0xff]
  %v53 = vld [vmem:[%s0 + $0x78] sm:$0xff]
  %v54 = vld [vmem:[%s0 + $0x80] sm:$0xff]
  %v55 = vld [vmem:[%s0 + $0x88] sm:$0xff]
  %v56 = vld [vmem:[%s0 + $0x90] sm:$0xff]
  %v57 = vld [vmem:[%s0 + $0x98] sm:$0xff]
  %v58 = vld [vmem:[%s0 + $0xa0] sm:$0xff]
  %v59 = vld [vmem:[%s0 + $0xa8] sm:$0xff]
  %v60 = vld [vmem:[%s0 + $0xb0] sm:$0xff]
  %v61 = vld [vmem:[%s0 + $0xb8] sm:$0xff]
  %v62 = vld [vmem:[%s0 + $0xc0] sm:$0xff]
  %v63 = vld [vmem:[%s0 + $0xc8] sm:$0xff]
  %v64 = vld [vmem:[%s0 + $0xd0] sm:$0xff]
  %v65 = vld [vmem:[%s0 + $0xd8] sm:$0xff]
  %v66 = vld [vmem:[%s0 + $0xe0] sm:$0xff]
  %v67 = vld [vmem:[%s0 + $0xe8] sm:$0xff]
  %v68 = vld [vmem:[%s0 + $0xf0] sm:$0xff]
  %v69 = vld [vmem:[%s0 + $0xf8] sm:$0xff]
  %v70 = vld [vmem:[%s0 + $0x100] sm:$0xff]
  %v71 = vld [vmem:[%s0 + $0x108] sm:$0xff]
  %v72 = vld [vmem:[%s0 + $0x110] sm:$0xff]
  %v73 = vld [vmem:[%s0 + $0x118] sm:$0xff]
  %v74 = vld [vmem:[%s0 + $0x120] sm:$0xff]
  %v75 = vld [vmem:[%s0 + $0x128] sm:$0xff]
  %v76 = vld [vmem:[%s0 + $0x130] sm:$0xff]
  %v77 = vld [vmem:[%s0 + $0x138] sm:$0xff]
  %v78 = vld [vmem:[%s0 + $0x140] sm:$0xff]
  %v79 = vld [vmem:[%s0 + $0x148] sm:$0xff]
  %v80 = vld [vmem:[%s0 + $0x150] sm:$0xff]
  %v81 = vld [vmem:[%s0 + $0x158] sm:$0xff]
  %v82 = vld [vmem:[%s0 + $0x160] sm:$0xff]
  %v83 = vld [vmem:[%s0 + $0x168] sm:$0xff]
  %v84 = vld [vmem:[%s0 + $0x170] sm:$0xff]
  %v85 = vld [vmem:[%s0 + $0x178] sm:$0xff]
  %v86 = vld [vmem:[%s0 + $0x180] sm:$0xff]
  %v87 = vld [vmem:[%s0 + $0x188] sm:$0xff]
  %v88 = vld [vmem:[%s0 + $0x190] sm:$0xff]
  %v89 = vld [vmem:[%s0 + $0x198] sm:$0xff]
  %v90 = vld [vmem:[%s0 + $0x1a0] sm:$0xff]
  %v91 = vld [vmem:[%s0 + $0x1a8] sm:$0xff]
  %v92 = vld [vmem:[%s0 + $0x1b0] sm:$0xff]
  %v93 = vld [vmem:[%s0 + $0x1b8] sm:$0xff]
  %v94 = vld [vmem:[%s0 + $0x1c0] sm:$0xff]
  %v95 = vld [vmem:[%s0 + $0x1c8] sm:$0xff]
  %v96 = vld [vmem:[%s0 + $0x1d0] sm:$0xff]
  %v97 = vld [vmem:[%s0 + $0x1d8] sm:$0xff]
  %v98 = vld [vmem:[%s0 + $0x1e0] sm:$0xff]
  %v99 = vld [vmem:[%s0 + $0x1e8] sm:$0xff]
  %v100 = vld [vmem:[%s0 + $0x1f0] sm:$0xff]
  %v101 = vld [vmem:[%s0 + $0x1f8] sm:$0xff]
  %v102 = vld [vmem:[%s0 + $0x200] sm:$0xff]
  %v103 = vld [vmem:[%s0 + $0x208] sm:$0xff]
  %v104 = vld [vmem:[%s0 + $0x210] sm:$0xff]
  %v105 = vld [vmem:[%s0 + $0x218] sm:$0xff]
  %v106 = vld [vmem:[%s0 + $0x220] sm:$0xff]
  %v107 = vld [vmem:[%s0 + $0x228] sm:$0xff]
  %v108 = vld [vmem:[%s0 + $0x230] sm:$0xff]
  %v109 = vld [vmem:[%s0 + $0x238] sm:$0xff]
  %v110 = vld [vmem:[%s0 + $0x240] sm:$0xff]
  %v111 = vld [vmem:[%s0 + $0x248] sm:$0xff]
  %v112 = vld [vmem:[%s0 + $0x250] sm:$0xff]
  %v113 = vld [vmem:[%s0 + $0x258] sm:$0xff]
  %v114 = vld [vmem:[%s0 + $0x260] sm:$0xff]
  %v115 = vld [vmem:[%s0 + $0x268] sm:$0xff]
  %v116 = vld [vmem:[%s0 + $0x270] sm:$0xff]
  %v117 = vld [vmem:[%s0 + $0x278] sm:$0xff]
  %v118 = vld [vmem:[%s0 + $0x280] sm:$0xff]
  %v119 = vld [vmem:[%s0 + $0x288] sm:$0xff]
  %v120 = vld [vmem:[%s0 + $0x290] sm:$0xff]
  %v121 = vld [vmem:[%s0 + $0x298] sm:$0xff]
  %v122 = vld [vmem:[%s0 + $0x2a0] sm:$0xff]
  %v123 = vld [vmem:[%s0 + $0x2a8] sm:$0xff]
  %v124 = vld [vmem:[%s0 + $0x2b0] sm:$0xff]
  %v125 = vld [vmem:[%s0 + $0x2b8] sm:$0xff]
  %v126 = vld [vmem:[%s0 + $0x2c0] sm:$0xff]
  %v127 = vld [vmem:[%s0 + $0x2c8] sm:$0xff]
  %v128 = vld [vmem:[%s0 + $0x2d0] sm:$0xff]
  %v129 = vld [vmem:[%s0 + $0x2d8] sm:$0xff]
  %v130 = vld [vmem:[%s0 + $0x2e0] sm:$0xff]
  %v131 = vld [vmem:[%s0 + $0x2e8] sm:$0xff]
  %v132 = vld [vmem:[%s0 + $0x2f0] sm:$0xff]
  %v133 = vld [vmem:[%s0 + $0x2f8] sm:$0xff]
  %v134 = vld [vmem:[%s0 + $0x300] sm:$0xff]
  %v135 = vld [vmem:[%s0 + $0x308] sm:$0xff]
  %v136 = vld [vmem:[%s0 + $0x310] sm:$0xff]
  %v137 = vld [vmem:[%s0 + $0x318] sm:$0xff]
  %v138 = vld [vmem:[%s0 + $0x320] sm:$0xff]
  %v139 = vld [vmem:[%s0 + $0x328] sm:$0xff]
  %v140 = vld [vmem:[%s0 + $0x330] sm:$0xff]
  %v141 = vld [vmem:[%s0 + $0x338] sm:$0xff]
  %v142 = vld [vmem:[%s0 + $0x340] sm:$0xff]
  %v143 = vld [vmem:[%s0 + $0x348] sm:$0xff]
  %v144 = vld [vmem:[%s0 + $0x350] sm:$0xff]
  %v145 = vld [vmem:[%s0 + $0x358] sm:$0xff]
  %v146 = vld [vmem:[%s0 + $0x360] sm:$0xff]
  %v147 = vld [vmem:[%s0 + $0x368] sm:$0xff]
  %v148 = vld [vmem:[%s0 + $0x370] sm:$0xff]
  %v149 = vld [vmem:[%s0 + $0x378] sm:$0xff]
  %v150 = vld [vmem:[%s0 + $0x380] sm:$0xff]
  %v151 = vld [vmem:[%s0 + $0x388] sm:$0xff]
  %v152 = vld [vmem:[%s0 + $0x390] sm:$0xff]
  %v153 = vld [vmem:[%s0 + $0x398] sm:$0xff]
  %v154 = vld [vmem:[%s0 + $0x3a0] sm:$0xff]
  %v155 = vld [vmem:[%s0 + $0x3a8] sm:$0xff]
  %v156 = vld [vmem:[%s0 + $0x3b0] sm:$0xff]
  %v157 = vld [vmem:[%s0 + $0x3b8] sm:$0xff]
  %v158 = vld [vmem:[%s0 + $0x3c0] sm:$0xff]
  %v159 = vld [vmem:[%s0 + $0x3c8] sm:$0xff]
  %v160 = vld [vmem:[%s0 + $0x3d0] sm:$0xff]
  %v161 = vld [vmem:[%s0 + $0x3d8] sm:$0xff]
  %v162 = vld [vmem:[%s0 + $0x3e0] sm:$0xff]
  %v163 = vld [vmem:[%s0 + $0x3e8] sm:$0xff]
  %v164 = vld [vmem:[%s0 + $0x3f0] sm:$0xff]
  %v165 = vld [vmem:[%s0 + $0x3f8] sm:$0xff]
  %v166 = vld [vmem:[%s1] sm:$0xf]
  %v167 = vld [vmem:[%s1 + $0x4] sm:$0xf]
  %v168 = vld [vmem:[%s1 + $0x8] sm:$0xf]
  %v169 = vld [vmem:[%s1 + $0xc] sm:$0xf]
  %v170 = vld [vmem:[%s1 + $0x10] sm:$0xf]
  %v171 = vld [vmem:[%s1 + $0x14] sm:$0xf]
  %v172 = vld [vmem:[%s1 + $0x18] sm:$0xf]
  %v173 = vld [vmem:[%s1 + $0x1c] sm:$0xf]
  %v174 = vld [vmem:[%s1 + $0x20] sm:$0xf]
  %v175 = vld [vmem:[%s1 + $0x24] sm:$0xf]
  %v176 = vld [vmem:[%s1 + $0x28] sm:$0xf]
  %v177 = vld [vmem:[%s1 + $0x2c] sm:$0xf]
  %v178 = vld [vmem:[%s1 + $0x30] sm:$0xf]
  %v179 = vld [vmem:[%s1 + $0x34] sm:$0xf]
  %v180 = vld [vmem:[%s1 + $0x38] sm:$0xf]
  %v181 = vld [vmem:[%s1 + $0x3c] sm:$0xf]
  %v182 = vld [vmem:[%s1 + $0x40] sm:$0xf]
  %v183 = vld [vmem:[%s1 + $0x44] sm:$0xf]
  %v184 = vld [vmem:[%s1 + $0x48] sm:$0xf]
  %v185 = vld [vmem:[%s1 + $0x4c] sm:$0xf]
  %v186 = vld [vmem:[%s1 + $0x50] sm:$0xf]
  %v187 = vld [vmem:[%s1 + $0x54] sm:$0xf]
  %v188 = vld [vmem:[%s1 + $0x58] sm:$0xf]
  %v189 = vld [vmem:[%s1 + $0x5c] sm:$0xf]
  %v190 = vld [vmem:[%s1 + $0x60] sm:$0xf]
  %v191 = vld [vmem:[%s1 + $0x64] sm:$0xf]
  %v192 = vld [vmem:[%s1 + $0x68] sm:$0xf]
  %v193 = vld [vmem:[%s1 + $0x6c] sm:$0xf]
  %v194 = vld [vmem:[%s1 + $0x70] sm:$0xf]
  %v195 = vld [vmem:[%s1 + $0x74] sm:$0xf]
  %v196 = vld [vmem:[%s1 + $0x78] sm:$0xf]
  %v197 = vld [vmem:[%s1 + $0x7c] sm:$0xf]
  %v198 = vld [vmem:[%s2] sm:$0x1]
  %v200 = vperm.slane %v198, 0
  %v330 = vunpack.c.l.b16 %v38
  %v331 = vunpack.c.h.b16 %v38
  %v332 = vunpack.c.l.b16 %v39
  %v333 = vunpack.c.h.b16 %v39
  %v334 = vunpack.c.l.b16 %v40
  %v335 = vunpack.c.h.b16 %v40
  %v336 = vunpack.c.l.b16 %v41
  %v337 = vunpack.c.h.b16 %v41
  %v338 = vunpack.c.l.b16 %v42
  %v339 = vunpack.c.h.b16 %v42
  %v340 = vunpack.c.l.b16 %v43
  %v341 = vunpack.c.h.b16 %v43
  %v342 = vunpack.c.l.b16 %v44
  %v343 = vunpack.c.h.b16 %v44
  %v344 = vunpack.c.l.b16 %v45
  %v345 = vunpack.c.h.b16 %v45
  %v346 = vunpack.c.l.b16 %v46
  %v347 = vunpack.c.h.b16 %v46
  %v348 = vunpack.c.l.b16 %v47
  %v349 = vunpack.c.h.b16 %v47
  %v350 = vunpack.c.l.b16 %v48
  %v351 = vunpack.c.h.b16 %v48
  %v352 = vunpack.c.l.b16 %v49
  %v353 = vunpack.c.h.b16 %v49
  %v354 = vunpack.c.l.b16 %v50
  %v355 = vunpack.c.h.b16 %v50
  %v356 = vunpack.c.l.b16 %v51
  %v357 = vunpack.c.h.b16 %v51
  %v358 = vunpack.c.l.b16 %v52
  %v359 = vunpack.c.h.b16 %v52
  %v360 = vunpack.c.l.b16 %v53
  %v361 = vunpack.c.h.b16 %v53
  %v362 = vunpack.c.l.b16 %v54
  %v363 = vunpack.c.h.b16 %v54
  %v364 = vunpack.c.l.b16 %v55
  %v365 = vunpack.c.h.b16 %v55
  %v366 = vunpack.c.l.b16 %v56
  %v367 = vunpack.c.h.b16 %v56
  %v368 = vunpack.c.l.b16 %v57
  %v369 = vunpack.c.h.b16 %v57
  %v370 = vunpack.c.l.b16 %v58
  %v371 = vunpack.c.h.b16 %v58
  %v372 = vunpack.c.l.b16 %v59
  %v373 = vunpack.c.h.b16 %v59
  %v374 = vunpack.c.l.b16 %v60
  %v375 = vunpack.c.h.b16 %v60
  %v376 = vunpack.c.l.b16 %v61
  %v377 = vunpack.c.h.b16 %v61
  %v378 = vunpack.c.l.b16 %v62
  %v379 = vunpack.c.h.b16 %v62
  %v380 = vunpack.c.l.b16 %v63
  %v381 = vunpack.c.h.b16 %v63
  %v382 = vunpack.c.l.b16 %v64
  %v383 = vunpack.c.h.b16 %v64
  %v384 = vunpack.c.l.b16 %v65
  %v385 = vunpack.c.h.b16 %v65
  %v386 = vunpack.c.l.b16 %v66
  %v387 = vunpack.c.h.b16 %v66
  %v388 = vunpack.c.l.b16 %v67
  %v389 = vunpack.c.h.b16 %v67
  %v390 = vunpack.c.l.b16 %v68
  %v391 = vunpack.c.h.b16 %v68
  %v392 = vunpack.c.l.b16 %v69
  %v393 = vunpack.c.h.b16 %v69
  %v394 = vunpack.c.l.b16 %v70
  %v395 = vunpack.c.h.b16 %v70
  %v396 = vunpack.c.l.b16 %v71
  %v397 = vunpack.c.h.b16 %v71
  %v398 = vunpack.c.l.b16 %v72
  %v399 = vunpack.c.h.b16 %v72
  %v400 = vunpack.c.l.b16 %v73
  %v401 = vunpack.c.h.b16 %v73
  %v402 = vunpack.c.l.b16 %v74
  %v403 = vunpack.c.h.b16 %v74
  %v404 = vunpack.c.l.b16 %v75
  %v405 = vunpack.c.h.b16 %v75
  %v406 = vunpack.c.l.b16 %v76
  %v407 = vunpack.c.h.b16 %v76
  %v408 = vunpack.c.l.b16 %v77
  %v409 = vunpack.c.h.b16 %v77
  %v410 = vunpack.c.l.b16 %v78
  %v411 = vunpack.c.h.b16 %v78
  %v412 = vunpack.c.l.b16 %v79
  %v413 = vunpack.c.h.b16 %v79
  %v414 = vunpack.c.l.b16 %v80
  %v415 = vunpack.c.h.b16 %v80
  %v416 = vunpack.c.l.b16 %v81
  %v417 = vunpack.c.h.b16 %v81
  %v418 = vunpack.c.l.b16 %v82
  %v419 = vunpack.c.h.b16 %v82
  %v420 = vunpack.c.l.b16 %v83
  %v421 = vunpack.c.h.b16 %v83
  %v422 = vunpack.c.l.b16 %v84
  %v423 = vunpack.c.h.b16 %v84
  %v424 = vunpack.c.l.b16 %v85
  %v425 = vunpack.c.h.b16 %v85
  %v426 = vunpack.c.l.b16 %v86
  %v427 = vunpack.c.h.b16 %v86
  %v428 = vunpack.c.l.b16 %v87
  %v429 = vunpack.c.h.b16 %v87
  %v430 = vunpack.c.l.b16 %v88
  %v431 = vunpack.c.h.b16 %v88
  %v432 = vunpack.c.l.b16 %v89
  %v433 = vunpack.c.h.b16 %v89
  %v434 = vunpack.c.l.b16 %v90
  %v435 = vunpack.c.h.b16 %v90
  %v436 = vunpack.c.l.b16 %v91
  %v437 = vunpack.c.h.b16 %v91
  %v438 = vunpack.c.l.b16 %v92
  %v439 = vunpack.c.h.b16 %v92
  %v440 = vunpack.c.l.b16 %v93
  %v441 = vunpack.c.h.b16 %v93
  %v442 = vunpack.c.l.b16 %v94
  %v443 = vunpack.c.h.b16 %v94
  %v444 = vunpack.c.l.b16 %v95
  %v445 = vunpack.c.h.b16 %v95
  %v446 = vunpack.c.l.b16 %v96
  %v447 = vunpack.c.h.b16 %v96
  %v448 = vunpack.c.l.b16 %v97
  %v449 = vunpack.c.h.b16 %v97
  %v450 = vunpack.c.l.b16 %v98
  %v451 = vunpack.c.h.b16 %v98
  %v452 = vunpack.c.l.b16 %v99
  %v453 = vunpack.c.h.b16 %v99
  %v454 = vunpack.c.l.b16 %v100
  %v455 = vunpack.c.h.b16 %v100
  %v456 = vunpack.c.l.b16 %v101
  %v457 = vunpack.c.h.b16 %v101
  %v458 = vunpack.c.l.b16 %v102
  %v459 = vunpack.c.h.b16 %v102
  %v460 = vunpack.c.l.b16 %v103
  %v461 = vunpack.c.h.b16 %v103
  %v462 = vunpack.c.l.b16 %v104
  %v463 = vunpack.c.h.b16 %v104
  %v464 = vunpack.c.l.b16 %v105
  %v465 = vunpack.c.h.b16 %v105
  %v466 = vunpack.c.l.b16 %v106
  %v467 = vunpack.c.h.b16 %v106
  %v468 = vunpack.c.l.b16 %v107
  %v469 = vunpack.c.h.b16 %v107
  %v470 = vunpack.c.l.b16 %v108
  %v471 = vunpack.c.h.b16 %v108
  %v472 = vunpack.c.l.b16 %v109
  %v473 = vunpack.c.h.b16 %v109
  %v474 = vunpack.c.l.b16 %v110
  %v475 = vunpack.c.h.b16 %v110
  %v476 = vunpack.c.l.b16 %v111
  %v477 = vunpack.c.h.b16 %v111
  %v478 = vunpack.c.l.b16 %v112
  %v479 = vunpack.c.h.b16 %v112
  %v480 = vunpack.c.l.b16 %v113
  %v481 = vunpack.c.h.b16 %v113
  %v482 = vunpack.c.l.b16 %v114
  %v483 = vunpack.c.h.b16 %v114
  %v484 = vunpack.c.l.b16 %v115
  %v485 = vunpack.c.h.b16 %v115
  %v486 = vunpack.c.l.b16 %v116
  %v487 = vunpack.c.h.b16 %v116
  %v488 = vunpack.c.l.b16 %v117
  %v489 = vunpack.c.h.b16 %v117
  %v490 = vunpack.c.l.b16 %v118
  %v491 = vunpack.c.h.b16 %v118
  %v492 = vunpack.c.l.b16 %v119
  %v493 = vunpack.c.h.b16 %v119
  %v494 = vunpack.c.l.b16 %v120
  %v495 = vunpack.c.h.b16 %v120
  %v496 = vunpack.c.l.b16 %v121
  %v497 = vunpack.c.h.b16 %v121
  %v498 = vunpack.c.l.b16 %v122
  %v499 = vunpack.c.h.b16 %v122
  %v500 = vunpack.c.l.b16 %v123
  %v501 = vunpack.c.h.b16 %v123
  %v502 = vunpack.c.l.b16 %v124
  %v503 = vunpack.c.h.b16 %v124
  %v504 = vunpack.c.l.b16 %v125
  %v505 = vunpack.c.h.b16 %v125
  %v506 = vunpack.c.l.b16 %v126
  %v507 = vunpack.c.h.b16 %v126
  %v508 = vunpack.c.l.b16 %v127
  %v509 = vunpack.c.h.b16 %v127
  %v510 = vunpack.c.l.b16 %v128
  %v511 = vunpack.c.h.b16 %v128
  %v512 = vunpack.c.l.b16 %v129
  %v513 = vunpack.c.h.b16 %v129
  %v514 = vunpack.c.l.b16 %v130
  %v515 = vunpack.c.h.b16 %v130
  %v516 = vunpack.c.l.b16 %v131
  %v517 = vunpack.c.h.b16 %v131
  %v518 = vunpack.c.l.b16 %v132
  %v519 = vunpack.c.h.b16 %v132
  %v520 = vunpack.c.l.b16 %v133
  %v521 = vunpack.c.h.b16 %v133
  %v522 = vunpack.c.l.b16 %v134
  %v523 = vunpack.c.h.b16 %v134
  %v524 = vunpack.c.l.b16 %v135
  %v525 = vunpack.c.h.b16 %v135
  %v526 = vunpack.c.l.b16 %v136
  %v527 = vunpack.c.h.b16 %v136
  %v528 = vunpack.c.l.b16 %v137
  %v529 = vunpack.c.h.b16 %v137
  %v530 = vunpack.c.l.b16 %v138
  %v531 = vunpack.c.h.b16 %v138
  %v532 = vunpack.c.l.b16 %v139
  %v533 = vunpack.c.h.b16 %v139
  %v534 = vunpack.c.l.b16 %v140
  %v535 = vunpack.c.h.b16 %v140
  %v536 = vunpack.c.l.b16 %v141
  %v537 = vunpack.c.h.b16 %v141
  %v538 = vunpack.c.l.b16 %v142
  %v539 = vunpack.c.h.b16 %v142
  %v540 = vunpack.c.l.b16 %v143
  %v541 = vunpack.c.h.b16 %v143
  %v542 = vunpack.c.l.b16 %v144
  %v543 = vunpack.c.h.b16 %v144
  %v544 = vunpack.c.l.b16 %v145
  %v545 = vunpack.c.h.b16 %v145
  %v546 = vunpack.c.l.b16 %v146
  %v547 = vunpack.c.h.b16 %v146
  %v548 = vunpack.c.l.b16 %v147
  %v549 = vunpack.c.h.b16 %v147
  %v550 = vunpack.c.l.b16 %v148
  %v551 = vunpack.c.h.b16 %v148
  %v552 = vunpack.c.l.b16 %v149
  %v553 = vunpack.c.h.b16 %v149
  %v554 = vunpack.c.l.b16 %v150
  %v555 = vunpack.c.h.b16 %v150
  %v556 = vunpack.c.l.b16 %v151
  %v557 = vunpack.c.h.b16 %v151
  %v558 = vunpack.c.l.b16 %v152
  %v559 = vunpack.c.h.b16 %v152
  %v560 = vunpack.c.l.b16 %v153
  %v561 = vunpack.c.h.b16 %v153
  %v562 = vunpack.c.l.b16 %v154
  %v563 = vunpack.c.h.b16 %v154
  %v564 = vunpack.c.l.b16 %v155
  %v565 = vunpack.c.h.b16 %v155
  %v566 = vunpack.c.l.b16 %v156
  %v567 = vunpack.c.h.b16 %v156
  %v568 = vunpack.c.l.b16 %v157
  %v569 = vunpack.c.h.b16 %v157
  %v570 = vunpack.c.l.b16 %v158
  %v571 = vunpack.c.h.b16 %v158
  %v572 = vunpack.c.l.b16 %v159
  %v573 = vunpack.c.h.b16 %v159
  %v574 = vunpack.c.l.b16 %v160
  %v575 = vunpack.c.h.b16 %v160
  %v576 = vunpack.c.l.b16 %v161
  %v577 = vunpack.c.h.b16 %v161
  %v578 = vunpack.c.l.b16 %v162
  %v579 = vunpack.c.h.b16 %v162
  %v580 = vunpack.c.l.b16 %v163
  %v581 = vunpack.c.h.b16 %v163
  %v582 = vunpack.c.l.b16 %v164
  %v583 = vunpack.c.h.b16 %v164
  %v584 = vunpack.c.l.b16 %v165
  %v585 = vunpack.c.h.b16 %v165
  %v586 = vpack.c.b16 %v332, %v330
  %v587 = vpack.c.b16 %v333, %v331
  %v588 = vpack.c.b16 %v336, %v334
  %v589 = vpack.c.b16 %v337, %v335
  %v590 = vpack.c.b16 %v340, %v338
  %v591 = vpack.c.b16 %v341, %v339
  %v592 = vpack.c.b16 %v344, %v342
  %v593 = vpack.c.b16 %v345, %v343
  %v594 = vpack.c.b16 %v348, %v346
  %v595 = vpack.c.b16 %v349, %v347
  %v596 = vpack.c.b16 %v352, %v350
  %v597 = vpack.c.b16 %v353, %v351
  %v598 = vpack.c.b16 %v356, %v354
  %v599 = vpack.c.b16 %v357, %v355
  %v600 = vpack.c.b16 %v360, %v358
  %v601 = vpack.c.b16 %v361, %v359
  %v602 = vpack.c.b16 %v364, %v362
  %v603 = vpack.c.b16 %v365, %v363
  %v604 = vpack.c.b16 %v368, %v366
  %v605 = vpack.c.b16 %v369, %v367
  %v606 = vpack.c.b16 %v372, %v370
  %v607 = vpack.c.b16 %v373, %v371
  %v608 = vpack.c.b16 %v376, %v374
  %v609 = vpack.c.b16 %v377, %v375
  %v610 = vpack.c.b16 %v380, %v378
  %v611 = vpack.c.b16 %v381, %v379
  %v612 = vpack.c.b16 %v384, %v382
  %v613 = vpack.c.b16 %v385, %v383
  %v614 = vpack.c.b16 %v388, %v386
  %v615 = vpack.c.b16 %v389, %v387
  %v616 = vpack.c.b16 %v392, %v390
  %v617 = vpack.c.b16 %v393, %v391
  %v618 = vpack.c.b16 %v396, %v394
  %v619 = vpack.c.b16 %v397, %v395
  %v620 = vpack.c.b16 %v400, %v398
  %v621 = vpack.c.b16 %v401, %v399
  %v622 = vpack.c.b16 %v404, %v402
  %v623 = vpack.c.b16 %v405, %v403
  %v624 = vpack.c.b16 %v408, %v406
  %v625 = vpack.c.b16 %v409, %v407
  %v626 = vpack.c.b16 %v412, %v410
  %v627 = vpack.c.b16 %v413, %v411
  %v628 = vpack.c.b16 %v416, %v414
  %v629 = vpack.c.b16 %v417, %v415
  %v630 = vpack.c.b16 %v420, %v418
  %v631 = vpack.c.b16 %v421, %v419
  %v632 = vpack.c.b16 %v424, %v422
  %v633 = vpack.c.b16 %v425, %v423
  %v634 = vpack.c.b16 %v428, %v426
  %v635 = vpack.c.b16 %v429, %v427
  %v636 = vpack.c.b16 %v432, %v430
  %v637 = vpack.c.b16 %v433, %v431
  %v638 = vpack.c.b16 %v436, %v434
  %v639 = vpack.c.b16 %v437, %v435
  %v640 = vpack.c.b16 %v440, %v438
  %v641 = vpack.c.b16 %v441, %v439
  %v642 = vpack.c.b16 %v444, %v442
  %v643 = vpack.c.b16 %v445, %v443
  %v644 = vpack.c.b16 %v448, %v446
  %v645 = vpack.c.b16 %v449, %v447
  %v646 = vpack.c.b16 %v452, %v450
  %v647 = vpack.c.b16 %v453, %v451
  %v648 = vpack.c.b16 %v456, %v454
  %v649 = vpack.c.b16 %v457, %v455
  %v650 = vpack.c.b16 %v460, %v458
  %v651 = vpack.c.b16 %v461, %v459
  %v652 = vpack.c.b16 %v464, %v462
  %v653 = vpack.c.b16 %v465, %v463
  %v654 = vpack.c.b16 %v468, %v466
  %v655 = vpack.c.b16 %v469, %v467
  %v656 = vpack.c.b16 %v472, %v470
  %v657 = vpack.c.b16 %v473, %v471
  %v658 = vpack.c.b16 %v476, %v474
  %v659 = vpack.c.b16 %v477, %v475
  %v660 = vpack.c.b16 %v480, %v478
  %v661 = vpack.c.b16 %v481, %v479
  %v662 = vpack.c.b16 %v484, %v482
  %v663 = vpack.c.b16 %v485, %v483
  %v664 = vpack.c.b16 %v488, %v486
  %v665 = vpack.c.b16 %v489, %v487
  %v666 = vpack.c.b16 %v492, %v490
  %v667 = vpack.c.b16 %v493, %v491
  %v668 = vpack.c.b16 %v496, %v494
  %v669 = vpack.c.b16 %v497, %v495
  %v670 = vpack.c.b16 %v500, %v498
  %v671 = vpack.c.b16 %v501, %v499
  %v672 = vpack.c.b16 %v504, %v502
  %v673 = vpack.c.b16 %v505, %v503
  %v674 = vpack.c.b16 %v508, %v506
  %v675 = vpack.c.b16 %v509, %v507
  %v676 = vpack.c.b16 %v512, %v510
  %v677 = vpack.c.b16 %v513, %v511
  %v678 = vpack.c.b16 %v516, %v514
  %v679 = vpack.c.b16 %v517, %v515
  %v680 = vpack.c.b16 %v520, %v518
  %v681 = vpack.c.b16 %v521, %v519
  %v682 = vpack.c.b16 %v524, %v522
  %v683 = vpack.c.b16 %v525, %v523
  %v684 = vpack.c.b16 %v528, %v526
  %v685 = vpack.c.b16 %v529, %v527
  %v686 = vpack.c.b16 %v532, %v530
  %v687 = vpack.c.b16 %v533, %v531
  %v688 = vpack.c.b16 %v536, %v534
  %v689 = vpack.c.b16 %v537, %v535
  %v690 = vpack.c.b16 %v540, %v538
  %v691 = vpack.c.b16 %v541, %v539
  %v692 = vpack.c.b16 %v544, %v542
  %v693 = vpack.c.b16 %v545, %v543
  %v694 = vpack.c.b16 %v548, %v546
  %v695 = vpack.c.b16 %v549, %v547
  %v696 = vpack.c.b16 %v552, %v550
  %v697 = vpack.c.b16 %v553, %v551
  %v698 = vpack.c.b16 %v556, %v554
  %v699 = vpack.c.b16 %v557, %v555
  %v700 = vpack.c.b16 %v560, %v558
  %v701 = vpack.c.b16 %v561, %v559
  %v702 = vpack.c.b16 %v564, %v562
  %v703 = vpack.c.b16 %v565, %v563
  %v704 = vpack.c.b16 %v568, %v566
  %v705 = vpack.c.b16 %v569, %v567
  %v706 = vpack.c.b16 %v572, %v570
  %v707 = vpack.c.b16 %v573, %v571
  %v708 = vpack.c.b16 %v576, %v574
  %v709 = vpack.c.b16 %v577, %v575
  %v710 = vpack.c.b16 %v580, %v578
  %v711 = vpack.c.b16 %v581, %v579
  %v712 = vpack.c.b16 %v584, %v582
  %v713 = vpack.c.b16 %v585, %v583
  %v874 = vunpack.c.l.b16 %v166
  %v875 = vunpack.c.l.b16 %v167
  %v876 = vunpack.c.l.b16 %v168
  %v877 = vunpack.c.l.b16 %v169
  %v878 = vunpack.c.l.b16 %v170
  %v879 = vunpack.c.l.b16 %v171
  %v880 = vunpack.c.l.b16 %v172
  %v881 = vunpack.c.l.b16 %v173
  %v882 = vunpack.c.l.b16 %v174
  %v883 = vunpack.c.l.b16 %v175
  %v884 = vunpack.c.l.b16 %v176
  %v885 = vunpack.c.l.b16 %v177
  %v886 = vunpack.c.l.b16 %v178
  %v887 = vunpack.c.l.b16 %v179
  %v888 = vunpack.c.l.b16 %v180
  %v889 = vunpack.c.l.b16 %v181
  %v890 = vunpack.c.l.b16 %v182
  %v891 = vunpack.c.l.b16 %v183
  %v892 = vunpack.c.l.b16 %v184
  %v893 = vunpack.c.l.b16 %v185
  %v894 = vunpack.c.l.b16 %v186
  %v895 = vunpack.c.l.b16 %v187
  %v896 = vunpack.c.l.b16 %v188
  %v897 = vunpack.c.l.b16 %v189
  %v898 = vunpack.c.l.b16 %v190
  %v899 = vunpack.c.l.b16 %v191
  %v900 = vunpack.c.l.b16 %v192
  %v901 = vunpack.c.l.b16 %v193
  %v902 = vunpack.c.l.b16 %v194
  %v903 = vunpack.c.l.b16 %v195
  %v904 = vunpack.c.l.b16 %v196
  %v905 = vunpack.c.l.b16 %v197
  %v906 = vpack.c.b16 %v875, %v874
  %v907 = vpack.c.b16 %v877, %v876
  %v908 = vpack.c.b16 %v879, %v878
  %v909 = vpack.c.b16 %v881, %v880
  %v910 = vpack.c.b16 %v883, %v882
  %v911 = vpack.c.b16 %v885, %v884
  %v912 = vpack.c.b16 %v887, %v886
  %v913 = vpack.c.b16 %v889, %v888
  %v914 = vpack.c.b16 %v891, %v890
  %v915 = vpack.c.b16 %v893, %v892
  %v916 = vpack.c.b16 %v895, %v894
  %v917 = vpack.c.b16 %v897, %v896
  %v918 = vpack.c.b16 %v899, %v898
  %v919 = vpack.c.b16 %v901, %v900
  %v920 = vpack.c.b16 %v903, %v902
  %v921 = vpack.c.b16 %v905, %v904
  %938 = vmatpush.bf16.msra.mxu0 %v913
  %939 = vmatpush.bf16.msra.mxu0 %v912
  %940 = vmatpush.bf16.msra.mxu0 %v911
  %941 = vmatpush.bf16.msra.mxu0 %v910
  %942 = vmatpush.bf16.msra.mxu0 %v909
  %943 = vmatpush.bf16.msra.mxu0 %v908
  %944 = vmatpush.bf16.msra.mxu0 %v907
  %945 = vmatpush.bf16.msra.mxu0 %v906
  %946 = vmatmul.bf16.gmra.mxu0 %v586
  %v947 = vpop.f32.mrf.mxu0
  %v948 = vadd.f32 %v200, %v947
  %v949 = vpop.f32.mrf.mxu0
  %v950 = vadd.f32 %v200, %v949
  %951 = vmatmul.bf16.gmra.mxu0 %v588
  %v952 = vpop.f32.mrf.mxu0
  %v953 = vadd.f32 %v200, %v952
  %v954 = vpop.f32.mrf.mxu0
  %v955 = vadd.f32 %v200, %v954
  %956 = vmatmul.bf16.gmra.mxu0 %v590
  %v957 = vpop.f32.mrf.mxu0
  %v958 = vadd.f32 %v200, %v957
  %v959 = vpop.f32.mrf.mxu0
  %v960 = vadd.f32 %v200, %v959
  %961 = vmatmul.bf16.gmra.mxu0 %v592
  %v962 = vpop.f32.mrf.mxu0
  %v963 = vadd.f32 %v200, %v962
  %v964 = vpop.f32.mrf.mxu0
  %v965 = vadd.f32 %v200, %v964
  %966 = vmatmul.bf16.gmra.mxu0 %v594
  %v967 = vpop.f32.mrf.mxu0
  %v968 = vadd.f32 %v200, %v967
  %v969 = vpop.f32.mrf.mxu0
  %v970 = vadd.f32 %v200, %v969
  %971 = vmatmul.bf16.gmra.mxu0 %v596
  %v972 = vpop.f32.mrf.mxu0
  %v973 = vadd.f32 %v200, %v972
  %v974 = vpop.f32.mrf.mxu0
  %v975 = vadd.f32 %v200, %v974
  %976 = vmatmul.bf16.gmra.mxu0 %v598
  %v977 = vpop.f32.mrf.mxu0
  %v978 = vadd.f32 %v200, %v977
  %v979 = vpop.f32.mrf.mxu0
  %v980 = vadd.f32 %v200, %v979
  %981 = vmatmul.bf16.gmra.mxu0 %v600
  %v982 = vpop.f32.mrf.mxu0
  %v983 = vadd.f32 %v200, %v982
  %v984 = vpop.f32.mrf.mxu0
  %v985 = vadd.f32 %v200, %v984
  %986 = vmatmul.bf16.gmra.mxu0 %v602
  %v987 = vpop.f32.mrf.mxu0
  %v988 = vadd.f32 %v200, %v987
  %v989 = vpop.f32.mrf.mxu0
  %v990 = vadd.f32 %v200, %v989
  %991 = vmatmul.bf16.gmra.mxu0 %v604
  %v992 = vpop.f32.mrf.mxu0
  %v993 = vadd.f32 %v200, %v992
  %v994 = vpop.f32.mrf.mxu0
  %v995 = vadd.f32 %v200, %v994
  %996 = vmatmul.bf16.gmra.mxu0 %v606
  %v997 = vpop.f32.mrf.mxu0
  %v998 = vadd.f32 %v200, %v997
  %v999 = vpop.f32.mrf.mxu0
  %v1000 = vadd.f32 %v200, %v999
  %1001 = vmatmul.bf16.gmra.mxu0 %v608
  %v1002 = vpop.f32.mrf.mxu0
  %v1003 = vadd.f32 %v200, %v1002
  %v1004 = vpop.f32.mrf.mxu0
  %v1005 = vadd.f32 %v200, %v1004
  %1006 = vmatmul.bf16.gmra.mxu0 %v610
  %v1007 = vpop.f32.mrf.mxu0
  %v1008 = vadd.f32 %v200, %v1007
  %v1009 = vpop.f32.mrf.mxu0
  %v1010 = vadd.f32 %v200, %v1009
  %1011 = vmatmul.bf16.gmra.mxu0 %v612
  %v1012 = vpop.f32.mrf.mxu0
  %v1013 = vadd.f32 %v200, %v1012
  %v1014 = vpop.f32.mrf.mxu0
  %v1015 = vadd.f32 %v200, %v1014
  %1016 = vmatmul.bf16.gmra.mxu0 %v614
  %v1017 = vpop.f32.mrf.mxu0
  %v1018 = vadd.f32 %v200, %v1017
  %v1019 = vpop.f32.mrf.mxu0
  %v1020 = vadd.f32 %v200, %v1019
  %1021 = vmatmul.bf16.gmra.mxu0 %v616
  %v1022 = vpop.f32.mrf.mxu0
  %v1023 = vadd.f32 %v200, %v1022
  %v1024 = vpop.f32.mrf.mxu0
  %v1025 = vadd.f32 %v200, %v1024
  %1026 = vmatmul.bf16.gmra.mxu0 %v618
  %v1027 = vpop.f32.mrf.mxu0
  %v1028 = vadd.f32 %v200, %v1027
  %v1029 = vpop.f32.mrf.mxu0
  %v1030 = vadd.f32 %v200, %v1029
  %1031 = vmatmul.bf16.gmra.mxu0 %v620
  %v1032 = vpop.f32.mrf.mxu0
  %v1033 = vadd.f32 %v200, %v1032
  %v1034 = vpop.f32.mrf.mxu0
  %v1035 = vadd.f32 %v200, %v1034
  %1036 = vmatmul.bf16.gmra.mxu0 %v622
  %v1037 = vpop.f32.mrf.mxu0
  %v1038 = vadd.f32 %v200, %v1037
  %v1039 = vpop.f32.mrf.mxu0
  %v1040 = vadd.f32 %v200, %v1039
  %1041 = vmatmul.bf16.gmra.mxu0 %v624
  %v1042 = vpop.f32.mrf.mxu0
  %v1043 = vadd.f32 %v200, %v1042
  %v1044 = vpop.f32.mrf.mxu0
  %v1045 = vadd.f32 %v200, %v1044
  %1046 = vmatmul.bf16.gmra.mxu0 %v626
  %v1047 = vpop.f32.mrf.mxu0
  %v1048 = vadd.f32 %v200, %v1047
  %v1049 = vpop.f32.mrf.mxu0
  %v1050 = vadd.f32 %v200, %v1049
  %1051 = vmatmul.bf16.gmra.mxu0 %v628
  %v1052 = vpop.f32.mrf.mxu0
  %v1053 = vadd.f32 %v200, %v1052
  %v1054 = vpop.f32.mrf.mxu0
  %v1055 = vadd.f32 %v200, %v1054
  %1056 = vmatmul.bf16.gmra.mxu0 %v630
  %v1057 = vpop.f32.mrf.mxu0
  %v1058 = vadd.f32 %v200, %v1057
  %v1059 = vpop.f32.mrf.mxu0
  %v1060 = vadd.f32 %v200, %v1059
  %1061 = vmatmul.bf16.gmra.mxu0 %v632
  %v1062 = vpop.f32.mrf.mxu0
  %v1063 = vadd.f32 %v200, %v1062
  %v1064 = vpop.f32.mrf.mxu0
  %v1065 = vadd.f32 %v200, %v1064
  %1066 = vmatmul.bf16.gmra.mxu0 %v634
  %v1067 = vpop.f32.mrf.mxu0
  %v1068 = vadd.f32 %v200, %v1067
  %v1069 = vpop.f32.mrf.mxu0
  %v1070 = vadd.f32 %v200, %v1069
  %1071 = vmatmul.bf16.gmra.mxu0 %v636
  %v1072 = vpop.f32.mrf.mxu0
  %v1073 = vadd.f32 %v200, %v1072
  %v1074 = vpop.f32.mrf.mxu0
  %v1075 = vadd.f32 %v200, %v1074
  %1076 = vmatmul.bf16.gmra.mxu0 %v638
  %v1077 = vpop.f32.mrf.mxu0
  %v1078 = vadd.f32 %v200, %v1077
  %v1079 = vpop.f32.mrf.mxu0
  %v1080 = vadd.f32 %v200, %v1079
  %1081 = vmatmul.bf16.gmra.mxu0 %v640
  %v1082 = vpop.f32.mrf.mxu0
  %v1083 = vadd.f32 %v200, %v1082
  %v1084 = vpop.f32.mrf.mxu0
  %v1085 = vadd.f32 %v200, %v1084
  %1086 = vmatmul.bf16.gmra.mxu0 %v642
  %v1087 = vpop.f32.mrf.mxu0
  %v1088 = vadd.f32 %v200, %v1087
  %v1089 = vpop.f32.mrf.mxu0
  %v1090 = vadd.f32 %v200, %v1089
  %1091 = vmatmul.bf16.gmra.mxu0 %v644
  %v1092 = vpop.f32.mrf.mxu0
  %v1093 = vadd.f32 %v200, %v1092
  %v1094 = vpop.f32.mrf.mxu0
  %v1095 = vadd.f32 %v200, %v1094
  %1096 = vmatmul.bf16.gmra.mxu0 %v646
  %v1097 = vpop.f32.mrf.mxu0
  %v1098 = vadd.f32 %v200, %v1097
  %v1099 = vpop.f32.mrf.mxu0
  %v1100 = vadd.f32 %v200, %v1099
  %1101 = vmatmul.bf16.gmra.mxu0 %v648
  %v1102 = vpop.f32.mrf.mxu0
  %v1103 = vadd.f32 %v200, %v1102
  %v1104 = vpop.f32.mrf.mxu0
  %v1105 = vadd.f32 %v200, %v1104
  %1106 = vmatmul.bf16.gmra.mxu0 %v650
  %v1107 = vpop.f32.mrf.mxu0
  %v1108 = vadd.f32 %v200, %v1107
  %v1109 = vpop.f32.mrf.mxu0
  %v1110 = vadd.f32 %v200, %v1109
  %1111 = vmatmul.bf16.gmra.mxu0 %v652
  %v1112 = vpop.f32.mrf.mxu0
  %v1113 = vadd.f32 %v200, %v1112
  %v1114 = vpop.f32.mrf.mxu0
  %v1115 = vadd.f32 %v200, %v1114
  %1116 = vmatmul.bf16.gmra.mxu0 %v654
  %v1117 = vpop.f32.mrf.mxu0
  %v1118 = vadd.f32 %v200, %v1117
  %v1119 = vpop.f32.mrf.mxu0
  %v1120 = vadd.f32 %v200, %v1119
  %1121 = vmatmul.bf16.gmra.mxu0 %v656
  %v1122 = vpop.f32.mrf.mxu0
  %v1123 = vadd.f32 %v200, %v1122
  %v1124 = vpop.f32.mrf.mxu0
  %v1125 = vadd.f32 %v200, %v1124
  %1126 = vmatmul.bf16.gmra.mxu0 %v658
  %v1127 = vpop.f32.mrf.mxu0
  %v1128 = vadd.f32 %v200, %v1127
  %v1129 = vpop.f32.mrf.mxu0
  %v1130 = vadd.f32 %v200, %v1129
  %1131 = vmatmul.bf16.gmra.mxu0 %v660
  %v1132 = vpop.f32.mrf.mxu0
  %v1133 = vadd.f32 %v200, %v1132
  %v1134 = vpop.f32.mrf.mxu0
  %v1135 = vadd.f32 %v200, %v1134
  %1136 = vmatmul.bf16.gmra.mxu0 %v662
  %v1137 = vpop.f32.mrf.mxu0
  %v1138 = vadd.f32 %v200, %v1137
  %v1139 = vpop.f32.mrf.mxu0
  %v1140 = vadd.f32 %v200, %v1139
  %1141 = vmatmul.bf16.gmra.mxu0 %v664
  %v1142 = vpop.f32.mrf.mxu0
  %v1143 = vadd.f32 %v200, %v1142
  %v1144 = vpop.f32.mrf.mxu0
  %v1145 = vadd.f32 %v200, %v1144
  %1146 = vmatmul.bf16.gmra.mxu0 %v666
  %v1147 = vpop.f32.mrf.mxu0
  %v1148 = vadd.f32 %v200, %v1147
  %v1149 = vpop.f32.mrf.mxu0
  %v1150 = vadd.f32 %v200, %v1149
  %1151 = vmatmul.bf16.gmra.mxu0 %v668
  %v1152 = vpop.f32.mrf.mxu0
  %v1153 = vadd.f32 %v200, %v1152
  %v1154 = vpop.f32.mrf.mxu0
  %v1155 = vadd.f32 %v200, %v1154
  %1156 = vmatmul.bf16.gmra.mxu0 %v670
  %v1157 = vpop.f32.mrf.mxu0
  %v1158 = vadd.f32 %v200, %v1157
  %v1159 = vpop.f32.mrf.mxu0
  %v1160 = vadd.f32 %v200, %v1159
  %1161 = vmatmul.bf16.gmra.mxu0 %v672
  %v1162 = vpop.f32.mrf.mxu0
  %v1163 = vadd.f32 %v200, %v1162
  %v1164 = vpop.f32.mrf.mxu0
  %v1165 = vadd.f32 %v200, %v1164
  %1166 = vmatmul.bf16.gmra.mxu0 %v674
  %v1167 = vpop.f32.mrf.mxu0
  %v1168 = vadd.f32 %v200, %v1167
  %v1169 = vpop.f32.mrf.mxu0
  %v1170 = vadd.f32 %v200, %v1169
  %1171 = vmatmul.bf16.gmra.mxu0 %v676
  %v1172 = vpop.f32.mrf.mxu0
  %v1173 = vadd.f32 %v200, %v1172
  %v1174 = vpop.f32.mrf.mxu0
  %v1175 = vadd.f32 %v200, %v1174
  %1176 = vmatmul.bf16.gmra.mxu0 %v678
  %v1177 = vpop.f32.mrf.mxu0
  %v1178 = vadd.f32 %v200, %v1177
  %v1179 = vpop.f32.mrf.mxu0
  %v1180 = vadd.f32 %v200, %v1179
  %1181 = vmatmul.bf16.gmra.mxu0 %v680
  %v1182 = vpop.f32.mrf.mxu0
  %v1183 = vadd.f32 %v200, %v1182
  %v1184 = vpop.f32.mrf.mxu0
  %v1185 = vadd.f32 %v200, %v1184
  %1186 = vmatmul.bf16.gmra.mxu0 %v682
  %v1187 = vpop.f32.mrf.mxu0
  %v1188 = vadd.f32 %v200, %v1187
  %v1189 = vpop.f32.mrf.mxu0
  %v1190 = vadd.f32 %v200, %v1189
  %1191 = vmatmul.bf16.gmra.mxu0 %v684
  %v1192 = vpop.f32.mrf.mxu0
  %v1193 = vadd.f32 %v200, %v1192
  %v1194 = vpop.f32.mrf.mxu0
  %v1195 = vadd.f32 %v200, %v1194
  %1196 = vmatmul.bf16.gmra.mxu0 %v686
  %v1197 = vpop.f32.mrf.mxu0
  %v1198 = vadd.f32 %v200, %v1197
  %v1199 = vpop.f32.mrf.mxu0
  %v1200 = vadd.f32 %v200, %v1199
  %1201 = vmatmul.bf16.gmra.mxu0 %v688
  %v1202 = vpop.f32.mrf.mxu0
  %v1203 = vadd.f32 %v200, %v1202
  %v1204 = vpop.f32.mrf.mxu0
  %v1205 = vadd.f32 %v200, %v1204
  %1206 = vmatmul.bf16.gmra.mxu0 %v690
  %v1207 = vpop.f32.mrf.mxu0
  %v1208 = vadd.f32 %v200, %v1207
  %v1209 = vpop.f32.mrf.mxu0
  %v1210 = vadd.f32 %v200, %v1209
  %1211 = vmatmul.bf16.gmra.mxu0 %v692
  %v1212 = vpop.f32.mrf.mxu0
  %v1213 = vadd.f32 %v200, %v1212
  %v1214 = vpop.f32.mrf.mxu0
  %v1215 = vadd.f32 %v200, %v1214
  %1216 = vmatmul.bf16.gmra.mxu0 %v694
  %v1217 = vpop.f32.mrf.mxu0
  %v1218 = vadd.f32 %v200, %v1217
  %v1219 = vpop.f32.mrf.mxu0
  %v1220 = vadd.f32 %v200, %v1219
  %1221 = vmatmul.bf16.gmra.mxu0 %v696
  %v1222 = vpop.f32.mrf.mxu0
  %v1223 = vadd.f32 %v200, %v1222
  %v1224 = vpop.f32.mrf.mxu0
  %v1225 = vadd.f32 %v200, %v1224
  %1226 = vmatmul.bf16.gmra.mxu0 %v698
  %v1227 = vpop.f32.mrf.mxu0
  %v1228 = vadd.f32 %v200, %v1227
  %v1229 = vpop.f32.mrf.mxu0
  %v1230 = vadd.f32 %v200, %v1229
  %1231 = vmatmul.bf16.gmra.mxu0 %v700
  %v1232 = vpop.f32.mrf.mxu0
  %v1233 = vadd.f32 %v200, %v1232
  %v1234 = vpop.f32.mrf.mxu0
  %v1235 = vadd.f32 %v200, %v1234
  %1236 = vmatmul.bf16.gmra.mxu0 %v702
  %v1237 = vpop.f32.mrf.mxu0
  %v1238 = vadd.f32 %v200, %v1237
  %v1239 = vpop.f32.mrf.mxu0
  %v1240 = vadd.f32 %v200, %v1239
  %1241 = vmatmul.bf16.gmra.mxu0 %v704
  %v1242 = vpop.f32.mrf.mxu0
  %v1243 = vadd.f32 %v200, %v1242
  %v1244 = vpop.f32.mrf.mxu0
  %v1245 = vadd.f32 %v200, %v1244
  %1246 = vmatmul.bf16.gmra.mxu0 %v706
  %v1247 = vpop.f32.mrf.mxu0
  %v1248 = vadd.f32 %v200, %v1247
  %v1249 = vpop.f32.mrf.mxu0
  %v1250 = vadd.f32 %v200, %v1249
  %1251 = vmatmul.bf16.gmra.mxu0 %v708
  %v1252 = vpop.f32.mrf.mxu0
  %v1253 = vadd.f32 %v200, %v1252
  %v1254 = vpop.f32.mrf.mxu0
  %v1255 = vadd.f32 %v200, %v1254
  %1256 = vmatmul.bf16.gmra.mxu0 %v710
  %v1257 = vpop.f32.mrf.mxu0
  %v1258 = vadd.f32 %v200, %v1257
  %v1259 = vpop.f32.mrf.mxu0
  %v1260 = vadd.f32 %v200, %v1259
  %1261 = vmatmul.bf16.gmra.mxu0 %v712
  %v1262 = vpop.f32.mrf.mxu0
  %v1263 = vadd.f32 %v200, %v1262
  %v1264 = vpop.f32.mrf.mxu0
  %v1265 = vadd.f32 %v200, %v1264
  %1266 = vdwg.mxu0
  %1267 = vmatpush.bf16.msra.mxu0 %v921
  %1268 = vmatpush.bf16.msra.mxu0 %v920
  %1269 = vmatpush.bf16.msra.mxu0 %v919
  %1270 = vmatpush.bf16.msra.mxu0 %v918
  %1271 = vmatpush.bf16.msra.mxu0 %v917
  %1272 = vmatpush.bf16.msra.mxu0 %v916
  %1273 = vmatpush.bf16.msra.mxu0 %v915
  %1274 = vmatpush.bf16.msra.mxu0 %v914
  %1275 = vmatmul.bf16.gmra.mxu0 %v587
  %v1276 = vpop.f32.mrf.mxu0
  %v1277 = vadd.f32 %v948, %v1276
  %v1278 = vpop.f32.mrf.mxu0
  %v1279 = vadd.f32 %v950, %v1278
  %1280 = vmatmul.bf16.gmra.mxu0 %v589
  %v1281 = vpop.f32.mrf.mxu0
  %v1282 = vadd.f32 %v953, %v1281
  %v1283 = vpop.f32.mrf.mxu0
  %v1284 = vadd.f32 %v955, %v1283
  %1285 = vmatmul.bf16.gmra.mxu0 %v591
  %v1286 = vpop.f32.mrf.mxu0
  %v1287 = vadd.f32 %v958, %v1286
  %v1288 = vpop.f32.mrf.mxu0
  %v1289 = vadd.f32 %v960, %v1288
  %1290 = vmatmul.bf16.gmra.mxu0 %v593
  %v1291 = vpop.f32.mrf.mxu0
  %v1292 = vadd.f32 %v963, %v1291
  %v1293 = vpop.f32.mrf.mxu0
  %v1294 = vadd.f32 %v965, %v1293
  %1295 = vmatmul.bf16.gmra.mxu0 %v595
  %v1296 = vpop.f32.mrf.mxu0
  %v1297 = vadd.f32 %v968, %v1296
  %v1298 = vpop.f32.mrf.mxu0
  %v1299 = vadd.f32 %v970, %v1298
  %1300 = vmatmul.bf16.gmra.mxu0 %v597
  %v1301 = vpop.f32.mrf.mxu0
  %v1302 = vadd.f32 %v973, %v1301
  %v1303 = vpop.f32.mrf.mxu0
  %v1304 = vadd.f32 %v975, %v1303
  %1305 = vmatmul.bf16.gmra.mxu0 %v599
  %v1306 = vpop.f32.mrf.mxu0
  %v1307 = vadd.f32 %v978, %v1306
  %v1308 = vpop.f32.mrf.mxu0
  %v1309 = vadd.f32 %v980, %v1308
  %1310 = vmatmul.bf16.gmra.mxu0 %v601
  %v1311 = vpop.f32.mrf.mxu0
  %v1312 = vadd.f32 %v983, %v1311
  %v1313 = vpop.f32.mrf.mxu0
  %v1314 = vadd.f32 %v985, %v1313
  %1315 = vmatmul.bf16.gmra.mxu0 %v603
  %v1316 = vpop.f32.mrf.mxu0
  %v1317 = vadd.f32 %v988, %v1316
  %v1318 = vpop.f32.mrf.mxu0
  %v1319 = vadd.f32 %v990, %v1318
  %1320 = vmatmul.bf16.gmra.mxu0 %v605
  %v1321 = vpop.f32.mrf.mxu0
  %v1322 = vadd.f32 %v993, %v1321
  %v1323 = vpop.f32.mrf.mxu0
  %v1324 = vadd.f32 %v995, %v1323
  %1325 = vmatmul.bf16.gmra.mxu0 %v607
  %v1326 = vpop.f32.mrf.mxu0
  %v1327 = vadd.f32 %v998, %v1326
  %v1328 = vpop.f32.mrf.mxu0
  %v1329 = vadd.f32 %v1000, %v1328
  %1330 = vmatmul.bf16.gmra.mxu0 %v609
  %v1331 = vpop.f32.mrf.mxu0
  %v1332 = vadd.f32 %v1003, %v1331
  %v1333 = vpop.f32.mrf.mxu0
  %v1334 = vadd.f32 %v1005, %v1333
  %1335 = vmatmul.bf16.gmra.mxu0 %v611
  %v1336 = vpop.f32.mrf.mxu0
  %v1337 = vadd.f32 %v1008, %v1336
  %v1338 = vpop.f32.mrf.mxu0
  %v1339 = vadd.f32 %v1010, %v1338
  %1340 = vmatmul.bf16.gmra.mxu0 %v613
  %v1341 = vpop.f32.mrf.mxu0
  %v1342 = vadd.f32 %v1013, %v1341
  %v1343 = vpop.f32.mrf.mxu0
  %v1344 = vadd.f32 %v1015, %v1343
  %1345 = vmatmul.bf16.gmra.mxu0 %v615
  %v1346 = vpop.f32.mrf.mxu0
  %v1347 = vadd.f32 %v1018, %v1346
  %v1348 = vpop.f32.mrf.mxu0
  %v1349 = vadd.f32 %v1020, %v1348
  %1350 = vmatmul.bf16.gmra.mxu0 %v617
  %v1351 = vpop.f32.mrf.mxu0
  %v1352 = vadd.f32 %v1023, %v1351
  %v1353 = vpop.f32.mrf.mxu0
  %v1354 = vadd.f32 %v1025, %v1353
  %1355 = vmatmul.bf16.gmra.mxu0 %v619
  %v1356 = vpop.f32.mrf.mxu0
  %v1357 = vadd.f32 %v1028, %v1356
  %v1358 = vpop.f32.mrf.mxu0
  %v1359 = vadd.f32 %v1030, %v1358
  %1360 = vmatmul.bf16.gmra.mxu0 %v621
  %v1361 = vpop.f32.mrf.mxu0
  %v1362 = vadd.f32 %v1033, %v1361
  %v1363 = vpop.f32.mrf.mxu0
  %v1364 = vadd.f32 %v1035, %v1363
  %1365 = vmatmul.bf16.gmra.mxu0 %v623
  %v1366 = vpop.f32.mrf.mxu0
  %v1367 = vadd.f32 %v1038, %v1366
  %v1368 = vpop.f32.mrf.mxu0
  %v1369 = vadd.f32 %v1040, %v1368
  %1370 = vmatmul.bf16.gmra.mxu0 %v625
  %v1371 = vpop.f32.mrf.mxu0
  %v1372 = vadd.f32 %v1043, %v1371
  %v1373 = vpop.f32.mrf.mxu0
  %v1374 = vadd.f32 %v1045, %v1373
  %1375 = vmatmul.bf16.gmra.mxu0 %v627
  %v1376 = vpop.f32.mrf.mxu0
  %v1377 = vadd.f32 %v1048, %v1376
  %v1378 = vpop.f32.mrf.mxu0
  %v1379 = vadd.f32 %v1050, %v1378
  %1380 = vmatmul.bf16.gmra.mxu0 %v629
  %v1381 = vpop.f32.mrf.mxu0
  %v1382 = vadd.f32 %v1053, %v1381
  %v1383 = vpop.f32.mrf.mxu0
  %v1384 = vadd.f32 %v1055, %v1383
  %1385 = vmatmul.bf16.gmra.mxu0 %v631
  %v1386 = vpop.f32.mrf.mxu0
  %v1387 = vadd.f32 %v1058, %v1386
  %v1388 = vpop.f32.mrf.mxu0
  %v1389 = vadd.f32 %v1060, %v1388
  %1390 = vmatmul.bf16.gmra.mxu0 %v633
  %v1391 = vpop.f32.mrf.mxu0
  %v1392 = vadd.f32 %v1063, %v1391
  %v1393 = vpop.f32.mrf.mxu0
  %v1394 = vadd.f32 %v1065, %v1393
  %1395 = vmatmul.bf16.gmra.mxu0 %v635
  %v1396 = vpop.f32.mrf.mxu0
  %v1397 = vadd.f32 %v1068, %v1396
  %v1398 = vpop.f32.mrf.mxu0
  %v1399 = vadd.f32 %v1070, %v1398
  %1400 = vmatmul.bf16.gmra.mxu0 %v637
  %v1401 = vpop.f32.mrf.mxu0
  %v1402 = vadd.f32 %v1073, %v1401
  %v1403 = vpop.f32.mrf.mxu0
  %v1404 = vadd.f32 %v1075, %v1403
  %1405 = vmatmul.bf16.gmra.mxu0 %v639
  %v1406 = vpop.f32.mrf.mxu0
  %v1407 = vadd.f32 %v1078, %v1406
  %v1408 = vpop.f32.mrf.mxu0
  %v1409 = vadd.f32 %v1080, %v1408
  %1410 = vmatmul.bf16.gmra.mxu0 %v641
  %v1411 = vpop.f32.mrf.mxu0
  %v1412 = vadd.f32 %v1083, %v1411
  %v1413 = vpop.f32.mrf.mxu0
  %v1414 = vadd.f32 %v1085, %v1413
  %1415 = vmatmul.bf16.gmra.mxu0 %v643
  %v1416 = vpop.f32.mrf.mxu0
  %v1417 = vadd.f32 %v1088, %v1416
  %v1418 = vpop.f32.mrf.mxu0
  %v1419 = vadd.f32 %v1090, %v1418
  %1420 = vmatmul.bf16.gmra.mxu0 %v645
  %v1421 = vpop.f32.mrf.mxu0
  %v1422 = vadd.f32 %v1093, %v1421
  %v1423 = vpop.f32.mrf.mxu0
  %v1424 = vadd.f32 %v1095, %v1423
  %1425 = vmatmul.bf16.gmra.mxu0 %v647
  %v1426 = vpop.f32.mrf.mxu0
  %v1427 = vadd.f32 %v1098, %v1426
  %v1428 = vpop.f32.mrf.mxu0
  %v1429 = vadd.f32 %v1100, %v1428
  %1430 = vmatmul.bf16.gmra.mxu0 %v649
  %v1431 = vpop.f32.mrf.mxu0
  %v1432 = vadd.f32 %v1103, %v1431
  %v1433 = vpop.f32.mrf.mxu0
  %v1434 = vadd.f32 %v1105, %v1433
  %1435 = vmatmul.bf16.gmra.mxu0 %v651
  %v1436 = vpop.f32.mrf.mxu0
  %v1437 = vadd.f32 %v1108, %v1436
  %v1438 = vpop.f32.mrf.mxu0
  %v1439 = vadd.f32 %v1110, %v1438
  %1440 = vmatmul.bf16.gmra.mxu0 %v653
  %v1441 = vpop.f32.mrf.mxu0
  %v1442 = vadd.f32 %v1113, %v1441
  %v1443 = vpop.f32.mrf.mxu0
  %v1444 = vadd.f32 %v1115, %v1443
  %1445 = vmatmul.bf16.gmra.mxu0 %v655
  %v1446 = vpop.f32.mrf.mxu0
  %v1447 = vadd.f32 %v1118, %v1446
  %v1448 = vpop.f32.mrf.mxu0
  %v1449 = vadd.f32 %v1120, %v1448
  %1450 = vmatmul.bf16.gmra.mxu0 %v657
  %v1451 = vpop.f32.mrf.mxu0
  %v1452 = vadd.f32 %v1123, %v1451
  %v1453 = vpop.f32.mrf.mxu0
  %v1454 = vadd.f32 %v1125, %v1453
  %1455 = vmatmul.bf16.gmra.mxu0 %v659
  %v1456 = vpop.f32.mrf.mxu0
  %v1457 = vadd.f32 %v1128, %v1456
  %v1458 = vpop.f32.mrf.mxu0
  %v1459 = vadd.f32 %v1130, %v1458
  %1460 = vmatmul.bf16.gmra.mxu0 %v661
  %v1461 = vpop.f32.mrf.mxu0
  %v1462 = vadd.f32 %v1133, %v1461
  %v1463 = vpop.f32.mrf.mxu0
  %v1464 = vadd.f32 %v1135, %v1463
  %1465 = vmatmul.bf16.gmra.mxu0 %v663
  %v1466 = vpop.f32.mrf.mxu0
  %v1467 = vadd.f32 %v1138, %v1466
  %v1468 = vpop.f32.mrf.mxu0
  %v1469 = vadd.f32 %v1140, %v1468
  %1470 = vmatmul.bf16.gmra.mxu0 %v665
  %v1471 = vpop.f32.mrf.mxu0
  %v1472 = vadd.f32 %v1143, %v1471
  %v1473 = vpop.f32.mrf.mxu0
  %v1474 = vadd.f32 %v1145, %v1473
  %1475 = vmatmul.bf16.gmra.mxu0 %v667
  %v1476 = vpop.f32.mrf.mxu0
  %v1477 = vadd.f32 %v1148, %v1476
  %v1478 = vpop.f32.mrf.mxu0
  %v1479 = vadd.f32 %v1150, %v1478
  %1480 = vmatmul.bf16.gmra.mxu0 %v669
  %v1481 = vpop.f32.mrf.mxu0
  %v1482 = vadd.f32 %v1153, %v1481
  %v1483 = vpop.f32.mrf.mxu0
  %v1484 = vadd.f32 %v1155, %v1483
  %1485 = vmatmul.bf16.gmra.mxu0 %v671
  %v1486 = vpop.f32.mrf.mxu0
  %v1487 = vadd.f32 %v1158, %v1486
  %v1488 = vpop.f32.mrf.mxu0
  %v1489 = vadd.f32 %v1160, %v1488
  %1490 = vmatmul.bf16.gmra.mxu0 %v673
  %v1491 = vpop.f32.mrf.mxu0
  %v1492 = vadd.f32 %v1163, %v1491
  %v1493 = vpop.f32.mrf.mxu0
  %v1494 = vadd.f32 %v1165, %v1493
  %1495 = vmatmul.bf16.gmra.mxu0 %v675
  %v1496 = vpop.f32.mrf.mxu0
  %v1497 = vadd.f32 %v1168, %v1496
  %v1498 = vpop.f32.mrf.mxu0
  %v1499 = vadd.f32 %v1170, %v1498
  %1500 = vmatmul.bf16.gmra.mxu0 %v677
  %v1501 = vpop.f32.mrf.mxu0
  %v1502 = vadd.f32 %v1173, %v1501
  %v1503 = vpop.f32.mrf.mxu0
  %v1504 = vadd.f32 %v1175, %v1503
  %1505 = vmatmul.bf16.gmra.mxu0 %v679
  %v1506 = vpop.f32.mrf.mxu0
  %v1507 = vadd.f32 %v1178, %v1506
  %v1508 = vpop.f32.mrf.mxu0
  %v1509 = vadd.f32 %v1180, %v1508
  %1510 = vmatmul.bf16.gmra.mxu0 %v681
  %v1511 = vpop.f32.mrf.mxu0
  %v1512 = vadd.f32 %v1183, %v1511
  %v1513 = vpop.f32.mrf.mxu0
  %v1514 = vadd.f32 %v1185, %v1513
  %1515 = vmatmul.bf16.gmra.mxu0 %v683
  %v1516 = vpop.f32.mrf.mxu0
  %v1517 = vadd.f32 %v1188, %v1516
  %v1518 = vpop.f32.mrf.mxu0
  %v1519 = vadd.f32 %v1190, %v1518
  %1520 = vmatmul.bf16.gmra.mxu0 %v685
  %v1521 = vpop.f32.mrf.mxu0
  %v1522 = vadd.f32 %v1193, %v1521
  %v1523 = vpop.f32.mrf.mxu0
  %v1524 = vadd.f32 %v1195, %v1523
  %1525 = vmatmul.bf16.gmra.mxu0 %v687
  %v1526 = vpop.f32.mrf.mxu0
  %v1527 = vadd.f32 %v1198, %v1526
  %v1528 = vpop.f32.mrf.mxu0
  %v1529 = vadd.f32 %v1200, %v1528
  %1530 = vmatmul.bf16.gmra.mxu0 %v689
  %v1531 = vpop.f32.mrf.mxu0
  %v1532 = vadd.f32 %v1203, %v1531
  %v1533 = vpop.f32.mrf.mxu0
  %v1534 = vadd.f32 %v1205, %v1533
  %1535 = vmatmul.bf16.gmra.mxu0 %v691
  %v1536 = vpop.f32.mrf.mxu0
  %v1537 = vadd.f32 %v1208, %v1536
  %v1538 = vpop.f32.mrf.mxu0
  %v1539 = vadd.f32 %v1210, %v1538
  %1540 = vmatmul.bf16.gmra.mxu0 %v693
  %v1541 = vpop.f32.mrf.mxu0
  %v1542 = vadd.f32 %v1213, %v1541
  %v1543 = vpop.f32.mrf.mxu0
  %v1544 = vadd.f32 %v1215, %v1543
  %1545 = vmatmul.bf16.gmra.mxu0 %v695
  %v1546 = vpop.f32.mrf.mxu0
  %v1547 = vadd.f32 %v1218, %v1546
  %v1548 = vpop.f32.mrf.mxu0
  %v1549 = vadd.f32 %v1220, %v1548
  %1550 = vmatmul.bf16.gmra.mxu0 %v697
  %v1551 = vpop.f32.mrf.mxu0
  %v1552 = vadd.f32 %v1223, %v1551
  %v1553 = vpop.f32.mrf.mxu0
  %v1554 = vadd.f32 %v1225, %v1553
  %1555 = vmatmul.bf16.gmra.mxu0 %v699
  %v1556 = vpop.f32.mrf.mxu0
  %v1557 = vadd.f32 %v1228, %v1556
  %v1558 = vpop.f32.mrf.mxu0
  %v1559 = vadd.f32 %v1230, %v1558
  %1560 = vmatmul.bf16.gmra.mxu0 %v701
  %v1561 = vpop.f32.mrf.mxu0
  %v1562 = vadd.f32 %v1233, %v1561
  %v1563 = vpop.f32.mrf.mxu0
  %v1564 = vadd.f32 %v1235, %v1563
  %1565 = vmatmul.bf16.gmra.mxu0 %v703
  %v1566 = vpop.f32.mrf.mxu0
  %v1567 = vadd.f32 %v1238, %v1566
  %v1568 = vpop.f32.mrf.mxu0
  %v1569 = vadd.f32 %v1240, %v1568
  %1570 = vmatmul.bf16.gmra.mxu0 %v705
  %v1571 = vpop.f32.mrf.mxu0
  %v1572 = vadd.f32 %v1243, %v1571
  %v1573 = vpop.f32.mrf.mxu0
  %v1574 = vadd.f32 %v1245, %v1573
  %1575 = vmatmul.bf16.gmra.mxu0 %v707
  %v1576 = vpop.f32.mrf.mxu0
  %v1577 = vadd.f32 %v1248, %v1576
  %v1578 = vpop.f32.mrf.mxu0
  %v1579 = vadd.f32 %v1250, %v1578
  %1580 = vmatmul.bf16.gmra.mxu0 %v709
  %v1581 = vpop.f32.mrf.mxu0
  %v1582 = vadd.f32 %v1253, %v1581
  %v1583 = vpop.f32.mrf.mxu0
  %v1584 = vadd.f32 %v1255, %v1583
  %1585 = vmatmul.bf16.gmra.mxu0 %v711
  %v1586 = vpop.f32.mrf.mxu0
  %v1587 = vadd.f32 %v1258, %v1586
  %v1588 = vpop.f32.mrf.mxu0
  %v1589 = vadd.f32 %v1260, %v1588
  %1590 = vmatmul.bf16.gmra.mxu0 %v713
  %v1591 = vpop.f32.mrf.mxu0
  %v1592 = vadd.f32 %v1263, %v1591
  %v1593 = vpop.f32.mrf.mxu0
  %v1594 = vadd.f32 %v1265, %v1593
  %1595 = vdwg.mxu0
  %v1596 = vmax.f32 %v1277, 0.0
  %v1597 = vmax.f32 %v1279, 0.0
  %v1598 = vmax.f32 %v1282, 0.0
  %v1599 = vmax.f32 %v1284, 0.0
  %v1600 = vmax.f32 %v1287, 0.0
  %v1601 = vmax.f32 %v1289, 0.0
  %v1602 = vmax.f32 %v1292, 0.0
  %v1603 = vmax.f32 %v1294, 0.0
  %v1604 = vmax.f32 %v1297, 0.0
  %v1605 = vmax.f32 %v1299, 0.0
  %v1606 = vmax.f32 %v1302, 0.0
  %v1607 = vmax.f32 %v1304, 0.0
  %v1608 = vmax.f32 %v1307, 0.0
  %v1609 = vmax.f32 %v1309, 0.0
  %v1610 = vmax.f32 %v1312, 0.0
  %v1611 = vmax.f32 %v1314, 0.0
  %v1612 = vmax.f32 %v1317, 0.0
  %v1613 = vmax.f32 %v1319, 0.0
  %v1614 = vmax.f32 %v1322, 0.0
  %v1615 = vmax.f32 %v1324, 0.0
  %v1616 = vmax.f32 %v1327, 0.0
  %v1617 = vmax.f32 %v1329, 0.0
  %v1618 = vmax.f32 %v1332, 0.0
  %v1619 = vmax.f32 %v1334, 0.0
  %v1620 = vmax.f32 %v1337, 0.0
  %v1621 = vmax.f32 %v1339, 0.0
  %v1622 = vmax.f32 %v1342, 0.0
  %v1623 = vmax.f32 %v1344, 0.0
  %v1624 = vmax.f32 %v1347, 0.0
  %v1625 = vmax.f32 %v1349, 0.0
  %v1626 = vmax.f32 %v1352, 0.0
  %v1627 = vmax.f32 %v1354, 0.0
  %v1628 = vmax.f32 %v1357, 0.0
  %v1629 = vmax.f32 %v1359, 0.0
  %v1630 = vmax.f32 %v1362, 0.0
  %v1631 = vmax.f32 %v1364, 0.0
  %v1632 = vmax.f32 %v1367, 0.0
  %v1633 = vmax.f32 %v1369, 0.0
  %v1634 = vmax.f32 %v1372, 0.0
  %v1635 = vmax.f32 %v1374, 0.0
  %v1636 = vmax.f32 %v1377, 0.0
  %v1637 = vmax.f32 %v1379, 0.0
  %v1638 = vmax.f32 %v1382, 0.0
  %v1639 = vmax.f32 %v1384, 0.0
  %v1640 = vmax.f32 %v1387, 0.0
  %v1641 = vmax.f32 %v1389, 0.0
  %v1642 = vmax.f32 %v1392, 0.0
  %v1643 = vmax.f32 %v1394, 0.0
  %v1644 = vmax.f32 %v1397, 0.0
  %v1645 = vmax.f32 %v1399, 0.0
  %v1646 = vmax.f32 %v1402, 0.0
  %v1647 = vmax.f32 %v1404, 0.0
  %v1648 = vmax.f32 %v1407, 0.0
  %v1649 = vmax.f32 %v1409, 0.0
  %v1650 = vmax.f32 %v1412, 0.0
  %v1651 = vmax.f32 %v1414, 0.0
  %v1652 = vmax.f32 %v1417, 0.0
  %v1653 = vmax.f32 %v1419, 0.0
  %v1654 = vmax.f32 %v1422, 0.0
  %v1655 = vmax.f32 %v1424, 0.0
  %v1656 = vmax.f32 %v1427, 0.0
  %v1657 = vmax.f32 %v1429, 0.0
  %v1658 = vmax.f32 %v1432, 0.0
  %v1659 = vmax.f32 %v1434, 0.0
  %v1660 = vmax.f32 %v1437, 0.0
  %v1661 = vmax.f32 %v1439, 0.0
  %v1662 = vmax.f32 %v1442, 0.0
  %v1663 = vmax.f32 %v1444, 0.0
  %v1664 = vmax.f32 %v1447, 0.0
  %v1665 = vmax.f32 %v1449, 0.0
  %v1666 = vmax.f32 %v1452, 0.0
  %v1667 = vmax.f32 %v1454, 0.0
  %v1668 = vmax.f32 %v1457, 0.0
  %v1669 = vmax.f32 %v1459, 0.0
  %v1670 = vmax.f32 %v1462, 0.0
  %v1671 = vmax.f32 %v1464, 0.0
  %v1672 = vmax.f32 %v1467, 0.0
  %v1673 = vmax.f32 %v1469, 0.0
  %v1674 = vmax.f32 %v1472, 0.0
  %v1675 = vmax.f32 %v1474, 0.0
  %v1676 = vmax.f32 %v1477, 0.0
  %v1677 = vmax.f32 %v1479, 0.0
  %v1678 = vmax.f32 %v1482, 0.0
  %v1679 = vmax.f32 %v1484, 0.0
  %v1680 = vmax.f32 %v1487, 0.0
  %v1681 = vmax.f32 %v1489, 0.0
  %v1682 = vmax.f32 %v1492, 0.0
  %v1683 = vmax.f32 %v1494, 0.0
  %v1684 = vmax.f32 %v1497, 0.0
  %v1685 = vmax.f32 %v1499, 0.0
  %v1686 = vmax.f32 %v1502, 0.0
  %v1687 = vmax.f32 %v1504, 0.0
  %v1688 = vmax.f32 %v1507, 0.0
  %v1689 = vmax.f32 %v1509, 0.0
  %v1690 = vmax.f32 %v1512, 0.0
  %v1691 = vmax.f32 %v1514, 0.0
  %v1692 = vmax.f32 %v1517, 0.0
  %v1693 = vmax.f32 %v1519, 0.0
  %v1694 = vmax.f32 %v1522, 0.0
  %v1695 = vmax.f32 %v1524, 0.0
  %v1696 = vmax.f32 %v1527, 0.0
  %v1697 = vmax.f32 %v1529, 0.0
  %v1698 = vmax.f32 %v1532, 0.0
  %v1699 = vmax.f32 %v1534, 0.0
  %v1700 = vmax.f32 %v1537, 0.0
  %v1701 = vmax.f32 %v1539, 0.0
  %v1702 = vmax.f32 %v1542, 0.0
  %v1703 = vmax.f32 %v1544, 0.0
  %v1704 = vmax.f32 %v1547, 0.0
  %v1705 = vmax.f32 %v1549, 0.0
  %v1706 = vmax.f32 %v1552, 0.0
  %v1707 = vmax.f32 %v1554, 0.0
  %v1708 = vmax.f32 %v1557, 0.0
  %v1709 = vmax.f32 %v1559, 0.0
  %v1710 = vmax.f32 %v1562, 0.0
  %v1711 = vmax.f32 %v1564, 0.0
  %v1712 = vmax.f32 %v1567, 0.0
  %v1713 = vmax.f32 %v1569, 0.0
  %v1714 = vmax.f32 %v1572, 0.0
  %v1715 = vmax.f32 %v1574, 0.0
  %v1716 = vmax.f32 %v1577, 0.0
  %v1717 = vmax.f32 %v1579, 0.0
  %v1718 = vmax.f32 %v1582, 0.0
  %v1719 = vmax.f32 %v1584, 0.0
  %v1720 = vmax.f32 %v1587, 0.0
  %v1721 = vmax.f32 %v1589, 0.0
  %v1722 = vmax.f32 %v1592, 0.0
  %v1723 = vmax.f32 %v1594, 0.0
  %v1724 = vpack.c.bf16 %v1596, %v1596
  %v1725 = vpack.c.bf16 %v1597, %v1597
  %v1726 = vpack.c.bf16 %v1598, %v1598
  %v1727 = vpack.c.bf16 %v1599, %v1599
  %v1728 = vpack.c.bf16 %v1600, %v1600
  %v1729 = vpack.c.bf16 %v1601, %v1601
  %v1730 = vpack.c.bf16 %v1602, %v1602
  %v1731 = vpack.c.bf16 %v1603, %v1603
  %v1732 = vpack.c.bf16 %v1604, %v1604
  %v1733 = vpack.c.bf16 %v1605, %v1605
  %v1734 = vpack.c.bf16 %v1606, %v1606
  %v1735 = vpack.c.bf16 %v1607, %v1607
  %v1736 = vpack.c.bf16 %v1608, %v1608
  %v1737 = vpack.c.bf16 %v1609, %v1609
  %v1738 = vpack.c.bf16 %v1610, %v1610
  %v1739 = vpack.c.bf16 %v1611, %v1611
  %v1740 = vpack.c.bf16 %v1612, %v1612
  %v1741 = vpack.c.bf16 %v1613, %v1613
  %v1742 = vpack.c.bf16 %v1614, %v1614
  %v1743 = vpack.c.bf16 %v1615, %v1615
  %v1744 = vpack.c.bf16 %v1616, %v1616
  %v1745 = vpack.c.bf16 %v1617, %v1617
  %v1746 = vpack.c.bf16 %v1618, %v1618
  %v1747 = vpack.c.bf16 %v1619, %v1619
  %v1748 = vpack.c.bf16 %v1620, %v1620
  %v1749 = vpack.c.bf16 %v1621, %v1621
  %v1750 = vpack.c.bf16 %v1622, %v1622
  %v1751 = vpack.c.bf16 %v1623, %v1623
  %v1752 = vpack.c.bf16 %v1624, %v1624
  %v1753 = vpack.c.bf16 %v1625, %v1625
  %v1754 = vpack.c.bf16 %v1626, %v1626
  %v1755 = vpack.c.bf16 %v1627, %v1627
  %v1756 = vpack.c.bf16 %v1628, %v1628
  %v1757 = vpack.c.bf16 %v1629, %v1629
  %v1758 = vpack.c.bf16 %v1630, %v1630
  %v1759 = vpack.c.bf16 %v1631, %v1631
  %v1760 = vpack.c.bf16 %v1632, %v1632
  %v1761 = vpack.c.bf16 %v1633, %v1633
  %v1762 = vpack.c.bf16 %v1634, %v1634
  %v1763 = vpack.c.bf16 %v1635, %v1635
  %v1764 = vpack.c.bf16 %v1636, %v1636
  %v1765 = vpack.c.bf16 %v1637, %v1637
  %v1766 = vpack.c.bf16 %v1638, %v1638
  %v1767 = vpack.c.bf16 %v1639, %v1639
  %v1768 = vpack.c.bf16 %v1640, %v1640
  %v1769 = vpack.c.bf16 %v1641, %v1641
  %v1770 = vpack.c.bf16 %v1642, %v1642
  %v1771 = vpack.c.bf16 %v1643, %v1643
  %v1772 = vpack.c.bf16 %v1644, %v1644
  %v1773 = vpack.c.bf16 %v1645, %v1645
  %v1774 = vpack.c.bf16 %v1646, %v1646
  %v1775 = vpack.c.bf16 %v1647, %v1647
  %v1776 = vpack.c.bf16 %v1648, %v1648
  %v1777 = vpack.c.bf16 %v1649, %v1649
  %v1778 = vpack.c.bf16 %v1650, %v1650
  %v1779 = vpack.c.bf16 %v1651, %v1651
  %v1780 = vpack.c.bf16 %v1652, %v1652
  %v1781 = vpack.c.bf16 %v1653, %v1653
  %v1782 = vpack.c.bf16 %v1654, %v1654
  %v1783 = vpack.c.bf16 %v1655, %v1655
  %v1784 = vpack.c.bf16 %v1656, %v1656
  %v1785 = vpack.c.bf16 %v1657, %v1657
  %v1786 = vpack.c.bf16 %v1658, %v1658
  %v1787 = vpack.c.bf16 %v1659, %v1659
  %v1788 = vpack.c.bf16 %v1660, %v1660
  %v1789 = vpack.c.bf16 %v1661, %v1661
  %v1790 = vpack.c.bf16 %v1662, %v1662
  %v1791 = vpack.c.bf16 %v1663, %v1663
  %v1792 = vpack.c.bf16 %v1664, %v1664
  %v1793 = vpack.c.bf16 %v1665, %v1665
  %v1794 = vpack.c.bf16 %v1666, %v1666
  %v1795 = vpack.c.bf16 %v1667, %v1667
  %v1796 = vpack.c.bf16 %v1668, %v1668
  %v1797 = vpack.c.bf16 %v1669, %v1669
  %v1798 = vpack.c.bf16 %v1670, %v1670
  %v1799 = vpack.c.bf16 %v1671, %v1671
  %v1800 = vpack.c.bf16 %v1672, %v1672
  %v1801 = vpack.c.bf16 %v1673, %v1673
  %v1802 = vpack.c.bf16 %v1674, %v1674
  %v1803 = vpack.c.bf16 %v1675, %v1675
  %v1804 = vpack.c.bf16 %v1676, %v1676
  %v1805 = vpack.c.bf16 %v1677, %v1677
  %v1806 = vpack.c.bf16 %v1678, %v1678
  %v1807 = vpack.c.bf16 %v1679, %v1679
  %v1808 = vpack.c.bf16 %v1680, %v1680
  %v1809 = vpack.c.bf16 %v1681, %v1681
  %v1810 = vpack.c.bf16 %v1682, %v1682
  %v1811 = vpack.c.bf16 %v1683, %v1683
  %v1812 = vpack.c.bf16 %v1684, %v1684
  %v1813 = vpack.c.bf16 %v1685, %v1685
  %v1814 = vpack.c.bf16 %v1686, %v1686
  %v1815 = vpack.c.bf16 %v1687, %v1687
  %v1816 = vpack.c.bf16 %v1688, %v1688
  %v1817 = vpack.c.bf16 %v1689, %v1689
  %v1818 = vpack.c.bf16 %v1690, %v1690
  %v1819 = vpack.c.bf16 %v1691, %v1691
  %v1820 = vpack.c.bf16 %v1692, %v1692
  %v1821 = vpack.c.bf16 %v1693, %v1693
  %v1822 = vpack.c.bf16 %v1694, %v1694
  %v1823 = vpack.c.bf16 %v1695, %v1695
  %v1824 = vpack.c.bf16 %v1696, %v1696
  %v1825 = vpack.c.bf16 %v1697, %v1697
  %v1826 = vpack.c.bf16 %v1698, %v1698
  %v1827 = vpack.c.bf16 %v1699, %v1699
  %v1828 = vpack.c.bf16 %v1700, %v1700
  %v1829 = vpack.c.bf16 %v1701, %v1701
  %v1830 = vpack.c.bf16 %v1702, %v1702
  %v1831 = vpack.c.bf16 %v1703, %v1703
  %v1832 = vpack.c.bf16 %v1704, %v1704
  %v1833 = vpack.c.bf16 %v1705, %v1705
  %v1834 = vpack.c.bf16 %v1706, %v1706
  %v1835 = vpack.c.bf16 %v1707, %v1707
  %v1836 = vpack.c.bf16 %v1708, %v1708
  %v1837 = vpack.c.bf16 %v1709, %v1709
  %v1838 = vpack.c.bf16 %v1710, %v1710
  %v1839 = vpack.c.bf16 %v1711, %v1711
  %v1840 = vpack.c.bf16 %v1712, %v1712
  %v1841 = vpack.c.bf16 %v1713, %v1713
  %v1842 = vpack.c.bf16 %v1714, %v1714
  %v1843 = vpack.c.bf16 %v1715, %v1715
  %v1844 = vpack.c.bf16 %v1716, %v1716
  %v1845 = vpack.c.bf16 %v1717, %v1717
  %v1846 = vpack.c.bf16 %v1718, %v1718
  %v1847 = vpack.c.bf16 %v1719, %v1719
  %v1848 = vpack.c.bf16 %v1720, %v1720
  %v1849 = vpack.c.bf16 %v1721, %v1721
  %v1850 = vpack.c.bf16 %v1722, %v1722
  %v1851 = vpack.c.bf16 %v1723, %v1723
  %v1852 = vld [vmem:[%s3] sm:$0xf]
  %v1853 = vld [vmem:[%s3 + $0x4] sm:$0xf]
  %v1854 = vld [vmem:[%s3 + $0x8] sm:$0xf]
  %v1855 = vld [vmem:[%s3 + $0xc] sm:$0xf]
  %v1856 = vld [vmem:[%s3 + $0x10] sm:$0xf]
  %v1857 = vld [vmem:[%s3 + $0x14] sm:$0xf]
  %v1858 = vld [vmem:[%s3 + $0x18] sm:$0xf]
  %v1859 = vld [vmem:[%s3 + $0x1c] sm:$0xf]
  %v1860 = vld [vmem:[%s3 + $0x20] sm:$0xf]
  %v1861 = vld [vmem:[%s3 + $0x24] sm:$0xf]
  %v1862 = vld [vmem:[%s3 + $0x28] sm:$0xf]
  %v1863 = vld [vmem:[%s3 + $0x2c] sm:$0xf]
  %v1864 = vld [vmem:[%s3 + $0x30] sm:$0xf]
  %v1865 = vld [vmem:[%s3 + $0x34] sm:$0xf]
  %v1866 = vld [vmem:[%s3 + $0x38] sm:$0xf]
  %v1867 = vld [vmem:[%s3 + $0x3c] sm:$0xf]
  %s1868 = scalar_lea.vmem %s3, 64
  %v1869 = vld [vmem:[%s1868] sm:$0xf]
  %v1870 = vld [vmem:[%s1868 + $0x4] sm:$0xf]
  %v1871 = vld [vmem:[%s1868 + $0x8] sm:$0xf]
  %v1872 = vld [vmem:[%s1868 + $0xc] sm:$0xf]
  %v1873 = vld [vmem:[%s1868 + $0x10] sm:$0xf]
  %v1874 = vld [vmem:[%s1868 + $0x14] sm:$0xf]
  %v1875 = vld [vmem:[%s1868 + $0x18] sm:$0xf]
  %v1876 = vld [vmem:[%s1868 + $0x1c] sm:$0xf]
  %v1877 = vld [vmem:[%s1868 + $0x20] sm:$0xf]
  %v1878 = vld [vmem:[%s1868 + $0x24] sm:$0xf]
  %v1879 = vld [vmem:[%s1868 + $0x28] sm:$0xf]
  %v1880 = vld [vmem:[%s1868 + $0x2c] sm:$0xf]
  %v1881 = vld [vmem:[%s1868 + $0x30] sm:$0xf]
  %v1882 = vld [vmem:[%s1868 + $0x34] sm:$0xf]
  %v1883 = vld [vmem:[%s1868 + $0x38] sm:$0xf]
  %v1884 = vld [vmem:[%s1868 + $0x3c] sm:$0xf]
  %v1903 = vunpack.c.l.b16 %v1756
  %v1904 = vunpack.c.l.b16 %v1757
  %v1905 = vunpack.c.l.b16 %v1758
  %v1906 = vunpack.c.l.b16 %v1759
  %v1907 = vunpack.c.l.b16 %v1760
  %v1908 = vunpack.c.l.b16 %v1761
  %v1909 = vunpack.c.l.b16 %v1764
  %v1910 = vunpack.c.l.b16 %v1765
  %v1911 = vunpack.c.l.b16 %v1766
  %v1912 = vunpack.c.l.b16 %v1767
  %v1913 = vunpack.c.l.b16 %v1768
  %v1914 = vunpack.c.l.b16 %v1769
  %v1915 = vunpack.c.l.b16 %v1772
  %v1916 = vunpack.c.l.b16 %v1773
  %v1917 = vunpack.c.l.b16 %v1774
  %v1918 = vunpack.c.l.b16 %v1775
  %v1919 = vunpack.c.l.b16 %v1776
  %v1920 = vunpack.c.l.b16 %v1777
  %v1921 = vpack.c.b16 %v1904, %v1903
  %v1922 = vpack.c.b16 %v1906, %v1905
  %v1923 = vpack.c.b16 %v1908, %v1907
  %v1924 = vpack.c.b16 %v1910, %v1909
  %v1925 = vpack.c.b16 %v1912, %v1911
  %v1926 = vpack.c.b16 %v1914, %v1913
  %v1927 = vpack.c.b16 %v1916, %v1915
  %v1928 = vpack.c.b16 %v1918, %v1917
  %v1929 = vpack.c.b16 %v1920, %v1919
  %v1955 = vunpack.c.l.b16 %v1869
  %v1956 = vunpack.c.l.b16 %v1870
  %v1957 = vunpack.c.l.b16 %v1871
  %v1958 = vunpack.c.l.b16 %v1872
  %v1959 = vunpack.c.l.b16 %v1873
  %v1960 = vunpack.c.l.b16 %v1874
  %v1961 = vunpack.c.l.b16 %v1875
  %v1962 = vunpack.c.l.b16 %v1876
  %v1963 = vunpack.c.l.b16 %v1877
  %v1964 = vunpack.c.l.b16 %v1878
  %v1965 = vunpack.c.l.b16 %v1879
  %v1966 = vunpack.c.l.b16 %v1880
  %v1967 = vunpack.c.l.b16 %v1881
  %v1968 = vunpack.c.l.b16 %v1882
  %v1969 = vunpack.c.l.b16 %v1883
  %v1970 = vunpack.c.l.b16 %v1884
  %v1971 = vpack.c.b16 %v1956, %v1955
  %v1972 = vpack.c.b16 %v1958, %v1957
  %v1973 = vpack.c.b16 %v1960, %v1959
  %v1974 = vpack.c.b16 %v1962, %v1961
  %v1975 = vpack.c.b16 %v1964, %v1963
  %v1976 = vpack.c.b16 %v1966, %v1965
  %v1977 = vpack.c.b16 %v1968, %v1967
  %v1978 = vpack.c.b16 %v1970, %v1969
  %1987 = vmatpush.bf16.msra.mxu0 %v1978
  %1988 = vmatpush.bf16.msra.mxu0 %v1977
  %1989 = vmatpush.bf16.msra.mxu0 %v1976
  %1990 = vmatpush.bf16.msra.mxu0 %v1975
  %1991 = vmatpush.bf16.msra.mxu0 %v1974
  %1992 = vmatpush.bf16.msra.mxu0 %v1973
  %1993 = vmatpush.bf16.msra.mxu0 %v1972
  %1994 = vmatpush.bf16.msra.mxu0 %v1971
  %1995 = vmatmul.bf16.gmra.mxu0 %v1921
  %v1996 = vpop.f32.mrf.mxu0
  %v1997 = vadd.f32 0.0, %v1996
  %v1998 = vpop.f32.mrf.mxu0
  %v1999 = vadd.f32 0.0, %v1998
  %2000 = vmatmul.bf16.gmra.mxu0 %v1922
  %v2001 = vpop.f32.mrf.mxu0
  %v2002 = vadd.f32 0.0, %v2001
  %v2003 = vpop.f32.mrf.mxu0
  %v2004 = vadd.f32 0.0, %v2003
  %2005 = vmatmul.bf16.gmra.mxu0 %v1923
  %v2006 = vpop.f32.mrf.mxu0
  %v2007 = vadd.f32 0.0, %v2006
  %v2008 = vpop.f32.mrf.mxu0
  %v2009 = vadd.f32 0.0, %v2008
  %2010 = vmatmul.bf16.gmra.mxu0 %v1924
  %v2011 = vpop.f32.mrf.mxu0
  %v2012 = vadd.f32 0.0, %v2011
  %v2013 = vpop.f32.mrf.mxu0
  %v2014 = vadd.f32 0.0, %v2013
  %2015 = vmatmul.bf16.gmra.mxu0 %v1925
  %v2016 = vpop.f32.mrf.mxu0
  %v2017 = vadd.f32 0.0, %v2016
  %v2018 = vpop.f32.mrf.mxu0
  %v2019 = vadd.f32 0.0, %v2018
  %2020 = vmatmul.bf16.gmra.mxu0 %v1926
  %v2021 = vpop.f32.mrf.mxu0
  %v2022 = vadd.f32 0.0, %v2021
  %v2023 = vpop.f32.mrf.mxu0
  %v2024 = vadd.f32 0.0, %v2023
  %2025 = vmatmul.bf16.gmra.mxu0 %v1927
  %v2026 = vpop.f32.mrf.mxu0
  %v2027 = vadd.f32 0.0, %v2026
  %v2028 = vpop.f32.mrf.mxu0
  %v2029 = vadd.f32 0.0, %v2028
  %2030 = vmatmul.bf16.gmra.mxu0 %v1928
  %v2031 = vpop.f32.mrf.mxu0
  %v2032 = vadd.f32 0.0, %v2031
  %v2033 = vpop.f32.mrf.mxu0
  %v2034 = vadd.f32 0.0, %v2033
  %2035 = vmatmul.bf16.gmra.mxu0 %v1929
  %v2036 = vpop.f32.mrf.mxu0
  %v2037 = vadd.f32 0.0, %v2036
  %v2038 = vpop.f32.mrf.mxu0
  %v2039 = vadd.f32 0.0, %v2038
  %2040 = vdwg.mxu0
  %v2059 = vunpack.c.l.b16 %v1724
  %v2060 = vunpack.c.l.b16 %v1725
  %v2061 = vunpack.c.l.b16 %v1726
  %v2062 = vunpack.c.l.b16 %v1727
  %v2063 = vunpack.c.l.b16 %v1728
  %v2064 = vunpack.c.l.b16 %v1729
  %v2065 = vunpack.c.l.b16 %v1732
  %v2066 = vunpack.c.l.b16 %v1733
  %v2067 = vunpack.c.l.b16 %v1734
  %v2068 = vunpack.c.l.b16 %v1735
  %v2069 = vunpack.c.l.b16 %v1736
  %v2070 = vunpack.c.l.b16 %v1737
  %v2071 = vunpack.c.l.b16 %v1740
  %v2072 = vunpack.c.l.b16 %v1741
  %v2073 = vunpack.c.l.b16 %v1742
  %v2074 = vunpack.c.l.b16 %v1743
  %v2075 = vunpack.c.l.b16 %v1744
  %v2076 = vunpack.c.l.b16 %v1745
  %v2077 = vpack.c.b16 %v2060, %v2059
  %v2078 = vpack.c.b16 %v2062, %v2061
  %v2079 = vpack.c.b16 %v2064, %v2063
  %v2080 = vpack.c.b16 %v2066, %v2065
  %v2081 = vpack.c.b16 %v2068, %v2067
  %v2082 = vpack.c.b16 %v2070, %v2069
  %v2083 = vpack.c.b16 %v2072, %v2071
  %v2084 = vpack.c.b16 %v2074, %v2073
  %v2085 = vpack.c.b16 %v2076, %v2075
  %v2111 = vunpack.c.l.b16 %v1852
  %v2112 = vunpack.c.l.b16 %v1853
  %v2113 = vunpack.c.l.b16 %v1854
  %v2114 = vunpack.c.l.b16 %v1855
  %v2115 = vunpack.c.l.b16 %v1856
  %v2116 = vunpack.c.l.b16 %v1857
  %v2117 = vunpack.c.l.b16 %v1858
  %v2118 = vunpack.c.l.b16 %v1859
  %v2119 = vunpack.c.l.b16 %v1860
  %v2120 = vunpack.c.l.b16 %v1861
  %v2121 = vunpack.c.l.b16 %v1862
  %v2122 = vunpack.c.l.b16 %v1863
  %v2123 = vunpack.c.l.b16 %v1864
  %v2124 = vunpack.c.l.b16 %v1865
  %v2125 = vunpack.c.l.b16 %v1866
  %v2126 = vunpack.c.l.b16 %v1867
  %v2127 = vpack.c.b16 %v2112, %v2111
  %v2128 = vpack.c.b16 %v2114, %v2113
  %v2129 = vpack.c.b16 %v2116, %v2115
  %v2130 = vpack.c.b16 %v2118, %v2117
  %v2131 = vpack.c.b16 %v2120, %v2119
  %v2132 = vpack.c.b16 %v2122, %v2121
  %v2133 = vpack.c.b16 %v2124, %v2123
  %v2134 = vpack.c.b16 %v2126, %v2125
  %2143 = vmatpush.bf16.msra.mxu0 %v2134
  %2144 = vmatpush.bf16.msra.mxu0 %v2133
  %2145 = vmatpush.bf16.msra.mxu0 %v2132
  %2146 = vmatpush.bf16.msra.mxu0 %v2131
  %2147 = vmatpush.bf16.msra.mxu0 %v2130
  %2148 = vmatpush.bf16.msra.mxu0 %v2129
  %2149 = vmatpush.bf16.msra.mxu0 %v2128
  %2150 = vmatpush.bf16.msra.mxu0 %v2127
  %2151 = vmatmul.bf16.gmra.mxu0 %v2077
  %v2152 = vpop.f32.mrf.mxu0
  %v2153 = vadd.f32 %v1997, %v2152
  %v2154 = vpop.f32.mrf.mxu0
  %v2155 = vadd.f32 %v1999, %v2154
  %2156 = vmatmul.bf16.gmra.mxu0 %v2078
  %v2157 = vpop.f32.mrf.mxu0
  %v2158 = vadd.f32 %v2002, %v2157
  %v2159 = vpop.f32.mrf.mxu0
  %v2160 = vadd.f32 %v2004, %v2159
  %2161 = vmatmul.bf16.gmra.mxu0 %v2079
  %v2162 = vpop.f32.mrf.mxu0
  %v2163 = vadd.f32 %v2007, %v2162
  %v2164 = vpop.f32.mrf.mxu0
  %v2165 = vadd.f32 %v2009, %v2164
  %2166 = vmatmul.bf16.gmra.mxu0 %v2080
  %v2167 = vpop.f32.mrf.mxu0
  %v2168 = vadd.f32 %v2012, %v2167
  %v2169 = vpop.f32.mrf.mxu0
  %v2170 = vadd.f32 %v2014, %v2169
  %2171 = vmatmul.bf16.gmra.mxu0 %v2081
  %v2172 = vpop.f32.mrf.mxu0
  %v2173 = vadd.f32 %v2017, %v2172
  %v2174 = vpop.f32.mrf.mxu0
  %v2175 = vadd.f32 %v2019, %v2174
  %2176 = vmatmul.bf16.gmra.mxu0 %v2082
  %v2177 = vpop.f32.mrf.mxu0
  %v2178 = vadd.f32 %v2022, %v2177
  %v2179 = vpop.f32.mrf.mxu0
  %v2180 = vadd.f32 %v2024, %v2179
  %2181 = vmatmul.bf16.gmra.mxu0 %v2083
  %v2182 = vpop.f32.mrf.mxu0
  %v2183 = vadd.f32 %v2027, %v2182
  %v2184 = vpop.f32.mrf.mxu0
  %v2185 = vadd.f32 %v2029, %v2184
  %2186 = vmatmul.bf16.gmra.mxu0 %v2084
  %v2187 = vpop.f32.mrf.mxu0
  %v2188 = vadd.f32 %v2032, %v2187
  %v2189 = vpop.f32.mrf.mxu0
  %v2190 = vadd.f32 %v2034, %v2189
  %2191 = vmatmul.bf16.gmra.mxu0 %v2085
  %v2192 = vpop.f32.mrf.mxu0
  %v2193 = vadd.f32 %v2037, %v2192
  %v2194 = vpop.f32.mrf.mxu0
  %v2195 = vadd.f32 %v2039, %v2194
  %2196 = vdwg.mxu0
  %s2197 = scalar_lea.vmem %s3, 128
  %v2198 = vld [vmem:[%s2197] sm:$0xf]
  %v2199 = vld [vmem:[%s2197 + $0x4] sm:$0xf]
  %v2200 = vld [vmem:[%s2197 + $0x8] sm:$0xf]
  %v2201 = vld [vmem:[%s2197 + $0xc] sm:$0xf]
  %v2202 = vld [vmem:[%s2197 + $0x10] sm:$0xf]
  %v2203 = vld [vmem:[%s2197 + $0x14] sm:$0xf]
  %v2204 = vld [vmem:[%s2197 + $0x18] sm:$0xf]
  %v2205 = vld [vmem:[%s2197 + $0x1c] sm:$0xf]
  %v2206 = vld [vmem:[%s2197 + $0x20] sm:$0xf]
  %v2207 = vld [vmem:[%s2197 + $0x24] sm:$0xf]
  %v2208 = vld [vmem:[%s2197 + $0x28] sm:$0xf]
  %v2209 = vld [vmem:[%s2197 + $0x2c] sm:$0xf]
  %v2210 = vld [vmem:[%s2197 + $0x30] sm:$0xf]
  %v2211 = vld [vmem:[%s2197 + $0x34] sm:$0xf]
  %v2212 = vld [vmem:[%s2197 + $0x38] sm:$0xf]
  %v2213 = vld [vmem:[%s2197 + $0x3c] sm:$0xf]
  %v2220 = vunpack.c.l.b16 %v1730
  %v2221 = vunpack.c.l.b16 %v1731
  %v2222 = vunpack.c.l.b16 %v1738
  %v2223 = vunpack.c.l.b16 %v1739
  %v2224 = vunpack.c.l.b16 %v1746
  %v2225 = vunpack.c.l.b16 %v1747
  %v2226 = vpack.c.b16 %v2221, %v2220
  %v2227 = vpack.c.b16 %v2223, %v2222
  %v2228 = vpack.c.b16 %v2225, %v2224
  %v2248 = vunpack.c.l.b16 %v2198
  %v2249 = vunpack.c.l.b16 %v2199
  %v2250 = vunpack.c.l.b16 %v2200
  %v2251 = vunpack.c.l.b16 %v2201
  %v2252 = vunpack.c.l.b16 %v2202
  %v2253 = vunpack.c.l.b16 %v2203
  %v2254 = vunpack.c.l.b16 %v2204
  %v2255 = vunpack.c.l.b16 %v2205
  %v2256 = vunpack.c.l.b16 %v2206
  %v2257 = vunpack.c.l.b16 %v2207
  %v2258 = vunpack.c.l.b16 %v2208
  %v2259 = vunpack.c.l.b16 %v2209
  %v2260 = vunpack.c.l.b16 %v2210
  %v2261 = vunpack.c.l.b16 %v2211
  %v2262 = vunpack.c.l.b16 %v2212
  %v2263 = vunpack.c.l.b16 %v2213
  %v2264 = vpack.c.b16 %v2249, %v2248
  %v2265 = vpack.c.b16 %v2251, %v2250
  %v2266 = vpack.c.b16 %v2253, %v2252
  %v2267 = vpack.c.b16 %v2255, %v2254
  %v2268 = vpack.c.b16 %v2257, %v2256
  %v2269 = vpack.c.b16 %v2259, %v2258
  %v2270 = vpack.c.b16 %v2261, %v2260
  %v2271 = vpack.c.b16 %v2263, %v2262
  %2280 = vmatpush.bf16.msra.mxu0 %v2271
  %2281 = vmatpush.bf16.msra.mxu0 %v2270
  %2282 = vmatpush.bf16.msra.mxu0 %v2269
  %2283 = vmatpush.bf16.msra.mxu0 %v2268
  %2284 = vmatpush.bf16.msra.mxu0 %v2267
  %2285 = vmatpush.bf16.msra.mxu0 %v2266
  %2286 = vmatpush.bf16.msra.mxu0 %v2265
  %2287 = vmatpush.bf16.msra.mxu0 %v2264
  %2288 = vmatmul.bf16.gmra.mxu0 %v2078
  %v2289 = vpop.f32.mrf.mxu0
  %v2290 = vadd.f32 0.0, %v2289
  %v2291 = vpop.f32.mrf.mxu0
  %v2292 = vadd.f32 0.0, %v2291
  %2293 = vmatmul.bf16.gmra.mxu0 %v2079
  %v2294 = vpop.f32.mrf.mxu0
  %v2295 = vadd.f32 0.0, %v2294
  %v2296 = vpop.f32.mrf.mxu0
  %v2297 = vadd.f32 0.0, %v2296
  %2298 = vmatmul.bf16.gmra.mxu0 %v2226
  %v2299 = vpop.f32.mrf.mxu0
  %v2300 = vadd.f32 0.0, %v2299
  %v2301 = vpop.f32.mrf.mxu0
  %v2302 = vadd.f32 0.0, %v2301
  %2303 = vmatmul.bf16.gmra.mxu0 %v2081
  %v2304 = vpop.f32.mrf.mxu0
  %v2305 = vadd.f32 0.0, %v2304
  %v2306 = vpop.f32.mrf.mxu0
  %v2307 = vadd.f32 0.0, %v2306
  %2308 = vmatmul.bf16.gmra.mxu0 %v2082
  %v2309 = vpop.f32.mrf.mxu0
  %v2310 = vadd.f32 0.0, %v2309
  %v2311 = vpop.f32.mrf.mxu0
  %v2312 = vadd.f32 0.0, %v2311
  %2313 = vmatmul.bf16.gmra.mxu0 %v2227
  %v2314 = vpop.f32.mrf.mxu0
  %v2315 = vadd.f32 0.0, %v2314
  %v2316 = vpop.f32.mrf.mxu0
  %v2317 = vadd.f32 0.0, %v2316
  %2318 = vmatmul.bf16.gmra.mxu0 %v2084
  %v2319 = vpop.f32.mrf.mxu0
  %v2320 = vadd.f32 0.0, %v2319
  %v2321 = vpop.f32.mrf.mxu0
  %v2322 = vadd.f32 0.0, %v2321
  %2323 = vmatmul.bf16.gmra.mxu0 %v2085
  %v2324 = vpop.f32.mrf.mxu0
  %v2325 = vadd.f32 0.0, %v2324
  %v2326 = vpop.f32.mrf.mxu0
  %v2327 = vadd.f32 0.0, %v2326
  %2328 = vmatmul.bf16.gmra.mxu0 %v2228
  %v2329 = vpop.f32.mrf.mxu0
  %v2330 = vadd.f32 0.0, %v2329
  %v2331 = vpop.f32.mrf.mxu0
  %v2332 = vadd.f32 0.0, %v2331
  %2333 = vdwg.mxu0
  %v2334 = vadd.f32 %v2153, %v2290
  %v2335 = vadd.f32 %v2155, %v2292
  %v2336 = vadd.f32 %v2158, %v2295
  %v2337 = vadd.f32 %v2160, %v2297
  %v2338 = vadd.f32 %v2163, %v2300
  %v2339 = vadd.f32 %v2165, %v2302
  %v2340 = vadd.f32 %v2168, %v2305
  %v2341 = vadd.f32 %v2170, %v2307
  %v2342 = vadd.f32 %v2173, %v2310
  %v2343 = vadd.f32 %v2175, %v2312
  %v2344 = vadd.f32 %v2178, %v2315
  %v2345 = vadd.f32 %v2180, %v2317
  %v2346 = vadd.f32 %v2183, %v2320
  %v2347 = vadd.f32 %v2185, %v2322
  %v2348 = vadd.f32 %v2188, %v2325
  %v2349 = vadd.f32 %v2190, %v2327
  %v2350 = vadd.f32 %v2193, %v2330
  %v2351 = vadd.f32 %v2195, %v2332
  %s2352 = scalar_lea.vmem %s3, 192
  %v2353 = vld [vmem:[%s2352] sm:$0xf]
  %v2354 = vld [vmem:[%s2352 + $0x4] sm:$0xf]
  %v2355 = vld [vmem:[%s2352 + $0x8] sm:$0xf]
  %v2356 = vld [vmem:[%s2352 + $0xc] sm:$0xf]
  %v2357 = vld [vmem:[%s2352 + $0x10] sm:$0xf]
  %v2358 = vld [vmem:[%s2352 + $0x14] sm:$0xf]
  %v2359 = vld [vmem:[%s2352 + $0x18] sm:$0xf]
  %v2360 = vld [vmem:[%s2352 + $0x1c] sm:$0xf]
  %v2361 = vld [vmem:[%s2352 + $0x20] sm:$0xf]
  %v2362 = vld [vmem:[%s2352 + $0x24] sm:$0xf]
  %v2363 = vld [vmem:[%s2352 + $0x28] sm:$0xf]
  %v2364 = vld [vmem:[%s2352 + $0x2c] sm:$0xf]
  %v2365 = vld [vmem:[%s2352 + $0x30] sm:$0xf]
  %v2366 = vld [vmem:[%s2352 + $0x34] sm:$0xf]
  %v2367 = vld [vmem:[%s2352 + $0x38] sm:$0xf]
  %v2368 = vld [vmem:[%s2352 + $0x3c] sm:$0xf]
  %v2375 = vunpack.c.l.b16 %v1762
  %v2376 = vunpack.c.l.b16 %v1763
  %v2377 = vunpack.c.l.b16 %v1770
  %v2378 = vunpack.c.l.b16 %v1771
  %v2379 = vunpack.c.l.b16 %v1778
  %v2380 = vunpack.c.l.b16 %v1779
  %v2381 = vpack.c.b16 %v2376, %v2375
  %v2382 = vpack.c.b16 %v2378, %v2377
  %v2383 = vpack.c.b16 %v2380, %v2379
  %v2403 = vunpack.c.l.b16 %v2353
  %v2404 = vunpack.c.l.b16 %v2354
  %v2405 = vunpack.c.l.b16 %v2355
  %v2406 = vunpack.c.l.b16 %v2356
  %v2407 = vunpack.c.l.b16 %v2357
  %v2408 = vunpack.c.l.b16 %v2358
  %v2409 = vunpack.c.l.b16 %v2359
  %v2410 = vunpack.c.l.b16 %v2360
  %v2411 = vunpack.c.l.b16 %v2361
  %v2412 = vunpack.c.l.b16 %v2362
  %v2413 = vunpack.c.l.b16 %v2363
  %v2414 = vunpack.c.l.b16 %v2364
  %v2415 = vunpack.c.l.b16 %v2365
  %v2416 = vunpack.c.l.b16 %v2366
  %v2417 = vunpack.c.l.b16 %v2367
  %v2418 = vunpack.c.l.b16 %v2368
  %v2419 = vpack.c.b16 %v2404, %v2403
  %v2420 = vpack.c.b16 %v2406, %v2405
  %v2421 = vpack.c.b16 %v2408, %v2407
  %v2422 = vpack.c.b16 %v2410, %v2409
  %v2423 = vpack.c.b16 %v2412, %v2411
  %v2424 = vpack.c.b16 %v2414, %v2413
  %v2425 = vpack.c.b16 %v2416, %v2415
  %v2426 = vpack.c.b16 %v2418, %v2417
  %2435 = vmatpush.bf16.msra.mxu0 %v2426
  %2436 = vmatpush.bf16.msra.mxu0 %v2425
  %2437 = vmatpush.bf16.msra.mxu0 %v2424
  %2438 = vmatpush.bf16.msra.mxu0 %v2423
  %2439 = vmatpush.bf16.msra.mxu0 %v2422
  %2440 = vmatpush.bf16.msra.mxu0 %v2421
  %2441 = vmatpush.bf16.msra.mxu0 %v2420
  %2442 = vmatpush.bf16.msra.mxu0 %v2419
  %2443 = vmatmul.bf16.gmra.mxu0 %v1922
  %v2444 = vpop.f32.mrf.mxu0
  %v2445 = vadd.f32 0.0, %v2444
  %v2446 = vpop.f32.mrf.mxu0
  %v2447 = vadd.f32 0.0, %v2446
  %2448 = vmatmul.bf16.gmra.mxu0 %v1923
  %v2449 = vpop.f32.mrf.mxu0
  %v2450 = vadd.f32 0.0, %v2449
  %v2451 = vpop.f32.mrf.mxu0
  %v2452 = vadd.f32 0.0, %v2451
  %2453 = vmatmul.bf16.gmra.mxu0 %v2381
  %v2454 = vpop.f32.mrf.mxu0
  %v2455 = vadd.f32 0.0, %v2454
  %v2456 = vpop.f32.mrf.mxu0
  %v2457 = vadd.f32 0.0, %v2456
  %2458 = vmatmul.bf16.gmra.mxu0 %v1925
  %v2459 = vpop.f32.mrf.mxu0
  %v2460 = vadd.f32 0.0, %v2459
  %v2461 = vpop.f32.mrf.mxu0
  %v2462 = vadd.f32 0.0, %v2461
  %2463 = vmatmul.bf16.gmra.mxu0 %v1926
  %v2464 = vpop.f32.mrf.mxu0
  %v2465 = vadd.f32 0.0, %v2464
  %v2466 = vpop.f32.mrf.mxu0
  %v2467 = vadd.f32 0.0, %v2466
  %2468 = vmatmul.bf16.gmra.mxu0 %v2382
  %v2469 = vpop.f32.mrf.mxu0
  %v2470 = vadd.f32 0.0, %v2469
  %v2471 = vpop.f32.mrf.mxu0
  %v2472 = vadd.f32 0.0, %v2471
  %2473 = vmatmul.bf16.gmra.mxu0 %v1928
  %v2474 = vpop.f32.mrf.mxu0
  %v2475 = vadd.f32 0.0, %v2474
  %v2476 = vpop.f32.mrf.mxu0
  %v2477 = vadd.f32 0.0, %v2476
  %2478 = vmatmul.bf16.gmra.mxu0 %v1929
  %v2479 = vpop.f32.mrf.mxu0
  %v2480 = vadd.f32 0.0, %v2479
  %v2481 = vpop.f32.mrf.mxu0
  %v2482 = vadd.f32 0.0, %v2481
  %2483 = vmatmul.bf16.gmra.mxu0 %v2383
  %v2484 = vpop.f32.mrf.mxu0
  %v2485 = vadd.f32 0.0, %v2484
  %v2486 = vpop.f32.mrf.mxu0
  %v2487 = vadd.f32 0.0, %v2486
  %2488 = vdwg.mxu0
  %v2489 = vadd.f32 %v2334, %v2445
  %v2490 = vadd.f32 %v2335, %v2447
  %v2491 = vadd.f32 %v2336, %v2450
  %v2492 = vadd.f32 %v2337, %v2452
  %v2493 = vadd.f32 %v2338, %v2455
  %v2494 = vadd.f32 %v2339, %v2457
  %v2495 = vadd.f32 %v2340, %v2460
  %v2496 = vadd.f32 %v2341, %v2462
  %v2497 = vadd.f32 %v2342, %v2465
  %v2498 = vadd.f32 %v2343, %v2467
  %v2499 = vadd.f32 %v2344, %v2470
  %v2500 = vadd.f32 %v2345, %v2472
  %v2501 = vadd.f32 %v2346, %v2475
  %v2502 = vadd.f32 %v2347, %v2477
  %v2503 = vadd.f32 %v2348, %v2480
  %v2504 = vadd.f32 %v2349, %v2482
  %v2505 = vadd.f32 %v2350, %v2485
  %v2506 = vadd.f32 %v2351, %v2487
  %s2507 = scalar_lea.vmem %s3, 256
  %v2508 = vld [vmem:[%s2507] sm:$0xf]
  %v2509 = vld [vmem:[%s2507 + $0x4] sm:$0xf]
  %v2510 = vld [vmem:[%s2507 + $0x8] sm:$0xf]
  %v2511 = vld [vmem:[%s2507 + $0xc] sm:$0xf]
  %v2512 = vld [vmem:[%s2507 + $0x10] sm:$0xf]
  %v2513 = vld [vmem:[%s2507 + $0x14] sm:$0xf]
  %v2514 = vld [vmem:[%s2507 + $0x18] sm:$0xf]
  %v2515 = vld [vmem:[%s2507 + $0x1c] sm:$0xf]
  %v2516 = vld [vmem:[%s2507 + $0x20] sm:$0xf]
  %v2517 = vld [vmem:[%s2507 + $0x24] sm:$0xf]
  %v2518 = vld [vmem:[%s2507 + $0x28] sm:$0xf]
  %v2519 = vld [vmem:[%s2507 + $0x2c] sm:$0xf]
  %v2520 = vld [vmem:[%s2507 + $0x30] sm:$0xf]
  %v2521 = vld [vmem:[%s2507 + $0x34] sm:$0xf]
  %v2522 = vld [vmem:[%s2507 + $0x38] sm:$0xf]
  %v2523 = vld [vmem:[%s2507 + $0x3c] sm:$0xf]
  %v2542 = vunpack.c.l.b16 %v1788
  %v2543 = vunpack.c.l.b16 %v1789
  %v2544 = vunpack.c.l.b16 %v1790
  %v2545 = vunpack.c.l.b16 %v1791
  %v2546 = vunpack.c.l.b16 %v1792
  %v2547 = vunpack.c.l.b16 %v1793
  %v2548 = vunpack.c.l.b16 %v1796
  %v2549 = vunpack.c.l.b16 %v1797
  %v2550 = vunpack.c.l.b16 %v1798
  %v2551 = vunpack.c.l.b16 %v1799
  %v2552 = vunpack.c.l.b16 %v1800
  %v2553 = vunpack.c.l.b16 %v1801
  %v2554 = vunpack.c.l.b16 %v1804
  %v2555 = vunpack.c.l.b16 %v1805
  %v2556 = vunpack.c.l.b16 %v1806
  %v2557 = vunpack.c.l.b16 %v1807
  %v2558 = vunpack.c.l.b16 %v1808
  %v2559 = vunpack.c.l.b16 %v1809
  %v2560 = vpack.c.b16 %v2543, %v2542
  %v2561 = vpack.c.b16 %v2545, %v2544
  %v2562 = vpack.c.b16 %v2547, %v2546
  %v2563 = vpack.c.b16 %v2549, %v2548
  %v2564 = vpack.c.b16 %v2551, %v2550
  %v2565 = vpack.c.b16 %v2553, %v2552
  %v2566 = vpack.c.b16 %v2555, %v2554
  %v2567 = vpack.c.b16 %v2557, %v2556
  %v2568 = vpack.c.b16 %v2559, %v2558
  %v2594 = vunpack.c.l.b16 %v2508
  %v2595 = vunpack.c.l.b16 %v2509
  %v2596 = vunpack.c.l.b16 %v2510
  %v2597 = vunpack.c.l.b16 %v2511
  %v2598 = vunpack.c.l.b16 %v2512
  %v2599 = vunpack.c.l.b16 %v2513
  %v2600 = vunpack.c.l.b16 %v2514
  %v2601 = vunpack.c.l.b16 %v2515
  %v2602 = vunpack.c.l.b16 %v2516
  %v2603 = vunpack.c.l.b16 %v2517
  %v2604 = vunpack.c.l.b16 %v2518
  %v2605 = vunpack.c.l.b16 %v2519
  %v2606 = vunpack.c.l.b16 %v2520
  %v2607 = vunpack.c.l.b16 %v2521
  %v2608 = vunpack.c.l.b16 %v2522
  %v2609 = vunpack.c.l.b16 %v2523
  %v2610 = vpack.c.b16 %v2595, %v2594
  %v2611 = vpack.c.b16 %v2597, %v2596
  %v2612 = vpack.c.b16 %v2599, %v2598
  %v2613 = vpack.c.b16 %v2601, %v2600
  %v2614 = vpack.c.b16 %v2603, %v2602
  %v2615 = vpack.c.b16 %v2605, %v2604
  %v2616 = vpack.c.b16 %v2607, %v2606
  %v2617 = vpack.c.b16 %v2609, %v2608
  %2626 = vmatpush.bf16.msra.mxu0 %v2617
  %2627 = vmatpush.bf16.msra.mxu0 %v2616
  %2628 = vmatpush.bf16.msra.mxu0 %v2615
  %2629 = vmatpush.bf16.msra.mxu0 %v2614
  %2630 = vmatpush.bf16.msra.mxu0 %v2613
  %2631 = vmatpush.bf16.msra.mxu0 %v2612
  %2632 = vmatpush.bf16.msra.mxu0 %v2611
  %2633 = vmatpush.bf16.msra.mxu0 %v2610
  %2634 = vmatmul.bf16.gmra.mxu0 %v2560
  %v2635 = vpop.f32.mrf.mxu0
  %v2636 = vadd.f32 0.0, %v2635
  %v2637 = vpop.f32.mrf.mxu0
  %v2638 = vadd.f32 0.0, %v2637
  %2639 = vmatmul.bf16.gmra.mxu0 %v2561
  %v2640 = vpop.f32.mrf.mxu0
  %v2641 = vadd.f32 0.0, %v2640
  %v2642 = vpop.f32.mrf.mxu0
  %v2643 = vadd.f32 0.0, %v2642
  %2644 = vmatmul.bf16.gmra.mxu0 %v2562
  %v2645 = vpop.f32.mrf.mxu0
  %v2646 = vadd.f32 0.0, %v2645
  %v2647 = vpop.f32.mrf.mxu0
  %v2648 = vadd.f32 0.0, %v2647
  %2649 = vmatmul.bf16.gmra.mxu0 %v2563
  %v2650 = vpop.f32.mrf.mxu0
  %v2651 = vadd.f32 0.0, %v2650
  %v2652 = vpop.f32.mrf.mxu0
  %v2653 = vadd.f32 0.0, %v2652
  %2654 = vmatmul.bf16.gmra.mxu0 %v2564
  %v2655 = vpop.f32.mrf.mxu0
  %v2656 = vadd.f32 0.0, %v2655
  %v2657 = vpop.f32.mrf.mxu0
  %v2658 = vadd.f32 0.0, %v2657
  %2659 = vmatmul.bf16.gmra.mxu0 %v2565
  %v2660 = vpop.f32.mrf.mxu0
  %v2661 = vadd.f32 0.0, %v2660
  %v2662 = vpop.f32.mrf.mxu0
  %v2663 = vadd.f32 0.0, %v2662
  %2664 = vmatmul.bf16.gmra.mxu0 %v2566
  %v2665 = vpop.f32.mrf.mxu0
  %v2666 = vadd.f32 0.0, %v2665
  %v2667 = vpop.f32.mrf.mxu0
  %v2668 = vadd.f32 0.0, %v2667
  %2669 = vmatmul.bf16.gmra.mxu0 %v2567
  %v2670 = vpop.f32.mrf.mxu0
  %v2671 = vadd.f32 0.0, %v2670
  %v2672 = vpop.f32.mrf.mxu0
  %v2673 = vadd.f32 0.0, %v2672
  %2674 = vmatmul.bf16.gmra.mxu0 %v2568
  %v2675 = vpop.f32.mrf.mxu0
  %v2676 = vadd.f32 0.0, %v2675
  %v2677 = vpop.f32.mrf.mxu0
  %v2678 = vadd.f32 0.0, %v2677
  %2679 = vdwg.mxu0
  %v2680 = vadd.f32 %v2489, %v2636
  %v2681 = vadd.f32 %v2490, %v2638
  %v2682 = vadd.f32 %v2491, %v2641
  %v2683 = vadd.f32 %v2492, %v2643
  %v2684 = vadd.f32 %v2493, %v2646
  %v2685 = vadd.f32 %v2494, %v2648
  %v2686 = vadd.f32 %v2495, %v2651
  %v2687 = vadd.f32 %v2496, %v2653
  %v2688 = vadd.f32 %v2497, %v2656
  %v2689 = vadd.f32 %v2498, %v2658
  %v2690 = vadd.f32 %v2499, %v2661
  %v2691 = vadd.f32 %v2500, %v2663
  %v2692 = vadd.f32 %v2501, %v2666
  %v2693 = vadd.f32 %v2502, %v2668
  %v2694 = vadd.f32 %v2503, %v2671
  %v2695 = vadd.f32 %v2504, %v2673
  %v2696 = vadd.f32 %v2505, %v2676
  %v2697 = vadd.f32 %v2506, %v2678
  %s2698 = scalar_lea.vmem %s3, 320
  %v2699 = vld [vmem:[%s2698] sm:$0xf]
  %v2700 = vld [vmem:[%s2698 + $0x4] sm:$0xf]
  %v2701 = vld [vmem:[%s2698 + $0x8] sm:$0xf]
  %v2702 = vld [vmem:[%s2698 + $0xc] sm:$0xf]
  %v2703 = vld [vmem:[%s2698 + $0x10] sm:$0xf]
  %v2704 = vld [vmem:[%s2698 + $0x14] sm:$0xf]
  %v2705 = vld [vmem:[%s2698 + $0x18] sm:$0xf]
  %v2706 = vld [vmem:[%s2698 + $0x1c] sm:$0xf]
  %v2707 = vld [vmem:[%s2698 + $0x20] sm:$0xf]
  %v2708 = vld [vmem:[%s2698 + $0x24] sm:$0xf]
  %v2709 = vld [vmem:[%s2698 + $0x28] sm:$0xf]
  %v2710 = vld [vmem:[%s2698 + $0x2c] sm:$0xf]
  %v2711 = vld [vmem:[%s2698 + $0x30] sm:$0xf]
  %v2712 = vld [vmem:[%s2698 + $0x34] sm:$0xf]
  %v2713 = vld [vmem:[%s2698 + $0x38] sm:$0xf]
  %v2714 = vld [vmem:[%s2698 + $0x3c] sm:$0xf]
  %v2733 = vunpack.c.l.b16 %v1820
  %v2734 = vunpack.c.l.b16 %v1821
  %v2735 = vunpack.c.l.b16 %v1822
  %v2736 = vunpack.c.l.b16 %v1823
  %v2737 = vunpack.c.l.b16 %v1824
  %v2738 = vunpack.c.l.b16 %v1825
  %v2739 = vunpack.c.l.b16 %v1828
  %v2740 = vunpack.c.l.b16 %v1829
  %v2741 = vunpack.c.l.b16 %v1830
  %v2742 = vunpack.c.l.b16 %v1831
  %v2743 = vunpack.c.l.b16 %v1832
  %v2744 = vunpack.c.l.b16 %v1833
  %v2745 = vunpack.c.l.b16 %v1836
  %v2746 = vunpack.c.l.b16 %v1837
  %v2747 = vunpack.c.l.b16 %v1838
  %v2748 = vunpack.c.l.b16 %v1839
  %v2749 = vunpack.c.l.b16 %v1840
  %v2750 = vunpack.c.l.b16 %v1841
  %v2751 = vpack.c.b16 %v2734, %v2733
  %v2752 = vpack.c.b16 %v2736, %v2735
  %v2753 = vpack.c.b16 %v2738, %v2737
  %v2754 = vpack.c.b16 %v2740, %v2739
  %v2755 = vpack.c.b16 %v2742, %v2741
  %v2756 = vpack.c.b16 %v2744, %v2743
  %v2757 = vpack.c.b16 %v2746, %v2745
  %v2758 = vpack.c.b16 %v2748, %v2747
  %v2759 = vpack.c.b16 %v2750, %v2749
  %v2785 = vunpack.c.l.b16 %v2699
  %v2786 = vunpack.c.l.b16 %v2700
  %v2787 = vunpack.c.l.b16 %v2701
  %v2788 = vunpack.c.l.b16 %v2702
  %v2789 = vunpack.c.l.b16 %v2703
  %v2790 = vunpack.c.l.b16 %v2704
  %v2791 = vunpack.c.l.b16 %v2705
  %v2792 = vunpack.c.l.b16 %v2706
  %v2793 = vunpack.c.l.b16 %v2707
  %v2794 = vunpack.c.l.b16 %v2708
  %v2795 = vunpack.c.l.b16 %v2709
  %v2796 = vunpack.c.l.b16 %v2710
  %v2797 = vunpack.c.l.b16 %v2711
  %v2798 = vunpack.c.l.b16 %v2712
  %v2799 = vunpack.c.l.b16 %v2713
  %v2800 = vunpack.c.l.b16 %v2714
  %v2801 = vpack.c.b16 %v2786, %v2785
  %v2802 = vpack.c.b16 %v2788, %v2787
  %v2803 = vpack.c.b16 %v2790, %v2789
  %v2804 = vpack.c.b16 %v2792, %v2791
  %v2805 = vpack.c.b16 %v2794, %v2793
  %v2806 = vpack.c.b16 %v2796, %v2795
  %v2807 = vpack.c.b16 %v2798, %v2797
  %v2808 = vpack.c.b16 %v2800, %v2799
  %2817 = vmatpush.bf16.msra.mxu0 %v2808
  %2818 = vmatpush.bf16.msra.mxu0 %v2807
  %2819 = vmatpush.bf16.msra.mxu0 %v2806
  %2820 = vmatpush.bf16.msra.mxu0 %v2805
  %2821 = vmatpush.bf16.msra.mxu0 %v2804
  %2822 = vmatpush.bf16.msra.mxu0 %v2803
  %2823 = vmatpush.bf16.msra.mxu0 %v2802
  %2824 = vmatpush.bf16.msra.mxu0 %v2801
  %2825 = vmatmul.bf16.gmra.mxu0 %v2751
  %v2826 = vpop.f32.mrf.mxu0
  %v2827 = vadd.f32 0.0, %v2826
  %v2828 = vpop.f32.mrf.mxu0
  %v2829 = vadd.f32 0.0, %v2828
  %2830 = vmatmul.bf16.gmra.mxu0 %v2752
  %v2831 = vpop.f32.mrf.mxu0
  %v2832 = vadd.f32 0.0, %v2831
  %v2833 = vpop.f32.mrf.mxu0
  %v2834 = vadd.f32 0.0, %v2833
  %2835 = vmatmul.bf16.gmra.mxu0 %v2753
  %v2836 = vpop.f32.mrf.mxu0
  %v2837 = vadd.f32 0.0, %v2836
  %v2838 = vpop.f32.mrf.mxu0
  %v2839 = vadd.f32 0.0, %v2838
  %2840 = vmatmul.bf16.gmra.mxu0 %v2754
  %v2841 = vpop.f32.mrf.mxu0
  %v2842 = vadd.f32 0.0, %v2841
  %v2843 = vpop.f32.mrf.mxu0
  %v2844 = vadd.f32 0.0, %v2843
  %2845 = vmatmul.bf16.gmra.mxu0 %v2755
  %v2846 = vpop.f32.mrf.mxu0
  %v2847 = vadd.f32 0.0, %v2846
  %v2848 = vpop.f32.mrf.mxu0
  %v2849 = vadd.f32 0.0, %v2848
  %2850 = vmatmul.bf16.gmra.mxu0 %v2756
  %v2851 = vpop.f32.mrf.mxu0
  %v2852 = vadd.f32 0.0, %v2851
  %v2853 = vpop.f32.mrf.mxu0
  %v2854 = vadd.f32 0.0, %v2853
  %2855 = vmatmul.bf16.gmra.mxu0 %v2757
  %v2856 = vpop.f32.mrf.mxu0
  %v2857 = vadd.f32 0.0, %v2856
  %v2858 = vpop.f32.mrf.mxu0
  %v2859 = vadd.f32 0.0, %v2858
  %2860 = vmatmul.bf16.gmra.mxu0 %v2758
  %v2861 = vpop.f32.mrf.mxu0
  %v2862 = vadd.f32 0.0, %v2861
  %v2863 = vpop.f32.mrf.mxu0
  %v2864 = vadd.f32 0.0, %v2863
  %2865 = vmatmul.bf16.gmra.mxu0 %v2759
  %v2866 = vpop.f32.mrf.mxu0
  %v2867 = vadd.f32 0.0, %v2866
  %v2868 = vpop.f32.mrf.mxu0
  %v2869 = vadd.f32 0.0, %v2868
  %2870 = vdwg.mxu0
  %v2871 = vadd.f32 %v2680, %v2827
  %v2872 = vadd.f32 %v2681, %v2829
  %v2873 = vadd.f32 %v2682, %v2832
  %v2874 = vadd.f32 %v2683, %v2834
  %v2875 = vadd.f32 %v2684, %v2837
  %v2876 = vadd.f32 %v2685, %v2839
  %v2877 = vadd.f32 %v2686, %v2842
  %v2878 = vadd.f32 %v2687, %v2844
  %v2879 = vadd.f32 %v2688, %v2847
  %v2880 = vadd.f32 %v2689, %v2849
  %v2881 = vadd.f32 %v2690, %v2852
  %v2882 = vadd.f32 %v2691, %v2854
  %v2883 = vadd.f32 %v2692, %v2857
  %v2884 = vadd.f32 %v2693, %v2859
  %v2885 = vadd.f32 %v2694, %v2862
  %v2886 = vadd.f32 %v2695, %v2864
  %v2887 = vadd.f32 %v2696, %v2867
  %v2888 = vadd.f32 %v2697, %v2869
  %s2889 = scalar_lea.vmem %s3, 384
  %v2890 = vld [vmem:[%s2889] sm:$0xf]
  %v2891 = vld [vmem:[%s2889 + $0x4] sm:$0xf]
  %v2892 = vld [vmem:[%s2889 + $0x8] sm:$0xf]
  %v2893 = vld [vmem:[%s2889 + $0xc] sm:$0xf]
  %v2894 = vld [vmem:[%s2889 + $0x10] sm:$0xf]
  %v2895 = vld [vmem:[%s2889 + $0x14] sm:$0xf]
  %v2896 = vld [vmem:[%s2889 + $0x18] sm:$0xf]
  %v2897 = vld [vmem:[%s2889 + $0x1c] sm:$0xf]
  %v2898 = vld [vmem:[%s2889 + $0x20] sm:$0xf]
  %v2899 = vld [vmem:[%s2889 + $0x24] sm:$0xf]
  %v2900 = vld [vmem:[%s2889 + $0x28] sm:$0xf]
  %v2901 = vld [vmem:[%s2889 + $0x2c] sm:$0xf]
  %v2902 = vld [vmem:[%s2889 + $0x30] sm:$0xf]
  %v2903 = vld [vmem:[%s2889 + $0x34] sm:$0xf]
  %v2904 = vld [vmem:[%s2889 + $0x38] sm:$0xf]
  %v2905 = vld [vmem:[%s2889 + $0x3c] sm:$0xf]
  %v2912 = vunpack.c.l.b16 %v1794
  %v2913 = vunpack.c.l.b16 %v1795
  %v2914 = vunpack.c.l.b16 %v1802
  %v2915 = vunpack.c.l.b16 %v1803
  %v2916 = vunpack.c.l.b16 %v1810
  %v2917 = vunpack.c.l.b16 %v1811
  %v2918 = vpack.c.b16 %v2913, %v2912
  %v2919 = vpack.c.b16 %v2915, %v2914
  %v2920 = vpack.c.b16 %v2917, %v2916
  %v2940 = vunpack.c.l.b16 %v2890
  %v2941 = vunpack.c.l.b16 %v2891
  %v2942 = vunpack.c.l.b16 %v2892
  %v2943 = vunpack.c.l.b16 %v2893
  %v2944 = vunpack.c.l.b16 %v2894
  %v2945 = vunpack.c.l.b16 %v2895
  %v2946 = vunpack.c.l.b16 %v2896
  %v2947 = vunpack.c.l.b16 %v2897
  %v2948 = vunpack.c.l.b16 %v2898
  %v2949 = vunpack.c.l.b16 %v2899
  %v2950 = vunpack.c.l.b16 %v2900
  %v2951 = vunpack.c.l.b16 %v2901
  %v2952 = vunpack.c.l.b16 %v2902
  %v2953 = vunpack.c.l.b16 %v2903
  %v2954 = vunpack.c.l.b16 %v2904
  %v2955 = vunpack.c.l.b16 %v2905
  %v2956 = vpack.c.b16 %v2941, %v2940
  %v2957 = vpack.c.b16 %v2943, %v2942
  %v2958 = vpack.c.b16 %v2945, %v2944
  %v2959 = vpack.c.b16 %v2947, %v2946
  %v2960 = vpack.c.b16 %v2949, %v2948
  %v2961 = vpack.c.b16 %v2951, %v2950
  %v2962 = vpack.c.b16 %v2953, %v2952
  %v2963 = vpack.c.b16 %v2955, %v2954
  %2972 = vmatpush.bf16.msra.mxu0 %v2963
  %2973 = vmatpush.bf16.msra.mxu0 %v2962
  %2974 = vmatpush.bf16.msra.mxu0 %v2961
  %2975 = vmatpush.bf16.msra.mxu0 %v2960
  %2976 = vmatpush.bf16.msra.mxu0 %v2959
  %2977 = vmatpush.bf16.msra.mxu0 %v2958
  %2978 = vmatpush.bf16.msra.mxu0 %v2957
  %2979 = vmatpush.bf16.msra.mxu0 %v2956
  %2980 = vmatmul.bf16.gmra.mxu0 %v2561
  %v2981 = vpop.f32.mrf.mxu0
  %v2982 = vadd.f32 0.0, %v2981
  %v2983 = vpop.f32.mrf.mxu0
  %v2984 = vadd.f32 0.0, %v2983
  %2985 = vmatmul.bf16.gmra.mxu0 %v2562
  %v2986 = vpop.f32.mrf.mxu0
  %v2987 = vadd.f32 0.0, %v2986
  %v2988 = vpop.f32.mrf.mxu0
  %v2989 = vadd.f32 0.0, %v2988
  %2990 = vmatmul.bf16.gmra.mxu0 %v2918
  %v2991 = vpop.f32.mrf.mxu0
  %v2992 = vadd.f32 0.0, %v2991
  %v2993 = vpop.f32.mrf.mxu0
  %v2994 = vadd.f32 0.0, %v2993
  %2995 = vmatmul.bf16.gmra.mxu0 %v2564
  %v2996 = vpop.f32.mrf.mxu0
  %v2997 = vadd.f32 0.0, %v2996
  %v2998 = vpop.f32.mrf.mxu0
  %v2999 = vadd.f32 0.0, %v2998
  %3000 = vmatmul.bf16.gmra.mxu0 %v2565
  %v3001 = vpop.f32.mrf.mxu0
  %v3002 = vadd.f32 0.0, %v3001
  %v3003 = vpop.f32.mrf.mxu0
  %v3004 = vadd.f32 0.0, %v3003
  %3005 = vmatmul.bf16.gmra.mxu0 %v2919
  %v3006 = vpop.f32.mrf.mxu0
  %v3007 = vadd.f32 0.0, %v3006
  %v3008 = vpop.f32.mrf.mxu0
  %v3009 = vadd.f32 0.0, %v3008
  %3010 = vmatmul.bf16.gmra.mxu0 %v2567
  %v3011 = vpop.f32.mrf.mxu0
  %v3012 = vadd.f32 0.0, %v3011
  %v3013 = vpop.f32.mrf.mxu0
  %v3014 = vadd.f32 0.0, %v3013
  %3015 = vmatmul.bf16.gmra.mxu0 %v2568
  %v3016 = vpop.f32.mrf.mxu0
  %v3017 = vadd.f32 0.0, %v3016
  %v3018 = vpop.f32.mrf.mxu0
  %v3019 = vadd.f32 0.0, %v3018
  %3020 = vmatmul.bf16.gmra.mxu0 %v2920
  %v3021 = vpop.f32.mrf.mxu0
  %v3022 = vadd.f32 0.0, %v3021
  %v3023 = vpop.f32.mrf.mxu0
  %v3024 = vadd.f32 0.0, %v3023
  %3025 = vdwg.mxu0
  %v3026 = vadd.f32 %v2871, %v2982
  %v3027 = vadd.f32 %v2872, %v2984
  %v3028 = vadd.f32 %v2873, %v2987
  %v3029 = vadd.f32 %v2874, %v2989
  %v3030 = vadd.f32 %v2875, %v2992
  %v3031 = vadd.f32 %v2876, %v2994
  %v3032 = vadd.f32 %v2877, %v2997
  %v3033 = vadd.f32 %v2878, %v2999
  %v3034 = vadd.f32 %v2879, %v3002
  %v3035 = vadd.f32 %v2880, %v3004
  %v3036 = vadd.f32 %v2881, %v3007
  %v3037 = vadd.f32 %v2882, %v3009
  %v3038 = vadd.f32 %v2883, %v3012
  %v3039 = vadd.f32 %v2884, %v3014
  %v3040 = vadd.f32 %v2885, %v3017
  %v3041 = vadd.f32 %v2886, %v3019
  %v3042 = vadd.f32 %v2887, %v3022
  %v3043 = vadd.f32 %v2888, %v3024
  %s3044 = scalar_lea.vmem %s3, 448
  %v3045 = vld [vmem:[%s3044] sm:$0xf]
  %v3046 = vld [vmem:[%s3044 + $0x4] sm:$0xf]
  %v3047 = vld [vmem:[%s3044 + $0x8] sm:$0xf]
  %v3048 = vld [vmem:[%s3044 + $0xc] sm:$0xf]
  %v3049 = vld [vmem:[%s3044 + $0x10] sm:$0xf]
  %v3050 = vld [vmem:[%s3044 + $0x14] sm:$0xf]
  %v3051 = vld [vmem:[%s3044 + $0x18] sm:$0xf]
  %v3052 = vld [vmem:[%s3044 + $0x1c] sm:$0xf]
  %v3053 = vld [vmem:[%s3044 + $0x20] sm:$0xf]
  %v3054 = vld [vmem:[%s3044 + $0x24] sm:$0xf]
  %v3055 = vld [vmem:[%s3044 + $0x28] sm:$0xf]
  %v3056 = vld [vmem:[%s3044 + $0x2c] sm:$0xf]
  %v3057 = vld [vmem:[%s3044 + $0x30] sm:$0xf]
  %v3058 = vld [vmem:[%s3044 + $0x34] sm:$0xf]
  %v3059 = vld [vmem:[%s3044 + $0x38] sm:$0xf]
  %v3060 = vld [vmem:[%s3044 + $0x3c] sm:$0xf]
  %v3067 = vunpack.c.l.b16 %v1826
  %v3068 = vunpack.c.l.b16 %v1827
  %v3069 = vunpack.c.l.b16 %v1834
  %v3070 = vunpack.c.l.b16 %v1835
  %v3071 = vunpack.c.l.b16 %v1842
  %v3072 = vunpack.c.l.b16 %v1843
  %v3073 = vpack.c.b16 %v3068, %v3067
  %v3074 = vpack.c.b16 %v3070, %v3069
  %v3075 = vpack.c.b16 %v3072, %v3071
  %v3095 = vunpack.c.l.b16 %v3045
  %v3096 = vunpack.c.l.b16 %v3046
  %v3097 = vunpack.c.l.b16 %v3047
  %v3098 = vunpack.c.l.b16 %v3048
  %v3099 = vunpack.c.l.b16 %v3049
  %v3100 = vunpack.c.l.b16 %v3050
  %v3101 = vunpack.c.l.b16 %v3051
  %v3102 = vunpack.c.l.b16 %v3052
  %v3103 = vunpack.c.l.b16 %v3053
  %v3104 = vunpack.c.l.b16 %v3054
  %v3105 = vunpack.c.l.b16 %v3055
  %v3106 = vunpack.c.l.b16 %v3056
  %v3107 = vunpack.c.l.b16 %v3057
  %v3108 = vunpack.c.l.b16 %v3058
  %v3109 = vunpack.c.l.b16 %v3059
  %v3110 = vunpack.c.l.b16 %v3060
  %v3111 = vpack.c.b16 %v3096, %v3095
  %v3112 = vpack.c.b16 %v3098, %v3097
  %v3113 = vpack.c.b16 %v3100, %v3099
  %v3114 = vpack.c.b16 %v3102, %v3101
  %v3115 = vpack.c.b16 %v3104, %v3103
  %v3116 = vpack.c.b16 %v3106, %v3105
  %v3117 = vpack.c.b16 %v3108, %v3107
  %v3118 = vpack.c.b16 %v3110, %v3109
  %3127 = vmatpush.bf16.msra.mxu0 %v3118
  %3128 = vmatpush.bf16.msra.mxu0 %v3117
  %3129 = vmatpush.bf16.msra.mxu0 %v3116
  %3130 = vmatpush.bf16.msra.mxu0 %v3115
  %3131 = vmatpush.bf16.msra.mxu0 %v3114
  %3132 = vmatpush.bf16.msra.mxu0 %v3113
  %3133 = vmatpush.bf16.msra.mxu0 %v3112
  %3134 = vmatpush.bf16.msra.mxu0 %v3111
  %3135 = vmatmul.bf16.gmra.mxu0 %v2752
  %v3136 = vpop.f32.mrf.mxu0
  %v3137 = vadd.f32 0.0, %v3136
  %v3138 = vpop.f32.mrf.mxu0
  %v3139 = vadd.f32 0.0, %v3138
  %3140 = vmatmul.bf16.gmra.mxu0 %v2753
  %v3141 = vpop.f32.mrf.mxu0
  %v3142 = vadd.f32 0.0, %v3141
  %v3143 = vpop.f32.mrf.mxu0
  %v3144 = vadd.f32 0.0, %v3143
  %3145 = vmatmul.bf16.gmra.mxu0 %v3073
  %v3146 = vpop.f32.mrf.mxu0
  %v3147 = vadd.f32 0.0, %v3146
  %v3148 = vpop.f32.mrf.mxu0
  %v3149 = vadd.f32 0.0, %v3148
  %3150 = vmatmul.bf16.gmra.mxu0 %v2755
  %v3151 = vpop.f32.mrf.mxu0
  %v3152 = vadd.f32 0.0, %v3151
  %v3153 = vpop.f32.mrf.mxu0
  %v3154 = vadd.f32 0.0, %v3153
  %3155 = vmatmul.bf16.gmra.mxu0 %v2756
  %v3156 = vpop.f32.mrf.mxu0
  %v3157 = vadd.f32 0.0, %v3156
  %v3158 = vpop.f32.mrf.mxu0
  %v3159 = vadd.f32 0.0, %v3158
  %3160 = vmatmul.bf16.gmra.mxu0 %v3074
  %v3161 = vpop.f32.mrf.mxu0
  %v3162 = vadd.f32 0.0, %v3161
  %v3163 = vpop.f32.mrf.mxu0
  %v3164 = vadd.f32 0.0, %v3163
  %3165 = vmatmul.bf16.gmra.mxu0 %v2758
  %v3166 = vpop.f32.mrf.mxu0
  %v3167 = vadd.f32 0.0, %v3166
  %v3168 = vpop.f32.mrf.mxu0
  %v3169 = vadd.f32 0.0, %v3168
  %3170 = vmatmul.bf16.gmra.mxu0 %v2759
  %v3171 = vpop.f32.mrf.mxu0
  %v3172 = vadd.f32 0.0, %v3171
  %v3173 = vpop.f32.mrf.mxu0
  %v3174 = vadd.f32 0.0, %v3173
  %3175 = vmatmul.bf16.gmra.mxu0 %v3075
  %v3176 = vpop.f32.mrf.mxu0
  %v3177 = vadd.f32 0.0, %v3176
  %v3178 = vpop.f32.mrf.mxu0
  %v3179 = vadd.f32 0.0, %v3178
  %3180 = vdwg.mxu0
  %v3181 = vadd.f32 %v3026, %v3137
  %v3182 = vadd.f32 %v3027, %v3139
  %v3183 = vadd.f32 %v3028, %v3142
  %v3184 = vadd.f32 %v3029, %v3144
  %v3185 = vadd.f32 %v3030, %v3147
  %v3186 = vadd.f32 %v3031, %v3149
  %v3187 = vadd.f32 %v3032, %v3152
  %v3188 = vadd.f32 %v3033, %v3154
  %v3189 = vadd.f32 %v3034, %v3157
  %v3190 = vadd.f32 %v3035, %v3159
  %v3191 = vadd.f32 %v3036, %v3162
  %v3192 = vadd.f32 %v3037, %v3164
  %v3193 = vadd.f32 %v3038, %v3167
  %v3194 = vadd.f32 %v3039, %v3169
  %v3195 = vadd.f32 %v3040, %v3172
  %v3196 = vadd.f32 %v3041, %v3174
  %v3197 = vadd.f32 %v3042, %v3177
  %v3198 = vadd.f32 %v3043, %v3179
  %s3199 = scalar_lea.vmem %s3, 512
  %v3200 = vld [vmem:[%s3199] sm:$0xf]
  %v3201 = vld [vmem:[%s3199 + $0x4] sm:$0xf]
  %v3202 = vld [vmem:[%s3199 + $0x8] sm:$0xf]
  %v3203 = vld [vmem:[%s3199 + $0xc] sm:$0xf]
  %v3204 = vld [vmem:[%s3199 + $0x10] sm:$0xf]
  %v3205 = vld [vmem:[%s3199 + $0x14] sm:$0xf]
  %v3206 = vld [vmem:[%s3199 + $0x18] sm:$0xf]
  %v3207 = vld [vmem:[%s3199 + $0x1c] sm:$0xf]
  %v3208 = vld [vmem:[%s3199 + $0x20] sm:$0xf]
  %v3209 = vld [vmem:[%s3199 + $0x24] sm:$0xf]
  %v3210 = vld [vmem:[%s3199 + $0x28] sm:$0xf]
  %v3211 = vld [vmem:[%s3199 + $0x2c] sm:$0xf]
  %v3212 = vld [vmem:[%s3199 + $0x30] sm:$0xf]
  %v3213 = vld [vmem:[%s3199 + $0x34] sm:$0xf]
  %v3214 = vld [vmem:[%s3199 + $0x38] sm:$0xf]
  %v3215 = vld [vmem:[%s3199 + $0x3c] sm:$0xf]
  %v3222 = vunpack.c.l.b16 %v1748
  %v3223 = vunpack.c.l.b16 %v1749
  %v3224 = vunpack.c.l.b16 %v1750
  %v3225 = vunpack.c.l.b16 %v1751
  %v3226 = vunpack.c.l.b16 %v1752
  %v3227 = vunpack.c.l.b16 %v1753
  %v3228 = vpack.c.b16 %v3223, %v3222
  %v3229 = vpack.c.b16 %v3225, %v3224
  %v3230 = vpack.c.b16 %v3227, %v3226
  %v3250 = vunpack.c.l.b16 %v3200
  %v3251 = vunpack.c.l.b16 %v3201
  %v3252 = vunpack.c.l.b16 %v3202
  %v3253 = vunpack.c.l.b16 %v3203
  %v3254 = vunpack.c.l.b16 %v3204
  %v3255 = vunpack.c.l.b16 %v3205
  %v3256 = vunpack.c.l.b16 %v3206
  %v3257 = vunpack.c.l.b16 %v3207
  %v3258 = vunpack.c.l.b16 %v3208
  %v3259 = vunpack.c.l.b16 %v3209
  %v3260 = vunpack.c.l.b16 %v3210
  %v3261 = vunpack.c.l.b16 %v3211
  %v3262 = vunpack.c.l.b16 %v3212
  %v3263 = vunpack.c.l.b16 %v3213
  %v3264 = vunpack.c.l.b16 %v3214
  %v3265 = vunpack.c.l.b16 %v3215
  %v3266 = vpack.c.b16 %v3251, %v3250
  %v3267 = vpack.c.b16 %v3253, %v3252
  %v3268 = vpack.c.b16 %v3255, %v3254
  %v3269 = vpack.c.b16 %v3257, %v3256
  %v3270 = vpack.c.b16 %v3259, %v3258
  %v3271 = vpack.c.b16 %v3261, %v3260
  %v3272 = vpack.c.b16 %v3263, %v3262
  %v3273 = vpack.c.b16 %v3265, %v3264
  %3282 = vmatpush.bf16.msra.mxu0 %v3273
  %3283 = vmatpush.bf16.msra.mxu0 %v3272
  %3284 = vmatpush.bf16.msra.mxu0 %v3271
  %3285 = vmatpush.bf16.msra.mxu0 %v3270
  %3286 = vmatpush.bf16.msra.mxu0 %v3269
  %3287 = vmatpush.bf16.msra.mxu0 %v3268
  %3288 = vmatpush.bf16.msra.mxu0 %v3267
  %3289 = vmatpush.bf16.msra.mxu0 %v3266
  %3290 = vmatmul.bf16.gmra.mxu0 %v2080
  %v3291 = vpop.f32.mrf.mxu0
  %v3292 = vadd.f32 0.0, %v3291
  %v3293 = vpop.f32.mrf.mxu0
  %v3294 = vadd.f32 0.0, %v3293
  %3295 = vmatmul.bf16.gmra.mxu0 %v2081
  %v3296 = vpop.f32.mrf.mxu0
  %v3297 = vadd.f32 0.0, %v3296
  %v3298 = vpop.f32.mrf.mxu0
  %v3299 = vadd.f32 0.0, %v3298
  %3300 = vmatmul.bf16.gmra.mxu0 %v2082
  %v3301 = vpop.f32.mrf.mxu0
  %v3302 = vadd.f32 0.0, %v3301
  %v3303 = vpop.f32.mrf.mxu0
  %v3304 = vadd.f32 0.0, %v3303
  %3305 = vmatmul.bf16.gmra.mxu0 %v2083
  %v3306 = vpop.f32.mrf.mxu0
  %v3307 = vadd.f32 0.0, %v3306
  %v3308 = vpop.f32.mrf.mxu0
  %v3309 = vadd.f32 0.0, %v3308
  %3310 = vmatmul.bf16.gmra.mxu0 %v2084
  %v3311 = vpop.f32.mrf.mxu0
  %v3312 = vadd.f32 0.0, %v3311
  %v3313 = vpop.f32.mrf.mxu0
  %v3314 = vadd.f32 0.0, %v3313
  %3315 = vmatmul.bf16.gmra.mxu0 %v2085
  %v3316 = vpop.f32.mrf.mxu0
  %v3317 = vadd.f32 0.0, %v3316
  %v3318 = vpop.f32.mrf.mxu0
  %v3319 = vadd.f32 0.0, %v3318
  %3320 = vmatmul.bf16.gmra.mxu0 %v3228
  %v3321 = vpop.f32.mrf.mxu0
  %v3322 = vadd.f32 0.0, %v3321
  %v3323 = vpop.f32.mrf.mxu0
  %v3324 = vadd.f32 0.0, %v3323
  %3325 = vmatmul.bf16.gmra.mxu0 %v3229
  %v3326 = vpop.f32.mrf.mxu0
  %v3327 = vadd.f32 0.0, %v3326
  %v3328 = vpop.f32.mrf.mxu0
  %v3329 = vadd.f32 0.0, %v3328
  %3330 = vmatmul.bf16.gmra.mxu0 %v3230
  %v3331 = vpop.f32.mrf.mxu0
  %v3332 = vadd.f32 0.0, %v3331
  %v3333 = vpop.f32.mrf.mxu0
  %v3334 = vadd.f32 0.0, %v3333
  %3335 = vdwg.mxu0
  %v3336 = vadd.f32 %v3181, %v3292
  %v3337 = vadd.f32 %v3182, %v3294
  %v3338 = vadd.f32 %v3183, %v3297
  %v3339 = vadd.f32 %v3184, %v3299
  %v3340 = vadd.f32 %v3185, %v3302
  %v3341 = vadd.f32 %v3186, %v3304
  %v3342 = vadd.f32 %v3187, %v3307
  %v3343 = vadd.f32 %v3188, %v3309
  %v3344 = vadd.f32 %v3189, %v3312
  %v3345 = vadd.f32 %v3190, %v3314
  %v3346 = vadd.f32 %v3191, %v3317
  %v3347 = vadd.f32 %v3192, %v3319
  %v3348 = vadd.f32 %v3193, %v3322
  %v3349 = vadd.f32 %v3194, %v3324
  %v3350 = vadd.f32 %v3195, %v3327
  %v3351 = vadd.f32 %v3196, %v3329
  %v3352 = vadd.f32 %v3197, %v3332
  %v3353 = vadd.f32 %v3198, %v3334
  %s3354 = scalar_lea.vmem %s3, 576
  %v3355 = vld [vmem:[%s3354] sm:$0xf]
  %v3356 = vld [vmem:[%s3354 + $0x4] sm:$0xf]
  %v3357 = vld [vmem:[%s3354 + $0x8] sm:$0xf]
  %v3358 = vld [vmem:[%s3354 + $0xc] sm:$0xf]
  %v3359 = vld [vmem:[%s3354 + $0x10] sm:$0xf]
  %v3360 = vld [vmem:[%s3354 + $0x14] sm:$0xf]
  %v3361 = vld [vmem:[%s3354 + $0x18] sm:$0xf]
  %v3362 = vld [vmem:[%s3354 + $0x1c] sm:$0xf]
  %v3363 = vld [vmem:[%s3354 + $0x20] sm:$0xf]
  %v3364 = vld [vmem:[%s3354 + $0x24] sm:$0xf]
  %v3365 = vld [vmem:[%s3354 + $0x28] sm:$0xf]
  %v3366 = vld [vmem:[%s3354 + $0x2c] sm:$0xf]
  %v3367 = vld [vmem:[%s3354 + $0x30] sm:$0xf]
  %v3368 = vld [vmem:[%s3354 + $0x34] sm:$0xf]
  %v3369 = vld [vmem:[%s3354 + $0x38] sm:$0xf]
  %v3370 = vld [vmem:[%s3354 + $0x3c] sm:$0xf]
  %v3377 = vunpack.c.l.b16 %v1780
  %v3378 = vunpack.c.l.b16 %v1781
  %v3379 = vunpack.c.l.b16 %v1782
  %v3380 = vunpack.c.l.b16 %v1783
  %v3381 = vunpack.c.l.b16 %v1784
  %v3382 = vunpack.c.l.b16 %v1785
  %v3383 = vpack.c.b16 %v3378, %v3377
  %v3384 = vpack.c.b16 %v3380, %v3379
  %v3385 = vpack.c.b16 %v3382, %v3381
  %v3405 = vunpack.c.l.b16 %v3355
  %v3406 = vunpack.c.l.b16 %v3356
  %v3407 = vunpack.c.l.b16 %v3357
  %v3408 = vunpack.c.l.b16 %v3358
  %v3409 = vunpack.c.l.b16 %v3359
  %v3410 = vunpack.c.l.b16 %v3360
  %v3411 = vunpack.c.l.b16 %v3361
  %v3412 = vunpack.c.l.b16 %v3362
  %v3413 = vunpack.c.l.b16 %v3363
  %v3414 = vunpack.c.l.b16 %v3364
  %v3415 = vunpack.c.l.b16 %v3365
  %v3416 = vunpack.c.l.b16 %v3366
  %v3417 = vunpack.c.l.b16 %v3367
  %v3418 = vunpack.c.l.b16 %v3368
  %v3419 = vunpack.c.l.b16 %v3369
  %v3420 = vunpack.c.l.b16 %v3370
  %v3421 = vpack.c.b16 %v3406, %v3405
  %v3422 = vpack.c.b16 %v3408, %v3407
  %v3423 = vpack.c.b16 %v3410, %v3409
  %v3424 = vpack.c.b16 %v3412, %v3411
  %v3425 = vpack.c.b16 %v3414, %v3413
  %v3426 = vpack.c.b16 %v3416, %v3415
  %v3427 = vpack.c.b16 %v3418, %v3417
  %v3428 = vpack.c.b16 %v3420, %v3419
  %3437 = vmatpush.bf16.msra.mxu0 %v3428
  %3438 = vmatpush.bf16.msra.mxu0 %v3427
  %3439 = vmatpush.bf16.msra.mxu0 %v3426
  %3440 = vmatpush.bf16.msra.mxu0 %v3425
  %3441 = vmatpush.bf16.msra.mxu0 %v3424
  %3442 = vmatpush.bf16.msra.mxu0 %v3423
  %3443 = vmatpush.bf16.msra.mxu0 %v3422
  %3444 = vmatpush.bf16.msra.mxu0 %v3421
  %3445 = vmatmul.bf16.gmra.mxu0 %v1924
  %v3446 = vpop.f32.mrf.mxu0
  %v3447 = vadd.f32 0.0, %v3446
  %v3448 = vpop.f32.mrf.mxu0
  %v3449 = vadd.f32 0.0, %v3448
  %3450 = vmatmul.bf16.gmra.mxu0 %v1925
  %v3451 = vpop.f32.mrf.mxu0
  %v3452 = vadd.f32 0.0, %v3451
  %v3453 = vpop.f32.mrf.mxu0
  %v3454 = vadd.f32 0.0, %v3453
  %3455 = vmatmul.bf16.gmra.mxu0 %v1926
  %v3456 = vpop.f32.mrf.mxu0
  %v3457 = vadd.f32 0.0, %v3456
  %v3458 = vpop.f32.mrf.mxu0
  %v3459 = vadd.f32 0.0, %v3458
  %3460 = vmatmul.bf16.gmra.mxu0 %v1927
  %v3461 = vpop.f32.mrf.mxu0
  %v3462 = vadd.f32 0.0, %v3461
  %v3463 = vpop.f32.mrf.mxu0
  %v3464 = vadd.f32 0.0, %v3463
  %3465 = vmatmul.bf16.gmra.mxu0 %v1928
  %v3466 = vpop.f32.mrf.mxu0
  %v3467 = vadd.f32 0.0, %v3466
  %v3468 = vpop.f32.mrf.mxu0
  %v3469 = vadd.f32 0.0, %v3468
  %3470 = vmatmul.bf16.gmra.mxu0 %v1929
  %v3471 = vpop.f32.mrf.mxu0
  %v3472 = vadd.f32 0.0, %v3471
  %v3473 = vpop.f32.mrf.mxu0
  %v3474 = vadd.f32 0.0, %v3473
  %3475 = vmatmul.bf16.gmra.mxu0 %v3383
  %v3476 = vpop.f32.mrf.mxu0
  %v3477 = vadd.f32 0.0, %v3476
  %v3478 = vpop.f32.mrf.mxu0
  %v3479 = vadd.f32 0.0, %v3478
  %3480 = vmatmul.bf16.gmra.mxu0 %v3384
  %v3481 = vpop.f32.mrf.mxu0
  %v3482 = vadd.f32 0.0, %v3481
  %v3483 = vpop.f32.mrf.mxu0
  %v3484 = vadd.f32 0.0, %v3483
  %3485 = vmatmul.bf16.gmra.mxu0 %v3385
  %v3486 = vpop.f32.mrf.mxu0
  %v3487 = vadd.f32 0.0, %v3486
  %v3488 = vpop.f32.mrf.mxu0
  %v3489 = vadd.f32 0.0, %v3488
  %3490 = vdwg.mxu0
  %v3491 = vadd.f32 %v3336, %v3447
  %v3492 = vadd.f32 %v3337, %v3449
  %v3493 = vadd.f32 %v3338, %v3452
  %v3494 = vadd.f32 %v3339, %v3454
  %v3495 = vadd.f32 %v3340, %v3457
  %v3496 = vadd.f32 %v3341, %v3459
  %v3497 = vadd.f32 %v3342, %v3462
  %v3498 = vadd.f32 %v3343, %v3464
  %v3499 = vadd.f32 %v3344, %v3467
  %v3500 = vadd.f32 %v3345, %v3469
  %v3501 = vadd.f32 %v3346, %v3472
  %v3502 = vadd.f32 %v3347, %v3474
  %v3503 = vadd.f32 %v3348, %v3477
  %v3504 = vadd.f32 %v3349, %v3479
  %v3505 = vadd.f32 %v3350, %v3482
  %v3506 = vadd.f32 %v3351, %v3484
  %v3507 = vadd.f32 %v3352, %v3487
  %v3508 = vadd.f32 %v3353, %v3489
  %s3509 = scalar_lea.vmem %s3, 640
  %v3510 = vld [vmem:[%s3509] sm:$0xf]
  %v3511 = vld [vmem:[%s3509 + $0x4] sm:$0xf]
  %v3512 = vld [vmem:[%s3509 + $0x8] sm:$0xf]
  %v3513 = vld [vmem:[%s3509 + $0xc] sm:$0xf]
  %v3514 = vld [vmem:[%s3509 + $0x10] sm:$0xf]
  %v3515 = vld [vmem:[%s3509 + $0x14] sm:$0xf]
  %v3516 = vld [vmem:[%s3509 + $0x18] sm:$0xf]
  %v3517 = vld [vmem:[%s3509 + $0x1c] sm:$0xf]
  %v3518 = vld [vmem:[%s3509 + $0x20] sm:$0xf]
  %v3519 = vld [vmem:[%s3509 + $0x24] sm:$0xf]
  %v3520 = vld [vmem:[%s3509 + $0x28] sm:$0xf]
  %v3521 = vld [vmem:[%s3509 + $0x2c] sm:$0xf]
  %v3522 = vld [vmem:[%s3509 + $0x30] sm:$0xf]
  %v3523 = vld [vmem:[%s3509 + $0x34] sm:$0xf]
  %v3524 = vld [vmem:[%s3509 + $0x38] sm:$0xf]
  %v3525 = vld [vmem:[%s3509 + $0x3c] sm:$0xf]
  %v3528 = vunpack.c.l.b16 %v1754
  %v3529 = vunpack.c.l.b16 %v1755
  %v3530 = vpack.c.b16 %v3529, %v3528
  %v3548 = vunpack.c.l.b16 %v3510
  %v3549 = vunpack.c.l.b16 %v3511
  %v3550 = vunpack.c.l.b16 %v3512
  %v3551 = vunpack.c.l.b16 %v3513
  %v3552 = vunpack.c.l.b16 %v3514
  %v3553 = vunpack.c.l.b16 %v3515
  %v3554 = vunpack.c.l.b16 %v3516
  %v3555 = vunpack.c.l.b16 %v3517
  %v3556 = vunpack.c.l.b16 %v3518
  %v3557 = vunpack.c.l.b16 %v3519
  %v3558 = vunpack.c.l.b16 %v3520
  %v3559 = vunpack.c.l.b16 %v3521
  %v3560 = vunpack.c.l.b16 %v3522
  %v3561 = vunpack.c.l.b16 %v3523
  %v3562 = vunpack.c.l.b16 %v3524
  %v3563 = vunpack.c.l.b16 %v3525
  %v3564 = vpack.c.b16 %v3549, %v3548
  %v3565 = vpack.c.b16 %v3551, %v3550
  %v3566 = vpack.c.b16 %v3553, %v3552
  %v3567 = vpack.c.b16 %v3555, %v3554
  %v3568 = vpack.c.b16 %v3557, %v3556
  %v3569 = vpack.c.b16 %v3559, %v3558
  %v3570 = vpack.c.b16 %v3561, %v3560
  %v3571 = vpack.c.b16 %v3563, %v3562
  %3580 = vmatpush.bf16.msra.mxu0 %v3571
  %3581 = vmatpush.bf16.msra.mxu0 %v3570
  %3582 = vmatpush.bf16.msra.mxu0 %v3569
  %3583 = vmatpush.bf16.msra.mxu0 %v3568
  %3584 = vmatpush.bf16.msra.mxu0 %v3567
  %3585 = vmatpush.bf16.msra.mxu0 %v3566
  %3586 = vmatpush.bf16.msra.mxu0 %v3565
  %3587 = vmatpush.bf16.msra.mxu0 %v3564
  %3588 = vmatmul.bf16.gmra.mxu0 %v2081
  %v3589 = vpop.f32.mrf.mxu0
  %v3590 = vadd.f32 0.0, %v3589
  %v3591 = vpop.f32.mrf.mxu0
  %v3592 = vadd.f32 0.0, %v3591
  %3593 = vmatmul.bf16.gmra.mxu0 %v2082
  %v3594 = vpop.f32.mrf.mxu0
  %v3595 = vadd.f32 0.0, %v3594
  %v3596 = vpop.f32.mrf.mxu0
  %v3597 = vadd.f32 0.0, %v3596
  %3598 = vmatmul.bf16.gmra.mxu0 %v2227
  %v3599 = vpop.f32.mrf.mxu0
  %v3600 = vadd.f32 0.0, %v3599
  %v3601 = vpop.f32.mrf.mxu0
  %v3602 = vadd.f32 0.0, %v3601
  %3603 = vmatmul.bf16.gmra.mxu0 %v2084
  %v3604 = vpop.f32.mrf.mxu0
  %v3605 = vadd.f32 0.0, %v3604
  %v3606 = vpop.f32.mrf.mxu0
  %v3607 = vadd.f32 0.0, %v3606
  %3608 = vmatmul.bf16.gmra.mxu0 %v2085
  %v3609 = vpop.f32.mrf.mxu0
  %v3610 = vadd.f32 0.0, %v3609
  %v3611 = vpop.f32.mrf.mxu0
  %v3612 = vadd.f32 0.0, %v3611
  %3613 = vmatmul.bf16.gmra.mxu0 %v2228
  %v3614 = vpop.f32.mrf.mxu0
  %v3615 = vadd.f32 0.0, %v3614
  %v3616 = vpop.f32.mrf.mxu0
  %v3617 = vadd.f32 0.0, %v3616
  %3618 = vmatmul.bf16.gmra.mxu0 %v3229
  %v3619 = vpop.f32.mrf.mxu0
  %v3620 = vadd.f32 0.0, %v3619
  %v3621 = vpop.f32.mrf.mxu0
  %v3622 = vadd.f32 0.0, %v3621
  %3623 = vmatmul.bf16.gmra.mxu0 %v3230
  %v3624 = vpop.f32.mrf.mxu0
  %v3625 = vadd.f32 0.0, %v3624
  %v3626 = vpop.f32.mrf.mxu0
  %v3627 = vadd.f32 0.0, %v3626
  %3628 = vmatmul.bf16.gmra.mxu0 %v3530
  %v3629 = vpop.f32.mrf.mxu0
  %v3630 = vadd.f32 0.0, %v3629
  %v3631 = vpop.f32.mrf.mxu0
  %v3632 = vadd.f32 0.0, %v3631
  %3633 = vdwg.mxu0
  %v3634 = vadd.f32 %v3491, %v3590
  %v3635 = vadd.f32 %v3492, %v3592
  %v3636 = vadd.f32 %v3493, %v3595
  %v3637 = vadd.f32 %v3494, %v3597
  %v3638 = vadd.f32 %v3495, %v3600
  %v3639 = vadd.f32 %v3496, %v3602
  %v3640 = vadd.f32 %v3497, %v3605
  %v3641 = vadd.f32 %v3498, %v3607
  %v3642 = vadd.f32 %v3499, %v3610
  %v3643 = vadd.f32 %v3500, %v3612
  %v3644 = vadd.f32 %v3501, %v3615
  %v3645 = vadd.f32 %v3502, %v3617
  %v3646 = vadd.f32 %v3503, %v3620
  %v3647 = vadd.f32 %v3504, %v3622
  %v3648 = vadd.f32 %v3505, %v3625
  %v3649 = vadd.f32 %v3506, %v3627
  %v3650 = vadd.f32 %v3507, %v3630
  %v3651 = vadd.f32 %v3508, %v3632
  %s3652 = scalar_lea.vmem %s3, 704
  %v3653 = vld [vmem:[%s3652] sm:$0xf]
  %v3654 = vld [vmem:[%s3652 + $0x4] sm:$0xf]
  %v3655 = vld [vmem:[%s3652 + $0x8] sm:$0xf]
  %v3656 = vld [vmem:[%s3652 + $0xc] sm:$0xf]
  %v3657 = vld [vmem:[%s3652 + $0x10] sm:$0xf]
  %v3658 = vld [vmem:[%s3652 + $0x14] sm:$0xf]
  %v3659 = vld [vmem:[%s3652 + $0x18] sm:$0xf]
  %v3660 = vld [vmem:[%s3652 + $0x1c] sm:$0xf]
  %v3661 = vld [vmem:[%s3652 + $0x20] sm:$0xf]
  %v3662 = vld [vmem:[%s3652 + $0x24] sm:$0xf]
  %v3663 = vld [vmem:[%s3652 + $0x28] sm:$0xf]
  %v3664 = vld [vmem:[%s3652 + $0x2c] sm:$0xf]
  %v3665 = vld [vmem:[%s3652 + $0x30] sm:$0xf]
  %v3666 = vld [vmem:[%s3652 + $0x34] sm:$0xf]
  %v3667 = vld [vmem:[%s3652 + $0x38] sm:$0xf]
  %v3668 = vld [vmem:[%s3652 + $0x3c] sm:$0xf]
  %v3671 = vunpack.c.l.b16 %v1786
  %v3672 = vunpack.c.l.b16 %v1787
  %v3673 = vpack.c.b16 %v3672, %v3671
  %v3691 = vunpack.c.l.b16 %v3653
  %v3692 = vunpack.c.l.b16 %v3654
  %v3693 = vunpack.c.l.b16 %v3655
  %v3694 = vunpack.c.l.b16 %v3656
  %v3695 = vunpack.c.l.b16 %v3657
  %v3696 = vunpack.c.l.b16 %v3658
  %v3697 = vunpack.c.l.b16 %v3659
  %v3698 = vunpack.c.l.b16 %v3660
  %v3699 = vunpack.c.l.b16 %v3661
  %v3700 = vunpack.c.l.b16 %v3662
  %v3701 = vunpack.c.l.b16 %v3663
  %v3702 = vunpack.c.l.b16 %v3664
  %v3703 = vunpack.c.l.b16 %v3665
  %v3704 = vunpack.c.l.b16 %v3666
  %v3705 = vunpack.c.l.b16 %v3667
  %v3706 = vunpack.c.l.b16 %v3668
  %v3707 = vpack.c.b16 %v3692, %v3691
  %v3708 = vpack.c.b16 %v3694, %v3693
  %v3709 = vpack.c.b16 %v3696, %v3695
  %v3710 = vpack.c.b16 %v3698, %v3697
  %v3711 = vpack.c.b16 %v3700, %v3699
  %v3712 = vpack.c.b16 %v3702, %v3701
  %v3713 = vpack.c.b16 %v3704, %v3703
  %v3714 = vpack.c.b16 %v3706, %v3705
  %3723 = vmatpush.bf16.msra.mxu0 %v3714
  %3724 = vmatpush.bf16.msra.mxu0 %v3713
  %3725 = vmatpush.bf16.msra.mxu0 %v3712
  %3726 = vmatpush.bf16.msra.mxu0 %v3711
  %3727 = vmatpush.bf16.msra.mxu0 %v3710
  %3728 = vmatpush.bf16.msra.mxu0 %v3709
  %3729 = vmatpush.bf16.msra.mxu0 %v3708
  %3730 = vmatpush.bf16.msra.mxu0 %v3707
  %3731 = vmatmul.bf16.gmra.mxu0 %v1925
  %v3732 = vpop.f32.mrf.mxu0
  %v3733 = vadd.f32 0.0, %v3732
  %v3734 = vpop.f32.mrf.mxu0
  %v3735 = vadd.f32 0.0, %v3734
  %3736 = vmatmul.bf16.gmra.mxu0 %v1926
  %v3737 = vpop.f32.mrf.mxu0
  %v3738 = vadd.f32 0.0, %v3737
  %v3739 = vpop.f32.mrf.mxu0
  %v3740 = vadd.f32 0.0, %v3739
  %3741 = vmatmul.bf16.gmra.mxu0 %v2382
  %v3742 = vpop.f32.mrf.mxu0
  %v3743 = vadd.f32 0.0, %v3742
  %v3744 = vpop.f32.mrf.mxu0
  %v3745 = vadd.f32 0.0, %v3744
  %3746 = vmatmul.bf16.gmra.mxu0 %v1928
  %v3747 = vpop.f32.mrf.mxu0
  %v3748 = vadd.f32 0.0, %v3747
  %v3749 = vpop.f32.mrf.mxu0
  %v3750 = vadd.f32 0.0, %v3749
  %3751 = vmatmul.bf16.gmra.mxu0 %v1929
  %v3752 = vpop.f32.mrf.mxu0
  %v3753 = vadd.f32 0.0, %v3752
  %v3754 = vpop.f32.mrf.mxu0
  %v3755 = vadd.f32 0.0, %v3754
  %3756 = vmatmul.bf16.gmra.mxu0 %v2383
  %v3757 = vpop.f32.mrf.mxu0
  %v3758 = vadd.f32 0.0, %v3757
  %v3759 = vpop.f32.mrf.mxu0
  %v3760 = vadd.f32 0.0, %v3759
  %3761 = vmatmul.bf16.gmra.mxu0 %v3384
  %v3762 = vpop.f32.mrf.mxu0
  %v3763 = vadd.f32 0.0, %v3762
  %v3764 = vpop.f32.mrf.mxu0
  %v3765 = vadd.f32 0.0, %v3764
  %3766 = vmatmul.bf16.gmra.mxu0 %v3385
  %v3767 = vpop.f32.mrf.mxu0
  %v3768 = vadd.f32 0.0, %v3767
  %v3769 = vpop.f32.mrf.mxu0
  %v3770 = vadd.f32 0.0, %v3769
  %3771 = vmatmul.bf16.gmra.mxu0 %v3673
  %v3772 = vpop.f32.mrf.mxu0
  %v3773 = vadd.f32 0.0, %v3772
  %v3774 = vpop.f32.mrf.mxu0
  %v3775 = vadd.f32 0.0, %v3774
  %3776 = vdwg.mxu0
  %v3777 = vadd.f32 %v3634, %v3733
  %v3778 = vadd.f32 %v3635, %v3735
  %v3779 = vadd.f32 %v3636, %v3738
  %v3780 = vadd.f32 %v3637, %v3740
  %v3781 = vadd.f32 %v3638, %v3743
  %v3782 = vadd.f32 %v3639, %v3745
  %v3783 = vadd.f32 %v3640, %v3748
  %v3784 = vadd.f32 %v3641, %v3750
  %v3785 = vadd.f32 %v3642, %v3753
  %v3786 = vadd.f32 %v3643, %v3755
  %v3787 = vadd.f32 %v3644, %v3758
  %v3788 = vadd.f32 %v3645, %v3760
  %v3789 = vadd.f32 %v3646, %v3763
  %v3790 = vadd.f32 %v3647, %v3765
  %v3791 = vadd.f32 %v3648, %v3768
  %v3792 = vadd.f32 %v3649, %v3770
  %v3793 = vadd.f32 %v3650, %v3773
  %v3794 = vadd.f32 %v3651, %v3775
  %s3795 = scalar_lea.vmem %s3, 768
  %v3796 = vld [vmem:[%s3795] sm:$0xf]
  %v3797 = vld [vmem:[%s3795 + $0x4] sm:$0xf]
  %v3798 = vld [vmem:[%s3795 + $0x8] sm:$0xf]
  %v3799 = vld [vmem:[%s3795 + $0xc] sm:$0xf]
  %v3800 = vld [vmem:[%s3795 + $0x10] sm:$0xf]
  %v3801 = vld [vmem:[%s3795 + $0x14] sm:$0xf]
  %v3802 = vld [vmem:[%s3795 + $0x18] sm:$0xf]
  %v3803 = vld [vmem:[%s3795 + $0x1c] sm:$0xf]
  %v3804 = vld [vmem:[%s3795 + $0x20] sm:$0xf]
  %v3805 = vld [vmem:[%s3795 + $0x24] sm:$0xf]
  %v3806 = vld [vmem:[%s3795 + $0x28] sm:$0xf]
  %v3807 = vld [vmem:[%s3795 + $0x2c] sm:$0xf]
  %v3808 = vld [vmem:[%s3795 + $0x30] sm:$0xf]
  %v3809 = vld [vmem:[%s3795 + $0x34] sm:$0xf]
  %v3810 = vld [vmem:[%s3795 + $0x38] sm:$0xf]
  %v3811 = vld [vmem:[%s3795 + $0x3c] sm:$0xf]
  %v3818 = vunpack.c.l.b16 %v1812
  %v3819 = vunpack.c.l.b16 %v1813
  %v3820 = vunpack.c.l.b16 %v1814
  %v3821 = vunpack.c.l.b16 %v1815
  %v3822 = vunpack.c.l.b16 %v1816
  %v3823 = vunpack.c.l.b16 %v1817
  %v3824 = vpack.c.b16 %v3819, %v3818
  %v3825 = vpack.c.b16 %v3821, %v3820
  %v3826 = vpack.c.b16 %v3823, %v3822
  %v3846 = vunpack.c.l.b16 %v3796
  %v3847 = vunpack.c.l.b16 %v3797
  %v3848 = vunpack.c.l.b16 %v3798
  %v3849 = vunpack.c.l.b16 %v3799
  %v3850 = vunpack.c.l.b16 %v3800
  %v3851 = vunpack.c.l.b16 %v3801
  %v3852 = vunpack.c.l.b16 %v3802
  %v3853 = vunpack.c.l.b16 %v3803
  %v3854 = vunpack.c.l.b16 %v3804
  %v3855 = vunpack.c.l.b16 %v3805
  %v3856 = vunpack.c.l.b16 %v3806
  %v3857 = vunpack.c.l.b16 %v3807
  %v3858 = vunpack.c.l.b16 %v3808
  %v3859 = vunpack.c.l.b16 %v3809
  %v3860 = vunpack.c.l.b16 %v3810
  %v3861 = vunpack.c.l.b16 %v3811
  %v3862 = vpack.c.b16 %v3847, %v3846
  %v3863 = vpack.c.b16 %v3849, %v3848
  %v3864 = vpack.c.b16 %v3851, %v3850
  %v3865 = vpack.c.b16 %v3853, %v3852
  %v3866 = vpack.c.b16 %v3855, %v3854
  %v3867 = vpack.c.b16 %v3857, %v3856
  %v3868 = vpack.c.b16 %v3859, %v3858
  %v3869 = vpack.c.b16 %v3861, %v3860
  %3878 = vmatpush.bf16.msra.mxu0 %v3869
  %3879 = vmatpush.bf16.msra.mxu0 %v3868
  %3880 = vmatpush.bf16.msra.mxu0 %v3867
  %3881 = vmatpush.bf16.msra.mxu0 %v3866
  %3882 = vmatpush.bf16.msra.mxu0 %v3865
  %3883 = vmatpush.bf16.msra.mxu0 %v3864
  %3884 = vmatpush.bf16.msra.mxu0 %v3863
  %3885 = vmatpush.bf16.msra.mxu0 %v3862
  %3886 = vmatmul.bf16.gmra.mxu0 %v2563
  %v3887 = vpop.f32.mrf.mxu0
  %v3888 = vadd.f32 0.0, %v3887
  %v3889 = vpop.f32.mrf.mxu0
  %v3890 = vadd.f32 0.0, %v3889
  %3891 = vmatmul.bf16.gmra.mxu0 %v2564
  %v3892 = vpop.f32.mrf.mxu0
  %v3893 = vadd.f32 0.0, %v3892
  %v3894 = vpop.f32.mrf.mxu0
  %v3895 = vadd.f32 0.0, %v3894
  %3896 = vmatmul.bf16.gmra.mxu0 %v2565
  %v3897 = vpop.f32.mrf.mxu0
  %v3898 = vadd.f32 0.0, %v3897
  %v3899 = vpop.f32.mrf.mxu0
  %v3900 = vadd.f32 0.0, %v3899
  %3901 = vmatmul.bf16.gmra.mxu0 %v2566
  %v3902 = vpop.f32.mrf.mxu0
  %v3903 = vadd.f32 0.0, %v3902
  %v3904 = vpop.f32.mrf.mxu0
  %v3905 = vadd.f32 0.0, %v3904
  %3906 = vmatmul.bf16.gmra.mxu0 %v2567
  %v3907 = vpop.f32.mrf.mxu0
  %v3908 = vadd.f32 0.0, %v3907
  %v3909 = vpop.f32.mrf.mxu0
  %v3910 = vadd.f32 0.0, %v3909
  %3911 = vmatmul.bf16.gmra.mxu0 %v2568
  %v3912 = vpop.f32.mrf.mxu0
  %v3913 = vadd.f32 0.0, %v3912
  %v3914 = vpop.f32.mrf.mxu0
  %v3915 = vadd.f32 0.0, %v3914
  %3916 = vmatmul.bf16.gmra.mxu0 %v3824
  %v3917 = vpop.f32.mrf.mxu0
  %v3918 = vadd.f32 0.0, %v3917
  %v3919 = vpop.f32.mrf.mxu0
  %v3920 = vadd.f32 0.0, %v3919
  %3921 = vmatmul.bf16.gmra.mxu0 %v3825
  %v3922 = vpop.f32.mrf.mxu0
  %v3923 = vadd.f32 0.0, %v3922
  %v3924 = vpop.f32.mrf.mxu0
  %v3925 = vadd.f32 0.0, %v3924
  %3926 = vmatmul.bf16.gmra.mxu0 %v3826
  %v3927 = vpop.f32.mrf.mxu0
  %v3928 = vadd.f32 0.0, %v3927
  %v3929 = vpop.f32.mrf.mxu0
  %v3930 = vadd.f32 0.0, %v3929
  %3931 = vdwg.mxu0
  %v3932 = vadd.f32 %v3777, %v3888
  %v3933 = vadd.f32 %v3778, %v3890
  %v3934 = vadd.f32 %v3779, %v3893
  %v3935 = vadd.f32 %v3780, %v3895
  %v3936 = vadd.f32 %v3781, %v3898
  %v3937 = vadd.f32 %v3782, %v3900
  %v3938 = vadd.f32 %v3783, %v3903
  %v3939 = vadd.f32 %v3784, %v3905
  %v3940 = vadd.f32 %v3785, %v3908
  %v3941 = vadd.f32 %v3786, %v3910
  %v3942 = vadd.f32 %v3787, %v3913
  %v3943 = vadd.f32 %v3788, %v3915
  %v3944 = vadd.f32 %v3789, %v3918
  %v3945 = vadd.f32 %v3790, %v3920
  %v3946 = vadd.f32 %v3791, %v3923
  %v3947 = vadd.f32 %v3792, %v3925
  %v3948 = vadd.f32 %v3793, %v3928
  %v3949 = vadd.f32 %v3794, %v3930
  %s3950 = scalar_lea.vmem %s3, 832
  %v3951 = vld [vmem:[%s3950] sm:$0xf]
  %v3952 = vld [vmem:[%s3950 + $0x4] sm:$0xf]
  %v3953 = vld [vmem:[%s3950 + $0x8] sm:$0xf]
  %v3954 = vld [vmem:[%s3950 + $0xc] sm:$0xf]
  %v3955 = vld [vmem:[%s3950 + $0x10] sm:$0xf]
  %v3956 = vld [vmem:[%s3950 + $0x14] sm:$0xf]
  %v3957 = vld [vmem:[%s3950 + $0x18] sm:$0xf]
  %v3958 = vld [vmem:[%s3950 + $0x1c] sm:$0xf]
  %v3959 = vld [vmem:[%s3950 + $0x20] sm:$0xf]
  %v3960 = vld [vmem:[%s3950 + $0x24] sm:$0xf]
  %v3961 = vld [vmem:[%s3950 + $0x28] sm:$0xf]
  %v3962 = vld [vmem:[%s3950 + $0x2c] sm:$0xf]
  %v3963 = vld [vmem:[%s3950 + $0x30] sm:$0xf]
  %v3964 = vld [vmem:[%s3950 + $0x34] sm:$0xf]
  %v3965 = vld [vmem:[%s3950 + $0x38] sm:$0xf]
  %v3966 = vld [vmem:[%s3950 + $0x3c] sm:$0xf]
  %v3973 = vunpack.c.l.b16 %v1844
  %v3974 = vunpack.c.l.b16 %v1845
  %v3975 = vunpack.c.l.b16 %v1846
  %v3976 = vunpack.c.l.b16 %v1847
  %v3977 = vunpack.c.l.b16 %v1848
  %v3978 = vunpack.c.l.b16 %v1849
  %v3979 = vpack.c.b16 %v3974, %v3973
  %v3980 = vpack.c.b16 %v3976, %v3975
  %v3981 = vpack.c.b16 %v3978, %v3977
  %v4001 = vunpack.c.l.b16 %v3951
  %v4002 = vunpack.c.l.b16 %v3952
  %v4003 = vunpack.c.l.b16 %v3953
  %v4004 = vunpack.c.l.b16 %v3954
  %v4005 = vunpack.c.l.b16 %v3955
  %v4006 = vunpack.c.l.b16 %v3956
  %v4007 = vunpack.c.l.b16 %v3957
  %v4008 = vunpack.c.l.b16 %v3958
  %v4009 = vunpack.c.l.b16 %v3959
  %v4010 = vunpack.c.l.b16 %v3960
  %v4011 = vunpack.c.l.b16 %v3961
  %v4012 = vunpack.c.l.b16 %v3962
  %v4013 = vunpack.c.l.b16 %v3963
  %v4014 = vunpack.c.l.b16 %v3964
  %v4015 = vunpack.c.l.b16 %v3965
  %v4016 = vunpack.c.l.b16 %v3966
  %v4017 = vpack.c.b16 %v4002, %v4001
  %v4018 = vpack.c.b16 %v4004, %v4003
  %v4019 = vpack.c.b16 %v4006, %v4005
  %v4020 = vpack.c.b16 %v4008, %v4007
  %v4021 = vpack.c.b16 %v4010, %v4009
  %v4022 = vpack.c.b16 %v4012, %v4011
  %v4023 = vpack.c.b16 %v4014, %v4013
  %v4024 = vpack.c.b16 %v4016, %v4015
  %4033 = vmatpush.bf16.msra.mxu0 %v4024
  %4034 = vmatpush.bf16.msra.mxu0 %v4023
  %4035 = vmatpush.bf16.msra.mxu0 %v4022
  %4036 = vmatpush.bf16.msra.mxu0 %v4021
  %4037 = vmatpush.bf16.msra.mxu0 %v4020
  %4038 = vmatpush.bf16.msra.mxu0 %v4019
  %4039 = vmatpush.bf16.msra.mxu0 %v4018
  %4040 = vmatpush.bf16.msra.mxu0 %v4017
  %4041 = vmatmul.bf16.gmra.mxu0 %v2754
  %v4042 = vpop.f32.mrf.mxu0
  %v4043 = vadd.f32 0.0, %v4042
  %v4044 = vpop.f32.mrf.mxu0
  %v4045 = vadd.f32 0.0, %v4044
  %4046 = vmatmul.bf16.gmra.mxu0 %v2755
  %v4047 = vpop.f32.mrf.mxu0
  %v4048 = vadd.f32 0.0, %v4047
  %v4049 = vpop.f32.mrf.mxu0
  %v4050 = vadd.f32 0.0, %v4049
  %4051 = vmatmul.bf16.gmra.mxu0 %v2756
  %v4052 = vpop.f32.mrf.mxu0
  %v4053 = vadd.f32 0.0, %v4052
  %v4054 = vpop.f32.mrf.mxu0
  %v4055 = vadd.f32 0.0, %v4054
  %4056 = vmatmul.bf16.gmra.mxu0 %v2757
  %v4057 = vpop.f32.mrf.mxu0
  %v4058 = vadd.f32 0.0, %v4057
  %v4059 = vpop.f32.mrf.mxu0
  %v4060 = vadd.f32 0.0, %v4059
  %4061 = vmatmul.bf16.gmra.mxu0 %v2758
  %v4062 = vpop.f32.mrf.mxu0
  %v4063 = vadd.f32 0.0, %v4062
  %v4064 = vpop.f32.mrf.mxu0
  %v4065 = vadd.f32 0.0, %v4064
  %4066 = vmatmul.bf16.gmra.mxu0 %v2759
  %v4067 = vpop.f32.mrf.mxu0
  %v4068 = vadd.f32 0.0, %v4067
  %v4069 = vpop.f32.mrf.mxu0
  %v4070 = vadd.f32 0.0, %v4069
  %4071 = vmatmul.bf16.gmra.mxu0 %v3979
  %v4072 = vpop.f32.mrf.mxu0
  %v4073 = vadd.f32 0.0, %v4072
  %v4074 = vpop.f32.mrf.mxu0
  %v4075 = vadd.f32 0.0, %v4074
  %4076 = vmatmul.bf16.gmra.mxu0 %v3980
  %v4077 = vpop.f32.mrf.mxu0
  %v4078 = vadd.f32 0.0, %v4077
  %v4079 = vpop.f32.mrf.mxu0
  %v4080 = vadd.f32 0.0, %v4079
  %4081 = vmatmul.bf16.gmra.mxu0 %v3981
  %v4082 = vpop.f32.mrf.mxu0
  %v4083 = vadd.f32 0.0, %v4082
  %v4084 = vpop.f32.mrf.mxu0
  %v4085 = vadd.f32 0.0, %v4084
  %4086 = vdwg.mxu0
  %v4087 = vadd.f32 %v3932, %v4043
  %v4088 = vadd.f32 %v3933, %v4045
  %v4089 = vadd.f32 %v3934, %v4048
  %v4090 = vadd.f32 %v3935, %v4050
  %v4091 = vadd.f32 %v3936, %v4053
  %v4092 = vadd.f32 %v3937, %v4055
  %v4093 = vadd.f32 %v3938, %v4058
  %v4094 = vadd.f32 %v3939, %v4060
  %v4095 = vadd.f32 %v3940, %v4063
  %v4096 = vadd.f32 %v3941, %v4065
  %v4097 = vadd.f32 %v3942, %v4068
  %v4098 = vadd.f32 %v3943, %v4070
  %v4099 = vadd.f32 %v3944, %v4073
  %v4100 = vadd.f32 %v3945, %v4075
  %v4101 = vadd.f32 %v3946, %v4078
  %v4102 = vadd.f32 %v3947, %v4080
  %v4103 = vadd.f32 %v3948, %v4083
  %v4104 = vadd.f32 %v3949, %v4085
  %s4105 = scalar_lea.vmem %s3, 896
  %v4106 = vld [vmem:[%s4105] sm:$0xf]
  %v4107 = vld [vmem:[%s4105 + $0x4] sm:$0xf]
  %v4108 = vld [vmem:[%s4105 + $0x8] sm:$0xf]
  %v4109 = vld [vmem:[%s4105 + $0xc] sm:$0xf]
  %v4110 = vld [vmem:[%s4105 + $0x10] sm:$0xf]
  %v4111 = vld [vmem:[%s4105 + $0x14] sm:$0xf]
  %v4112 = vld [vmem:[%s4105 + $0x18] sm:$0xf]
  %v4113 = vld [vmem:[%s4105 + $0x1c] sm:$0xf]
  %v4114 = vld [vmem:[%s4105 + $0x20] sm:$0xf]
  %v4115 = vld [vmem:[%s4105 + $0x24] sm:$0xf]
  %v4116 = vld [vmem:[%s4105 + $0x28] sm:$0xf]
  %v4117 = vld [vmem:[%s4105 + $0x2c] sm:$0xf]
  %v4118 = vld [vmem:[%s4105 + $0x30] sm:$0xf]
  %v4119 = vld [vmem:[%s4105 + $0x34] sm:$0xf]
  %v4120 = vld [vmem:[%s4105 + $0x38] sm:$0xf]
  %v4121 = vld [vmem:[%s4105 + $0x3c] sm:$0xf]
  %v4124 = vunpack.c.l.b16 %v1818
  %v4125 = vunpack.c.l.b16 %v1819
  %v4126 = vpack.c.b16 %v4125, %v4124
  %v4144 = vunpack.c.l.b16 %v4106
  %v4145 = vunpack.c.l.b16 %v4107
  %v4146 = vunpack.c.l.b16 %v4108
  %v4147 = vunpack.c.l.b16 %v4109
  %v4148 = vunpack.c.l.b16 %v4110
  %v4149 = vunpack.c.l.b16 %v4111
  %v4150 = vunpack.c.l.b16 %v4112
  %v4151 = vunpack.c.l.b16 %v4113
  %v4152 = vunpack.c.l.b16 %v4114
  %v4153 = vunpack.c.l.b16 %v4115
  %v4154 = vunpack.c.l.b16 %v4116
  %v4155 = vunpack.c.l.b16 %v4117
  %v4156 = vunpack.c.l.b16 %v4118
  %v4157 = vunpack.c.l.b16 %v4119
  %v4158 = vunpack.c.l.b16 %v4120
  %v4159 = vunpack.c.l.b16 %v4121
  %v4160 = vpack.c.b16 %v4145, %v4144
  %v4161 = vpack.c.b16 %v4147, %v4146
  %v4162 = vpack.c.b16 %v4149, %v4148
  %v4163 = vpack.c.b16 %v4151, %v4150
  %v4164 = vpack.c.b16 %v4153, %v4152
  %v4165 = vpack.c.b16 %v4155, %v4154
  %v4166 = vpack.c.b16 %v4157, %v4156
  %v4167 = vpack.c.b16 %v4159, %v4158
  %4176 = vmatpush.bf16.msra.mxu0 %v4167
  %4177 = vmatpush.bf16.msra.mxu0 %v4166
  %4178 = vmatpush.bf16.msra.mxu0 %v4165
  %4179 = vmatpush.bf16.msra.mxu0 %v4164
  %4180 = vmatpush.bf16.msra.mxu0 %v4163
  %4181 = vmatpush.bf16.msra.mxu0 %v4162
  %4182 = vmatpush.bf16.msra.mxu0 %v4161
  %4183 = vmatpush.bf16.msra.mxu0 %v4160
  %4184 = vmatmul.bf16.gmra.mxu0 %v2564
  %v4185 = vpop.f32.mrf.mxu0
  %v4186 = vadd.f32 0.0, %v4185
  %v4187 = vpop.f32.mrf.mxu0
  %v4188 = vadd.f32 0.0, %v4187
  %4189 = vmatmul.bf16.gmra.mxu0 %v2565
  %v4190 = vpop.f32.mrf.mxu0
  %v4191 = vadd.f32 0.0, %v4190
  %v4192 = vpop.f32.mrf.mxu0
  %v4193 = vadd.f32 0.0, %v4192
  %4194 = vmatmul.bf16.gmra.mxu0 %v2919
  %v4195 = vpop.f32.mrf.mxu0
  %v4196 = vadd.f32 0.0, %v4195
  %v4197 = vpop.f32.mrf.mxu0
  %v4198 = vadd.f32 0.0, %v4197
  %4199 = vmatmul.bf16.gmra.mxu0 %v2567
  %v4200 = vpop.f32.mrf.mxu0
  %v4201 = vadd.f32 0.0, %v4200
  %v4202 = vpop.f32.mrf.mxu0
  %v4203 = vadd.f32 0.0, %v4202
  %4204 = vmatmul.bf16.gmra.mxu0 %v2568
  %v4205 = vpop.f32.mrf.mxu0
  %v4206 = vadd.f32 0.0, %v4205
  %v4207 = vpop.f32.mrf.mxu0
  %v4208 = vadd.f32 0.0, %v4207
  %4209 = vmatmul.bf16.gmra.mxu0 %v2920
  %v4210 = vpop.f32.mrf.mxu0
  %v4211 = vadd.f32 0.0, %v4210
  %v4212 = vpop.f32.mrf.mxu0
  %v4213 = vadd.f32 0.0, %v4212
  %4214 = vmatmul.bf16.gmra.mxu0 %v3825
  %v4215 = vpop.f32.mrf.mxu0
  %v4216 = vadd.f32 0.0, %v4215
  %v4217 = vpop.f32.mrf.mxu0
  %v4218 = vadd.f32 0.0, %v4217
  %4219 = vmatmul.bf16.gmra.mxu0 %v3826
  %v4220 = vpop.f32.mrf.mxu0
  %v4221 = vadd.f32 0.0, %v4220
  %v4222 = vpop.f32.mrf.mxu0
  %v4223 = vadd.f32 0.0, %v4222
  %4224 = vmatmul.bf16.gmra.mxu0 %v4126
  %v4225 = vpop.f32.mrf.mxu0
  %v4226 = vadd.f32 0.0, %v4225
  %v4227 = vpop.f32.mrf.mxu0
  %v4228 = vadd.f32 0.0, %v4227
  %4229 = vdwg.mxu0
  %v4230 = vadd.f32 %v4087, %v4186
  %v4231 = vadd.f32 %v4088, %v4188
  %v4232 = vadd.f32 %v4089, %v4191
  %v4233 = vadd.f32 %v4090, %v4193
  %v4234 = vadd.f32 %v4091, %v4196
  %v4235 = vadd.f32 %v4092, %v4198
  %v4236 = vadd.f32 %v4093, %v4201
  %v4237 = vadd.f32 %v4094, %v4203
  %v4238 = vadd.f32 %v4095, %v4206
  %v4239 = vadd.f32 %v4096, %v4208
  %v4240 = vadd.f32 %v4097, %v4211
  %v4241 = vadd.f32 %v4098, %v4213
  %v4242 = vadd.f32 %v4099, %v4216
  %v4243 = vadd.f32 %v4100, %v4218
  %v4244 = vadd.f32 %v4101, %v4221
  %v4245 = vadd.f32 %v4102, %v4223
  %v4246 = vadd.f32 %v4103, %v4226
  %v4247 = vadd.f32 %v4104, %v4228
  %s4248 = scalar_lea.vmem %s3, 960
  %v4249 = vld [vmem:[%s4248] sm:$0xf]
  %v4250 = vld [vmem:[%s4248 + $0x4] sm:$0xf]
  %v4251 = vld [vmem:[%s4248 + $0x8] sm:$0xf]
  %v4252 = vld [vmem:[%s4248 + $0xc] sm:$0xf]
  %v4253 = vld [vmem:[%s4248 + $0x10] sm:$0xf]
  %v4254 = vld [vmem:[%s4248 + $0x14] sm:$0xf]
  %v4255 = vld [vmem:[%s4248 + $0x18] sm:$0xf]
  %v4256 = vld [vmem:[%s4248 + $0x1c] sm:$0xf]
  %v4257 = vld [vmem:[%s4248 + $0x20] sm:$0xf]
  %v4258 = vld [vmem:[%s4248 + $0x24] sm:$0xf]
  %v4259 = vld [vmem:[%s4248 + $0x28] sm:$0xf]
  %v4260 = vld [vmem:[%s4248 + $0x2c] sm:$0xf]
  %v4261 = vld [vmem:[%s4248 + $0x30] sm:$0xf]
  %v4262 = vld [vmem:[%s4248 + $0x34] sm:$0xf]
  %v4263 = vld [vmem:[%s4248 + $0x38] sm:$0xf]
  %v4264 = vld [vmem:[%s4248 + $0x3c] sm:$0xf]
  %v4267 = vunpack.c.l.b16 %v1850
  %v4268 = vunpack.c.l.b16 %v1851
  %v4269 = vpack.c.b16 %v4268, %v4267
  %v4287 = vunpack.c.l.b16 %v4249
  %v4288 = vunpack.c.l.b16 %v4250
  %v4289 = vunpack.c.l.b16 %v4251
  %v4290 = vunpack.c.l.b16 %v4252
  %v4291 = vunpack.c.l.b16 %v4253
  %v4292 = vunpack.c.l.b16 %v4254
  %v4293 = vunpack.c.l.b16 %v4255
  %v4294 = vunpack.c.l.b16 %v4256
  %v4295 = vunpack.c.l.b16 %v4257
  %v4296 = vunpack.c.l.b16 %v4258
  %v4297 = vunpack.c.l.b16 %v4259
  %v4298 = vunpack.c.l.b16 %v4260
  %v4299 = vunpack.c.l.b16 %v4261
  %v4300 = vunpack.c.l.b16 %v4262
  %v4301 = vunpack.c.l.b16 %v4263
  %v4302 = vunpack.c.l.b16 %v4264
  %v4303 = vpack.c.b16 %v4288, %v4287
  %v4304 = vpack.c.b16 %v4290, %v4289
  %v4305 = vpack.c.b16 %v4292, %v4291
  %v4306 = vpack.c.b16 %v4294, %v4293
  %v4307 = vpack.c.b16 %v4296, %v4295
  %v4308 = vpack.c.b16 %v4298, %v4297
  %v4309 = vpack.c.b16 %v4300, %v4299
  %v4310 = vpack.c.b16 %v4302, %v4301
  %4319 = vmatpush.bf16.msra.mxu0 %v4310
  %4320 = vmatpush.bf16.msra.mxu0 %v4309
  %4321 = vmatpush.bf16.msra.mxu0 %v4308
  %4322 = vmatpush.bf16.msra.mxu0 %v4307
  %4323 = vmatpush.bf16.msra.mxu0 %v4306
  %4324 = vmatpush.bf16.msra.mxu0 %v4305
  %4325 = vmatpush.bf16.msra.mxu0 %v4304
  %4326 = vmatpush.bf16.msra.mxu0 %v4303
  %4327 = vmatmul.bf16.gmra.mxu0 %v2755
  %v4328 = vpop.f32.mrf.mxu0
  %v4329 = vadd.f32 0.0, %v4328
  %v4330 = vpop.f32.mrf.mxu0
  %v4331 = vadd.f32 0.0, %v4330
  %4332 = vmatmul.bf16.gmra.mxu0 %v2756
  %v4333 = vpop.f32.mrf.mxu0
  %v4334 = vadd.f32 0.0, %v4333
  %v4335 = vpop.f32.mrf.mxu0
  %v4336 = vadd.f32 0.0, %v4335
  %4337 = vmatmul.bf16.gmra.mxu0 %v3074
  %v4338 = vpop.f32.mrf.mxu0
  %v4339 = vadd.f32 0.0, %v4338
  %v4340 = vpop.f32.mrf.mxu0
  %v4341 = vadd.f32 0.0, %v4340
  %4342 = vmatmul.bf16.gmra.mxu0 %v2758
  %v4343 = vpop.f32.mrf.mxu0
  %v4344 = vadd.f32 0.0, %v4343
  %v4345 = vpop.f32.mrf.mxu0
  %v4346 = vadd.f32 0.0, %v4345
  %4347 = vmatmul.bf16.gmra.mxu0 %v2759
  %v4348 = vpop.f32.mrf.mxu0
  %v4349 = vadd.f32 0.0, %v4348
  %v4350 = vpop.f32.mrf.mxu0
  %v4351 = vadd.f32 0.0, %v4350
  %4352 = vmatmul.bf16.gmra.mxu0 %v3075
  %v4353 = vpop.f32.mrf.mxu0
  %v4354 = vadd.f32 0.0, %v4353
  %v4355 = vpop.f32.mrf.mxu0
  %v4356 = vadd.f32 0.0, %v4355
  %4357 = vmatmul.bf16.gmra.mxu0 %v3980
  %v4358 = vpop.f32.mrf.mxu0
  %v4359 = vadd.f32 0.0, %v4358
  %v4360 = vpop.f32.mrf.mxu0
  %v4361 = vadd.f32 0.0, %v4360
  %4362 = vmatmul.bf16.gmra.mxu0 %v3981
  %v4363 = vpop.f32.mrf.mxu0
  %v4364 = vadd.f32 0.0, %v4363
  %v4365 = vpop.f32.mrf.mxu0
  %v4366 = vadd.f32 0.0, %v4365
  %4367 = vmatmul.bf16.gmra.mxu0 %v4269
  %v4368 = vpop.f32.mrf.mxu0
  %v4369 = vadd.f32 0.0, %v4368
  %v4370 = vpop.f32.mrf.mxu0
  %v4371 = vadd.f32 0.0, %v4370
  %4372 = vdwg.mxu0
  %v4373 = vadd.f32 %v4230, %v4329
  %v4374 = vadd.f32 %v4231, %v4331
  %v4375 = vadd.f32 %v4232, %v4334
  %v4376 = vadd.f32 %v4233, %v4336
  %v4377 = vadd.f32 %v4234, %v4339
  %v4378 = vadd.f32 %v4235, %v4341
  %v4379 = vadd.f32 %v4236, %v4344
  %v4380 = vadd.f32 %v4237, %v4346
  %v4381 = vadd.f32 %v4238, %v4349
  %v4382 = vadd.f32 %v4239, %v4351
  %v4383 = vadd.f32 %v4240, %v4354
  %v4384 = vadd.f32 %v4241, %v4356
  %v4385 = vadd.f32 %v4242, %v4359
  %v4386 = vadd.f32 %v4243, %v4361
  %v4387 = vadd.f32 %v4244, %v4364
  %v4388 = vadd.f32 %v4245, %v4366
  %v4389 = vadd.f32 %v4246, %v4369
  %v4390 = vadd.f32 %v4247, %v4371
  %v4391 = vld [vmem:[%s4] sm:$0x1]
  %v4393 = vperm.slane %v4391, 0
  %v4395 = vadd.f32 %v4373, %v4393
  %v4396 = vadd.f32 %v4374, %v4393
  %v4397 = vadd.f32 %v4375, %v4393
  %v4398 = vadd.f32 %v4376, %v4393
  %v4399 = vadd.f32 %v4377, %v4393
  %v4400 = vadd.f32 %v4378, %v4393
  %v4401 = vadd.f32 %v4379, %v4393
  %v4402 = vadd.f32 %v4380, %v4393
  %v4403 = vadd.f32 %v4381, %v4393
  %v4404 = vadd.f32 %v4382, %v4393
  %v4405 = vadd.f32 %v4383, %v4393
  %v4406 = vadd.f32 %v4384, %v4393
  %v4407 = vadd.f32 %v4385, %v4393
  %v4408 = vadd.f32 %v4386, %v4393
  %v4409 = vadd.f32 %v4387, %v4393
  %v4410 = vadd.f32 %v4388, %v4393
  %v4411 = vadd.f32 %v4389, %v4393
  %v4412 = vadd.f32 %v4390, %v4393
  %v4413 = vmax.f32 %v4395, 0.0
  %v4414 = vmax.f32 %v4396, 0.0
  %v4415 = vmax.f32 %v4397, 0.0
  %v4416 = vmax.f32 %v4398, 0.0
  %v4417 = vmax.f32 %v4399, 0.0
  %v4418 = vmax.f32 %v4400, 0.0
  %v4419 = vmax.f32 %v4401, 0.0
  %v4420 = vmax.f32 %v4402, 0.0
  %v4421 = vmax.f32 %v4403, 0.0
  %v4422 = vmax.f32 %v4404, 0.0
  %v4423 = vmax.f32 %v4405, 0.0
  %v4424 = vmax.f32 %v4406, 0.0
  %v4425 = vmax.f32 %v4407, 0.0
  %v4426 = vmax.f32 %v4408, 0.0
  %v4427 = vmax.f32 %v4409, 0.0
  %v4428 = vmax.f32 %v4410, 0.0
  %v4429 = vmax.f32 %v4411, 0.0
  %v4430 = vmax.f32 %v4412, 0.0
  %v4431 = vpack.c.bf16 %v4413, %v4413
  %v4432 = vpack.c.bf16 %v4414, %v4414
  %v4433 = vpack.c.bf16 %v4415, %v4415
  %v4434 = vpack.c.bf16 %v4416, %v4416
  %v4435 = vpack.c.bf16 %v4417, %v4417
  %v4436 = vpack.c.bf16 %v4418, %v4418
  %v4437 = vpack.c.bf16 %v4419, %v4419
  %v4438 = vpack.c.bf16 %v4420, %v4420
  %v4439 = vpack.c.bf16 %v4421, %v4421
  %v4440 = vpack.c.bf16 %v4422, %v4422
  %v4441 = vpack.c.bf16 %v4423, %v4423
  %v4442 = vpack.c.bf16 %v4424, %v4424
  %v4443 = vpack.c.bf16 %v4425, %v4425
  %v4444 = vpack.c.bf16 %v4426, %v4426
  %v4445 = vpack.c.bf16 %v4427, %v4427
  %v4446 = vpack.c.bf16 %v4428, %v4428
  %v4447 = vpack.c.bf16 %v4429, %v4429
  %v4448 = vpack.c.bf16 %v4430, %v4430
  %v4449 = vld [vmem:[%s5] sm:$0xf]
  %v4450 = vld [vmem:[%s5 + $0x4] sm:$0xf]
  %v4451 = vld [vmem:[%s5 + $0x8] sm:$0xf]
  %v4452 = vld [vmem:[%s5 + $0xc] sm:$0xf]
  %v4453 = vld [vmem:[%s5 + $0x10] sm:$0xf]
  %v4454 = vld [vmem:[%s5 + $0x14] sm:$0xf]
  %v4455 = vld [vmem:[%s5 + $0x18] sm:$0xf]
  %v4456 = vld [vmem:[%s5 + $0x1c] sm:$0xf]
  %v4457 = vld [vmem:[%s5 + $0x20] sm:$0xf]
  %v4458 = vld [vmem:[%s5 + $0x24] sm:$0xf]
  %v4459 = vld [vmem:[%s5 + $0x28] sm:$0xf]
  %v4460 = vld [vmem:[%s5 + $0x2c] sm:$0xf]
  %v4461 = vld [vmem:[%s5 + $0x30] sm:$0xf]
  %v4462 = vld [vmem:[%s5 + $0x34] sm:$0xf]
  %v4463 = vld [vmem:[%s5 + $0x38] sm:$0xf]
  %v4464 = vld [vmem:[%s5 + $0x3c] sm:$0xf]
  %s4465 = scalar_lea.vmem %s5, 64
  %v4466 = vld [vmem:[%s4465] sm:$0xf]
  %v4467 = vld [vmem:[%s4465 + $0x4] sm:$0xf]
  %v4468 = vld [vmem:[%s4465 + $0x8] sm:$0xf]
  %v4469 = vld [vmem:[%s4465 + $0xc] sm:$0xf]
  %v4470 = vld [vmem:[%s4465 + $0x10] sm:$0xf]
  %v4471 = vld [vmem:[%s4465 + $0x14] sm:$0xf]
  %v4472 = vld [vmem:[%s4465 + $0x18] sm:$0xf]
  %v4473 = vld [vmem:[%s4465 + $0x1c] sm:$0xf]
  %v4474 = vld [vmem:[%s4465 + $0x20] sm:$0xf]
  %v4475 = vld [vmem:[%s4465 + $0x24] sm:$0xf]
  %v4476 = vld [vmem:[%s4465 + $0x28] sm:$0xf]
  %v4477 = vld [vmem:[%s4465 + $0x2c] sm:$0xf]
  %v4478 = vld [vmem:[%s4465 + $0x30] sm:$0xf]
  %v4479 = vld [vmem:[%s4465 + $0x34] sm:$0xf]
  %v4480 = vld [vmem:[%s4465 + $0x38] sm:$0xf]
  %v4481 = vld [vmem:[%s4465 + $0x3c] sm:$0xf]
  %v4484 = vunpack.c.l.b16 %v4433
  %v4485 = vunpack.c.l.b16 %v4434
  %v4486 = vpack.c.b16 %v4485, %v4484
  %v4504 = vunpack.c.l.b16 %v4466
  %v4505 = vunpack.c.l.b16 %v4467
  %v4506 = vunpack.c.l.b16 %v4468
  %v4507 = vunpack.c.l.b16 %v4469
  %v4508 = vunpack.c.l.b16 %v4470
  %v4509 = vunpack.c.l.b16 %v4471
  %v4510 = vunpack.c.l.b16 %v4472
  %v4511 = vunpack.c.l.b16 %v4473
  %v4512 = vunpack.c.l.b16 %v4474
  %v4513 = vunpack.c.l.b16 %v4475
  %v4514 = vunpack.c.l.b16 %v4476
  %v4515 = vunpack.c.l.b16 %v4477
  %v4516 = vunpack.c.l.b16 %v4478
  %v4517 = vunpack.c.l.b16 %v4479
  %v4518 = vunpack.c.l.b16 %v4480
  %v4519 = vunpack.c.l.b16 %v4481
  %v4520 = vpack.c.b16 %v4505, %v4504
  %v4521 = vpack.c.b16 %v4507, %v4506
  %v4522 = vpack.c.b16 %v4509, %v4508
  %v4523 = vpack.c.b16 %v4511, %v4510
  %v4524 = vpack.c.b16 %v4513, %v4512
  %v4525 = vpack.c.b16 %v4515, %v4514
  %v4526 = vpack.c.b16 %v4517, %v4516
  %v4527 = vpack.c.b16 %v4519, %v4518
  %4536 = vmatpush.bf16.msra.mxu0 %v4527
  %4537 = vmatpush.bf16.msra.mxu0 %v4526
  %4538 = vmatpush.bf16.msra.mxu0 %v4525
  %4539 = vmatpush.bf16.msra.mxu0 %v4524
  %4540 = vmatpush.bf16.msra.mxu0 %v4523
  %4541 = vmatpush.bf16.msra.mxu0 %v4522
  %4542 = vmatpush.bf16.msra.mxu0 %v4521
  %4543 = vmatpush.bf16.msra.mxu0 %v4520
  %4544 = vmatmul.bf16.gmra.mxu0 %v4486
  %v4545 = vpop.f32.mrf.mxu0
  %v4546 = vadd.f32 0.0, %v4545
  %v4547 = vpop.f32.mrf.mxu0
  %v4548 = vadd.f32 0.0, %v4547
  %4549 = vdwg.mxu0
  %v4552 = vunpack.c.l.b16 %v4431
  %v4553 = vunpack.c.l.b16 %v4432
  %v4554 = vpack.c.b16 %v4553, %v4552
  %v4572 = vunpack.c.l.b16 %v4449
  %v4573 = vunpack.c.l.b16 %v4450
  %v4574 = vunpack.c.l.b16 %v4451
  %v4575 = vunpack.c.l.b16 %v4452
  %v4576 = vunpack.c.l.b16 %v4453
  %v4577 = vunpack.c.l.b16 %v4454
  %v4578 = vunpack.c.l.b16 %v4455
  %v4579 = vunpack.c.l.b16 %v4456
  %v4580 = vunpack.c.l.b16 %v4457
  %v4581 = vunpack.c.l.b16 %v4458
  %v4582 = vunpack.c.l.b16 %v4459
  %v4583 = vunpack.c.l.b16 %v4460
  %v4584 = vunpack.c.l.b16 %v4461
  %v4585 = vunpack.c.l.b16 %v4462
  %v4586 = vunpack.c.l.b16 %v4463
  %v4587 = vunpack.c.l.b16 %v4464
  %v4588 = vpack.c.b16 %v4573, %v4572
  %v4589 = vpack.c.b16 %v4575, %v4574
  %v4590 = vpack.c.b16 %v4577, %v4576
  %v4591 = vpack.c.b16 %v4579, %v4578
  %v4592 = vpack.c.b16 %v4581, %v4580
  %v4593 = vpack.c.b16 %v4583, %v4582
  %v4594 = vpack.c.b16 %v4585, %v4584
  %v4595 = vpack.c.b16 %v4587, %v4586
  %4604 = vmatpush.bf16.msra.mxu0 %v4595
  %4605 = vmatpush.bf16.msra.mxu0 %v4594
  %4606 = vmatpush.bf16.msra.mxu0 %v4593
  %4607 = vmatpush.bf16.msra.mxu0 %v4592
  %4608 = vmatpush.bf16.msra.mxu0 %v4591
  %4609 = vmatpush.bf16.msra.mxu0 %v4590
  %4610 = vmatpush.bf16.msra.mxu0 %v4589
  %4611 = vmatpush.bf16.msra.mxu0 %v4588
  %4612 = vmatmul.bf16.gmra.mxu0 %v4554
  %v4613 = vpop.f32.mrf.mxu0
  %v4614 = vadd.f32 %v4546, %v4613
  %v4615 = vpop.f32.mrf.mxu0
  %v4616 = vadd.f32 %v4548, %v4615
  %4617 = vdwg.mxu0
  %s4618 = scalar_lea.vmem %s5, 128
  %v4619 = vld [vmem:[%s4618] sm:$0xf]
  %v4620 = vld [vmem:[%s4618 + $0x4] sm:$0xf]
  %v4621 = vld [vmem:[%s4618 + $0x8] sm:$0xf]
  %v4622 = vld [vmem:[%s4618 + $0xc] sm:$0xf]
  %v4623 = vld [vmem:[%s4618 + $0x10] sm:$0xf]
  %v4624 = vld [vmem:[%s4618 + $0x14] sm:$0xf]
  %v4625 = vld [vmem:[%s4618 + $0x18] sm:$0xf]
  %v4626 = vld [vmem:[%s4618 + $0x1c] sm:$0xf]
  %v4627 = vld [vmem:[%s4618 + $0x20] sm:$0xf]
  %v4628 = vld [vmem:[%s4618 + $0x24] sm:$0xf]
  %v4629 = vld [vmem:[%s4618 + $0x28] sm:$0xf]
  %v4630 = vld [vmem:[%s4618 + $0x2c] sm:$0xf]
  %v4631 = vld [vmem:[%s4618 + $0x30] sm:$0xf]
  %v4632 = vld [vmem:[%s4618 + $0x34] sm:$0xf]
  %v4633 = vld [vmem:[%s4618 + $0x38] sm:$0xf]
  %v4634 = vld [vmem:[%s4618 + $0x3c] sm:$0xf]
  %v4637 = vunpack.c.l.b16 %v4435
  %v4638 = vunpack.c.l.b16 %v4436
  %v4639 = vpack.c.b16 %v4638, %v4637
  %v4657 = vunpack.c.l.b16 %v4619
  %v4658 = vunpack.c.l.b16 %v4620
  %v4659 = vunpack.c.l.b16 %v4621
  %v4660 = vunpack.c.l.b16 %v4622
  %v4661 = vunpack.c.l.b16 %v4623
  %v4662 = vunpack.c.l.b16 %v4624
  %v4663 = vunpack.c.l.b16 %v4625
  %v4664 = vunpack.c.l.b16 %v4626
  %v4665 = vunpack.c.l.b16 %v4627
  %v4666 = vunpack.c.l.b16 %v4628
  %v4667 = vunpack.c.l.b16 %v4629
  %v4668 = vunpack.c.l.b16 %v4630
  %v4669 = vunpack.c.l.b16 %v4631
  %v4670 = vunpack.c.l.b16 %v4632
  %v4671 = vunpack.c.l.b16 %v4633
  %v4672 = vunpack.c.l.b16 %v4634
  %v4673 = vpack.c.b16 %v4658, %v4657
  %v4674 = vpack.c.b16 %v4660, %v4659
  %v4675 = vpack.c.b16 %v4662, %v4661
  %v4676 = vpack.c.b16 %v4664, %v4663
  %v4677 = vpack.c.b16 %v4666, %v4665
  %v4678 = vpack.c.b16 %v4668, %v4667
  %v4679 = vpack.c.b16 %v4670, %v4669
  %v4680 = vpack.c.b16 %v4672, %v4671
  %4689 = vmatpush.bf16.msra.mxu0 %v4680
  %4690 = vmatpush.bf16.msra.mxu0 %v4679
  %4691 = vmatpush.bf16.msra.mxu0 %v4678
  %4692 = vmatpush.bf16.msra.mxu0 %v4677
  %4693 = vmatpush.bf16.msra.mxu0 %v4676
  %4694 = vmatpush.bf16.msra.mxu0 %v4675
  %4695 = vmatpush.bf16.msra.mxu0 %v4674
  %4696 = vmatpush.bf16.msra.mxu0 %v4673
  %4697 = vmatmul.bf16.gmra.mxu0 %v4639
  %v4698 = vpop.f32.mrf.mxu0
  %v4699 = vadd.f32 0.0, %v4698
  %v4700 = vpop.f32.mrf.mxu0
  %v4701 = vadd.f32 0.0, %v4700
  %4702 = vdwg.mxu0
  %v4703 = vadd.f32 %v4614, %v4699
  %v4704 = vadd.f32 %v4616, %v4701
  %s4705 = scalar_lea.vmem %s5, 192
  %v4706 = vld [vmem:[%s4705] sm:$0xf]
  %v4707 = vld [vmem:[%s4705 + $0x4] sm:$0xf]
  %v4708 = vld [vmem:[%s4705 + $0x8] sm:$0xf]
  %v4709 = vld [vmem:[%s4705 + $0xc] sm:$0xf]
  %v4710 = vld [vmem:[%s4705 + $0x10] sm:$0xf]
  %v4711 = vld [vmem:[%s4705 + $0x14] sm:$0xf]
  %v4712 = vld [vmem:[%s4705 + $0x18] sm:$0xf]
  %v4713 = vld [vmem:[%s4705 + $0x1c] sm:$0xf]
  %v4714 = vld [vmem:[%s4705 + $0x20] sm:$0xf]
  %v4715 = vld [vmem:[%s4705 + $0x24] sm:$0xf]
  %v4716 = vld [vmem:[%s4705 + $0x28] sm:$0xf]
  %v4717 = vld [vmem:[%s4705 + $0x2c] sm:$0xf]
  %v4718 = vld [vmem:[%s4705 + $0x30] sm:$0xf]
  %v4719 = vld [vmem:[%s4705 + $0x34] sm:$0xf]
  %v4720 = vld [vmem:[%s4705 + $0x38] sm:$0xf]
  %v4721 = vld [vmem:[%s4705 + $0x3c] sm:$0xf]
  %v4724 = vunpack.c.l.b16 %v4437
  %v4725 = vunpack.c.l.b16 %v4438
  %v4726 = vpack.c.b16 %v4725, %v4724
  %v4744 = vunpack.c.l.b16 %v4706
  %v4745 = vunpack.c.l.b16 %v4707
  %v4746 = vunpack.c.l.b16 %v4708
  %v4747 = vunpack.c.l.b16 %v4709
  %v4748 = vunpack.c.l.b16 %v4710
  %v4749 = vunpack.c.l.b16 %v4711
  %v4750 = vunpack.c.l.b16 %v4712
  %v4751 = vunpack.c.l.b16 %v4713
  %v4752 = vunpack.c.l.b16 %v4714
  %v4753 = vunpack.c.l.b16 %v4715
  %v4754 = vunpack.c.l.b16 %v4716
  %v4755 = vunpack.c.l.b16 %v4717
  %v4756 = vunpack.c.l.b16 %v4718
  %v4757 = vunpack.c.l.b16 %v4719
  %v4758 = vunpack.c.l.b16 %v4720
  %v4759 = vunpack.c.l.b16 %v4721
  %v4760 = vpack.c.b16 %v4745, %v4744
  %v4761 = vpack.c.b16 %v4747, %v4746
  %v4762 = vpack.c.b16 %v4749, %v4748
  %v4763 = vpack.c.b16 %v4751, %v4750
  %v4764 = vpack.c.b16 %v4753, %v4752
  %v4765 = vpack.c.b16 %v4755, %v4754
  %v4766 = vpack.c.b16 %v4757, %v4756
  %v4767 = vpack.c.b16 %v4759, %v4758
  %4776 = vmatpush.bf16.msra.mxu0 %v4767
  %4777 = vmatpush.bf16.msra.mxu0 %v4766
  %4778 = vmatpush.bf16.msra.mxu0 %v4765
  %4779 = vmatpush.bf16.msra.mxu0 %v4764
  %4780 = vmatpush.bf16.msra.mxu0 %v4763
  %4781 = vmatpush.bf16.msra.mxu0 %v4762
  %4782 = vmatpush.bf16.msra.mxu0 %v4761
  %4783 = vmatpush.bf16.msra.mxu0 %v4760
  %4784 = vmatmul.bf16.gmra.mxu0 %v4726
  %v4785 = vpop.f32.mrf.mxu0
  %v4786 = vadd.f32 0.0, %v4785
  %v4787 = vpop.f32.mrf.mxu0
  %v4788 = vadd.f32 0.0, %v4787
  %4789 = vdwg.mxu0
  %v4790 = vadd.f32 %v4703, %v4786
  %v4791 = vadd.f32 %v4704, %v4788
  %s4792 = scalar_lea.vmem %s5, 256
  %v4793 = vld [vmem:[%s4792] sm:$0xf]
  %v4794 = vld [vmem:[%s4792 + $0x4] sm:$0xf]
  %v4795 = vld [vmem:[%s4792 + $0x8] sm:$0xf]
  %v4796 = vld [vmem:[%s4792 + $0xc] sm:$0xf]
  %v4797 = vld [vmem:[%s4792 + $0x10] sm:$0xf]
  %v4798 = vld [vmem:[%s4792 + $0x14] sm:$0xf]
  %v4799 = vld [vmem:[%s4792 + $0x18] sm:$0xf]
  %v4800 = vld [vmem:[%s4792 + $0x1c] sm:$0xf]
  %v4801 = vld [vmem:[%s4792 + $0x20] sm:$0xf]
  %v4802 = vld [vmem:[%s4792 + $0x24] sm:$0xf]
  %v4803 = vld [vmem:[%s4792 + $0x28] sm:$0xf]
  %v4804 = vld [vmem:[%s4792 + $0x2c] sm:$0xf]
  %v4805 = vld [vmem:[%s4792 + $0x30] sm:$0xf]
  %v4806 = vld [vmem:[%s4792 + $0x34] sm:$0xf]
  %v4807 = vld [vmem:[%s4792 + $0x38] sm:$0xf]
  %v4808 = vld [vmem:[%s4792 + $0x3c] sm:$0xf]
  %v4811 = vunpack.c.l.b16 %v4439
  %v4812 = vunpack.c.l.b16 %v4440
  %v4813 = vpack.c.b16 %v4812, %v4811
  %v4831 = vunpack.c.l.b16 %v4793
  %v4832 = vunpack.c.l.b16 %v4794
  %v4833 = vunpack.c.l.b16 %v4795
  %v4834 = vunpack.c.l.b16 %v4796
  %v4835 = vunpack.c.l.b16 %v4797
  %v4836 = vunpack.c.l.b16 %v4798
  %v4837 = vunpack.c.l.b16 %v4799
  %v4838 = vunpack.c.l.b16 %v4800
  %v4839 = vunpack.c.l.b16 %v4801
  %v4840 = vunpack.c.l.b16 %v4802
  %v4841 = vunpack.c.l.b16 %v4803
  %v4842 = vunpack.c.l.b16 %v4804
  %v4843 = vunpack.c.l.b16 %v4805
  %v4844 = vunpack.c.l.b16 %v4806
  %v4845 = vunpack.c.l.b16 %v4807
  %v4846 = vunpack.c.l.b16 %v4808
  %v4847 = vpack.c.b16 %v4832, %v4831
  %v4848 = vpack.c.b16 %v4834, %v4833
  %v4849 = vpack.c.b16 %v4836, %v4835
  %v4850 = vpack.c.b16 %v4838, %v4837
  %v4851 = vpack.c.b16 %v4840, %v4839
  %v4852 = vpack.c.b16 %v4842, %v4841
  %v4853 = vpack.c.b16 %v4844, %v4843
  %v4854 = vpack.c.b16 %v4846, %v4845
  %4863 = vmatpush.bf16.msra.mxu0 %v4854
  %4864 = vmatpush.bf16.msra.mxu0 %v4853
  %4865 = vmatpush.bf16.msra.mxu0 %v4852
  %4866 = vmatpush.bf16.msra.mxu0 %v4851
  %4867 = vmatpush.bf16.msra.mxu0 %v4850
  %4868 = vmatpush.bf16.msra.mxu0 %v4849
  %4869 = vmatpush.bf16.msra.mxu0 %v4848
  %4870 = vmatpush.bf16.msra.mxu0 %v4847
  %4871 = vmatmul.bf16.gmra.mxu0 %v4813
  %v4872 = vpop.f32.mrf.mxu0
  %v4873 = vadd.f32 0.0, %v4872
  %v4874 = vpop.f32.mrf.mxu0
  %v4875 = vadd.f32 0.0, %v4874
  %4876 = vdwg.mxu0
  %v4877 = vadd.f32 %v4790, %v4873
  %v4878 = vadd.f32 %v4791, %v4875
  %s4879 = scalar_lea.vmem %s5, 320
  %v4880 = vld [vmem:[%s4879] sm:$0xf]
  %v4881 = vld [vmem:[%s4879 + $0x4] sm:$0xf]
  %v4882 = vld [vmem:[%s4879 + $0x8] sm:$0xf]
  %v4883 = vld [vmem:[%s4879 + $0xc] sm:$0xf]
  %v4884 = vld [vmem:[%s4879 + $0x10] sm:$0xf]
  %v4885 = vld [vmem:[%s4879 + $0x14] sm:$0xf]
  %v4886 = vld [vmem:[%s4879 + $0x18] sm:$0xf]
  %v4887 = vld [vmem:[%s4879 + $0x1c] sm:$0xf]
  %v4888 = vld [vmem:[%s4879 + $0x20] sm:$0xf]
  %v4889 = vld [vmem:[%s4879 + $0x24] sm:$0xf]
  %v4890 = vld [vmem:[%s4879 + $0x28] sm:$0xf]
  %v4891 = vld [vmem:[%s4879 + $0x2c] sm:$0xf]
  %v4892 = vld [vmem:[%s4879 + $0x30] sm:$0xf]
  %v4893 = vld [vmem:[%s4879 + $0x34] sm:$0xf]
  %v4894 = vld [vmem:[%s4879 + $0x38] sm:$0xf]
  %v4895 = vld [vmem:[%s4879 + $0x3c] sm:$0xf]
  %v4898 = vunpack.c.l.b16 %v4441
  %v4899 = vunpack.c.l.b16 %v4442
  %v4900 = vpack.c.b16 %v4899, %v4898
  %v4918 = vunpack.c.l.b16 %v4880
  %v4919 = vunpack.c.l.b16 %v4881
  %v4920 = vunpack.c.l.b16 %v4882
  %v4921 = vunpack.c.l.b16 %v4883
  %v4922 = vunpack.c.l.b16 %v4884
  %v4923 = vunpack.c.l.b16 %v4885
  %v4924 = vunpack.c.l.b16 %v4886
  %v4925 = vunpack.c.l.b16 %v4887
  %v4926 = vunpack.c.l.b16 %v4888
  %v4927 = vunpack.c.l.b16 %v4889
  %v4928 = vunpack.c.l.b16 %v4890
  %v4929 = vunpack.c.l.b16 %v4891
  %v4930 = vunpack.c.l.b16 %v4892
  %v4931 = vunpack.c.l.b16 %v4893
  %v4932 = vunpack.c.l.b16 %v4894
  %v4933 = vunpack.c.l.b16 %v4895
  %v4934 = vpack.c.b16 %v4919, %v4918
  %v4935 = vpack.c.b16 %v4921, %v4920
  %v4936 = vpack.c.b16 %v4923, %v4922
  %v4937 = vpack.c.b16 %v4925, %v4924
  %v4938 = vpack.c.b16 %v4927, %v4926
  %v4939 = vpack.c.b16 %v4929, %v4928
  %v4940 = vpack.c.b16 %v4931, %v4930
  %v4941 = vpack.c.b16 %v4933, %v4932
  %4950 = vmatpush.bf16.msra.mxu0 %v4941
  %4951 = vmatpush.bf16.msra.mxu0 %v4940
  %4952 = vmatpush.bf16.msra.mxu0 %v4939
  %4953 = vmatpush.bf16.msra.mxu0 %v4938
  %4954 = vmatpush.bf16.msra.mxu0 %v4937
  %4955 = vmatpush.bf16.msra.mxu0 %v4936
  %4956 = vmatpush.bf16.msra.mxu0 %v4935
  %4957 = vmatpush.bf16.msra.mxu0 %v4934
  %4958 = vmatmul.bf16.gmra.mxu0 %v4900
  %v4959 = vpop.f32.mrf.mxu0
  %v4960 = vadd.f32 0.0, %v4959
  %v4961 = vpop.f32.mrf.mxu0
  %v4962 = vadd.f32 0.0, %v4961
  %4963 = vdwg.mxu0
  %v4964 = vadd.f32 %v4877, %v4960
  %v4965 = vadd.f32 %v4878, %v4962
  %s4966 = scalar_lea.vmem %s5, 384
  %v4967 = vld [vmem:[%s4966] sm:$0xf]
  %v4968 = vld [vmem:[%s4966 + $0x4] sm:$0xf]
  %v4969 = vld [vmem:[%s4966 + $0x8] sm:$0xf]
  %v4970 = vld [vmem:[%s4966 + $0xc] sm:$0xf]
  %v4971 = vld [vmem:[%s4966 + $0x10] sm:$0xf]
  %v4972 = vld [vmem:[%s4966 + $0x14] sm:$0xf]
  %v4973 = vld [vmem:[%s4966 + $0x18] sm:$0xf]
  %v4974 = vld [vmem:[%s4966 + $0x1c] sm:$0xf]
  %v4975 = vld [vmem:[%s4966 + $0x20] sm:$0xf]
  %v4976 = vld [vmem:[%s4966 + $0x24] sm:$0xf]
  %v4977 = vld [vmem:[%s4966 + $0x28] sm:$0xf]
  %v4978 = vld [vmem:[%s4966 + $0x2c] sm:$0xf]
  %v4979 = vld [vmem:[%s4966 + $0x30] sm:$0xf]
  %v4980 = vld [vmem:[%s4966 + $0x34] sm:$0xf]
  %v4981 = vld [vmem:[%s4966 + $0x38] sm:$0xf]
  %v4982 = vld [vmem:[%s4966 + $0x3c] sm:$0xf]
  %v4985 = vunpack.c.l.b16 %v4443
  %v4986 = vunpack.c.l.b16 %v4444
  %v4987 = vpack.c.b16 %v4986, %v4985
  %v5005 = vunpack.c.l.b16 %v4967
  %v5006 = vunpack.c.l.b16 %v4968
  %v5007 = vunpack.c.l.b16 %v4969
  %v5008 = vunpack.c.l.b16 %v4970
  %v5009 = vunpack.c.l.b16 %v4971
  %v5010 = vunpack.c.l.b16 %v4972
  %v5011 = vunpack.c.l.b16 %v4973
  %v5012 = vunpack.c.l.b16 %v4974
  %v5013 = vunpack.c.l.b16 %v4975
  %v5014 = vunpack.c.l.b16 %v4976
  %v5015 = vunpack.c.l.b16 %v4977
  %v5016 = vunpack.c.l.b16 %v4978
  %v5017 = vunpack.c.l.b16 %v4979
  %v5018 = vunpack.c.l.b16 %v4980
  %v5019 = vunpack.c.l.b16 %v4981
  %v5020 = vunpack.c.l.b16 %v4982
  %v5021 = vpack.c.b16 %v5006, %v5005
  %v5022 = vpack.c.b16 %v5008, %v5007
  %v5023 = vpack.c.b16 %v5010, %v5009
  %v5024 = vpack.c.b16 %v5012, %v5011
  %v5025 = vpack.c.b16 %v5014, %v5013
  %v5026 = vpack.c.b16 %v5016, %v5015
  %v5027 = vpack.c.b16 %v5018, %v5017
  %v5028 = vpack.c.b16 %v5020, %v5019
  %5037 = vmatpush.bf16.msra.mxu0 %v5028
  %5038 = vmatpush.bf16.msra.mxu0 %v5027
  %5039 = vmatpush.bf16.msra.mxu0 %v5026
  %5040 = vmatpush.bf16.msra.mxu0 %v5025
  %5041 = vmatpush.bf16.msra.mxu0 %v5024
  %5042 = vmatpush.bf16.msra.mxu0 %v5023
  %5043 = vmatpush.bf16.msra.mxu0 %v5022
  %5044 = vmatpush.bf16.msra.mxu0 %v5021
  %5045 = vmatmul.bf16.gmra.mxu0 %v4987
  %v5046 = vpop.f32.mrf.mxu0
  %v5047 = vadd.f32 0.0, %v5046
  %v5048 = vpop.f32.mrf.mxu0
  %v5049 = vadd.f32 0.0, %v5048
  %5050 = vdwg.mxu0
  %v5051 = vadd.f32 %v4964, %v5047
  %v5052 = vadd.f32 %v4965, %v5049
  %s5053 = scalar_lea.vmem %s5, 448
  %v5054 = vld [vmem:[%s5053] sm:$0xf]
  %v5055 = vld [vmem:[%s5053 + $0x4] sm:$0xf]
  %v5056 = vld [vmem:[%s5053 + $0x8] sm:$0xf]
  %v5057 = vld [vmem:[%s5053 + $0xc] sm:$0xf]
  %v5058 = vld [vmem:[%s5053 + $0x10] sm:$0xf]
  %v5059 = vld [vmem:[%s5053 + $0x14] sm:$0xf]
  %v5060 = vld [vmem:[%s5053 + $0x18] sm:$0xf]
  %v5061 = vld [vmem:[%s5053 + $0x1c] sm:$0xf]
  %v5062 = vld [vmem:[%s5053 + $0x20] sm:$0xf]
  %v5063 = vld [vmem:[%s5053 + $0x24] sm:$0xf]
  %v5064 = vld [vmem:[%s5053 + $0x28] sm:$0xf]
  %v5065 = vld [vmem:[%s5053 + $0x2c] sm:$0xf]
  %v5066 = vld [vmem:[%s5053 + $0x30] sm:$0xf]
  %v5067 = vld [vmem:[%s5053 + $0x34] sm:$0xf]
  %v5068 = vld [vmem:[%s5053 + $0x38] sm:$0xf]
  %v5069 = vld [vmem:[%s5053 + $0x3c] sm:$0xf]
  %v5072 = vunpack.c.l.b16 %v4445
  %v5073 = vunpack.c.l.b16 %v4446
  %v5074 = vpack.c.b16 %v5073, %v5072
  %v5092 = vunpack.c.l.b16 %v5054
  %v5093 = vunpack.c.l.b16 %v5055
  %v5094 = vunpack.c.l.b16 %v5056
  %v5095 = vunpack.c.l.b16 %v5057
  %v5096 = vunpack.c.l.b16 %v5058
  %v5097 = vunpack.c.l.b16 %v5059
  %v5098 = vunpack.c.l.b16 %v5060
  %v5099 = vunpack.c.l.b16 %v5061
  %v5100 = vunpack.c.l.b16 %v5062
  %v5101 = vunpack.c.l.b16 %v5063
  %v5102 = vunpack.c.l.b16 %v5064
  %v5103 = vunpack.c.l.b16 %v5065
  %v5104 = vunpack.c.l.b16 %v5066
  %v5105 = vunpack.c.l.b16 %v5067
  %v5106 = vunpack.c.l.b16 %v5068
  %v5107 = vunpack.c.l.b16 %v5069
  %v5108 = vpack.c.b16 %v5093, %v5092
  %v5109 = vpack.c.b16 %v5095, %v5094
  %v5110 = vpack.c.b16 %v5097, %v5096
  %v5111 = vpack.c.b16 %v5099, %v5098
  %v5112 = vpack.c.b16 %v5101, %v5100
  %v5113 = vpack.c.b16 %v5103, %v5102
  %v5114 = vpack.c.b16 %v5105, %v5104
  %v5115 = vpack.c.b16 %v5107, %v5106
  %5124 = vmatpush.bf16.msra.mxu0 %v5115
  %5125 = vmatpush.bf16.msra.mxu0 %v5114
  %5126 = vmatpush.bf16.msra.mxu0 %v5113
  %5127 = vmatpush.bf16.msra.mxu0 %v5112
  %5128 = vmatpush.bf16.msra.mxu0 %v5111
  %5129 = vmatpush.bf16.msra.mxu0 %v5110
  %5130 = vmatpush.bf16.msra.mxu0 %v5109
  %5131 = vmatpush.bf16.msra.mxu0 %v5108
  %5132 = vmatmul.bf16.gmra.mxu0 %v5074
  %v5133 = vpop.f32.mrf.mxu0
  %v5134 = vadd.f32 0.0, %v5133
  %v5135 = vpop.f32.mrf.mxu0
  %v5136 = vadd.f32 0.0, %v5135
  %5137 = vdwg.mxu0
  %v5138 = vadd.f32 %v5051, %v5134
  %v5139 = vadd.f32 %v5052, %v5136
  %s5140 = scalar_lea.vmem %s5, 512
  %v5141 = vld [vmem:[%s5140] sm:$0xf]
  %v5142 = vld [vmem:[%s5140 + $0x4] sm:$0xf]
  %v5143 = vld [vmem:[%s5140 + $0x8] sm:$0xf]
  %v5144 = vld [vmem:[%s5140 + $0xc] sm:$0xf]
  %v5145 = vld [vmem:[%s5140 + $0x10] sm:$0xf]
  %v5146 = vld [vmem:[%s5140 + $0x14] sm:$0xf]
  %v5147 = vld [vmem:[%s5140 + $0x18] sm:$0xf]
  %v5148 = vld [vmem:[%s5140 + $0x1c] sm:$0xf]
  %v5149 = vld [vmem:[%s5140 + $0x20] sm:$0xf]
  %v5150 = vld [vmem:[%s5140 + $0x24] sm:$0xf]
  %v5151 = vld [vmem:[%s5140 + $0x28] sm:$0xf]
  %v5152 = vld [vmem:[%s5140 + $0x2c] sm:$0xf]
  %v5153 = vld [vmem:[%s5140 + $0x30] sm:$0xf]
  %v5154 = vld [vmem:[%s5140 + $0x34] sm:$0xf]
  %v5155 = vld [vmem:[%s5140 + $0x38] sm:$0xf]
  %v5156 = vld [vmem:[%s5140 + $0x3c] sm:$0xf]
  %v5159 = vunpack.c.l.b16 %v4447
  %v5160 = vunpack.c.l.b16 %v4448
  %v5161 = vpack.c.b16 %v5160, %v5159
  %v5179 = vunpack.c.l.b16 %v5141
  %v5180 = vunpack.c.l.b16 %v5142
  %v5181 = vunpack.c.l.b16 %v5143
  %v5182 = vunpack.c.l.b16 %v5144
  %v5183 = vunpack.c.l.b16 %v5145
  %v5184 = vunpack.c.l.b16 %v5146
  %v5185 = vunpack.c.l.b16 %v5147
  %v5186 = vunpack.c.l.b16 %v5148
  %v5187 = vunpack.c.l.b16 %v5149
  %v5188 = vunpack.c.l.b16 %v5150
  %v5189 = vunpack.c.l.b16 %v5151
  %v5190 = vunpack.c.l.b16 %v5152
  %v5191 = vunpack.c.l.b16 %v5153
  %v5192 = vunpack.c.l.b16 %v5154
  %v5193 = vunpack.c.l.b16 %v5155
  %v5194 = vunpack.c.l.b16 %v5156
  %v5195 = vpack.c.b16 %v5180, %v5179
  %v5196 = vpack.c.b16 %v5182, %v5181
  %v5197 = vpack.c.b16 %v5184, %v5183
  %v5198 = vpack.c.b16 %v5186, %v5185
  %v5199 = vpack.c.b16 %v5188, %v5187
  %v5200 = vpack.c.b16 %v5190, %v5189
  %v5201 = vpack.c.b16 %v5192, %v5191
  %v5202 = vpack.c.b16 %v5194, %v5193
  %5211 = vmatpush.bf16.msra.mxu0 %v5202
  %5212 = vmatpush.bf16.msra.mxu0 %v5201
  %5213 = vmatpush.bf16.msra.mxu0 %v5200
  %5214 = vmatpush.bf16.msra.mxu0 %v5199
  %5215 = vmatpush.bf16.msra.mxu0 %v5198
  %5216 = vmatpush.bf16.msra.mxu0 %v5197
  %5217 = vmatpush.bf16.msra.mxu0 %v5196
  %5218 = vmatpush.bf16.msra.mxu0 %v5195
  %5219 = vmatmul.bf16.gmra.mxu0 %v5161
  %v5220 = vpop.f32.mrf.mxu0
  %v5221 = vadd.f32 0.0, %v5220
  %v5222 = vpop.f32.mrf.mxu0
  %v5223 = vadd.f32 0.0, %v5222
  %5224 = vdwg.mxu0
  %v5225 = vadd.f32 %v5138, %v5221
  %v5226 = vadd.f32 %v5139, %v5223
  %v5227 = vld [vmem:[%s6] sm:$0x1]
  %v5229 = vperm.slane %v5227, 0
  %v5231 = vadd.f32 %v5225, %v5229
  %v5232 = vadd.f32 %v5226, %v5229
  %v5233 = vmax.f32 %v5231, 0.0
  %v5234 = vmax.f32 %v5232, 0.0
  %v5235 = vpack.c.bf16 %v5234, %v5233
  %v5236 = vld [vmem:[%s7] sm:$0xff]
  %v5237 = vld [vmem:[%s7 + $0x8] sm:$0xff]
  %v5238 = vld [vmem:[%s7 + $0x10] sm:$0xff]
  %v5239 = vld [vmem:[%s7 + $0x18] sm:$0xff]
  %v5240 = vld [vmem:[%s7 + $0x20] sm:$0xff]
  %v5241 = vld [vmem:[%s7 + $0x28] sm:$0xff]
  %v5242 = vld [vmem:[%s7 + $0x30] sm:$0xff]
  %v5243 = vld [vmem:[%s7 + $0x38] sm:$0xff]
  %v5244 = vld [vmem:[%s7 + $0x40] sm:$0xff]
  %v5245 = vld [vmem:[%s7 + $0x48] sm:$0xff]
  %v5246 = vld [vmem:[%s7 + $0x50] sm:$0xff]
  %v5247 = vld [vmem:[%s7 + $0x58] sm:$0xff]
  %v5248 = vld [vmem:[%s7 + $0x60] sm:$0xff]
  %v5249 = vld [vmem:[%s7 + $0x68] sm:$0xff]
  %v5250 = vld [vmem:[%s7 + $0x70] sm:$0xff]
  %v5251 = vld [vmem:[%s7 + $0x78] sm:$0xff]
  %v5252 = vld [vmem:[%s7 + $0x80] sm:$0xff]
  %v5253 = vld [vmem:[%s7 + $0x88] sm:$0xff]
  %v5254 = vld [vmem:[%s7 + $0x90] sm:$0xff]
  %v5255 = vld [vmem:[%s7 + $0x98] sm:$0xff]
  %v5256 = vld [vmem:[%s7 + $0xa0] sm:$0xff]
  %v5257 = vld [vmem:[%s7 + $0xa8] sm:$0xff]
  %v5258 = vld [vmem:[%s7 + $0xb0] sm:$0xff]
  %v5259 = vld [vmem:[%s7 + $0xb8] sm:$0xff]
  %v5260 = vld [vmem:[%s7 + $0xc0] sm:$0xff]
  %v5261 = vld [vmem:[%s7 + $0xc8] sm:$0xff]
  %v5262 = vld [vmem:[%s7 + $0xd0] sm:$0xff]
  %v5263 = vld [vmem:[%s7 + $0xd8] sm:$0xff]
  %v5264 = vld [vmem:[%s7 + $0xe0] sm:$0xff]
  %v5265 = vld [vmem:[%s7 + $0xe8] sm:$0xff]
  %v5266 = vld [vmem:[%s7 + $0xf0] sm:$0xff]
  %v5267 = vld [vmem:[%s7 + $0xf8] sm:$0xff]
  %v5268 = vld [vmem:[%s8] sm:$0xf]
  %v5270 = vperm.slane %v5268, 0
  %v5271 = vperm.slane %v5268, 1
  %v5272 = vperm.slane %v5268, 2
  %v5273 = vperm.slane %v5268, 3
  %v5310 = vunpack.c.l.b16 %v5236
  %v5311 = vunpack.c.h.b16 %v5236
  %v5312 = vunpack.c.l.b16 %v5237
  %v5313 = vunpack.c.h.b16 %v5237
  %v5314 = vunpack.c.l.b16 %v5238
  %v5315 = vunpack.c.h.b16 %v5238
  %v5316 = vunpack.c.l.b16 %v5239
  %v5317 = vunpack.c.h.b16 %v5239
  %v5318 = vunpack.c.l.b16 %v5240
  %v5319 = vunpack.c.h.b16 %v5240
  %v5320 = vunpack.c.l.b16 %v5241
  %v5321 = vunpack.c.h.b16 %v5241
  %v5322 = vunpack.c.l.b16 %v5242
  %v5323 = vunpack.c.h.b16 %v5242
  %v5324 = vunpack.c.l.b16 %v5243
  %v5325 = vunpack.c.h.b16 %v5243
  %v5326 = vunpack.c.l.b16 %v5244
  %v5327 = vunpack.c.h.b16 %v5244
  %v5328 = vunpack.c.l.b16 %v5245
  %v5329 = vunpack.c.h.b16 %v5245
  %v5330 = vunpack.c.l.b16 %v5246
  %v5331 = vunpack.c.h.b16 %v5246
  %v5332 = vunpack.c.l.b16 %v5247
  %v5333 = vunpack.c.h.b16 %v5247
  %v5334 = vunpack.c.l.b16 %v5248
  %v5335 = vunpack.c.h.b16 %v5248
  %v5336 = vunpack.c.l.b16 %v5249
  %v5337 = vunpack.c.h.b16 %v5249
  %v5338 = vunpack.c.l.b16 %v5250
  %v5339 = vunpack.c.h.b16 %v5250
  %v5340 = vunpack.c.l.b16 %v5251
  %v5341 = vunpack.c.h.b16 %v5251
  %v5342 = vunpack.c.l.b16 %v5252
  %v5343 = vunpack.c.h.b16 %v5252
  %v5344 = vunpack.c.l.b16 %v5253
  %v5345 = vunpack.c.h.b16 %v5253
  %v5346 = vunpack.c.l.b16 %v5254
  %v5347 = vunpack.c.h.b16 %v5254
  %v5348 = vunpack.c.l.b16 %v5255
  %v5349 = vunpack.c.h.b16 %v5255
  %v5350 = vunpack.c.l.b16 %v5256
  %v5351 = vunpack.c.h.b16 %v5256
  %v5352 = vunpack.c.l.b16 %v5257
  %v5353 = vunpack.c.h.b16 %v5257
  %v5354 = vunpack.c.l.b16 %v5258
  %v5355 = vunpack.c.h.b16 %v5258
  %v5356 = vunpack.c.l.b16 %v5259
  %v5357 = vunpack.c.h.b16 %v5259
  %v5358 = vunpack.c.l.b16 %v5260
  %v5359 = vunpack.c.h.b16 %v5260
  %v5360 = vunpack.c.l.b16 %v5261
  %v5361 = vunpack.c.h.b16 %v5261
  %v5362 = vunpack.c.l.b16 %v5262
  %v5363 = vunpack.c.h.b16 %v5262
  %v5364 = vunpack.c.l.b16 %v5263
  %v5365 = vunpack.c.h.b16 %v5263
  %v5366 = vunpack.c.l.b16 %v5264
  %v5367 = vunpack.c.h.b16 %v5264
  %v5368 = vunpack.c.l.b16 %v5265
  %v5369 = vunpack.c.h.b16 %v5265
  %v5370 = vunpack.c.l.b16 %v5266
  %v5371 = vunpack.c.h.b16 %v5266
  %v5372 = vunpack.c.l.b16 %v5267
  %v5373 = vunpack.c.h.b16 %v5267
  %v5374 = vpack.c.b16 %v5314, %v5310
  %v5375 = vpack.c.b16 %v5315, %v5311
  %v5376 = vpack.c.b16 %v5316, %v5312
  %v5377 = vpack.c.b16 %v5317, %v5313
  %v5378 = vpack.c.b16 %v5322, %v5318
  %v5379 = vpack.c.b16 %v5323, %v5319
  %v5380 = vpack.c.b16 %v5324, %v5320
  %v5381 = vpack.c.b16 %v5325, %v5321
  %v5382 = vpack.c.b16 %v5330, %v5326
  %v5383 = vpack.c.b16 %v5331, %v5327
  %v5384 = vpack.c.b16 %v5332, %v5328
  %v5385 = vpack.c.b16 %v5333, %v5329
  %v5386 = vpack.c.b16 %v5338, %v5334
  %v5387 = vpack.c.b16 %v5339, %v5335
  %v5388 = vpack.c.b16 %v5340, %v5336
  %v5389 = vpack.c.b16 %v5341, %v5337
  %v5390 = vpack.c.b16 %v5346, %v5342
  %v5391 = vpack.c.b16 %v5347, %v5343
  %v5392 = vpack.c.b16 %v5348, %v5344
  %v5393 = vpack.c.b16 %v5349, %v5345
  %v5394 = vpack.c.b16 %v5354, %v5350
  %v5395 = vpack.c.b16 %v5355, %v5351
  %v5396 = vpack.c.b16 %v5356, %v5352
  %v5397 = vpack.c.b16 %v5357, %v5353
  %v5398 = vpack.c.b16 %v5362, %v5358
  %v5399 = vpack.c.b16 %v5363, %v5359
  %v5400 = vpack.c.b16 %v5364, %v5360
  %v5401 = vpack.c.b16 %v5365, %v5361
  %v5402 = vpack.c.b16 %v5370, %v5366
  %v5403 = vpack.c.b16 %v5371, %v5367
  %v5404 = vpack.c.b16 %v5372, %v5368
  %v5405 = vpack.c.b16 %v5373, %v5369
  %5438 = vmatpush.bf16.msra.mxu0 %v5402
  %5439 = vmatpush.bf16.msra.mxu0 %v5398
  %5440 = vmatpush.bf16.msra.mxu0 %v5394
  %5441 = vmatpush.bf16.msra.mxu0 %v5390
  %5442 = vmatpush.bf16.msra.mxu0 %v5386
  %5443 = vmatpush.bf16.msra.mxu0 %v5382
  %5444 = vmatpush.bf16.msra.mxu0 %v5378
  %5445 = vmatpush.bf16.msra.mxu0 %v5374
  %5446 = vmatmul.bf16.gmra.mxu0 %v5235
  %v5447 = vpop.f32.mrf.mxu0
  %v5448 = vadd.f32 %v5270, %v5447
  %v5449 = vpop.f32.mrf.mxu0
  %v5450 = vadd.f32 %v5270, %v5449
  %5451 = vdwg.mxu0
  %5452 = vmatpush.bf16.msra.mxu0 %v5403
  %5453 = vmatpush.bf16.msra.mxu0 %v5399
  %5454 = vmatpush.bf16.msra.mxu0 %v5395
  %5455 = vmatpush.bf16.msra.mxu0 %v5391
  %5456 = vmatpush.bf16.msra.mxu0 %v5387
  %5457 = vmatpush.bf16.msra.mxu0 %v5383
  %5458 = vmatpush.bf16.msra.mxu0 %v5379
  %5459 = vmatpush.bf16.msra.mxu0 %v5375
  %5460 = vmatmul.bf16.gmra.mxu0 %v5235
  %v5461 = vpop.f32.mrf.mxu0
  %v5462 = vadd.f32 %v5271, %v5461
  %v5463 = vpop.f32.mrf.mxu0
  %v5464 = vadd.f32 %v5271, %v5463
  %5465 = vdwg.mxu0
  %5466 = vmatpush.bf16.msra.mxu0 %v5404
  %5467 = vmatpush.bf16.msra.mxu0 %v5400
  %5468 = vmatpush.bf16.msra.mxu0 %v5396
  %5469 = vmatpush.bf16.msra.mxu0 %v5392
  %5470 = vmatpush.bf16.msra.mxu0 %v5388
  %5471 = vmatpush.bf16.msra.mxu0 %v5384
  %5472 = vmatpush.bf16.msra.mxu0 %v5380
  %5473 = vmatpush.bf16.msra.mxu0 %v5376
  %5474 = vmatmul.bf16.gmra.mxu0 %v5235
  %v5475 = vpop.f32.mrf.mxu0
  %v5476 = vadd.f32 %v5272, %v5475
  %v5477 = vpop.f32.mrf.mxu0
  %v5478 = vadd.f32 %v5272, %v5477
  %5479 = vdwg.mxu0
  %5480 = vmatpush.bf16.msra.mxu0 %v5405
  %5481 = vmatpush.bf16.msra.mxu0 %v5401
  %5482 = vmatpush.bf16.msra.mxu0 %v5397
  %5483 = vmatpush.bf16.msra.mxu0 %v5393
  %5484 = vmatpush.bf16.msra.mxu0 %v5389
  %5485 = vmatpush.bf16.msra.mxu0 %v5385
  %5486 = vmatpush.bf16.msra.mxu0 %v5381
  %5487 = vmatpush.bf16.msra.mxu0 %v5377
  %5488 = vmatmul.bf16.gmra.mxu0 %v5235
  %v5489 = vpop.f32.mrf.mxu0
  %v5490 = vadd.f32 %v5273, %v5489
  %v5491 = vpop.f32.mrf.mxu0
  %v5492 = vadd.f32 %v5273, %v5491
  %5493 = vdwg.mxu0
  %v5494 = vmax.f32 %v5448, 0.0
  %v5495 = vmax.f32 %v5462, 0.0
  %v5496 = vmax.f32 %v5476, 0.0
  %v5497 = vmax.f32 %v5490, 0.0
  %v5498 = vmax.f32 %v5450, 0.0
  %v5499 = vmax.f32 %v5464, 0.0
  %v5500 = vmax.f32 %v5478, 0.0
  %v5501 = vmax.f32 %v5492, 0.0
  %v5502 = vpack.c.bf16 %v5498, %v5494
  %v5503 = vpack.c.bf16 %v5499, %v5495
  %v5504 = vpack.c.bf16 %v5500, %v5496
  %v5505 = vpack.c.bf16 %v5501, %v5497
  %v5506 = vld [vmem:[%s9] sm:$0xf]
  %v5507 = vld [vmem:[%s9 + $0x4] sm:$0xf]
  %v5508 = vld [vmem:[%s9 + $0x8] sm:$0xf]
  %v5509 = vld [vmem:[%s9 + $0xc] sm:$0xf]
  %v5510 = vld [vmem:[%s9 + $0x10] sm:$0xf]
  %v5511 = vld [vmem:[%s9 + $0x14] sm:$0xf]
  %v5512 = vld [vmem:[%s9 + $0x18] sm:$0xf]
  %v5513 = vld [vmem:[%s9 + $0x1c] sm:$0xf]
  %v5514 = vld [vmem:[%s9 + $0x20] sm:$0xf]
  %v5515 = vld [vmem:[%s9 + $0x24] sm:$0xf]
  %v5516 = vld [vmem:[%s9 + $0x28] sm:$0xf]
  %v5517 = vld [vmem:[%s9 + $0x2c] sm:$0xf]
  %v5518 = vld [vmem:[%s9 + $0x30] sm:$0xf]
  %v5519 = vld [vmem:[%s9 + $0x34] sm:$0xf]
  %v5520 = vld [vmem:[%s9 + $0x38] sm:$0xf]
  %v5521 = vld [vmem:[%s9 + $0x3c] sm:$0xf]
  %v5522 = vld [vmem:[%s9 + $0x40] sm:$0xf]
  %v5523 = vld [vmem:[%s9 + $0x44] sm:$0xf]
  %v5524 = vld [vmem:[%s9 + $0x48] sm:$0xf]
  %v5525 = vld [vmem:[%s9 + $0x4c] sm:$0xf]
  %v5526 = vld [vmem:[%s9 + $0x50] sm:$0xf]
  %v5527 = vld [vmem:[%s9 + $0x54] sm:$0xf]
  %v5528 = vld [vmem:[%s9 + $0x58] sm:$0xf]
  %v5529 = vld [vmem:[%s9 + $0x5c] sm:$0xf]
  %v5530 = vld [vmem:[%s9 + $0x60] sm:$0xf]
  %v5531 = vld [vmem:[%s9 + $0x64] sm:$0xf]
  %v5532 = vld [vmem:[%s9 + $0x68] sm:$0xf]
  %v5533 = vld [vmem:[%s9 + $0x6c] sm:$0xf]
  %v5534 = vld [vmem:[%s9 + $0x70] sm:$0xf]
  %v5535 = vld [vmem:[%s9 + $0x74] sm:$0xf]
  %v5536 = vld [vmem:[%s9 + $0x78] sm:$0xf]
  %v5537 = vld [vmem:[%s9 + $0x7c] sm:$0xf]
  %v5538 = vld [vmem:[%s9 + $0x80] sm:$0xf]
  %v5539 = vld [vmem:[%s9 + $0x84] sm:$0xf]
  %v5540 = vld [vmem:[%s9 + $0x88] sm:$0xf]
  %v5541 = vld [vmem:[%s9 + $0x8c] sm:$0xf]
  %v5542 = vld [vmem:[%s9 + $0x90] sm:$0xf]
  %v5543 = vld [vmem:[%s9 + $0x94] sm:$0xf]
  %v5544 = vld [vmem:[%s9 + $0x98] sm:$0xf]
  %v5545 = vld [vmem:[%s9 + $0x9c] sm:$0xf]
  %v5546 = vld [vmem:[%s9 + $0xa0] sm:$0xf]
  %v5547 = vld [vmem:[%s9 + $0xa4] sm:$0xf]
  %v5548 = vld [vmem:[%s9 + $0xa8] sm:$0xf]
  %v5549 = vld [vmem:[%s9 + $0xac] sm:$0xf]
  %v5550 = vld [vmem:[%s9 + $0xb0] sm:$0xf]
  %v5551 = vld [vmem:[%s9 + $0xb4] sm:$0xf]
  %v5552 = vld [vmem:[%s9 + $0xb8] sm:$0xf]
  %v5553 = vld [vmem:[%s9 + $0xbc] sm:$0xf]
  %v5554 = vld [vmem:[%s9 + $0xc0] sm:$0xf]
  %v5555 = vld [vmem:[%s9 + $0xc4] sm:$0xf]
  %v5556 = vld [vmem:[%s9 + $0xc8] sm:$0xf]
  %v5557 = vld [vmem:[%s9 + $0xcc] sm:$0xf]
  %v5558 = vld [vmem:[%s9 + $0xd0] sm:$0xf]
  %v5559 = vld [vmem:[%s9 + $0xd4] sm:$0xf]
  %v5560 = vld [vmem:[%s9 + $0xd8] sm:$0xf]
  %v5561 = vld [vmem:[%s9 + $0xdc] sm:$0xf]
  %v5562 = vld [vmem:[%s9 + $0xe0] sm:$0xf]
  %v5563 = vld [vmem:[%s9 + $0xe4] sm:$0xf]
  %v5564 = vld [vmem:[%s9 + $0xe8] sm:$0xf]
  %v5565 = vld [vmem:[%s9 + $0xec] sm:$0xf]
  %v5566 = vld [vmem:[%s9 + $0xf0] sm:$0xf]
  %v5567 = vld [vmem:[%s9 + $0xf4] sm:$0xf]
  %v5568 = vld [vmem:[%s9 + $0xf8] sm:$0xf]
  %v5569 = vld [vmem:[%s9 + $0xfc] sm:$0xf]
  %v5570 = vld [vmem:[%s10] sm:$0x1]
  %v5572 = vperm.slane %v5570, 0
  %v5638 = vunpack.c.l.b16 %v5506
  %v5639 = vunpack.c.l.b16 %v5507
  %v5640 = vunpack.c.l.b16 %v5508
  %v5641 = vunpack.c.l.b16 %v5509
  %v5642 = vunpack.c.l.b16 %v5510
  %v5643 = vunpack.c.l.b16 %v5511
  %v5644 = vunpack.c.l.b16 %v5512
  %v5645 = vunpack.c.l.b16 %v5513
  %v5646 = vunpack.c.l.b16 %v5514
  %v5647 = vunpack.c.l.b16 %v5515
  %v5648 = vunpack.c.l.b16 %v5516
  %v5649 = vunpack.c.l.b16 %v5517
  %v5650 = vunpack.c.l.b16 %v5518
  %v5651 = vunpack.c.l.b16 %v5519
  %v5652 = vunpack.c.l.b16 %v5520
  %v5653 = vunpack.c.l.b16 %v5521
  %v5654 = vunpack.c.l.b16 %v5522
  %v5655 = vunpack.c.l.b16 %v5523
  %v5656 = vunpack.c.l.b16 %v5524
  %v5657 = vunpack.c.l.b16 %v5525
  %v5658 = vunpack.c.l.b16 %v5526
  %v5659 = vunpack.c.l.b16 %v5527
  %v5660 = vunpack.c.l.b16 %v5528
  %v5661 = vunpack.c.l.b16 %v5529
  %v5662 = vunpack.c.l.b16 %v5530
  %v5663 = vunpack.c.l.b16 %v5531
  %v5664 = vunpack.c.l.b16 %v5532
  %v5665 = vunpack.c.l.b16 %v5533
  %v5666 = vunpack.c.l.b16 %v5534
  %v5667 = vunpack.c.l.b16 %v5535
  %v5668 = vunpack.c.l.b16 %v5536
  %v5669 = vunpack.c.l.b16 %v5537
  %v5670 = vunpack.c.l.b16 %v5538
  %v5671 = vunpack.c.l.b16 %v5539
  %v5672 = vunpack.c.l.b16 %v5540
  %v5673 = vunpack.c.l.b16 %v5541
  %v5674 = vunpack.c.l.b16 %v5542
  %v5675 = vunpack.c.l.b16 %v5543
  %v5676 = vunpack.c.l.b16 %v5544
  %v5677 = vunpack.c.l.b16 %v5545
  %v5678 = vunpack.c.l.b16 %v5546
  %v5679 = vunpack.c.l.b16 %v5547
  %v5680 = vunpack.c.l.b16 %v5548
  %v5681 = vunpack.c.l.b16 %v5549
  %v5682 = vunpack.c.l.b16 %v5550
  %v5683 = vunpack.c.l.b16 %v5551
  %v5684 = vunpack.c.l.b16 %v5552
  %v5685 = vunpack.c.l.b16 %v5553
  %v5686 = vunpack.c.l.b16 %v5554
  %v5687 = vunpack.c.l.b16 %v5555
  %v5688 = vunpack.c.l.b16 %v5556
  %v5689 = vunpack.c.l.b16 %v5557
  %v5690 = vunpack.c.l.b16 %v5558
  %v5691 = vunpack.c.l.b16 %v5559
  %v5692 = vunpack.c.l.b16 %v5560
  %v5693 = vunpack.c.l.b16 %v5561
  %v5694 = vunpack.c.l.b16 %v5562
  %v5695 = vunpack.c.l.b16 %v5563
  %v5696 = vunpack.c.l.b16 %v5564
  %v5697 = vunpack.c.l.b16 %v5565
  %v5698 = vunpack.c.l.b16 %v5566
  %v5699 = vunpack.c.l.b16 %v5567
  %v5700 = vunpack.c.l.b16 %v5568
  %v5701 = vunpack.c.l.b16 %v5569
  %v5702 = vpack.c.b16 %v5639, %v5638
  %v5703 = vpack.c.b16 %v5641, %v5640
  %v5704 = vpack.c.b16 %v5643, %v5642
  %v5705 = vpack.c.b16 %v5645, %v5644
  %v5706 = vpack.c.b16 %v5647, %v5646
  %v5707 = vpack.c.b16 %v5649, %v5648
  %v5708 = vpack.c.b16 %v5651, %v5650
  %v5709 = vpack.c.b16 %v5653, %v5652
  %v5710 = vpack.c.b16 %v5655, %v5654
  %v5711 = vpack.c.b16 %v5657, %v5656
  %v5712 = vpack.c.b16 %v5659, %v5658
  %v5713 = vpack.c.b16 %v5661, %v5660
  %v5714 = vpack.c.b16 %v5663, %v5662
  %v5715 = vpack.c.b16 %v5665, %v5664
  %v5716 = vpack.c.b16 %v5667, %v5666
  %v5717 = vpack.c.b16 %v5669, %v5668
  %v5718 = vpack.c.b16 %v5671, %v5670
  %v5719 = vpack.c.b16 %v5673, %v5672
  %v5720 = vpack.c.b16 %v5675, %v5674
  %v5721 = vpack.c.b16 %v5677, %v5676
  %v5722 = vpack.c.b16 %v5679, %v5678
  %v5723 = vpack.c.b16 %v5681, %v5680
  %v5724 = vpack.c.b16 %v5683, %v5682
  %v5725 = vpack.c.b16 %v5685, %v5684
  %v5726 = vpack.c.b16 %v5687, %v5686
  %v5727 = vpack.c.b16 %v5689, %v5688
  %v5728 = vpack.c.b16 %v5691, %v5690
  %v5729 = vpack.c.b16 %v5693, %v5692
  %v5730 = vpack.c.b16 %v5695, %v5694
  %v5731 = vpack.c.b16 %v5697, %v5696
  %v5732 = vpack.c.b16 %v5699, %v5698
  %v5733 = vpack.c.b16 %v5701, %v5700
  %5766 = vmatpush.bf16.msra.mxu0 %v5709
  %5767 = vmatpush.bf16.msra.mxu0 %v5708
  %5768 = vmatpush.bf16.msra.mxu0 %v5707
  %5769 = vmatpush.bf16.msra.mxu0 %v5706
  %5770 = vmatpush.bf16.msra.mxu0 %v5705
  %5771 = vmatpush.bf16.msra.mxu0 %v5704
  %5772 = vmatpush.bf16.msra.mxu0 %v5703
  %5773 = vmatpush.bf16.msra.mxu0 %v5702
  %5774 = vmatmul.bf16.gmra.mxu0 %v5502
  %v5775 = vpop.f32.mrf.mxu0
  %v5776 = vadd.f32 %v5572, %v5775
  %v5777 = vpop.f32.mrf.mxu0
  %v5778 = vadd.f32 %v5572, %v5777
  %5779 = vdwg.mxu0
  %5780 = vmatpush.bf16.msra.mxu0 %v5717
  %5781 = vmatpush.bf16.msra.mxu0 %v5716
  %5782 = vmatpush.bf16.msra.mxu0 %v5715
  %5783 = vmatpush.bf16.msra.mxu0 %v5714
  %5784 = vmatpush.bf16.msra.mxu0 %v5713
  %5785 = vmatpush.bf16.msra.mxu0 %v5712
  %5786 = vmatpush.bf16.msra.mxu0 %v5711
  %5787 = vmatpush.bf16.msra.mxu0 %v5710
  %5788 = vmatmul.bf16.gmra.mxu0 %v5503
  %v5789 = vpop.f32.mrf.mxu0
  %v5790 = vadd.f32 %v5776, %v5789
  %v5791 = vpop.f32.mrf.mxu0
  %v5792 = vadd.f32 %v5778, %v5791
  %5793 = vdwg.mxu0
  %5794 = vmatpush.bf16.msra.mxu0 %v5725
  %5795 = vmatpush.bf16.msra.mxu0 %v5724
  %5796 = vmatpush.bf16.msra.mxu0 %v5723
  %5797 = vmatpush.bf16.msra.mxu0 %v5722
  %5798 = vmatpush.bf16.msra.mxu0 %v5721
  %5799 = vmatpush.bf16.msra.mxu0 %v5720
  %5800 = vmatpush.bf16.msra.mxu0 %v5719
  %5801 = vmatpush.bf16.msra.mxu0 %v5718
  %5802 = vmatmul.bf16.gmra.mxu0 %v5504
  %v5803 = vpop.f32.mrf.mxu0
  %v5804 = vadd.f32 %v5790, %v5803
  %v5805 = vpop.f32.mrf.mxu0
  %v5806 = vadd.f32 %v5792, %v5805
  %5807 = vdwg.mxu0
  %5808 = vmatpush.bf16.msra.mxu0 %v5733
  %5809 = vmatpush.bf16.msra.mxu0 %v5732
  %5810 = vmatpush.bf16.msra.mxu0 %v5731
  %5811 = vmatpush.bf16.msra.mxu0 %v5730
  %5812 = vmatpush.bf16.msra.mxu0 %v5729
  %5813 = vmatpush.bf16.msra.mxu0 %v5728
  %5814 = vmatpush.bf16.msra.mxu0 %v5727
  %5815 = vmatpush.bf16.msra.mxu0 %v5726
  %5816 = vmatmul.bf16.gmra.mxu0 %v5505
  %v5817 = vpop.f32.mrf.mxu0
  %v5818 = vadd.f32 %v5804, %v5817
  %v5819 = vpop.f32.mrf.mxu0
  %v5820 = vadd.f32 %v5806, %v5819
  %5821 = vdwg.mxu0
  %5822 = vst [vmem:[%s11] sm:$0xff] %v5818
  %5823 = vst [vmem:[%s11 + $0x8] sm:$0xff] %v5820
  // Predicated region
  $region46: #{_dqn_forward_impl.1} parent=0 // pred_check
    _
  $region47: #{_dqn_forward_impl.1} parent=0 // pred_check_branch
    %5825 = sbr.rel (0) target = $region49
  $region48: #{_dqn_forward_impl.1} parent=0 // pred_region
    _
  $region49: #{_dqn_forward_impl.1} parent=0 // pred_fallthru
    _
  // Predicated region
  $region50: #{_dqn_forward_impl.1} parent=0 // pred_check
    _
  $region51: #{_dqn_forward_impl.1} parent=0 // pred_check_branch
    %5827 = sbr.rel (0) target = $region53
  $region52: #{_dqn_forward_impl.1} parent=0 // pred_region
    _
  $region53: #{_dqn_forward_impl.1} parent=0 // pred_fallthru
    _

</llo_original>
